<compile_context>
chip_gen: v6e
topology: v6e:2x2x1
jax: 0.10.0
libtpu: 0.0.40
codegen_flags: <defaults>
</compile_context>

<pallas_src>
import functools
import math

import jax
import jax.numpy as jnp
from jax import lax
from jax.experimental import pallas as pl
from jax.experimental.pallas import tpu as pltpu

# ---------------------------------------------------------------------------
# Fixed geometry (ConvNet2FC on 1x28x28 inputs)
# ---------------------------------------------------------------------------
IMG_H, IMG_W = 28, 28
IMG = IMG_H * IMG_W          # 784 flat pixels per image
CH_ROWS = 112                # flat rows per inner chunk (divides 784, multiple of 8)
PAD_ROWS = 352               # zero rows appended so shifted reads stay in-bounds (>= max tap shift)
C_MAX = 64                   # widest activation channel count
TAIL_ROWS = 8                # row block for the 1x1-valid tail (only row 0 is used)


def _tap_shifts(k, dil):
    """Flat-row offsets of the k*k conv taps at dilation `dil` on the 28-wide grid."""
    return tuple(dil * (i * IMG_W + j) for i in range(k) for j in range(k))


SHIFTS_C1 = _tap_shifts(3, 1)                 # conv1, conv2 (dilation 1)
SHIFTS_C3 = _tap_shifts(3, 2)                 # conv3, conv4 (after pool1 -> dilation 2)
SHIFTS_C5 = _tap_shifts(4, 4)                 # conv5       (after pool2 -> dilation 4)
SHIFTS_P1 = (0, 1, IMG_W, IMG_W + 1)          # 2x2 max-pool at dilation 1
SHIFTS_P2 = (0, 2, 2 * IMG_W, 2 * IMG_W + 2)  # 2x2 max-pool at dilation 2


# ---------------------------------------------------------------------------
# Fused Pallas kernel
# ---------------------------------------------------------------------------
def _fused_kernel(x_ref,
                  w1_ref, b1_ref, w2_ref, b2_ref, w3_ref, b3_ref,
                  w4_ref, b4_ref, w5_ref, b5_ref, w6_ref, b6_ref,
                  o_ref, act_a, act_b,
                  *, n_batch, n_chunks, log_min, log_max):
    f32, bf16 = jnp.float32, jnp.bfloat16

    # Deterministic scratch contents.  The PAD_ROWS tail rows stay zero forever and
    # are only ever read on behalf of garbage output rows.
    act_a[...] = jnp.zeros(act_a.shape, f32)
    act_b[...] = jnp.zeros(act_b.shape, f32)

    def conv_layer(src, dst, w_ref, b_ref, shifts, cin, cout):
        """dst[r, :cout] = relu(sum_t src[r + shifts[t], :cin] @ W_t + b) for all rows."""
        w_all = w_ref[...]                       # [len(shifts)*cin, cout] f32, VMEM-resident
        bias = b_ref[...]                        # [1, cout] f32
        # Hoist per-tap weight tiles (and their bf16 casts) out of the row loop.
        if cin == 1:
            w_taps = [w_all[t:t + 1, :] for t in range(len(shifts))]
        else:
            w_bf = w_all.astype(bf16)
            w_taps = [w_bf[t * cin:(t + 1) * cin, :] for t in range(len(shifts))]

        def body(ci, carry):
            c0 = pl.multiple_of(ci * CH_ROWS, 8)
            acc = jnp.zeros((CH_ROWS, cout), f32)
            for t, s in enumerate(shifts):
                lhs = src[pl.ds(c0 + s, CH_ROWS), 0:cin]
                if cin == 1:
                    acc = acc + lhs * w_taps[t]                      # VPU outer product
                else:
                    acc = acc + jnp.dot(lhs.astype(bf16), w_taps[t],
                                        preferred_element_type=f32)  # MXU, f32 accumulate
            dst[pl.ds(c0, CH_ROWS), 0:cout] = jnp.maximum(acc + bias, 0.0)
            return carry

        lax.fori_loop(0, n_chunks, body, 0)

    def pool_layer(src, dst, shifts, chans):
        """2x2/stride-2 max pool kept on the full grid (doubles dilation downstream)."""
        def body(ci, carry):
            c0 = pl.multiple_of(ci * CH_ROWS, 8)
            m = src[pl.ds(c0 + shifts[0], CH_ROWS), 0:chans]
            for s in shifts[1:]:
                m = jnp.maximum(m, src[pl.ds(c0 + s, CH_ROWS), 0:chans])
            dst[pl.ds(c0, CH_ROWS), 0:chans] = m
            return carry

        lax.fori_loop(0, n_chunks, body, 0)

    # ConvNet2FC trunk, all activations VMEM-resident.
    conv_layer(x_ref, act_a, w1_ref, b1_ref, SHIFTS_C1, 1, 16)    # conv1 + relu
    conv_layer(act_a, act_b, w2_ref, b2_ref, SHIFTS_C1, 16, 32)   # conv2 + relu
    pool_layer(act_b, act_a, SHIFTS_P1, 32)                       # maxpool 2x2
    conv_layer(act_a, act_b, w3_ref, b3_ref, SHIFTS_C3, 32, 32)   # conv3 + relu
    conv_layer(act_b, act_a, w4_ref, b4_ref, SHIFTS_C3, 32, 64)   # conv4 + relu
    pool_layer(act_a, act_b, SHIFTS_P2, 64)                       # maxpool 2x2

    # Tail: conv5 (4x4 -> 1x1 valid) + conv6 (1x1, linear) + sigma normalizer.
    # Only one valid row per sample, so use a tiny TAIL_ROWS block each.
    w5 = w5_ref[...].astype(bf16)
    w5_taps = [w5[t * 64:(t + 1) * 64, :] for t in range(len(SHIFTS_C5))]
    b5 = b5_ref[...]
    w6 = w6_ref[...].astype(bf16)
    b6 = b6_ref[...]
    span = log_max - log_min
    for n in range(n_batch):
        base = n * IMG
        acc = jnp.zeros((TAIL_ROWS, 64), f32)
        for t, s in enumerate(SHIFTS_C5):
            lhs = act_b[base + s:base + s + TAIL_ROWS, 0:64].astype(bf16)
            acc = acc + jnp.dot(lhs, w5_taps[t], preferred_element_type=f32)
        h = jnp.maximum(acc + b5, 0.0).astype(bf16)                  # conv5 + relu
        y = jnp.dot(h, w6, preferred_element_type=f32) + b6          # conv6 (linear)
        y = jnp.exp(log_min + span * y)                              # sigma_net_normalizer
        o_ref[n:n + 1, :] = y[0:1, :].astype(o_ref.dtype)


# ---------------------------------------------------------------------------
# Host-side wrapper
# ---------------------------------------------------------------------------
def _prep_conv(w, b):
    """Torch-layout [Cout,Cin,kh,kw] weights -> flat [kh*kw*Cin, Cout] tap matrix."""
    cout, cin, kh, kw = w.shape
    wt = jnp.transpose(w, (2, 3, 1, 0)).reshape(kh * kw * cin, cout).astype(jnp.float32)
    return wt, b.reshape(1, cout).astype(jnp.float32)


def sigma_net_normalizer_forward(x_nchw, params, min_sigma_sq, max_sigma_sq):
    """exp(log(min_sq) + (log(max_sq)-log(min_sq)) * ConvNet2FC(x)) in one fused TPU kernel."""
    n, c, h, w = x_nchw.shape
    assert c == 1 and h == IMG_H and w == IMG_W, "kernel is specialised to 1x28x28 inputs"
    m = n * IMG
    assert m % CH_ROWS == 0
    n_chunks = m // CH_ROWS
    m_pad = m + PAD_ROWS

    # Flat [n*784 + y*28 + x, channel] layout, zero rows appended at the bottom.
    x_flat = jnp.pad(x_nchw.reshape(m, 1).astype(jnp.float32), ((0, PAD_ROWS), (0, 0)))

    flat_args = [x_flat]
    for name in ("conv1", "conv2", "conv3", "conv4", "conv5", "conv6"):
        flat_args.extend(_prep_conv(*params[name]))

    out_chan = params["conv6"][0].shape[0]
    kernel = functools.partial(
        _fused_kernel,
        n_batch=n,
        n_chunks=n_chunks,
        log_min=float(math.log(min_sigma_sq)),
        log_max=float(math.log(max_sigma_sq)),
    )
    return pl.pallas_call(
        kernel,
        out_shape=jax.ShapeDtypeStruct((n, out_chan), jnp.float32),
        scratch_shapes=[
            pltpu.VMEM((m_pad, C_MAX), jnp.float32),   # activation ping buffer
            pltpu.VMEM((m_pad, C_MAX), jnp.float32),   # activation pong buffer
        ],
    )(*flat_args)


# ---------------------------------------------------------------------------
# Parameter init (same ConvNet2FC(in_chan=1, out_chan=16, nh=4, nh_mlp=64) as before)
# ---------------------------------------------------------------------------
def init_params(key, in_chan=1, out_chan=16, nh=4, nh_mlp=64):
    def conv_init(k, cout, cin, kh, kw):
        k1, k2 = jax.random.split(k)
        fan_in = cin * kh * kw
        w = jax.random.normal(k1, (cout, cin, kh, kw), jnp.float32) / jnp.sqrt(fan_in)
        b = 0.01 * jax.random.normal(k2, (cout,), jnp.float32)
        return w, b

    keys = jax.random.split(key, 6)
    return {
        "conv1": conv_init(keys[0], nh * 4, in_chan, 3, 3),
        "conv2": conv_init(keys[1], nh * 8, nh * 4, 3, 3),
        "conv3": conv_init(keys[2], nh * 8, nh * 8, 3, 3),
        "conv4": conv_init(keys[3], nh * 16, nh * 8, 3, 3),
        "conv5": conv_init(keys[4], nh_mlp, nh * 16, 4, 4),
        "conv6": conv_init(keys[5], out_chan, nh_mlp, 1, 1),
    }


if __name__ == "__main__":
    key = jax.random.PRNGKey(0)
    k_x, k_p = jax.random.split(key)

    # MNIST-like input consistent with the inner ConvNet2FC (28x28 -> 1x1 at conv5).
    x = jax.random.normal(k_x, (2, 1, 28, 28), jnp.float32)       # NCHW
    params = init_params(k_p, in_chan=1, out_chan=16, nh=4, nh_mlp=64)

    out = sigma_net_normalizer_forward(x, params, min_sigma_sq=1e-2, max_sigma_sq=1.0)
    out = jax.block_until_ready(out)

    assert out.shape == (2, 16), out.shape
    assert jnp.all(jnp.isfinite(out))
    print("KERNEL_OK")
</pallas_src>

<mosaic_0001>
module attributes {stable_mosaic.version = 11 : i64} {
  func.func @_fused_kernel(%arg0: memref<1920x1xf32, #tpu.memory_space<vmem>>, %arg1: memref<9x16xf32, #tpu.memory_space<vmem>>, %arg2: memref<1x16xf32, #tpu.memory_space<vmem>>, %arg3: memref<144x32xf32, #tpu.memory_space<vmem>>, %arg4: memref<1x32xf32, #tpu.memory_space<vmem>>, %arg5: memref<288x32xf32, #tpu.memory_space<vmem>>, %arg6: memref<1x32xf32, #tpu.memory_space<vmem>>, %arg7: memref<288x64xf32, #tpu.memory_space<vmem>>, %arg8: memref<1x64xf32, #tpu.memory_space<vmem>>, %arg9: memref<1024x64xf32, #tpu.memory_space<vmem>>, %arg10: memref<1x64xf32, #tpu.memory_space<vmem>>, %arg11: memref<64x16xf32, #tpu.memory_space<vmem>>, %arg12: memref<1x16xf32, #tpu.memory_space<vmem>>, %arg13: memref<2x16xf32, #tpu.memory_space<vmem>>, %arg14: memref<1920x64xf32, #tpu.memory_space<vmem>>, %arg15: memref<1920x64xf32, #tpu.memory_space<vmem>>) attributes {dimension_semantics = [], scalar_prefetch = 0 : i64, scratch_operands = 2 : i64, tpu.core_type = #tpu.core_type<tc>} {
    %cst = arith.constant 0.000000e+00 : f32
    %0 = vector.broadcast %cst : f32 to vector<1920x64xf32>
    %c0 = arith.constant 0 : index
    %c0_0 = arith.constant 0 : index
    %1 = vector.load %arg14[%c0, %c0_0] : memref<1920x64xf32, #tpu.memory_space<vmem>>, vector<1920x64xf32>
    tpu.vector_store %arg14[%c0, %c0_0], %0 {strides = array<i32>} : memref<1920x64xf32, #tpu.memory_space<vmem>>, vector<1920x64xf32>,
    %cst_1 = arith.constant 0.000000e+00 : f32
    %2 = vector.broadcast %cst_1 : f32 to vector<1920x64xf32>
    %c0_2 = arith.constant 0 : index
    %c0_3 = arith.constant 0 : index
    %3 = vector.load %arg15[%c0_2, %c0_3] : memref<1920x64xf32, #tpu.memory_space<vmem>>, vector<1920x64xf32>
    tpu.vector_store %arg15[%c0_2, %c0_3], %2 {strides = array<i32>} : memref<1920x64xf32, #tpu.memory_space<vmem>>, vector<1920x64xf32>,
    %c0_4 = arith.constant 0 : index
    %c0_5 = arith.constant 0 : index
    %4 = vector.load %arg1[%c0_4, %c0_5] : memref<9x16xf32, #tpu.memory_space<vmem>>, vector<9x16xf32>
    %c0_6 = arith.constant 0 : index
    %c0_7 = arith.constant 0 : index
    %5 = vector.load %arg2[%c0_6, %c0_7] : memref<1x16xf32, #tpu.memory_space<vmem>>, vector<1x16xf32>
    %6 = vector.extract_strided_slice %4 {offsets = [0, 0], sizes = [1, 16], strides = [1, 1]} : vector<9x16xf32> to vector<1x16xf32>
    %7 = vector.extract_strided_slice %4 {offsets = [1, 0], sizes = [1, 16], strides = [1, 1]} : vector<9x16xf32> to vector<1x16xf32>
    %8 = vector.extract_strided_slice %4 {offsets = [2, 0], sizes = [1, 16], strides = [1, 1]} : vector<9x16xf32> to vector<1x16xf32>
    %9 = vector.extract_strided_slice %4 {offsets = [3, 0], sizes = [1, 16], strides = [1, 1]} : vector<9x16xf32> to vector<1x16xf32>
    %10 = vector.extract_strided_slice %4 {offsets = [4, 0], sizes = [1, 16], strides = [1, 1]} : vector<9x16xf32> to vector<1x16xf32>
    %11 = vector.extract_strided_slice %4 {offsets = [5, 0], sizes = [1, 16], strides = [1, 1]} : vector<9x16xf32> to vector<1x16xf32>
    %12 = vector.extract_strided_slice %4 {offsets = [6, 0], sizes = [1, 16], strides = [1, 1]} : vector<9x16xf32> to vector<1x16xf32>
    %13 = vector.extract_strided_slice %4 {offsets = [7, 0], sizes = [1, 16], strides = [1, 1]} : vector<9x16xf32> to vector<1x16xf32>
    %14 = vector.extract_strided_slice %4 {offsets = [8, 0], sizes = [1, 16], strides = [1, 1]} : vector<9x16xf32> to vector<1x16xf32>
    %c0_i32 = arith.constant 0 : i32
    %c14_i32 = arith.constant 14 : i32
    %15 = arith.addi %c0_i32, %c14_i32 : i32
    %c1_i32 = arith.constant 1 : i32
    scf.for %arg16 = %c0_i32 to %15 step %c1_i32  : i32 {
      %c112_i32 = arith.constant 112 : i32
      %239 = arith.muli %arg16, %c112_i32 : i32
      %240 = tpu.assume_multiple %239, 8 : i32
      %cst_127 = arith.constant 0.000000e+00 : f32
      %241 = vector.broadcast %cst_127 : f32 to vector<112x16xf32>
      %c0_i32_128 = arith.constant 0 : i32
      %242 = arith.addi %240, %c0_i32_128 : i32
      %243 = arith.index_cast %242 : i32 to index
      %c0_129 = arith.constant 0 : index
      %244 = vector.load %arg0[%243, %c0_129] : memref<1920x1xf32, #tpu.memory_space<vmem>>, vector<112x1xf32>
      %245 = vector.broadcast %244 : vector<112x1xf32> to vector<112x16xf32>
      %246 = vector.broadcast %6 : vector<1x16xf32> to vector<112x16xf32>
      %247 = arith.mulf %245, %246 : vector<112x16xf32>
      %248 = arith.addf %241, %247 : vector<112x16xf32>
      %c1_i32_130 = arith.constant 1 : i32
      %249 = arith.addi %240, %c1_i32_130 : i32
      %250 = arith.index_cast %249 : i32 to index
      %c0_131 = arith.constant 0 : index
      %251 = vector.load %arg0[%250, %c0_131] : memref<1920x1xf32, #tpu.memory_space<vmem>>, vector<112x1xf32>
      %252 = vector.broadcast %251 : vector<112x1xf32> to vector<112x16xf32>
      %253 = vector.broadcast %7 : vector<1x16xf32> to vector<112x16xf32>
      %254 = arith.mulf %252, %253 : vector<112x16xf32>
      %255 = arith.addf %248, %254 : vector<112x16xf32>
      %c2_i32 = arith.constant 2 : i32
      %256 = arith.addi %240, %c2_i32 : i32
      %257 = arith.index_cast %256 : i32 to index
      %c0_132 = arith.constant 0 : index
      %258 = vector.load %arg0[%257, %c0_132] : memref<1920x1xf32, #tpu.memory_space<vmem>>, vector<112x1xf32>
      %259 = vector.broadcast %258 : vector<112x1xf32> to vector<112x16xf32>
      %260 = vector.broadcast %8 : vector<1x16xf32> to vector<112x16xf32>
      %261 = arith.mulf %259, %260 : vector<112x16xf32>
      %262 = arith.addf %255, %261 : vector<112x16xf32>
      %c28_i32 = arith.constant 28 : i32
      %263 = arith.addi %240, %c28_i32 : i32
      %264 = arith.index_cast %263 : i32 to index
      %c0_133 = arith.constant 0 : index
      %265 = vector.load %arg0[%264, %c0_133] : memref<1920x1xf32, #tpu.memory_space<vmem>>, vector<112x1xf32>
      %266 = vector.broadcast %265 : vector<112x1xf32> to vector<112x16xf32>
      %267 = vector.broadcast %9 : vector<1x16xf32> to vector<112x16xf32>
      %268 = arith.mulf %266, %267 : vector<112x16xf32>
      %269 = arith.addf %262, %268 : vector<112x16xf32>
      %c29_i32 = arith.constant 29 : i32
      %270 = arith.addi %240, %c29_i32 : i32
      %271 = arith.index_cast %270 : i32 to index
      %c0_134 = arith.constant 0 : index
      %272 = vector.load %arg0[%271, %c0_134] : memref<1920x1xf32, #tpu.memory_space<vmem>>, vector<112x1xf32>
      %273 = vector.broadcast %272 : vector<112x1xf32> to vector<112x16xf32>
      %274 = vector.broadcast %10 : vector<1x16xf32> to vector<112x16xf32>
      %275 = arith.mulf %273, %274 : vector<112x16xf32>
      %276 = arith.addf %269, %275 : vector<112x16xf32>
      %c30_i32 = arith.constant 30 : i32
      %277 = arith.addi %240, %c30_i32 : i32
      %278 = arith.index_cast %277 : i32 to index
      %c0_135 = arith.constant 0 : index
      %279 = vector.load %arg0[%278, %c0_135] : memref<1920x1xf32, #tpu.memory_space<vmem>>, vector<112x1xf32>
      %280 = vector.broadcast %279 : vector<112x1xf32> to vector<112x16xf32>
      %281 = vector.broadcast %11 : vector<1x16xf32> to vector<112x16xf32>
      %282 = arith.mulf %280, %281 : vector<112x16xf32>
      %283 = arith.addf %276, %282 : vector<112x16xf32>
      %c56_i32 = arith.constant 56 : i32
      %284 = arith.addi %240, %c56_i32 : i32
      %285 = arith.index_cast %284 : i32 to index
      %c0_136 = arith.constant 0 : index
      %286 = vector.load %arg0[%285, %c0_136] : memref<1920x1xf32, #tpu.memory_space<vmem>>, vector<112x1xf32>
      %287 = vector.broadcast %286 : vector<112x1xf32> to vector<112x16xf32>
      %288 = vector.broadcast %12 : vector<1x16xf32> to vector<112x16xf32>
      %289 = arith.mulf %287, %288 : vector<112x16xf32>
      %290 = arith.addf %283, %289 : vector<112x16xf32>
      %c57_i32 = arith.constant 57 : i32
      %291 = arith.addi %240, %c57_i32 : i32
      %292 = arith.index_cast %291 : i32 to index
      %c0_137 = arith.constant 0 : index
      %293 = vector.load %arg0[%292, %c0_137] : memref<1920x1xf32, #tpu.memory_space<vmem>>, vector<112x1xf32>
      %294 = vector.broadcast %293 : vector<112x1xf32> to vector<112x16xf32>
      %295 = vector.broadcast %13 : vector<1x16xf32> to vector<112x16xf32>
      %296 = arith.mulf %294, %295 : vector<112x16xf32>
      %297 = arith.addf %290, %296 : vector<112x16xf32>
      %c58_i32 = arith.constant 58 : i32
      %298 = arith.addi %240, %c58_i32 : i32
      %299 = arith.index_cast %298 : i32 to index
      %c0_138 = arith.constant 0 : index
      %300 = vector.load %arg0[%299, %c0_138] : memref<1920x1xf32, #tpu.memory_space<vmem>>, vector<112x1xf32>
      %301 = vector.broadcast %300 : vector<112x1xf32> to vector<112x16xf32>
      %302 = vector.broadcast %14 : vector<1x16xf32> to vector<112x16xf32>
      %303 = arith.mulf %301, %302 : vector<112x16xf32>
      %304 = arith.addf %297, %303 : vector<112x16xf32>
      %305 = vector.broadcast %5 : vector<1x16xf32> to vector<112x16xf32>
      %306 = arith.addf %304, %305 : vector<112x16xf32>
      %cst_139 = arith.constant 0.000000e+00 : f32
      %307 = vector.broadcast %cst_139 : f32 to vector<112x16xf32>
      %308 = arith.maximumf %306, %307 : vector<112x16xf32>
      %309 = arith.index_cast %240 : i32 to index
      %c0_140 = arith.constant 0 : index
      %310 = vector.load %arg14[%309, %c0_140] : memref<1920x64xf32, #tpu.memory_space<vmem>>, vector<112x16xf32>
      tpu.vector_store %arg14[%309, %c0_140], %308 {strides = array<i32>} : memref<1920x64xf32, #tpu.memory_space<vmem>>, vector<112x16xf32>,
    }
    %c14_i32_8 = arith.constant 14 : i32
    %c0_9 = arith.constant 0 : index
    %c0_10 = arith.constant 0 : index
    %16 = vector.load %arg3[%c0_9, %c0_10] : memref<144x32xf32, #tpu.memory_space<vmem>>, vector<144x32xf32>
    %c0_11 = arith.constant 0 : index
    %c0_12 = arith.constant 0 : index
    %17 = vector.load %arg4[%c0_11, %c0_12] : memref<1x32xf32, #tpu.memory_space<vmem>>, vector<1x32xf32>
    %18 = arith.truncf %16 : vector<144x32xf32> to vector<144x32xbf16>
    %19 = vector.extract_strided_slice %18 {offsets = [0, 0], sizes = [16, 32], strides = [1, 1]} : vector<144x32xbf16> to vector<16x32xbf16>
    %20 = vector.extract_strided_slice %18 {offsets = [16, 0], sizes = [16, 32], strides = [1, 1]} : vector<144x32xbf16> to vector<16x32xbf16>
    %21 = vector.extract_strided_slice %18 {offsets = [32, 0], sizes = [16, 32], strides = [1, 1]} : vector<144x32xbf16> to vector<16x32xbf16>
    %22 = vector.extract_strided_slice %18 {offsets = [48, 0], sizes = [16, 32], strides = [1, 1]} : vector<144x32xbf16> to vector<16x32xbf16>
    %23 = vector.extract_strided_slice %18 {offsets = [64, 0], sizes = [16, 32], strides = [1, 1]} : vector<144x32xbf16> to vector<16x32xbf16>
    %24 = vector.extract_strided_slice %18 {offsets = [80, 0], sizes = [16, 32], strides = [1, 1]} : vector<144x32xbf16> to vector<16x32xbf16>
    %25 = vector.extract_strided_slice %18 {offsets = [96, 0], sizes = [16, 32], strides = [1, 1]} : vector<144x32xbf16> to vector<16x32xbf16>
    %26 = vector.extract_strided_slice %18 {offsets = [112, 0], sizes = [16, 32], strides = [1, 1]} : vector<144x32xbf16> to vector<16x32xbf16>
    %27 = vector.extract_strided_slice %18 {offsets = [128, 0], sizes = [16, 32], strides = [1, 1]} : vector<144x32xbf16> to vector<16x32xbf16>
    %c0_i32_13 = arith.constant 0 : i32
    %c14_i32_14 = arith.constant 14 : i32
    %28 = arith.addi %c0_i32_13, %c14_i32_14 : i32
    %c1_i32_15 = arith.constant 1 : i32
    scf.for %arg16 = %c0_i32_13 to %28 step %c1_i32_15  : i32 {
      %c112_i32 = arith.constant 112 : i32
      %239 = arith.muli %arg16, %c112_i32 : i32
      %240 = tpu.assume_multiple %239, 8 : i32
      %cst_127 = arith.constant 0.000000e+00 : f32
      %241 = vector.broadcast %cst_127 : f32 to vector<112x32xf32>
      %c0_i32_128 = arith.constant 0 : i32
      %242 = arith.addi %240, %c0_i32_128 : i32
      %243 = arith.index_cast %242 : i32 to index
      %c0_129 = arith.constant 0 : index
      %244 = vector.load %arg14[%243, %c0_129] : memref<1920x64xf32, #tpu.memory_space<vmem>>, vector<112x16xf32>
      %245 = arith.truncf %244 : vector<112x16xf32> to vector<112x16xbf16>
      %cst_130 = arith.constant dense<0.000000e+00> : vector<112x32xf32>
      %246 = tpu.matmul %245, %19, %cst_130 {dimension_numbers = #tpu.dot_dimension_numbers<[1], [0], [0], [1], [0, 0, 1, 1], [], []>} : vector<112x16xbf16>, vector<16x32xbf16>, vector<112x32xf32> -> vector<112x32xf32>
      %247 = arith.addf %241, %246 : vector<112x32xf32>
      %c1_i32_131 = arith.constant 1 : i32
      %248 = arith.addi %240, %c1_i32_131 : i32
      %249 = arith.index_cast %248 : i32 to index
      %c0_132 = arith.constant 0 : index
      %250 = vector.load %arg14[%249, %c0_132] : memref<1920x64xf32, #tpu.memory_space<vmem>>, vector<112x16xf32>
      %251 = arith.truncf %250 : vector<112x16xf32> to vector<112x16xbf16>
      %cst_133 = arith.constant dense<0.000000e+00> : vector<112x32xf32>
      %252 = tpu.matmul %251, %20, %cst_133 {dimension_numbers = #tpu.dot_dimension_numbers<[1], [0], [0], [1], [0, 0, 1, 1], [], []>} : vector<112x16xbf16>, vector<16x32xbf16>, vector<112x32xf32> -> vector<112x32xf32>
      %253 = arith.addf %247, %252 : vector<112x32xf32>
      %c2_i32 = arith.constant 2 : i32
      %254 = arith.addi %240, %c2_i32 : i32
      %255 = arith.index_cast %254 : i32 to index
      %c0_134 = arith.constant 0 : index
      %256 = vector.load %arg14[%255, %c0_134] : memref<1920x64xf32, #tpu.memory_space<vmem>>, vector<112x16xf32>
      %257 = arith.truncf %256 : vector<112x16xf32> to vector<112x16xbf16>
      %cst_135 = arith.constant dense<0.000000e+00> : vector<112x32xf32>
      %258 = tpu.matmul %257, %21, %cst_135 {dimension_numbers = #tpu.dot_dimension_numbers<[1], [0], [0], [1], [0, 0, 1, 1], [], []>} : vector<112x16xbf16>, vector<16x32xbf16>, vector<112x32xf32> -> vector<112x32xf32>
      %259 = arith.addf %253, %258 : vector<112x32xf32>
      %c28_i32 = arith.constant 28 : i32
      %260 = arith.addi %240, %c28_i32 : i32
      %261 = arith.index_cast %260 : i32 to index
      %c0_136 = arith.constant 0 : index
      %262 = vector.load %arg14[%261, %c0_136] : memref<1920x64xf32, #tpu.memory_space<vmem>>, vector<112x16xf32>
      %263 = arith.truncf %262 : vector<112x16xf32> to vector<112x16xbf16>
      %cst_137 = arith.constant dense<0.000000e+00> : vector<112x32xf32>
      %264 = tpu.matmul %263, %22, %cst_137 {dimension_numbers = #tpu.dot_dimension_numbers<[1], [0], [0], [1], [0, 0, 1, 1], [], []>} : vector<112x16xbf16>, vector<16x32xbf16>, vector<112x32xf32> -> vector<112x32xf32>
      %265 = arith.addf %259, %264 : vector<112x32xf32>
      %c29_i32 = arith.constant 29 : i32
      %266 = arith.addi %240, %c29_i32 : i32
      %267 = arith.index_cast %266 : i32 to index
      %c0_138 = arith.constant 0 : index
      %268 = vector.load %arg14[%267, %c0_138] : memref<1920x64xf32, #tpu.memory_space<vmem>>, vector<112x16xf32>
      %269 = arith.truncf %268 : vector<112x16xf32> to vector<112x16xbf16>
      %cst_139 = arith.constant dense<0.000000e+00> : vector<112x32xf32>
      %270 = tpu.matmul %269, %23, %cst_139 {dimension_numbers = #tpu.dot_dimension_numbers<[1], [0], [0], [1], [0, 0, 1, 1], [], []>} : vector<112x16xbf16>, vector<16x32xbf16>, vector<112x32xf32> -> vector<112x32xf32>
      %271 = arith.addf %265, %270 : vector<112x32xf32>
      %c30_i32 = arith.constant 30 : i32
      %272 = arith.addi %240, %c30_i32 : i32
      %273 = arith.index_cast %272 : i32 to index
      %c0_140 = arith.constant 0 : index
      %274 = vector.load %arg14[%273, %c0_140] : memref<1920x64xf32, #tpu.memory_space<vmem>>, vector<112x16xf32>
      %275 = arith.truncf %274 : vector<112x16xf32> to vector<112x16xbf16>
      %cst_141 = arith.constant dense<0.000000e+00> : vector<112x32xf32>
      %276 = tpu.matmul %275, %24, %cst_141 {dimension_numbers = #tpu.dot_dimension_numbers<[1], [0], [0], [1], [0, 0, 1, 1], [], []>} : vector<112x16xbf16>, vector<16x32xbf16>, vector<112x32xf32> -> vector<112x32xf32>
      %277 = arith.addf %271, %276 : vector<112x32xf32>
      %c56_i32 = arith.constant 56 : i32
      %278 = arith.addi %240, %c56_i32 : i32
      %279 = arith.index_cast %278 : i32 to index
      %c0_142 = arith.constant 0 : index
      %280 = vector.load %arg14[%279, %c0_142] : memref<1920x64xf32, #tpu.memory_space<vmem>>, vector<112x16xf32>
      %281 = arith.truncf %280 : vector<112x16xf32> to vector<112x16xbf16>
      %cst_143 = arith.constant dense<0.000000e+00> : vector<112x32xf32>
      %282 = tpu.matmul %281, %25, %cst_143 {dimension_numbers = #tpu.dot_dimension_numbers<[1], [0], [0], [1], [0, 0, 1, 1], [], []>} : vector<112x16xbf16>, vector<16x32xbf16>, vector<112x32xf32> -> vector<112x32xf32>
      %283 = arith.addf %277, %282 : vector<112x32xf32>
      %c57_i32 = arith.constant 57 : i32
      %284 = arith.addi %240, %c57_i32 : i32
      %285 = arith.index_cast %284 : i32 to index
      %c0_144 = arith.constant 0 : index
      %286 = vector.load %arg14[%285, %c0_144] : memref<1920x64xf32, #tpu.memory_space<vmem>>, vector<112x16xf32>
      %287 = arith.truncf %286 : vector<112x16xf32> to vector<112x16xbf16>
      %cst_145 = arith.constant dense<0.000000e+00> : vector<112x32xf32>
      %288 = tpu.matmul %287, %26, %cst_145 {dimension_numbers = #tpu.dot_dimension_numbers<[1], [0], [0], [1], [0, 0, 1, 1], [], []>} : vector<112x16xbf16>, vector<16x32xbf16>, vector<112x32xf32> -> vector<112x32xf32>
      %289 = arith.addf %283, %288 : vector<112x32xf32>
      %c58_i32 = arith.constant 58 : i32
      %290 = arith.addi %240, %c58_i32 : i32
      %291 = arith.index_cast %290 : i32 to index
      %c0_146 = arith.constant 0 : index
      %292 = vector.load %arg14[%291, %c0_146] : memref<1920x64xf32, #tpu.memory_space<vmem>>, vector<112x16xf32>
      %293 = arith.truncf %292 : vector<112x16xf32> to vector<112x16xbf16>
      %cst_147 = arith.constant dense<0.000000e+00> : vector<112x32xf32>
      %294 = tpu.matmul %293, %27, %cst_147 {dimension_numbers = #tpu.dot_dimension_numbers<[1], [0], [0], [1], [0, 0, 1, 1], [], []>} : vector<112x16xbf16>, vector<16x32xbf16>, vector<112x32xf32> -> vector<112x32xf32>
      %295 = arith.addf %289, %294 : vector<112x32xf32>
      %296 = vector.broadcast %17 : vector<1x32xf32> to vector<112x32xf32>
      %297 = arith.addf %295, %296 : vector<112x32xf32>
      %cst_148 = arith.constant 0.000000e+00 : f32
      %298 = vector.broadcast %cst_148 : f32 to vector<112x32xf32>
      %299 = arith.maximumf %297, %298 : vector<112x32xf32>
      %300 = arith.index_cast %240 : i32 to index
      %c0_149 = arith.constant 0 : index
      %301 = vector.load %arg15[%300, %c0_149] : memref<1920x64xf32, #tpu.memory_space<vmem>>, vector<112x32xf32>
      tpu.vector_store %arg15[%300, %c0_149], %299 {strides = array<i32>} : memref<1920x64xf32, #tpu.memory_space<vmem>>, vector<112x32xf32>,
    }
    %c14_i32_16 = arith.constant 14 : i32
    %c0_i32_17 = arith.constant 0 : i32
    %c14_i32_18 = arith.constant 14 : i32
    %29 = arith.addi %c0_i32_17, %c14_i32_18 : i32
    %c1_i32_19 = arith.constant 1 : i32
    scf.for %arg16 = %c0_i32_17 to %29 step %c1_i32_19  : i32 {
      %c112_i32 = arith.constant 112 : i32
      %239 = arith.muli %arg16, %c112_i32 : i32
      %240 = tpu.assume_multiple %239, 8 : i32
      %c0_i32_127 = arith.constant 0 : i32
      %241 = arith.addi %240, %c0_i32_127 : i32
      %242 = arith.index_cast %241 : i32 to index
      %c0_128 = arith.constant 0 : index
      %243 = vector.load %arg15[%242, %c0_128] : memref<1920x64xf32, #tpu.memory_space<vmem>>, vector<112x32xf32>
      %c1_i32_129 = arith.constant 1 : i32
      %244 = arith.addi %240, %c1_i32_129 : i32
      %245 = arith.index_cast %244 : i32 to index
      %c0_130 = arith.constant 0 : index
      %246 = vector.load %arg15[%245, %c0_130] : memref<1920x64xf32, #tpu.memory_space<vmem>>, vector<112x32xf32>
      %247 = arith.maximumf %243, %246 : vector<112x32xf32>
      %c28_i32 = arith.constant 28 : i32
      %248 = arith.addi %240, %c28_i32 : i32
      %249 = arith.index_cast %248 : i32 to index
      %c0_131 = arith.constant 0 : index
      %250 = vector.load %arg15[%249, %c0_131] : memref<1920x64xf32, #tpu.memory_space<vmem>>, vector<112x32xf32>
      %251 = arith.maximumf %247, %250 : vector<112x32xf32>
      %c29_i32 = arith.constant 29 : i32
      %252 = arith.addi %240, %c29_i32 : i32
      %253 = arith.index_cast %252 : i32 to index
      %c0_132 = arith.constant 0 : index
      %254 = vector.load %arg15[%253, %c0_132] : memref<1920x64xf32, #tpu.memory_space<vmem>>, vector<112x32xf32>
      %255 = arith.maximumf %251, %254 : vector<112x32xf32>
      %256 = arith.index_cast %240 : i32 to index
      %c0_133 = arith.constant 0 : index
      %257 = vector.load %arg14[%256, %c0_133] : memref<1920x64xf32, #tpu.memory_space<vmem>>, vector<112x32xf32>
      tpu.vector_store %arg14[%256, %c0_133], %255 {strides = array<i32>} : memref<1920x64xf32, #tpu.memory_space<vmem>>, vector<112x32xf32>,
    }
    %c14_i32_20 = arith.constant 14 : i32
    %c0_21 = arith.constant 0 : index
    %c0_22 = arith.constant 0 : index
    %30 = vector.load %arg5[%c0_21, %c0_22] : memref<288x32xf32, #tpu.memory_space<vmem>>, vector<288x32xf32>
    %c0_23 = arith.constant 0 : index
    %c0_24 = arith.constant 0 : index
    %31 = vector.load %arg6[%c0_23, %c0_24] : memref<1x32xf32, #tpu.memory_space<vmem>>, vector<1x32xf32>
    %32 = arith.truncf %30 : vector<288x32xf32> to vector<288x32xbf16>
    %33 = vector.extract_strided_slice %32 {offsets = [0, 0], sizes = [32, 32], strides = [1, 1]} : vector<288x32xbf16> to vector<32x32xbf16>
    %34 = vector.extract_strided_slice %32 {offsets = [32, 0], sizes = [32, 32], strides = [1, 1]} : vector<288x32xbf16> to vector<32x32xbf16>
    %35 = vector.extract_strided_slice %32 {offsets = [64, 0], sizes = [32, 32], strides = [1, 1]} : vector<288x32xbf16> to vector<32x32xbf16>
    %36 = vector.extract_strided_slice %32 {offsets = [96, 0], sizes = [32, 32], strides = [1, 1]} : vector<288x32xbf16> to vector<32x32xbf16>
    %37 = vector.extract_strided_slice %32 {offsets = [128, 0], sizes = [32, 32], strides = [1, 1]} : vector<288x32xbf16> to vector<32x32xbf16>
    %38 = vector.extract_strided_slice %32 {offsets = [160, 0], sizes = [32, 32], strides = [1, 1]} : vector<288x32xbf16> to vector<32x32xbf16>
    %39 = vector.extract_strided_slice %32 {offsets = [192, 0], sizes = [32, 32], strides = [1, 1]} : vector<288x32xbf16> to vector<32x32xbf16>
    %40 = vector.extract_strided_slice %32 {offsets = [224, 0], sizes = [32, 32], strides = [1, 1]} : vector<288x32xbf16> to vector<32x32xbf16>
    %41 = vector.extract_strided_slice %32 {offsets = [256, 0], sizes = [32, 32], strides = [1, 1]} : vector<288x32xbf16> to vector<32x32xbf16>
    %c0_i32_25 = arith.constant 0 : i32
    %c14_i32_26 = arith.constant 14 : i32
    %42 = arith.addi %c0_i32_25, %c14_i32_26 : i32
    %c1_i32_27 = arith.constant 1 : i32
    scf.for %arg16 = %c0_i32_25 to %42 step %c1_i32_27  : i32 {
      %c112_i32 = arith.constant 112 : i32
      %239 = arith.muli %arg16, %c112_i32 : i32
      %240 = tpu.assume_multiple %239, 8 : i32
      %cst_127 = arith.constant 0.000000e+00 : f32
      %241 = vector.broadcast %cst_127 : f32 to vector<112x32xf32>
      %c0_i32_128 = arith.constant 0 : i32
      %242 = arith.addi %240, %c0_i32_128 : i32
      %243 = arith.index_cast %242 : i32 to index
      %c0_129 = arith.constant 0 : index
      %244 = vector.load %arg14[%243, %c0_129] : memref<1920x64xf32, #tpu.memory_space<vmem>>, vector<112x32xf32>
      %245 = arith.truncf %244 : vector<112x32xf32> to vector<112x32xbf16>
      %cst_130 = arith.constant dense<0.000000e+00> : vector<112x32xf32>
      %246 = tpu.matmul %245, %33, %cst_130 {dimension_numbers = #tpu.dot_dimension_numbers<[1], [0], [0], [1], [0, 0, 1, 1], [], []>} : vector<112x32xbf16>, vector<32x32xbf16>, vector<112x32xf32> -> vector<112x32xf32>
      %247 = arith.addf %241, %246 : vector<112x32xf32>
      %c2_i32 = arith.constant 2 : i32
      %248 = arith.addi %240, %c2_i32 : i32
      %249 = arith.index_cast %248 : i32 to index
      %c0_131 = arith.constant 0 : index
      %250 = vector.load %arg14[%249, %c0_131] : memref<1920x64xf32, #tpu.memory_space<vmem>>, vector<112x32xf32>
      %251 = arith.truncf %250 : vector<112x32xf32> to vector<112x32xbf16>
      %cst_132 = arith.constant dense<0.000000e+00> : vector<112x32xf32>
      %252 = tpu.matmul %251, %34, %cst_132 {dimension_numbers = #tpu.dot_dimension_numbers<[1], [0], [0], [1], [0, 0, 1, 1], [], []>} : vector<112x32xbf16>, vector<32x32xbf16>, vector<112x32xf32> -> vector<112x32xf32>
      %253 = arith.addf %247, %252 : vector<112x32xf32>
      %c4_i32 = arith.constant 4 : i32
      %254 = arith.addi %240, %c4_i32 : i32
      %255 = arith.index_cast %254 : i32 to index
      %c0_133 = arith.constant 0 : index
      %256 = vector.load %arg14[%255, %c0_133] : memref<1920x64xf32, #tpu.memory_space<vmem>>, vector<112x32xf32>
      %257 = arith.truncf %256 : vector<112x32xf32> to vector<112x32xbf16>
      %cst_134 = arith.constant dense<0.000000e+00> : vector<112x32xf32>
      %258 = tpu.matmul %257, %35, %cst_134 {dimension_numbers = #tpu.dot_dimension_numbers<[1], [0], [0], [1], [0, 0, 1, 1], [], []>} : vector<112x32xbf16>, vector<32x32xbf16>, vector<112x32xf32> -> vector<112x32xf32>
      %259 = arith.addf %253, %258 : vector<112x32xf32>
      %c56_i32 = arith.constant 56 : i32
      %260 = arith.addi %240, %c56_i32 : i32
      %261 = arith.index_cast %260 : i32 to index
      %c0_135 = arith.constant 0 : index
      %262 = vector.load %arg14[%261, %c0_135] : memref<1920x64xf32, #tpu.memory_space<vmem>>, vector<112x32xf32>
      %263 = arith.truncf %262 : vector<112x32xf32> to vector<112x32xbf16>
      %cst_136 = arith.constant dense<0.000000e+00> : vector<112x32xf32>
      %264 = tpu.matmul %263, %36, %cst_136 {dimension_numbers = #tpu.dot_dimension_numbers<[1], [0], [0], [1], [0, 0, 1, 1], [], []>} : vector<112x32xbf16>, vector<32x32xbf16>, vector<112x32xf32> -> vector<112x32xf32>
      %265 = arith.addf %259, %264 : vector<112x32xf32>
      %c58_i32 = arith.constant 58 : i32
      %266 = arith.addi %240, %c58_i32 : i32
      %267 = arith.index_cast %266 : i32 to index
      %c0_137 = arith.constant 0 : index
      %268 = vector.load %arg14[%267, %c0_137] : memref<1920x64xf32, #tpu.memory_space<vmem>>, vector<112x32xf32>
      %269 = arith.truncf %268 : vector<112x32xf32> to vector<112x32xbf16>
      %cst_138 = arith.constant dense<0.000000e+00> : vector<112x32xf32>
      %270 = tpu.matmul %269, %37, %cst_138 {dimension_numbers = #tpu.dot_dimension_numbers<[1], [0], [0], [1], [0, 0, 1, 1], [], []>} : vector<112x32xbf16>, vector<32x32xbf16>, vector<112x32xf32> -> vector<112x32xf32>
      %271 = arith.addf %265, %270 : vector<112x32xf32>
      %c60_i32 = arith.constant 60 : i32
      %272 = arith.addi %240, %c60_i32 : i32
      %273 = arith.index_cast %272 : i32 to index
      %c0_139 = arith.constant 0 : index
      %274 = vector.load %arg14[%273, %c0_139] : memref<1920x64xf32, #tpu.memory_space<vmem>>, vector<112x32xf32>
      %275 = arith.truncf %274 : vector<112x32xf32> to vector<112x32xbf16>
      %cst_140 = arith.constant dense<0.000000e+00> : vector<112x32xf32>
      %276 = tpu.matmul %275, %38, %cst_140 {dimension_numbers = #tpu.dot_dimension_numbers<[1], [0], [0], [1], [0, 0, 1, 1], [], []>} : vector<112x32xbf16>, vector<32x32xbf16>, vector<112x32xf32> -> vector<112x32xf32>
      %277 = arith.addf %271, %276 : vector<112x32xf32>
      %c112_i32_141 = arith.constant 112 : i32
      %278 = arith.addi %240, %c112_i32_141 : i32
      %279 = arith.index_cast %278 : i32 to index
      %c0_142 = arith.constant 0 : index
      %280 = vector.load %arg14[%279, %c0_142] : memref<1920x64xf32, #tpu.memory_space<vmem>>, vector<112x32xf32>
      %281 = arith.truncf %280 : vector<112x32xf32> to vector<112x32xbf16>
      %cst_143 = arith.constant dense<0.000000e+00> : vector<112x32xf32>
      %282 = tpu.matmul %281, %39, %cst_143 {dimension_numbers = #tpu.dot_dimension_numbers<[1], [0], [0], [1], [0, 0, 1, 1], [], []>} : vector<112x32xbf16>, vector<32x32xbf16>, vector<112x32xf32> -> vector<112x32xf32>
      %283 = arith.addf %277, %282 : vector<112x32xf32>
      %c114_i32 = arith.constant 114 : i32
      %284 = arith.addi %240, %c114_i32 : i32
      %285 = arith.index_cast %284 : i32 to index
      %c0_144 = arith.constant 0 : index
      %286 = vector.load %arg14[%285, %c0_144] : memref<1920x64xf32, #tpu.memory_space<vmem>>, vector<112x32xf32>
      %287 = arith.truncf %286 : vector<112x32xf32> to vector<112x32xbf16>
      %cst_145 = arith.constant dense<0.000000e+00> : vector<112x32xf32>
      %288 = tpu.matmul %287, %40, %cst_145 {dimension_numbers = #tpu.dot_dimension_numbers<[1], [0], [0], [1], [0, 0, 1, 1], [], []>} : vector<112x32xbf16>, vector<32x32xbf16>, vector<112x32xf32> -> vector<112x32xf32>
      %289 = arith.addf %283, %288 : vector<112x32xf32>
      %c116_i32 = arith.constant 116 : i32
      %290 = arith.addi %240, %c116_i32 : i32
      %291 = arith.index_cast %290 : i32 to index
      %c0_146 = arith.constant 0 : index
      %292 = vector.load %arg14[%291, %c0_146] : memref<1920x64xf32, #tpu.memory_space<vmem>>, vector<112x32xf32>
      %293 = arith.truncf %292 : vector<112x32xf32> to vector<112x32xbf16>
      %cst_147 = arith.constant dense<0.000000e+00> : vector<112x32xf32>
      %294 = tpu.matmul %293, %41, %cst_147 {dimension_numbers = #tpu.dot_dimension_numbers<[1], [0], [0], [1], [0, 0, 1, 1], [], []>} : vector<112x32xbf16>, vector<32x32xbf16>, vector<112x32xf32> -> vector<112x32xf32>
      %295 = arith.addf %289, %294 : vector<112x32xf32>
      %296 = vector.broadcast %31 : vector<1x32xf32> to vector<112x32xf32>
      %297 = arith.addf %295, %296 : vector<112x32xf32>
      %cst_148 = arith.constant 0.000000e+00 : f32
      %298 = vector.broadcast %cst_148 : f32 to vector<112x32xf32>
      %299 = arith.maximumf %297, %298 : vector<112x32xf32>
      %300 = arith.index_cast %240 : i32 to index
      %c0_149 = arith.constant 0 : index
      %301 = vector.load %arg15[%300, %c0_149] : memref<1920x64xf32, #tpu.memory_space<vmem>>, vector<112x32xf32>
      tpu.vector_store %arg15[%300, %c0_149], %299 {strides = array<i32>} : memref<1920x64xf32, #tpu.memory_space<vmem>>, vector<112x32xf32>,
    }
    %c14_i32_28 = arith.constant 14 : i32
    %c0_29 = arith.constant 0 : index
    %c0_30 = arith.constant 0 : index
    %43 = vector.load %arg7[%c0_29, %c0_30] : memref<288x64xf32, #tpu.memory_space<vmem>>, vector<288x64xf32>
    %c0_31 = arith.constant 0 : index
    %c0_32 = arith.constant 0 : index
    %44 = vector.load %arg8[%c0_31, %c0_32] : memref<1x64xf32, #tpu.memory_space<vmem>>, vector<1x64xf32>
    %45 = arith.truncf %43 : vector<288x64xf32> to vector<288x64xbf16>
    %46 = vector.extract_strided_slice %45 {offsets = [0, 0], sizes = [32, 64], strides = [1, 1]} : vector<288x64xbf16> to vector<32x64xbf16>
    %47 = vector.extract_strided_slice %45 {offsets = [32, 0], sizes = [32, 64], strides = [1, 1]} : vector<288x64xbf16> to vector<32x64xbf16>
    %48 = vector.extract_strided_slice %45 {offsets = [64, 0], sizes = [32, 64], strides = [1, 1]} : vector<288x64xbf16> to vector<32x64xbf16>
    %49 = vector.extract_strided_slice %45 {offsets = [96, 0], sizes = [32, 64], strides = [1, 1]} : vector<288x64xbf16> to vector<32x64xbf16>
    %50 = vector.extract_strided_slice %45 {offsets = [128, 0], sizes = [32, 64], strides = [1, 1]} : vector<288x64xbf16> to vector<32x64xbf16>
    %51 = vector.extract_strided_slice %45 {offsets = [160, 0], sizes = [32, 64], strides = [1, 1]} : vector<288x64xbf16> to vector<32x64xbf16>
    %52 = vector.extract_strided_slice %45 {offsets = [192, 0], sizes = [32, 64], strides = [1, 1]} : vector<288x64xbf16> to vector<32x64xbf16>
    %53 = vector.extract_strided_slice %45 {offsets = [224, 0], sizes = [32, 64], strides = [1, 1]} : vector<288x64xbf16> to vector<32x64xbf16>
    %54 = vector.extract_strided_slice %45 {offsets = [256, 0], sizes = [32, 64], strides = [1, 1]} : vector<288x64xbf16> to vector<32x64xbf16>
    %c0_i32_33 = arith.constant 0 : i32
    %c14_i32_34 = arith.constant 14 : i32
    %55 = arith.addi %c0_i32_33, %c14_i32_34 : i32
    %c1_i32_35 = arith.constant 1 : i32
    scf.for %arg16 = %c0_i32_33 to %55 step %c1_i32_35  : i32 {
      %c112_i32 = arith.constant 112 : i32
      %239 = arith.muli %arg16, %c112_i32 : i32
      %240 = tpu.assume_multiple %239, 8 : i32
      %cst_127 = arith.constant 0.000000e+00 : f32
      %241 = vector.broadcast %cst_127 : f32 to vector<112x64xf32>
      %c0_i32_128 = arith.constant 0 : i32
      %242 = arith.addi %240, %c0_i32_128 : i32
      %243 = arith.index_cast %242 : i32 to index
      %c0_129 = arith.constant 0 : index
      %244 = vector.load %arg15[%243, %c0_129] : memref<1920x64xf32, #tpu.memory_space<vmem>>, vector<112x32xf32>
      %245 = arith.truncf %244 : vector<112x32xf32> to vector<112x32xbf16>
      %cst_130 = arith.constant dense<0.000000e+00> : vector<112x64xf32>
      %246 = tpu.matmul %245, %46, %cst_130 {dimension_numbers = #tpu.dot_dimension_numbers<[1], [0], [0], [1], [0, 0, 1, 1], [], []>} : vector<112x32xbf16>, vector<32x64xbf16>, vector<112x64xf32> -> vector<112x64xf32>
      %247 = arith.addf %241, %246 : vector<112x64xf32>
      %c2_i32 = arith.constant 2 : i32
      %248 = arith.addi %240, %c2_i32 : i32
      %249 = arith.index_cast %248 : i32 to index
      %c0_131 = arith.constant 0 : index
      %250 = vector.load %arg15[%249, %c0_131] : memref<1920x64xf32, #tpu.memory_space<vmem>>, vector<112x32xf32>
      %251 = arith.truncf %250 : vector<112x32xf32> to vector<112x32xbf16>
      %cst_132 = arith.constant dense<0.000000e+00> : vector<112x64xf32>
      %252 = tpu.matmul %251, %47, %cst_132 {dimension_numbers = #tpu.dot_dimension_numbers<[1], [0], [0], [1], [0, 0, 1, 1], [], []>} : vector<112x32xbf16>, vector<32x64xbf16>, vector<112x64xf32> -> vector<112x64xf32>
      %253 = arith.addf %247, %252 : vector<112x64xf32>
      %c4_i32 = arith.constant 4 : i32
      %254 = arith.addi %240, %c4_i32 : i32
      %255 = arith.index_cast %254 : i32 to index
      %c0_133 = arith.constant 0 : index
      %256 = vector.load %arg15[%255, %c0_133] : memref<1920x64xf32, #tpu.memory_space<vmem>>, vector<112x32xf32>
      %257 = arith.truncf %256 : vector<112x32xf32> to vector<112x32xbf16>
      %cst_134 = arith.constant dense<0.000000e+00> : vector<112x64xf32>
      %258 = tpu.matmul %257, %48, %cst_134 {dimension_numbers = #tpu.dot_dimension_numbers<[1], [0], [0], [1], [0, 0, 1, 1], [], []>} : vector<112x32xbf16>, vector<32x64xbf16>, vector<112x64xf32> -> vector<112x64xf32>
      %259 = arith.addf %253, %258 : vector<112x64xf32>
      %c56_i32 = arith.constant 56 : i32
      %260 = arith.addi %240, %c56_i32 : i32
      %261 = arith.index_cast %260 : i32 to index
      %c0_135 = arith.constant 0 : index
      %262 = vector.load %arg15[%261, %c0_135] : memref<1920x64xf32, #tpu.memory_space<vmem>>, vector<112x32xf32>
      %263 = arith.truncf %262 : vector<112x32xf32> to vector<112x32xbf16>
      %cst_136 = arith.constant dense<0.000000e+00> : vector<112x64xf32>
      %264 = tpu.matmul %263, %49, %cst_136 {dimension_numbers = #tpu.dot_dimension_numbers<[1], [0], [0], [1], [0, 0, 1, 1], [], []>} : vector<112x32xbf16>, vector<32x64xbf16>, vector<112x64xf32> -> vector<112x64xf32>
      %265 = arith.addf %259, %264 : vector<112x64xf32>
      %c58_i32 = arith.constant 58 : i32
      %266 = arith.addi %240, %c58_i32 : i32
      %267 = arith.index_cast %266 : i32 to index
      %c0_137 = arith.constant 0 : index
      %268 = vector.load %arg15[%267, %c0_137] : memref<1920x64xf32, #tpu.memory_space<vmem>>, vector<112x32xf32>
      %269 = arith.truncf %268 : vector<112x32xf32> to vector<112x32xbf16>
      %cst_138 = arith.constant dense<0.000000e+00> : vector<112x64xf32>
      %270 = tpu.matmul %269, %50, %cst_138 {dimension_numbers = #tpu.dot_dimension_numbers<[1], [0], [0], [1], [0, 0, 1, 1], [], []>} : vector<112x32xbf16>, vector<32x64xbf16>, vector<112x64xf32> -> vector<112x64xf32>
      %271 = arith.addf %265, %270 : vector<112x64xf32>
      %c60_i32 = arith.constant 60 : i32
      %272 = arith.addi %240, %c60_i32 : i32
      %273 = arith.index_cast %272 : i32 to index
      %c0_139 = arith.constant 0 : index
      %274 = vector.load %arg15[%273, %c0_139] : memref<1920x64xf32, #tpu.memory_space<vmem>>, vector<112x32xf32>
      %275 = arith.truncf %274 : vector<112x32xf32> to vector<112x32xbf16>
      %cst_140 = arith.constant dense<0.000000e+00> : vector<112x64xf32>
      %276 = tpu.matmul %275, %51, %cst_140 {dimension_numbers = #tpu.dot_dimension_numbers<[1], [0], [0], [1], [0, 0, 1, 1], [], []>} : vector<112x32xbf16>, vector<32x64xbf16>, vector<112x64xf32> -> vector<112x64xf32>
      %277 = arith.addf %271, %276 : vector<112x64xf32>
      %c112_i32_141 = arith.constant 112 : i32
      %278 = arith.addi %240, %c112_i32_141 : i32
      %279 = arith.index_cast %278 : i32 to index
      %c0_142 = arith.constant 0 : index
      %280 = vector.load %arg15[%279, %c0_142] : memref<1920x64xf32, #tpu.memory_space<vmem>>, vector<112x32xf32>
      %281 = arith.truncf %280 : vector<112x32xf32> to vector<112x32xbf16>
      %cst_143 = arith.constant dense<0.000000e+00> : vector<112x64xf32>
      %282 = tpu.matmul %281, %52, %cst_143 {dimension_numbers = #tpu.dot_dimension_numbers<[1], [0], [0], [1], [0, 0, 1, 1], [], []>} : vector<112x32xbf16>, vector<32x64xbf16>, vector<112x64xf32> -> vector<112x64xf32>
      %283 = arith.addf %277, %282 : vector<112x64xf32>
      %c114_i32 = arith.constant 114 : i32
      %284 = arith.addi %240, %c114_i32 : i32
      %285 = arith.index_cast %284 : i32 to index
      %c0_144 = arith.constant 0 : index
      %286 = vector.load %arg15[%285, %c0_144] : memref<1920x64xf32, #tpu.memory_space<vmem>>, vector<112x32xf32>
      %287 = arith.truncf %286 : vector<112x32xf32> to vector<112x32xbf16>
      %cst_145 = arith.constant dense<0.000000e+00> : vector<112x64xf32>
      %288 = tpu.matmul %287, %53, %cst_145 {dimension_numbers = #tpu.dot_dimension_numbers<[1], [0], [0], [1], [0, 0, 1, 1], [], []>} : vector<112x32xbf16>, vector<32x64xbf16>, vector<112x64xf32> -> vector<112x64xf32>
      %289 = arith.addf %283, %288 : vector<112x64xf32>
      %c116_i32 = arith.constant 116 : i32
      %290 = arith.addi %240, %c116_i32 : i32
      %291 = arith.index_cast %290 : i32 to index
      %c0_146 = arith.constant 0 : index
      %292 = vector.load %arg15[%291, %c0_146] : memref<1920x64xf32, #tpu.memory_space<vmem>>, vector<112x32xf32>
      %293 = arith.truncf %292 : vector<112x32xf32> to vector<112x32xbf16>
      %cst_147 = arith.constant dense<0.000000e+00> : vector<112x64xf32>
      %294 = tpu.matmul %293, %54, %cst_147 {dimension_numbers = #tpu.dot_dimension_numbers<[1], [0], [0], [1], [0, 0, 1, 1], [], []>} : vector<112x32xbf16>, vector<32x64xbf16>, vector<112x64xf32> -> vector<112x64xf32>
      %295 = arith.addf %289, %294 : vector<112x64xf32>
      %296 = vector.broadcast %44 : vector<1x64xf32> to vector<112x64xf32>
      %297 = arith.addf %295, %296 : vector<112x64xf32>
      %cst_148 = arith.constant 0.000000e+00 : f32
      %298 = vector.broadcast %cst_148 : f32 to vector<112x64xf32>
      %299 = arith.maximumf %297, %298 : vector<112x64xf32>
      %300 = arith.index_cast %240 : i32 to index
      %c0_149 = arith.constant 0 : index
      %301 = vector.load %arg14[%300, %c0_149] : memref<1920x64xf32, #tpu.memory_space<vmem>>, vector<112x64xf32>
      tpu.vector_store %arg14[%300, %c0_149], %299 {strides = array<i32>} : memref<1920x64xf32, #tpu.memory_space<vmem>>, vector<112x64xf32>,
    }
    %c14_i32_36 = arith.constant 14 : i32
    %c0_i32_37 = arith.constant 0 : i32
    %c14_i32_38 = arith.constant 14 : i32
    %56 = arith.addi %c0_i32_37, %c14_i32_38 : i32
    %c1_i32_39 = arith.constant 1 : i32
    scf.for %arg16 = %c0_i32_37 to %56 step %c1_i32_39  : i32 {
      %c112_i32 = arith.constant 112 : i32
      %239 = arith.muli %arg16, %c112_i32 : i32
      %240 = tpu.assume_multiple %239, 8 : i32
      %c0_i32_127 = arith.constant 0 : i32
      %241 = arith.addi %240, %c0_i32_127 : i32
      %242 = arith.index_cast %241 : i32 to index
      %c0_128 = arith.constant 0 : index
      %243 = vector.load %arg14[%242, %c0_128] : memref<1920x64xf32, #tpu.memory_space<vmem>>, vector<112x64xf32>
      %c2_i32 = arith.constant 2 : i32
      %244 = arith.addi %240, %c2_i32 : i32
      %245 = arith.index_cast %244 : i32 to index
      %c0_129 = arith.constant 0 : index
      %246 = vector.load %arg14[%245, %c0_129] : memref<1920x64xf32, #tpu.memory_space<vmem>>, vector<112x64xf32>
      %247 = arith.maximumf %243, %246 : vector<112x64xf32>
      %c56_i32 = arith.constant 56 : i32
      %248 = arith.addi %240, %c56_i32 : i32
      %249 = arith.index_cast %248 : i32 to index
      %c0_130 = arith.constant 0 : index
      %250 = vector.load %arg14[%249, %c0_130] : memref<1920x64xf32, #tpu.memory_space<vmem>>, vector<112x64xf32>
      %251 = arith.maximumf %247, %250 : vector<112x64xf32>
      %c58_i32 = arith.constant 58 : i32
      %252 = arith.addi %240, %c58_i32 : i32
      %253 = arith.index_cast %252 : i32 to index
      %c0_131 = arith.constant 0 : index
      %254 = vector.load %arg14[%253, %c0_131] : memref<1920x64xf32, #tpu.memory_space<vmem>>, vector<112x64xf32>
      %255 = arith.maximumf %251, %254 : vector<112x64xf32>
      %256 = arith.index_cast %240 : i32 to index
      %c0_132 = arith.constant 0 : index
      %257 = vector.load %arg15[%256, %c0_132] : memref<1920x64xf32, #tpu.memory_space<vmem>>, vector<112x64xf32>
      tpu.vector_store %arg15[%256, %c0_132], %255 {strides = array<i32>} : memref<1920x64xf32, #tpu.memory_space<vmem>>, vector<112x64xf32>,
    }
    %c14_i32_40 = arith.constant 14 : i32
    %c0_41 = arith.constant 0 : index
    %c0_42 = arith.constant 0 : index
    %57 = vector.load %arg9[%c0_41, %c0_42] : memref<1024x64xf32, #tpu.memory_space<vmem>>, vector<1024x64xf32>
    %58 = arith.truncf %57 : vector<1024x64xf32> to vector<1024x64xbf16>
    %59 = vector.extract_strided_slice %58 {offsets = [0, 0], sizes = [64, 64], strides = [1, 1]} : vector<1024x64xbf16> to vector<64x64xbf16>
    %60 = vector.extract_strided_slice %58 {offsets = [64, 0], sizes = [64, 64], strides = [1, 1]} : vector<1024x64xbf16> to vector<64x64xbf16>
    %61 = vector.extract_strided_slice %58 {offsets = [128, 0], sizes = [64, 64], strides = [1, 1]} : vector<1024x64xbf16> to vector<64x64xbf16>
    %62 = vector.extract_strided_slice %58 {offsets = [192, 0], sizes = [64, 64], strides = [1, 1]} : vector<1024x64xbf16> to vector<64x64xbf16>
    %63 = vector.extract_strided_slice %58 {offsets = [256, 0], sizes = [64, 64], strides = [1, 1]} : vector<1024x64xbf16> to vector<64x64xbf16>
    %64 = vector.extract_strided_slice %58 {offsets = [320, 0], sizes = [64, 64], strides = [1, 1]} : vector<1024x64xbf16> to vector<64x64xbf16>
    %65 = vector.extract_strided_slice %58 {offsets = [384, 0], sizes = [64, 64], strides = [1, 1]} : vector<1024x64xbf16> to vector<64x64xbf16>
    %66 = vector.extract_strided_slice %58 {offsets = [448, 0], sizes = [64, 64], strides = [1, 1]} : vector<1024x64xbf16> to vector<64x64xbf16>
    %67 = vector.extract_strided_slice %58 {offsets = [512, 0], sizes = [64, 64], strides = [1, 1]} : vector<1024x64xbf16> to vector<64x64xbf16>
    %68 = vector.extract_strided_slice %58 {offsets = [576, 0], sizes = [64, 64], strides = [1, 1]} : vector<1024x64xbf16> to vector<64x64xbf16>
    %69 = vector.extract_strided_slice %58 {offsets = [640, 0], sizes = [64, 64], strides = [1, 1]} : vector<1024x64xbf16> to vector<64x64xbf16>
    %70 = vector.extract_strided_slice %58 {offsets = [704, 0], sizes = [64, 64], strides = [1, 1]} : vector<1024x64xbf16> to vector<64x64xbf16>
    %71 = vector.extract_strided_slice %58 {offsets = [768, 0], sizes = [64, 64], strides = [1, 1]} : vector<1024x64xbf16> to vector<64x64xbf16>
    %72 = vector.extract_strided_slice %58 {offsets = [832, 0], sizes = [64, 64], strides = [1, 1]} : vector<1024x64xbf16> to vector<64x64xbf16>
    %73 = vector.extract_strided_slice %58 {offsets = [896, 0], sizes = [64, 64], strides = [1, 1]} : vector<1024x64xbf16> to vector<64x64xbf16>
    %74 = vector.extract_strided_slice %58 {offsets = [960, 0], sizes = [64, 64], strides = [1, 1]} : vector<1024x64xbf16> to vector<64x64xbf16>
    %c0_43 = arith.constant 0 : index
    %c0_44 = arith.constant 0 : index
    %75 = vector.load %arg10[%c0_43, %c0_44] : memref<1x64xf32, #tpu.memory_space<vmem>>, vector<1x64xf32>
    %c0_45 = arith.constant 0 : index
    %c0_46 = arith.constant 0 : index
    %76 = vector.load %arg11[%c0_45, %c0_46] : memref<64x16xf32, #tpu.memory_space<vmem>>, vector<64x16xf32>
    %77 = arith.truncf %76 : vector<64x16xf32> to vector<64x16xbf16>
    %c0_47 = arith.constant 0 : index
    %c0_48 = arith.constant 0 : index
    %78 = vector.load %arg12[%c0_47, %c0_48] : memref<1x16xf32, #tpu.memory_space<vmem>>, vector<1x16xf32>
    %cst_49 = arith.constant 0.000000e+00 : f32
    %79 = vector.broadcast %cst_49 : f32 to vector<8x64xf32>
    %c0_50 = arith.constant 0 : index
    %c0_51 = arith.constant 0 : index
    %80 = vector.load %arg15[%c0_50, %c0_51] : memref<1920x64xf32, #tpu.memory_space<vmem>>, vector<8x64xf32>
    %81 = arith.truncf %80 : vector<8x64xf32> to vector<8x64xbf16>
    %cst_52 = arith.constant dense<0.000000e+00> : vector<8x64xf32>
    %82 = tpu.matmul %81, %59, %cst_52 {dimension_numbers = #tpu.dot_dimension_numbers<[1], [0], [0], [1], [0, 0, 1, 1], [], []>} : vector<8x64xbf16>, vector<64x64xbf16>, vector<8x64xf32> -> vector<8x64xf32>
    %83 = arith.addf %79, %82 : vector<8x64xf32>
    %c4 = arith.constant 4 : index
    %c0_53 = arith.constant 0 : index
    %84 = vector.load %arg15[%c4, %c0_53] : memref<1920x64xf32, #tpu.memory_space<vmem>>, vector<8x64xf32>
    %85 = arith.truncf %84 : vector<8x64xf32> to vector<8x64xbf16>
    %cst_54 = arith.constant dense<0.000000e+00> : vector<8x64xf32>
    %86 = tpu.matmul %85, %60, %cst_54 {dimension_numbers = #tpu.dot_dimension_numbers<[1], [0], [0], [1], [0, 0, 1, 1], [], []>} : vector<8x64xbf16>, vector<64x64xbf16>, vector<8x64xf32> -> vector<8x64xf32>
    %87 = arith.addf %83, %86 : vector<8x64xf32>
    %c8 = arith.constant 8 : index
    %c0_55 = arith.constant 0 : index
    %88 = vector.load %arg15[%c8, %c0_55] : memref<1920x64xf32, #tpu.memory_space<vmem>>, vector<8x64xf32>
    %89 = arith.truncf %88 : vector<8x64xf32> to vector<8x64xbf16>
    %cst_56 = arith.constant dense<0.000000e+00> : vector<8x64xf32>
    %90 = tpu.matmul %89, %61, %cst_56 {dimension_numbers = #tpu.dot_dimension_numbers<[1], [0], [0], [1], [0, 0, 1, 1], [], []>} : vector<8x64xbf16>, vector<64x64xbf16>, vector<8x64xf32> -> vector<8x64xf32>
    %91 = arith.addf %87, %90 : vector<8x64xf32>
    %c12 = arith.constant 12 : index
    %c0_57 = arith.constant 0 : index
    %92 = vector.load %arg15[%c12, %c0_57] : memref<1920x64xf32, #tpu.memory_space<vmem>>, vector<8x64xf32>
    %93 = arith.truncf %92 : vector<8x64xf32> to vector<8x64xbf16>
    %cst_58 = arith.constant dense<0.000000e+00> : vector<8x64xf32>
    %94 = tpu.matmul %93, %62, %cst_58 {dimension_numbers = #tpu.dot_dimension_numbers<[1], [0], [0], [1], [0, 0, 1, 1], [], []>} : vector<8x64xbf16>, vector<64x64xbf16>, vector<8x64xf32> -> vector<8x64xf32>
    %95 = arith.addf %91, %94 : vector<8x64xf32>
    %c112 = arith.constant 112 : index
    %c0_59 = arith.constant 0 : index
    %96 = vector.load %arg15[%c112, %c0_59] : memref<1920x64xf32, #tpu.memory_space<vmem>>, vector<8x64xf32>
    %97 = arith.truncf %96 : vector<8x64xf32> to vector<8x64xbf16>
    %cst_60 = arith.constant dense<0.000000e+00> : vector<8x64xf32>
    %98 = tpu.matmul %97, %63, %cst_60 {dimension_numbers = #tpu.dot_dimension_numbers<[1], [0], [0], [1], [0, 0, 1, 1], [], []>} : vector<8x64xbf16>, vector<64x64xbf16>, vector<8x64xf32> -> vector<8x64xf32>
    %99 = arith.addf %95, %98 : vector<8x64xf32>
    %c116 = arith.constant 116 : index
    %c0_61 = arith.constant 0 : index
    %100 = vector.load %arg15[%c116, %c0_61] : memref<1920x64xf32, #tpu.memory_space<vmem>>, vector<8x64xf32>
    %101 = arith.truncf %100 : vector<8x64xf32> to vector<8x64xbf16>
    %cst_62 = arith.constant dense<0.000000e+00> : vector<8x64xf32>
    %102 = tpu.matmul %101, %64, %cst_62 {dimension_numbers = #tpu.dot_dimension_numbers<[1], [0], [0], [1], [0, 0, 1, 1], [], []>} : vector<8x64xbf16>, vector<64x64xbf16>, vector<8x64xf32> -> vector<8x64xf32>
    %103 = arith.addf %99, %102 : vector<8x64xf32>
    %c120 = arith.constant 120 : index
    %c0_63 = arith.constant 0 : index
    %104 = vector.load %arg15[%c120, %c0_63] : memref<1920x64xf32, #tpu.memory_space<vmem>>, vector<8x64xf32>
    %105 = arith.truncf %104 : vector<8x64xf32> to vector<8x64xbf16>
    %cst_64 = arith.constant dense<0.000000e+00> : vector<8x64xf32>
    %106 = tpu.matmul %105, %65, %cst_64 {dimension_numbers = #tpu.dot_dimension_numbers<[1], [0], [0], [1], [0, 0, 1, 1], [], []>} : vector<8x64xbf16>, vector<64x64xbf16>, vector<8x64xf32> -> vector<8x64xf32>
    %107 = arith.addf %103, %106 : vector<8x64xf32>
    %c124 = arith.constant 124 : index
    %c0_65 = arith.constant 0 : index
    %108 = vector.load %arg15[%c124, %c0_65] : memref<1920x64xf32, #tpu.memory_space<vmem>>, vector<8x64xf32>
    %109 = arith.truncf %108 : vector<8x64xf32> to vector<8x64xbf16>
    %cst_66 = arith.constant dense<0.000000e+00> : vector<8x64xf32>
    %110 = tpu.matmul %109, %66, %cst_66 {dimension_numbers = #tpu.dot_dimension_numbers<[1], [0], [0], [1], [0, 0, 1, 1], [], []>} : vector<8x64xbf16>, vector<64x64xbf16>, vector<8x64xf32> -> vector<8x64xf32>
    %111 = arith.addf %107, %110 : vector<8x64xf32>
    %c224 = arith.constant 224 : index
    %c0_67 = arith.constant 0 : index
    %112 = vector.load %arg15[%c224, %c0_67] : memref<1920x64xf32, #tpu.memory_space<vmem>>, vector<8x64xf32>
    %113 = arith.truncf %112 : vector<8x64xf32> to vector<8x64xbf16>
    %cst_68 = arith.constant dense<0.000000e+00> : vector<8x64xf32>
    %114 = tpu.matmul %113, %67, %cst_68 {dimension_numbers = #tpu.dot_dimension_numbers<[1], [0], [0], [1], [0, 0, 1, 1], [], []>} : vector<8x64xbf16>, vector<64x64xbf16>, vector<8x64xf32> -> vector<8x64xf32>
    %115 = arith.addf %111, %114 : vector<8x64xf32>
    %c228 = arith.constant 228 : index
    %c0_69 = arith.constant 0 : index
    %116 = vector.load %arg15[%c228, %c0_69] : memref<1920x64xf32, #tpu.memory_space<vmem>>, vector<8x64xf32>
    %117 = arith.truncf %116 : vector<8x64xf32> to vector<8x64xbf16>
    %cst_70 = arith.constant dense<0.000000e+00> : vector<8x64xf32>
    %118 = tpu.matmul %117, %68, %cst_70 {dimension_numbers = #tpu.dot_dimension_numbers<[1], [0], [0], [1], [0, 0, 1, 1], [], []>} : vector<8x64xbf16>, vector<64x64xbf16>, vector<8x64xf32> -> vector<8x64xf32>
    %119 = arith.addf %115, %118 : vector<8x64xf32>
    %c232 = arith.constant 232 : index
    %c0_71 = arith.constant 0 : index
    %120 = vector.load %arg15[%c232, %c0_71] : memref<1920x64xf32, #tpu.memory_space<vmem>>, vector<8x64xf32>
    %121 = arith.truncf %120 : vector<8x64xf32> to vector<8x64xbf16>
    %cst_72 = arith.constant dense<0.000000e+00> : vector<8x64xf32>
    %122 = tpu.matmul %121, %69, %cst_72 {dimension_numbers = #tpu.dot_dimension_numbers<[1], [0], [0], [1], [0, 0, 1, 1], [], []>} : vector<8x64xbf16>, vector<64x64xbf16>, vector<8x64xf32> -> vector<8x64xf32>
    %123 = arith.addf %119, %122 : vector<8x64xf32>
    %c236 = arith.constant 236 : index
    %c0_73 = arith.constant 0 : index
    %124 = vector.load %arg15[%c236, %c0_73] : memref<1920x64xf32, #tpu.memory_space<vmem>>, vector<8x64xf32>
    %125 = arith.truncf %124 : vector<8x64xf32> to vector<8x64xbf16>
    %cst_74 = arith.constant dense<0.000000e+00> : vector<8x64xf32>
    %126 = tpu.matmul %125, %70, %cst_74 {dimension_numbers = #tpu.dot_dimension_numbers<[1], [0], [0], [1], [0, 0, 1, 1], [], []>} : vector<8x64xbf16>, vector<64x64xbf16>, vector<8x64xf32> -> vector<8x64xf32>
    %127 = arith.addf %123, %126 : vector<8x64xf32>
    %c336 = arith.constant 336 : index
    %c0_75 = arith.constant 0 : index
    %128 = vector.load %arg15[%c336, %c0_75] : memref<1920x64xf32, #tpu.memory_space<vmem>>, vector<8x64xf32>
    %129 = arith.truncf %128 : vector<8x64xf32> to vector<8x64xbf16>
    %cst_76 = arith.constant dense<0.000000e+00> : vector<8x64xf32>
    %130 = tpu.matmul %129, %71, %cst_76 {dimension_numbers = #tpu.dot_dimension_numbers<[1], [0], [0], [1], [0, 0, 1, 1], [], []>} : vector<8x64xbf16>, vector<64x64xbf16>, vector<8x64xf32> -> vector<8x64xf32>
    %131 = arith.addf %127, %130 : vector<8x64xf32>
    %c340 = arith.constant 340 : index
    %c0_77 = arith.constant 0 : index
    %132 = vector.load %arg15[%c340, %c0_77] : memref<1920x64xf32, #tpu.memory_space<vmem>>, vector<8x64xf32>
    %133 = arith.truncf %132 : vector<8x64xf32> to vector<8x64xbf16>
    %cst_78 = arith.constant dense<0.000000e+00> : vector<8x64xf32>
    %134 = tpu.matmul %133, %72, %cst_78 {dimension_numbers = #tpu.dot_dimension_numbers<[1], [0], [0], [1], [0, 0, 1, 1], [], []>} : vector<8x64xbf16>, vector<64x64xbf16>, vector<8x64xf32> -> vector<8x64xf32>
    %135 = arith.addf %131, %134 : vector<8x64xf32>
    %c344 = arith.constant 344 : index
    %c0_79 = arith.constant 0 : index
    %136 = vector.load %arg15[%c344, %c0_79] : memref<1920x64xf32, #tpu.memory_space<vmem>>, vector<8x64xf32>
    %137 = arith.truncf %136 : vector<8x64xf32> to vector<8x64xbf16>
    %cst_80 = arith.constant dense<0.000000e+00> : vector<8x64xf32>
    %138 = tpu.matmul %137, %73, %cst_80 {dimension_numbers = #tpu.dot_dimension_numbers<[1], [0], [0], [1], [0, 0, 1, 1], [], []>} : vector<8x64xbf16>, vector<64x64xbf16>, vector<8x64xf32> -> vector<8x64xf32>
    %139 = arith.addf %135, %138 : vector<8x64xf32>
    %c348 = arith.constant 348 : index
    %c0_81 = arith.constant 0 : index
    %140 = vector.load %arg15[%c348, %c0_81] : memref<1920x64xf32, #tpu.memory_space<vmem>>, vector<8x64xf32>
    %141 = arith.truncf %140 : vector<8x64xf32> to vector<8x64xbf16>
    %cst_82 = arith.constant dense<0.000000e+00> : vector<8x64xf32>
    %142 = tpu.matmul %141, %74, %cst_82 {dimension_numbers = #tpu.dot_dimension_numbers<[1], [0], [0], [1], [0, 0, 1, 1], [], []>} : vector<8x64xbf16>, vector<64x64xbf16>, vector<8x64xf32> -> vector<8x64xf32>
    %143 = arith.addf %139, %142 : vector<8x64xf32>
    %144 = vector.broadcast %75 : vector<1x64xf32> to vector<8x64xf32>
    %145 = arith.addf %143, %144 : vector<8x64xf32>
    %cst_83 = arith.constant 0.000000e+00 : f32
    %146 = vector.broadcast %cst_83 : f32 to vector<8x64xf32>
    %147 = arith.maximumf %145, %146 : vector<8x64xf32>
    %148 = arith.truncf %147 : vector<8x64xf32> to vector<8x64xbf16>
    %cst_84 = arith.constant dense<0.000000e+00> : vector<8x16xf32>
    %149 = tpu.matmul %148, %77, %cst_84 {dimension_numbers = #tpu.dot_dimension_numbers<[1], [0], [0], [1], [0, 0, 1, 1], [], []>} : vector<8x64xbf16>, vector<64x16xbf16>, vector<8x16xf32> -> vector<8x16xf32>
    %150 = vector.broadcast %78 : vector<1x16xf32> to vector<8x16xf32>
    %151 = arith.addf %149, %150 : vector<8x16xf32>
    %cst_85 = arith.constant 4.60517025 : f32
    %152 = vector.broadcast %cst_85 : f32 to vector<8x16xf32>
    %153 = arith.mulf %152, %151 : vector<8x16xf32>
    %cst_86 = arith.constant -4.60517025 : f32
    %154 = vector.broadcast %cst_86 : f32 to vector<8x16xf32>
    %155 = arith.addf %154, %153 : vector<8x16xf32>
    %156 = math.exp %155 : vector<8x16xf32>
    %157 = vector.extract_strided_slice %156 {offsets = [0, 0], sizes = [1, 16], strides = [1, 1]} : vector<8x16xf32> to vector<1x16xf32>
    %c0_87 = arith.constant 0 : index
    %c0_88 = arith.constant 0 : index
    %158 = vector.load %arg13[%c0_87, %c0_88] : memref<2x16xf32, #tpu.memory_space<vmem>>, vector<1x16xf32>
    tpu.vector_store %arg13[%c0_87, %c0_88], %157 {strides = array<i32>} : memref<2x16xf32, #tpu.memory_space<vmem>>, vector<1x16xf32>,
    %cst_89 = arith.constant 0.000000e+00 : f32
    %159 = vector.broadcast %cst_89 : f32 to vector<8x64xf32>
    %c784 = arith.constant 784 : index
    %c0_90 = arith.constant 0 : index
    %160 = vector.load %arg15[%c784, %c0_90] : memref<1920x64xf32, #tpu.memory_space<vmem>>, vector<8x64xf32>
    %161 = arith.truncf %160 : vector<8x64xf32> to vector<8x64xbf16>
    %cst_91 = arith.constant dense<0.000000e+00> : vector<8x64xf32>
    %162 = tpu.matmul %161, %59, %cst_91 {dimension_numbers = #tpu.dot_dimension_numbers<[1], [0], [0], [1], [0, 0, 1, 1], [], []>} : vector<8x64xbf16>, vector<64x64xbf16>, vector<8x64xf32> -> vector<8x64xf32>
    %163 = arith.addf %159, %162 : vector<8x64xf32>
    %c788 = arith.constant 788 : index
    %c0_92 = arith.constant 0 : index
    %164 = vector.load %arg15[%c788, %c0_92] : memref<1920x64xf32, #tpu.memory_space<vmem>>, vector<8x64xf32>
    %165 = arith.truncf %164 : vector<8x64xf32> to vector<8x64xbf16>
    %cst_93 = arith.constant dense<0.000000e+00> : vector<8x64xf32>
    %166 = tpu.matmul %165, %60, %cst_93 {dimension_numbers = #tpu.dot_dimension_numbers<[1], [0], [0], [1], [0, 0, 1, 1], [], []>} : vector<8x64xbf16>, vector<64x64xbf16>, vector<8x64xf32> -> vector<8x64xf32>
    %167 = arith.addf %163, %166 : vector<8x64xf32>
    %c792 = arith.constant 792 : index
    %c0_94 = arith.constant 0 : index
    %168 = vector.load %arg15[%c792, %c0_94] : memref<1920x64xf32, #tpu.memory_space<vmem>>, vector<8x64xf32>
    %169 = arith.truncf %168 : vector<8x64xf32> to vector<8x64xbf16>
    %cst_95 = arith.constant dense<0.000000e+00> : vector<8x64xf32>
    %170 = tpu.matmul %169, %61, %cst_95 {dimension_numbers = #tpu.dot_dimension_numbers<[1], [0], [0], [1], [0, 0, 1, 1], [], []>} : vector<8x64xbf16>, vector<64x64xbf16>, vector<8x64xf32> -> vector<8x64xf32>
    %171 = arith.addf %167, %170 : vector<8x64xf32>
    %c796 = arith.constant 796 : index
    %c0_96 = arith.constant 0 : index
    %172 = vector.load %arg15[%c796, %c0_96] : memref<1920x64xf32, #tpu.memory_space<vmem>>, vector<8x64xf32>
    %173 = arith.truncf %172 : vector<8x64xf32> to vector<8x64xbf16>
    %cst_97 = arith.constant dense<0.000000e+00> : vector<8x64xf32>
    %174 = tpu.matmul %173, %62, %cst_97 {dimension_numbers = #tpu.dot_dimension_numbers<[1], [0], [0], [1], [0, 0, 1, 1], [], []>} : vector<8x64xbf16>, vector<64x64xbf16>, vector<8x64xf32> -> vector<8x64xf32>
    %175 = arith.addf %171, %174 : vector<8x64xf32>
    %c896 = arith.constant 896 : index
    %c0_98 = arith.constant 0 : index
    %176 = vector.load %arg15[%c896, %c0_98] : memref<1920x64xf32, #tpu.memory_space<vmem>>, vector<8x64xf32>
    %177 = arith.truncf %176 : vector<8x64xf32> to vector<8x64xbf16>
    %cst_99 = arith.constant dense<0.000000e+00> : vector<8x64xf32>
    %178 = tpu.matmul %177, %63, %cst_99 {dimension_numbers = #tpu.dot_dimension_numbers<[1], [0], [0], [1], [0, 0, 1, 1], [], []>} : vector<8x64xbf16>, vector<64x64xbf16>, vector<8x64xf32> -> vector<8x64xf32>
    %179 = arith.addf %175, %178 : vector<8x64xf32>
    %c900 = arith.constant 900 : index
    %c0_100 = arith.constant 0 : index
    %180 = vector.load %arg15[%c900, %c0_100] : memref<1920x64xf32, #tpu.memory_space<vmem>>, vector<8x64xf32>
    %181 = arith.truncf %180 : vector<8x64xf32> to vector<8x64xbf16>
    %cst_101 = arith.constant dense<0.000000e+00> : vector<8x64xf32>
    %182 = tpu.matmul %181, %64, %cst_101 {dimension_numbers = #tpu.dot_dimension_numbers<[1], [0], [0], [1], [0, 0, 1, 1], [], []>} : vector<8x64xbf16>, vector<64x64xbf16>, vector<8x64xf32> -> vector<8x64xf32>
    %183 = arith.addf %179, %182 : vector<8x64xf32>
    %c904 = arith.constant 904 : index
    %c0_102 = arith.constant 0 : index
    %184 = vector.load %arg15[%c904, %c0_102] : memref<1920x64xf32, #tpu.memory_space<vmem>>, vector<8x64xf32>
    %185 = arith.truncf %184 : vector<8x64xf32> to vector<8x64xbf16>
    %cst_103 = arith.constant dense<0.000000e+00> : vector<8x64xf32>
    %186 = tpu.matmul %185, %65, %cst_103 {dimension_numbers = #tpu.dot_dimension_numbers<[1], [0], [0], [1], [0, 0, 1, 1], [], []>} : vector<8x64xbf16>, vector<64x64xbf16>, vector<8x64xf32> -> vector<8x64xf32>
    %187 = arith.addf %183, %186 : vector<8x64xf32>
    %c908 = arith.constant 908 : index
    %c0_104 = arith.constant 0 : index
    %188 = vector.load %arg15[%c908, %c0_104] : memref<1920x64xf32, #tpu.memory_space<vmem>>, vector<8x64xf32>
    %189 = arith.truncf %188 : vector<8x64xf32> to vector<8x64xbf16>
    %cst_105 = arith.constant dense<0.000000e+00> : vector<8x64xf32>
    %190 = tpu.matmul %189, %66, %cst_105 {dimension_numbers = #tpu.dot_dimension_numbers<[1], [0], [0], [1], [0, 0, 1, 1], [], []>} : vector<8x64xbf16>, vector<64x64xbf16>, vector<8x64xf32> -> vector<8x64xf32>
    %191 = arith.addf %187, %190 : vector<8x64xf32>
    %c1008 = arith.constant 1008 : index
    %c0_106 = arith.constant 0 : index
    %192 = vector.load %arg15[%c1008, %c0_106] : memref<1920x64xf32, #tpu.memory_space<vmem>>, vector<8x64xf32>
    %193 = arith.truncf %192 : vector<8x64xf32> to vector<8x64xbf16>
    %cst_107 = arith.constant dense<0.000000e+00> : vector<8x64xf32>
    %194 = tpu.matmul %193, %67, %cst_107 {dimension_numbers = #tpu.dot_dimension_numbers<[1], [0], [0], [1], [0, 0, 1, 1], [], []>} : vector<8x64xbf16>, vector<64x64xbf16>, vector<8x64xf32> -> vector<8x64xf32>
    %195 = arith.addf %191, %194 : vector<8x64xf32>
    %c1012 = arith.constant 1012 : index
    %c0_108 = arith.constant 0 : index
    %196 = vector.load %arg15[%c1012, %c0_108] : memref<1920x64xf32, #tpu.memory_space<vmem>>, vector<8x64xf32>
    %197 = arith.truncf %196 : vector<8x64xf32> to vector<8x64xbf16>
    %cst_109 = arith.constant dense<0.000000e+00> : vector<8x64xf32>
    %198 = tpu.matmul %197, %68, %cst_109 {dimension_numbers = #tpu.dot_dimension_numbers<[1], [0], [0], [1], [0, 0, 1, 1], [], []>} : vector<8x64xbf16>, vector<64x64xbf16>, vector<8x64xf32> -> vector<8x64xf32>
    %199 = arith.addf %195, %198 : vector<8x64xf32>
    %c1016 = arith.constant 1016 : index
    %c0_110 = arith.constant 0 : index
    %200 = vector.load %arg15[%c1016, %c0_110] : memref<1920x64xf32, #tpu.memory_space<vmem>>, vector<8x64xf32>
    %201 = arith.truncf %200 : vector<8x64xf32> to vector<8x64xbf16>
    %cst_111 = arith.constant dense<0.000000e+00> : vector<8x64xf32>
    %202 = tpu.matmul %201, %69, %cst_111 {dimension_numbers = #tpu.dot_dimension_numbers<[1], [0], [0], [1], [0, 0, 1, 1], [], []>} : vector<8x64xbf16>, vector<64x64xbf16>, vector<8x64xf32> -> vector<8x64xf32>
    %203 = arith.addf %199, %202 : vector<8x64xf32>
    %c1020 = arith.constant 1020 : index
    %c0_112 = arith.constant 0 : index
    %204 = vector.load %arg15[%c1020, %c0_112] : memref<1920x64xf32, #tpu.memory_space<vmem>>, vector<8x64xf32>
    %205 = arith.truncf %204 : vector<8x64xf32> to vector<8x64xbf16>
    %cst_113 = arith.constant dense<0.000000e+00> : vector<8x64xf32>
    %206 = tpu.matmul %205, %70, %cst_113 {dimension_numbers = #tpu.dot_dimension_numbers<[1], [0], [0], [1], [0, 0, 1, 1], [], []>} : vector<8x64xbf16>, vector<64x64xbf16>, vector<8x64xf32> -> vector<8x64xf32>
    %207 = arith.addf %203, %206 : vector<8x64xf32>
    %c1120 = arith.constant 1120 : index
    %c0_114 = arith.constant 0 : index
    %208 = vector.load %arg15[%c1120, %c0_114] : memref<1920x64xf32, #tpu.memory_space<vmem>>, vector<8x64xf32>
    %209 = arith.truncf %208 : vector<8x64xf32> to vector<8x64xbf16>
    %cst_115 = arith.constant dense<0.000000e+00> : vector<8x64xf32>
    %210 = tpu.matmul %209, %71, %cst_115 {dimension_numbers = #tpu.dot_dimension_numbers<[1], [0], [0], [1], [0, 0, 1, 1], [], []>} : vector<8x64xbf16>, vector<64x64xbf16>, vector<8x64xf32> -> vector<8x64xf32>
    %211 = arith.addf %207, %210 : vector<8x64xf32>
    %c1124 = arith.constant 1124 : index
    %c0_116 = arith.constant 0 : index
    %212 = vector.load %arg15[%c1124, %c0_116] : memref<1920x64xf32, #tpu.memory_space<vmem>>, vector<8x64xf32>
    %213 = arith.truncf %212 : vector<8x64xf32> to vector<8x64xbf16>
    %cst_117 = arith.constant dense<0.000000e+00> : vector<8x64xf32>
    %214 = tpu.matmul %213, %72, %cst_117 {dimension_numbers = #tpu.dot_dimension_numbers<[1], [0], [0], [1], [0, 0, 1, 1], [], []>} : vector<8x64xbf16>, vector<64x64xbf16>, vector<8x64xf32> -> vector<8x64xf32>
    %215 = arith.addf %211, %214 : vector<8x64xf32>
    %c1128 = arith.constant 1128 : index
    %c0_118 = arith.constant 0 : index
    %216 = vector.load %arg15[%c1128, %c0_118] : memref<1920x64xf32, #tpu.memory_space<vmem>>, vector<8x64xf32>
    %217 = arith.truncf %216 : vector<8x64xf32> to vector<8x64xbf16>
    %cst_119 = arith.constant dense<0.000000e+00> : vector<8x64xf32>
    %218 = tpu.matmul %217, %73, %cst_119 {dimension_numbers = #tpu.dot_dimension_numbers<[1], [0], [0], [1], [0, 0, 1, 1], [], []>} : vector<8x64xbf16>, vector<64x64xbf16>, vector<8x64xf32> -> vector<8x64xf32>
    %219 = arith.addf %215, %218 : vector<8x64xf32>
    %c1132 = arith.constant 1132 : index
    %c0_120 = arith.constant 0 : index
    %220 = vector.load %arg15[%c1132, %c0_120] : memref<1920x64xf32, #tpu.memory_space<vmem>>, vector<8x64xf32>
    %221 = arith.truncf %220 : vector<8x64xf32> to vector<8x64xbf16>
    %cst_121 = arith.constant dense<0.000000e+00> : vector<8x64xf32>
    %222 = tpu.matmul %221, %74, %cst_121 {dimension_numbers = #tpu.dot_dimension_numbers<[1], [0], [0], [1], [0, 0, 1, 1], [], []>} : vector<8x64xbf16>, vector<64x64xbf16>, vector<8x64xf32> -> vector<8x64xf32>
    %223 = arith.addf %219, %222 : vector<8x64xf32>
    %224 = vector.broadcast %75 : vector<1x64xf32> to vector<8x64xf32>
    %225 = arith.addf %223, %224 : vector<8x64xf32>
    %cst_122 = arith.constant 0.000000e+00 : f32
    %226 = vector.broadcast %cst_122 : f32 to vector<8x64xf32>
    %227 = arith.maximumf %225, %226 : vector<8x64xf32>
    %228 = arith.truncf %227 : vector<8x64xf32> to vector<8x64xbf16>
    %cst_123 = arith.constant dense<0.000000e+00> : vector<8x16xf32>
    %229 = tpu.matmul %228, %77, %cst_123 {dimension_numbers = #tpu.dot_dimension_numbers<[1], [0], [0], [1], [0, 0, 1, 1], [], []>} : vector<8x64xbf16>, vector<64x16xbf16>, vector<8x16xf32> -> vector<8x16xf32>
    %230 = vector.broadcast %78 : vector<1x16xf32> to vector<8x16xf32>
    %231 = arith.addf %229, %230 : vector<8x16xf32>
    %cst_124 = arith.constant 4.60517025 : f32
    %232 = vector.broadcast %cst_124 : f32 to vector<8x16xf32>
    %233 = arith.mulf %232, %231 : vector<8x16xf32>
    %cst_125 = arith.constant -4.60517025 : f32
    %234 = vector.broadcast %cst_125 : f32 to vector<8x16xf32>
    %235 = arith.addf %234, %233 : vector<8x16xf32>
    %236 = math.exp %235 : vector<8x16xf32>
    %237 = vector.extract_strided_slice %236 {offsets = [0, 0], sizes = [1, 16], strides = [1, 1]} : vector<8x16xf32> to vector<1x16xf32>
    %c1 = arith.constant 1 : index
    %c0_126 = arith.constant 0 : index
    %238 = vector.load %arg13[%c1, %c0_126] : memref<2x16xf32, #tpu.memory_space<vmem>>, vector<1x16xf32>
    tpu.vector_store %arg13[%c1, %c0_126], %237 {strides = array<i32>} : memref<2x16xf32, #tpu.memory_space<vmem>>, vector<1x16xf32>,
    return
  }
}

</mosaic_0001>

<llo_original>
// kernel: tpu_custom_call.1
$region0: #{tpu_custom_call.1}
  #allocation0 [shape = 'u32[]', space=smem, size = 0x4, offset = 0x4, fixed_abs, tag = 'smem constant byte address 0x4 - core index']
  #allocation1 [shape = 'u32[144,128]{1,0:T(1,128)}', space=vmem, size = 0x12000, scoped, tag = 'internal scratch']
  #allocation2 [shape = 'f32[1920,64]{1,0:T(8,128)}', space=vmem, size = 0xf0000, scoped, tag = 'scratch operand']
  #allocation3 [shape = 'f32[1920,64]{1,0:T(8,128)}', space=vmem, size = 0xf0000, scoped, tag = 'scratch operand']
  %s0 = inlined_call_operand.vmem [shape: f32[1920,1], index: 0, kind: input, shape index: {}]
  %s1 = inlined_call_operand.vmem [shape: f32[9,16], index: 1, kind: input, shape index: {}]
  %s2 = inlined_call_operand.vmem [shape: f32[1,16], index: 2, kind: input, shape index: {}]
  %s3 = inlined_call_operand.vmem [shape: f32[144,32], index: 3, kind: input, shape index: {}]
  %s4 = inlined_call_operand.vmem [shape: f32[1,32], index: 4, kind: input, shape index: {}]
  %s5 = inlined_call_operand.vmem [shape: f32[288,32], index: 5, kind: input, shape index: {}]
  %s6 = inlined_call_operand.vmem [shape: f32[1,32], index: 6, kind: input, shape index: {}]
  %s7 = inlined_call_operand.vmem [shape: f32[288,64], index: 7, kind: input, shape index: {}]
  %s8 = inlined_call_operand.vmem [shape: f32[1,64], index: 8, kind: input, shape index: {}]
  %s9 = inlined_call_operand.vmem [shape: f32[1024,64], index: 9, kind: input, shape index: {}]
  %s10 = inlined_call_operand.vmem [shape: f32[1,64], index: 10, kind: input, shape index: {}]
  %s11 = inlined_call_operand.vmem [shape: f32[64,16], index: 11, kind: input, shape index: {}]
  %s12 = inlined_call_operand.vmem [shape: f32[1,16], index: 12, kind: input, shape index: {}]
  %s13 = inlined_call_operand.hbm [shape: f32[2,16], index: 13, kind: output, shape index: {}]
  %s14 = sld [smem:[#allocation0]]
  $region104: #{tpu_custom_call.1} parent=0
    _
  %s16 = ssub.s32 1, %s14
  %s17 = scalar_select 0, %s16, %s14
  $region1: #{tpu_custom_call.1} parent=0
    #allocation4 [shape = 'u8[1024]{0}', space=vmem, size = 0x400, scoped, tag = 'output window, operand 0, single buffered']
    #allocation5 [shape = 's32[1]{0}', space=sflag, size = 0x4, scoped, tag = 'scoped memory for tpu_custom_call.1']
    %18 = vsyncpa [#allocation5], 0
    // Predicated region
    $region2: #{tpu_custom_call.1} parent=1 // pred_check
      _
    $region3: #{tpu_custom_call.1} parent=1 // pred_check_branch
      %20 = sbr.rel (0) target = $region5
    $region4: #{tpu_custom_call.1} parent=1 // pred_region
      _
    $region5: #{tpu_custom_call.1} parent=1 // pred_fallthru
      _
    // Predicated region
    $region6: #{tpu_custom_call.1} parent=1 // pred_check
      _
    $region7: #{tpu_custom_call.1} parent=1 // pred_check_branch
      %22 = sbr.rel (0) target = $region9
    $region8: #{tpu_custom_call.1} parent=1 // pred_region
      _
    $region9: #{tpu_custom_call.1} parent=1 // pred_fallthru
      _
    // Predicated region
    $region10: #{tpu_custom_call.1} parent=1 // pred_check
      _
    $region11: #{tpu_custom_call.1} parent=1 // pred_check_branch
      %24 = sbr.rel (0) target = $region13
    $region12: #{tpu_custom_call.1} parent=1 // pred_region
      _
    $region13: #{tpu_custom_call.1} parent=1 // pred_fallthru
      _
    // Predicated region
    $region14: #{tpu_custom_call.1} parent=1 // pred_check
      _
    $region15: #{tpu_custom_call.1} parent=1 // pred_check_branch
      %26 = sbr.rel (0) target = $region17
    $region16: #{tpu_custom_call.1} parent=1 // pred_region
      _
    $region17: #{tpu_custom_call.1} parent=1 // pred_fallthru
      _
    // Predicated region
    $region18: #{tpu_custom_call.1} parent=1 // pred_check
      _
    $region19: #{tpu_custom_call.1} parent=1 // pred_check_branch
      %28 = sbr.rel (0) target = $region21
    $region20: #{tpu_custom_call.1} parent=1 // pred_region
      _
    $region21: #{tpu_custom_call.1} parent=1 // pred_fallthru
      _
    // Predicated region
    $region22: #{tpu_custom_call.1} parent=1 // pred_check
      _
    $region23: #{tpu_custom_call.1} parent=1 // pred_check_branch
      %30 = sbr.rel (0) target = $region25
    $region24: #{tpu_custom_call.1} parent=1 // pred_region
      _
    $region25: #{tpu_custom_call.1} parent=1 // pred_fallthru
      _
    // Predicated region
    $region26: #{tpu_custom_call.1} parent=1 // pred_check
      _
    $region27: #{tpu_custom_call.1} parent=1 // pred_check_branch
      %32 = sbr.rel (0) target = $region29
    $region28: #{tpu_custom_call.1} parent=1 // pred_region
      _
    $region29: #{tpu_custom_call.1} parent=1 // pred_fallthru
      _
    // Predicated region
    $region30: #{tpu_custom_call.1} parent=1 // pred_check
      _
    $region31: #{tpu_custom_call.1} parent=1 // pred_check_branch
      %34 = sbr.rel (0) target = $region33
    $region32: #{tpu_custom_call.1} parent=1 // pred_region
      _
    $region33: #{tpu_custom_call.1} parent=1 // pred_fallthru
      _
    // Predicated region
    $region34: #{tpu_custom_call.1} parent=1 // pred_check
      _
    $region35: #{tpu_custom_call.1} parent=1 // pred_check_branch
      %36 = sbr.rel (0) target = $region37
    $region36: #{tpu_custom_call.1} parent=1 // pred_region
      _
    $region37: #{tpu_custom_call.1} parent=1 // pred_fallthru
      _
    // Predicated region
    $region38: #{tpu_custom_call.1} parent=1 // pred_check
      _
    $region39: #{tpu_custom_call.1} parent=1 // pred_check_branch
      %38 = sbr.rel (0) target = $region41
    $region40: #{tpu_custom_call.1} parent=1 // pred_region
      _
    $region41: #{tpu_custom_call.1} parent=1 // pred_fallthru
      _
    // Predicated region
    $region42: #{tpu_custom_call.1} parent=1 // pred_check
      _
    $region43: #{tpu_custom_call.1} parent=1 // pred_check_branch
      %40 = sbr.rel (0) target = $region45
    $region44: #{tpu_custom_call.1} parent=1 // pred_region
      _
    $region45: #{tpu_custom_call.1} parent=1 // pred_fallthru
      _
    // Predicated region
    $region46: #{tpu_custom_call.1} parent=1 // pred_check
      _
    $region47: #{tpu_custom_call.1} parent=1 // pred_check_branch
      %42 = sbr.rel (0) target = $region49
    $region48: #{tpu_custom_call.1} parent=1 // pred_region
      _
    $region49: #{tpu_custom_call.1} parent=1 // pred_fallthru
      _
    // Predicated region
    $region50: #{tpu_custom_call.1} parent=1 // pred_check
      _
    $region51: #{tpu_custom_call.1} parent=1 // pred_check_branch
      %44 = sbr.rel (0) target = $region53
    $region52: #{tpu_custom_call.1} parent=1 // pred_region
      _
    $region53: #{tpu_custom_call.1} parent=1 // pred_fallthru
      _
    %vm46 = vcmask 523264
    %47 = vst.msk [vmem:[#allocation2] sm:$0xff] %vm46, 0.0
    %48 = vst.msk [vmem:[#allocation2 + $0x8] sm:$0xff] %vm46, 0.0
    %49 = vst.msk [vmem:[#allocation2 + $0x10] sm:$0xff] %vm46, 0.0
    %50 = vst.msk [vmem:[#allocation2 + $0x18] sm:$0xff] %vm46, 0.0
    %51 = vst.msk [vmem:[#allocation2 + $0x20] sm:$0xff] %vm46, 0.0
    %52 = vst.msk [vmem:[#allocation2 + $0x28] sm:$0xff] %vm46, 0.0
    %53 = vst.msk [vmem:[#allocation2 + $0x30] sm:$0xff] %vm46, 0.0
    %54 = vst.msk [vmem:[#allocation2 + $0x38] sm:$0xff] %vm46, 0.0
    %55 = vst.msk [vmem:[#allocation2 + $0x40] sm:$0xff] %vm46, 0.0
    %56 = vst.msk [vmem:[#allocation2 + $0x48] sm:$0xff] %vm46, 0.0
    %57 = vst.msk [vmem:[#allocation2 + $0x50] sm:$0xff] %vm46, 0.0
    %58 = vst.msk [vmem:[#allocation2 + $0x58] sm:$0xff] %vm46, 0.0
    %59 = vst.msk [vmem:[#allocation2 + $0x60] sm:$0xff] %vm46, 0.0
    %60 = vst.msk [vmem:[#allocation2 + $0x68] sm:$0xff] %vm46, 0.0
    %61 = vst.msk [vmem:[#allocation2 + $0x70] sm:$0xff] %vm46, 0.0
    %62 = vst.msk [vmem:[#allocation2 + $0x78] sm:$0xff] %vm46, 0.0
    %63 = vst.msk [vmem:[#allocation2 + $0x80] sm:$0xff] %vm46, 0.0
    %64 = vst.msk [vmem:[#allocation2 + $0x88] sm:$0xff] %vm46, 0.0
    %65 = vst.msk [vmem:[#allocation2 + $0x90] sm:$0xff] %vm46, 0.0
    %66 = vst.msk [vmem:[#allocation2 + $0x98] sm:$0xff] %vm46, 0.0
    %67 = vst.msk [vmem:[#allocation2 + $0xa0] sm:$0xff] %vm46, 0.0
    %68 = vst.msk [vmem:[#allocation2 + $0xa8] sm:$0xff] %vm46, 0.0
    %69 = vst.msk [vmem:[#allocation2 + $0xb0] sm:$0xff] %vm46, 0.0
    %70 = vst.msk [vmem:[#allocation2 + $0xb8] sm:$0xff] %vm46, 0.0
    %71 = vst.msk [vmem:[#allocation2 + $0xc0] sm:$0xff] %vm46, 0.0
    %72 = vst.msk [vmem:[#allocation2 + $0xc8] sm:$0xff] %vm46, 0.0
    %73 = vst.msk [vmem:[#allocation2 + $0xd0] sm:$0xff] %vm46, 0.0
    %74 = vst.msk [vmem:[#allocation2 + $0xd8] sm:$0xff] %vm46, 0.0
    %75 = vst.msk [vmem:[#allocation2 + $0xe0] sm:$0xff] %vm46, 0.0
    %76 = vst.msk [vmem:[#allocation2 + $0xe8] sm:$0xff] %vm46, 0.0
    %77 = vst.msk [vmem:[#allocation2 + $0xf0] sm:$0xff] %vm46, 0.0
    %78 = vst.msk [vmem:[#allocation2 + $0xf8] sm:$0xff] %vm46, 0.0
    %79 = vst.msk [vmem:[#allocation2 + $0x100] sm:$0xff] %vm46, 0.0
    %80 = vst.msk [vmem:[#allocation2 + $0x108] sm:$0xff] %vm46, 0.0
    %81 = vst.msk [vmem:[#allocation2 + $0x110] sm:$0xff] %vm46, 0.0
    %82 = vst.msk [vmem:[#allocation2 + $0x118] sm:$0xff] %vm46, 0.0
    %83 = vst.msk [vmem:[#allocation2 + $0x120] sm:$0xff] %vm46, 0.0
    %84 = vst.msk [vmem:[#allocation2 + $0x128] sm:$0xff] %vm46, 0.0
    %85 = vst.msk [vmem:[#allocation2 + $0x130] sm:$0xff] %vm46, 0.0
    %86 = vst.msk [vmem:[#allocation2 + $0x138] sm:$0xff] %vm46, 0.0
    %87 = vst.msk [vmem:[#allocation2 + $0x140] sm:$0xff] %vm46, 0.0
    %88 = vst.msk [vmem:[#allocation2 + $0x148] sm:$0xff] %vm46, 0.0
    %89 = vst.msk [vmem:[#allocation2 + $0x150] sm:$0xff] %vm46, 0.0
    %90 = vst.msk [vmem:[#allocation2 + $0x158] sm:$0xff] %vm46, 0.0
    %91 = vst.msk [vmem:[#allocation2 + $0x160] sm:$0xff] %vm46, 0.0
    %92 = vst.msk [vmem:[#allocation2 + $0x168] sm:$0xff] %vm46, 0.0
    %93 = vst.msk [vmem:[#allocation2 + $0x170] sm:$0xff] %vm46, 0.0
    %94 = vst.msk [vmem:[#allocation2 + $0x178] sm:$0xff] %vm46, 0.0
    %95 = vst.msk [vmem:[#allocation2 + $0x180] sm:$0xff] %vm46, 0.0
    %96 = vst.msk [vmem:[#allocation2 + $0x188] sm:$0xff] %vm46, 0.0
    %97 = vst.msk [vmem:[#allocation2 + $0x190] sm:$0xff] %vm46, 0.0
    %98 = vst.msk [vmem:[#allocation2 + $0x198] sm:$0xff] %vm46, 0.0
    %99 = vst.msk [vmem:[#allocation2 + $0x1a0] sm:$0xff] %vm46, 0.0
    %100 = vst.msk [vmem:[#allocation2 + $0x1a8] sm:$0xff] %vm46, 0.0
    %101 = vst.msk [vmem:[#allocation2 + $0x1b0] sm:$0xff] %vm46, 0.0
    %102 = vst.msk [vmem:[#allocation2 + $0x1b8] sm:$0xff] %vm46, 0.0
    %103 = vst.msk [vmem:[#allocation2 + $0x1c0] sm:$0xff] %vm46, 0.0
    %104 = vst.msk [vmem:[#allocation2 + $0x1c8] sm:$0xff] %vm46, 0.0
    %105 = vst.msk [vmem:[#allocation2 + $0x1d0] sm:$0xff] %vm46, 0.0
    %106 = vst.msk [vmem:[#allocation2 + $0x1d8] sm:$0xff] %vm46, 0.0
    %107 = vst.msk [vmem:[#allocation2 + $0x1e0] sm:$0xff] %vm46, 0.0
    %108 = vst.msk [vmem:[#allocation2 + $0x1e8] sm:$0xff] %vm46, 0.0
    %109 = vst.msk [vmem:[#allocation2 + $0x1f0] sm:$0xff] %vm46, 0.0
    %110 = vst.msk [vmem:[#allocation2 + $0x1f8] sm:$0xff] %vm46, 0.0
    %111 = vst.msk [vmem:[#allocation2 + $0x200] sm:$0xff] %vm46, 0.0
    %112 = vst.msk [vmem:[#allocation2 + $0x208] sm:$0xff] %vm46, 0.0
    %113 = vst.msk [vmem:[#allocation2 + $0x210] sm:$0xff] %vm46, 0.0
    %114 = vst.msk [vmem:[#allocation2 + $0x218] sm:$0xff] %vm46, 0.0
    %115 = vst.msk [vmem:[#allocation2 + $0x220] sm:$0xff] %vm46, 0.0
    %116 = vst.msk [vmem:[#allocation2 + $0x228] sm:$0xff] %vm46, 0.0
    %117 = vst.msk [vmem:[#allocation2 + $0x230] sm:$0xff] %vm46, 0.0
    %118 = vst.msk [vmem:[#allocation2 + $0x238] sm:$0xff] %vm46, 0.0
    %119 = vst.msk [vmem:[#allocation2 + $0x240] sm:$0xff] %vm46, 0.0
    %120 = vst.msk [vmem:[#allocation2 + $0x248] sm:$0xff] %vm46, 0.0
    %121 = vst.msk [vmem:[#allocation2 + $0x250] sm:$0xff] %vm46, 0.0
    %122 = vst.msk [vmem:[#allocation2 + $0x258] sm:$0xff] %vm46, 0.0
    %123 = vst.msk [vmem:[#allocation2 + $0x260] sm:$0xff] %vm46, 0.0
    %124 = vst.msk [vmem:[#allocation2 + $0x268] sm:$0xff] %vm46, 0.0
    %125 = vst.msk [vmem:[#allocation2 + $0x270] sm:$0xff] %vm46, 0.0
    %126 = vst.msk [vmem:[#allocation2 + $0x278] sm:$0xff] %vm46, 0.0
    %127 = vst.msk [vmem:[#allocation2 + $0x280] sm:$0xff] %vm46, 0.0
    %128 = vst.msk [vmem:[#allocation2 + $0x288] sm:$0xff] %vm46, 0.0
    %129 = vst.msk [vmem:[#allocation2 + $0x290] sm:$0xff] %vm46, 0.0
    %130 = vst.msk [vmem:[#allocation2 + $0x298] sm:$0xff] %vm46, 0.0
    %131 = vst.msk [vmem:[#allocation2 + $0x2a0] sm:$0xff] %vm46, 0.0
    %132 = vst.msk [vmem:[#allocation2 + $0x2a8] sm:$0xff] %vm46, 0.0
    %133 = vst.msk [vmem:[#allocation2 + $0x2b0] sm:$0xff] %vm46, 0.0
    %134 = vst.msk [vmem:[#allocation2 + $0x2b8] sm:$0xff] %vm46, 0.0
    %135 = vst.msk [vmem:[#allocation2 + $0x2c0] sm:$0xff] %vm46, 0.0
    %136 = vst.msk [vmem:[#allocation2 + $0x2c8] sm:$0xff] %vm46, 0.0
    %137 = vst.msk [vmem:[#allocation2 + $0x2d0] sm:$0xff] %vm46, 0.0
    %138 = vst.msk [vmem:[#allocation2 + $0x2d8] sm:$0xff] %vm46, 0.0
    %139 = vst.msk [vmem:[#allocation2 + $0x2e0] sm:$0xff] %vm46, 0.0
    %140 = vst.msk [vmem:[#allocation2 + $0x2e8] sm:$0xff] %vm46, 0.0
    %141 = vst.msk [vmem:[#allocation2 + $0x2f0] sm:$0xff] %vm46, 0.0
    %142 = vst.msk [vmem:[#allocation2 + $0x2f8] sm:$0xff] %vm46, 0.0
    %143 = vst.msk [vmem:[#allocation2 + $0x300] sm:$0xff] %vm46, 0.0
    %144 = vst.msk [vmem:[#allocation2 + $0x308] sm:$0xff] %vm46, 0.0
    %145 = vst.msk [vmem:[#allocation2 + $0x310] sm:$0xff] %vm46, 0.0
    %146 = vst.msk [vmem:[#allocation2 + $0x318] sm:$0xff] %vm46, 0.0
    %147 = vst.msk [vmem:[#allocation2 + $0x320] sm:$0xff] %vm46, 0.0
    %148 = vst.msk [vmem:[#allocation2 + $0x328] sm:$0xff] %vm46, 0.0
    %149 = vst.msk [vmem:[#allocation2 + $0x330] sm:$0xff] %vm46, 0.0
    %150 = vst.msk [vmem:[#allocation2 + $0x338] sm:$0xff] %vm46, 0.0
    %151 = vst.msk [vmem:[#allocation2 + $0x340] sm:$0xff] %vm46, 0.0
    %152 = vst.msk [vmem:[#allocation2 + $0x348] sm:$0xff] %vm46, 0.0
    %153 = vst.msk [vmem:[#allocation2 + $0x350] sm:$0xff] %vm46, 0.0
    %154 = vst.msk [vmem:[#allocation2 + $0x358] sm:$0xff] %vm46, 0.0
    %155 = vst.msk [vmem:[#allocation2 + $0x360] sm:$0xff] %vm46, 0.0
    %156 = vst.msk [vmem:[#allocation2 + $0x368] sm:$0xff] %vm46, 0.0
    %157 = vst.msk [vmem:[#allocation2 + $0x370] sm:$0xff] %vm46, 0.0
    %158 = vst.msk [vmem:[#allocation2 + $0x378] sm:$0xff] %vm46, 0.0
    %159 = vst.msk [vmem:[#allocation2 + $0x380] sm:$0xff] %vm46, 0.0
    %160 = vst.msk [vmem:[#allocation2 + $0x388] sm:$0xff] %vm46, 0.0
    %161 = vst.msk [vmem:[#allocation2 + $0x390] sm:$0xff] %vm46, 0.0
    %162 = vst.msk [vmem:[#allocation2 + $0x398] sm:$0xff] %vm46, 0.0
    %163 = vst.msk [vmem:[#allocation2 + $0x3a0] sm:$0xff] %vm46, 0.0
    %164 = vst.msk [vmem:[#allocation2 + $0x3a8] sm:$0xff] %vm46, 0.0
    %165 = vst.msk [vmem:[#allocation2 + $0x3b0] sm:$0xff] %vm46, 0.0
    %166 = vst.msk [vmem:[#allocation2 + $0x3b8] sm:$0xff] %vm46, 0.0
    %167 = vst.msk [vmem:[#allocation2 + $0x3c0] sm:$0xff] %vm46, 0.0
    %168 = vst.msk [vmem:[#allocation2 + $0x3c8] sm:$0xff] %vm46, 0.0
    %169 = vst.msk [vmem:[#allocation2 + $0x3d0] sm:$0xff] %vm46, 0.0
    %170 = vst.msk [vmem:[#allocation2 + $0x3d8] sm:$0xff] %vm46, 0.0
    %171 = vst.msk [vmem:[#allocation2 + $0x3e0] sm:$0xff] %vm46, 0.0
    %172 = vst.msk [vmem:[#allocation2 + $0x3e8] sm:$0xff] %vm46, 0.0
    %173 = vst.msk [vmem:[#allocation2 + $0x3f0] sm:$0xff] %vm46, 0.0
    %174 = vst.msk [vmem:[#allocation2 + $0x3f8] sm:$0xff] %vm46, 0.0
    %175 = vst.msk [vmem:[#allocation2 + $0x400] sm:$0xff] %vm46, 0.0
    %176 = vst.msk [vmem:[#allocation2 + $0x408] sm:$0xff] %vm46, 0.0
    %177 = vst.msk [vmem:[#allocation2 + $0x410] sm:$0xff] %vm46, 0.0
    %178 = vst.msk [vmem:[#allocation2 + $0x418] sm:$0xff] %vm46, 0.0
    %179 = vst.msk [vmem:[#allocation2 + $0x420] sm:$0xff] %vm46, 0.0
    %180 = vst.msk [vmem:[#allocation2 + $0x428] sm:$0xff] %vm46, 0.0
    %181 = vst.msk [vmem:[#allocation2 + $0x430] sm:$0xff] %vm46, 0.0
    %182 = vst.msk [vmem:[#allocation2 + $0x438] sm:$0xff] %vm46, 0.0
    %183 = vst.msk [vmem:[#allocation2 + $0x440] sm:$0xff] %vm46, 0.0
    %184 = vst.msk [vmem:[#allocation2 + $0x448] sm:$0xff] %vm46, 0.0
    %185 = vst.msk [vmem:[#allocation2 + $0x450] sm:$0xff] %vm46, 0.0
    %186 = vst.msk [vmem:[#allocation2 + $0x458] sm:$0xff] %vm46, 0.0
    %187 = vst.msk [vmem:[#allocation2 + $0x460] sm:$0xff] %vm46, 0.0
    %188 = vst.msk [vmem:[#allocation2 + $0x468] sm:$0xff] %vm46, 0.0
    %189 = vst.msk [vmem:[#allocation2 + $0x470] sm:$0xff] %vm46, 0.0
    %190 = vst.msk [vmem:[#allocation2 + $0x478] sm:$0xff] %vm46, 0.0
    %191 = vst.msk [vmem:[#allocation2 + $0x480] sm:$0xff] %vm46, 0.0
    %192 = vst.msk [vmem:[#allocation2 + $0x488] sm:$0xff] %vm46, 0.0
    %193 = vst.msk [vmem:[#allocation2 + $0x490] sm:$0xff] %vm46, 0.0
    %194 = vst.msk [vmem:[#allocation2 + $0x498] sm:$0xff] %vm46, 0.0
    %195 = vst.msk [vmem:[#allocation2 + $0x4a0] sm:$0xff] %vm46, 0.0
    %196 = vst.msk [vmem:[#allocation2 + $0x4a8] sm:$0xff] %vm46, 0.0
    %197 = vst.msk [vmem:[#allocation2 + $0x4b0] sm:$0xff] %vm46, 0.0
    %198 = vst.msk [vmem:[#allocation2 + $0x4b8] sm:$0xff] %vm46, 0.0
    %199 = vst.msk [vmem:[#allocation2 + $0x4c0] sm:$0xff] %vm46, 0.0
    %200 = vst.msk [vmem:[#allocation2 + $0x4c8] sm:$0xff] %vm46, 0.0
    %201 = vst.msk [vmem:[#allocation2 + $0x4d0] sm:$0xff] %vm46, 0.0
    %202 = vst.msk [vmem:[#allocation2 + $0x4d8] sm:$0xff] %vm46, 0.0
    %203 = vst.msk [vmem:[#allocation2 + $0x4e0] sm:$0xff] %vm46, 0.0
    %204 = vst.msk [vmem:[#allocation2 + $0x4e8] sm:$0xff] %vm46, 0.0
    %205 = vst.msk [vmem:[#allocation2 + $0x4f0] sm:$0xff] %vm46, 0.0
    %206 = vst.msk [vmem:[#allocation2 + $0x4f8] sm:$0xff] %vm46, 0.0
    %207 = vst.msk [vmem:[#allocation2 + $0x500] sm:$0xff] %vm46, 0.0
    %208 = vst.msk [vmem:[#allocation2 + $0x508] sm:$0xff] %vm46, 0.0
    %209 = vst.msk [vmem:[#allocation2 + $0x510] sm:$0xff] %vm46, 0.0
    %210 = vst.msk [vmem:[#allocation2 + $0x518] sm:$0xff] %vm46, 0.0
    %211 = vst.msk [vmem:[#allocation2 + $0x520] sm:$0xff] %vm46, 0.0
    %212 = vst.msk [vmem:[#allocation2 + $0x528] sm:$0xff] %vm46, 0.0
    %213 = vst.msk [vmem:[#allocation2 + $0x530] sm:$0xff] %vm46, 0.0
    %214 = vst.msk [vmem:[#allocation2 + $0x538] sm:$0xff] %vm46, 0.0
    %215 = vst.msk [vmem:[#allocation2 + $0x540] sm:$0xff] %vm46, 0.0
    %216 = vst.msk [vmem:[#allocation2 + $0x548] sm:$0xff] %vm46, 0.0
    %217 = vst.msk [vmem:[#allocation2 + $0x550] sm:$0xff] %vm46, 0.0
    %218 = vst.msk [vmem:[#allocation2 + $0x558] sm:$0xff] %vm46, 0.0
    %219 = vst.msk [vmem:[#allocation2 + $0x560] sm:$0xff] %vm46, 0.0
    %220 = vst.msk [vmem:[#allocation2 + $0x568] sm:$0xff] %vm46, 0.0
    %221 = vst.msk [vmem:[#allocation2 + $0x570] sm:$0xff] %vm46, 0.0
    %222 = vst.msk [vmem:[#allocation2 + $0x578] sm:$0xff] %vm46, 0.0
    %223 = vst.msk [vmem:[#allocation2 + $0x580] sm:$0xff] %vm46, 0.0
    %224 = vst.msk [vmem:[#allocation2 + $0x588] sm:$0xff] %vm46, 0.0
    %225 = vst.msk [vmem:[#allocation2 + $0x590] sm:$0xff] %vm46, 0.0
    %226 = vst.msk [vmem:[#allocation2 + $0x598] sm:$0xff] %vm46, 0.0
    %227 = vst.msk [vmem:[#allocation2 + $0x5a0] sm:$0xff] %vm46, 0.0
    %228 = vst.msk [vmem:[#allocation2 + $0x5a8] sm:$0xff] %vm46, 0.0
    %229 = vst.msk [vmem:[#allocation2 + $0x5b0] sm:$0xff] %vm46, 0.0
    %230 = vst.msk [vmem:[#allocation2 + $0x5b8] sm:$0xff] %vm46, 0.0
    %231 = vst.msk [vmem:[#allocation2 + $0x5c0] sm:$0xff] %vm46, 0.0
    %232 = vst.msk [vmem:[#allocation2 + $0x5c8] sm:$0xff] %vm46, 0.0
    %233 = vst.msk [vmem:[#allocation2 + $0x5d0] sm:$0xff] %vm46, 0.0
    %234 = vst.msk [vmem:[#allocation2 + $0x5d8] sm:$0xff] %vm46, 0.0
    %235 = vst.msk [vmem:[#allocation2 + $0x5e0] sm:$0xff] %vm46, 0.0
    %236 = vst.msk [vmem:[#allocation2 + $0x5e8] sm:$0xff] %vm46, 0.0
    %237 = vst.msk [vmem:[#allocation2 + $0x5f0] sm:$0xff] %vm46, 0.0
    %238 = vst.msk [vmem:[#allocation2 + $0x5f8] sm:$0xff] %vm46, 0.0
    %239 = vst.msk [vmem:[#allocation2 + $0x600] sm:$0xff] %vm46, 0.0
    %240 = vst.msk [vmem:[#allocation2 + $0x608] sm:$0xff] %vm46, 0.0
    %241 = vst.msk [vmem:[#allocation2 + $0x610] sm:$0xff] %vm46, 0.0
    %242 = vst.msk [vmem:[#allocation2 + $0x618] sm:$0xff] %vm46, 0.0
    %243 = vst.msk [vmem:[#allocation2 + $0x620] sm:$0xff] %vm46, 0.0
    %244 = vst.msk [vmem:[#allocation2 + $0x628] sm:$0xff] %vm46, 0.0
    %245 = vst.msk [vmem:[#allocation2 + $0x630] sm:$0xff] %vm46, 0.0
    %246 = vst.msk [vmem:[#allocation2 + $0x638] sm:$0xff] %vm46, 0.0
    %247 = vst.msk [vmem:[#allocation2 + $0x640] sm:$0xff] %vm46, 0.0
    %248 = vst.msk [vmem:[#allocation2 + $0x648] sm:$0xff] %vm46, 0.0
    %249 = vst.msk [vmem:[#allocation2 + $0x650] sm:$0xff] %vm46, 0.0
    %250 = vst.msk [vmem:[#allocation2 + $0x658] sm:$0xff] %vm46, 0.0
    %251 = vst.msk [vmem:[#allocation2 + $0x660] sm:$0xff] %vm46, 0.0
    %252 = vst.msk [vmem:[#allocation2 + $0x668] sm:$0xff] %vm46, 0.0
    %253 = vst.msk [vmem:[#allocation2 + $0x670] sm:$0xff] %vm46, 0.0
    %254 = vst.msk [vmem:[#allocation2 + $0x678] sm:$0xff] %vm46, 0.0
    %255 = vst.msk [vmem:[#allocation2 + $0x680] sm:$0xff] %vm46, 0.0
    %256 = vst.msk [vmem:[#allocation2 + $0x688] sm:$0xff] %vm46, 0.0
    %257 = vst.msk [vmem:[#allocation2 + $0x690] sm:$0xff] %vm46, 0.0
    %258 = vst.msk [vmem:[#allocation2 + $0x698] sm:$0xff] %vm46, 0.0
    %259 = vst.msk [vmem:[#allocation2 + $0x6a0] sm:$0xff] %vm46, 0.0
    %260 = vst.msk [vmem:[#allocation2 + $0x6a8] sm:$0xff] %vm46, 0.0
    %261 = vst.msk [vmem:[#allocation2 + $0x6b0] sm:$0xff] %vm46, 0.0
    %262 = vst.msk [vmem:[#allocation2 + $0x6b8] sm:$0xff] %vm46, 0.0
    %263 = vst.msk [vmem:[#allocation2 + $0x6c0] sm:$0xff] %vm46, 0.0
    %264 = vst.msk [vmem:[#allocation2 + $0x6c8] sm:$0xff] %vm46, 0.0
    %265 = vst.msk [vmem:[#allocation2 + $0x6d0] sm:$0xff] %vm46, 0.0
    %266 = vst.msk [vmem:[#allocation2 + $0x6d8] sm:$0xff] %vm46, 0.0
    %267 = vst.msk [vmem:[#allocation2 + $0x6e0] sm:$0xff] %vm46, 0.0
    %268 = vst.msk [vmem:[#allocation2 + $0x6e8] sm:$0xff] %vm46, 0.0
    %269 = vst.msk [vmem:[#allocation2 + $0x6f0] sm:$0xff] %vm46, 0.0
    %270 = vst.msk [vmem:[#allocation2 + $0x6f8] sm:$0xff] %vm46, 0.0
    %271 = vst.msk [vmem:[#allocation2 + $0x700] sm:$0xff] %vm46, 0.0
    %272 = vst.msk [vmem:[#allocation2 + $0x708] sm:$0xff] %vm46, 0.0
    %273 = vst.msk [vmem:[#allocation2 + $0x710] sm:$0xff] %vm46, 0.0
    %274 = vst.msk [vmem:[#allocation2 + $0x718] sm:$0xff] %vm46, 0.0
    %275 = vst.msk [vmem:[#allocation2 + $0x720] sm:$0xff] %vm46, 0.0
    %276 = vst.msk [vmem:[#allocation2 + $0x728] sm:$0xff] %vm46, 0.0
    %277 = vst.msk [vmem:[#allocation2 + $0x730] sm:$0xff] %vm46, 0.0
    %278 = vst.msk [vmem:[#allocation2 + $0x738] sm:$0xff] %vm46, 0.0
    %279 = vst.msk [vmem:[#allocation2 + $0x740] sm:$0xff] %vm46, 0.0
    %280 = vst.msk [vmem:[#allocation2 + $0x748] sm:$0xff] %vm46, 0.0
    %281 = vst.msk [vmem:[#allocation2 + $0x750] sm:$0xff] %vm46, 0.0
    %282 = vst.msk [vmem:[#allocation2 + $0x758] sm:$0xff] %vm46, 0.0
    %283 = vst.msk [vmem:[#allocation2 + $0x760] sm:$0xff] %vm46, 0.0
    %284 = vst.msk [vmem:[#allocation2 + $0x768] sm:$0xff] %vm46, 0.0
    %285 = vst.msk [vmem:[#allocation2 + $0x770] sm:$0xff] %vm46, 0.0
    %286 = vst.msk [vmem:[#allocation2 + $0x778] sm:$0xff] %vm46, 0.0
    %287 = vst.msk [vmem:[#allocation3] sm:$0xff] %vm46, 0.0
    %288 = vst.msk [vmem:[#allocation3 + $0x8] sm:$0xff] %vm46, 0.0
    %289 = vst.msk [vmem:[#allocation3 + $0x10] sm:$0xff] %vm46, 0.0
    %290 = vst.msk [vmem:[#allocation3 + $0x18] sm:$0xff] %vm46, 0.0
    %291 = vst.msk [vmem:[#allocation3 + $0x20] sm:$0xff] %vm46, 0.0
    %292 = vst.msk [vmem:[#allocation3 + $0x28] sm:$0xff] %vm46, 0.0
    %293 = vst.msk [vmem:[#allocation3 + $0x30] sm:$0xff] %vm46, 0.0
    %294 = vst.msk [vmem:[#allocation3 + $0x38] sm:$0xff] %vm46, 0.0
    %295 = vst.msk [vmem:[#allocation3 + $0x40] sm:$0xff] %vm46, 0.0
    %296 = vst.msk [vmem:[#allocation3 + $0x48] sm:$0xff] %vm46, 0.0
    %297 = vst.msk [vmem:[#allocation3 + $0x50] sm:$0xff] %vm46, 0.0
    %298 = vst.msk [vmem:[#allocation3 + $0x58] sm:$0xff] %vm46, 0.0
    %299 = vst.msk [vmem:[#allocation3 + $0x60] sm:$0xff] %vm46, 0.0
    %300 = vst.msk [vmem:[#allocation3 + $0x68] sm:$0xff] %vm46, 0.0
    %301 = vst.msk [vmem:[#allocation3 + $0x70] sm:$0xff] %vm46, 0.0
    %302 = vst.msk [vmem:[#allocation3 + $0x78] sm:$0xff] %vm46, 0.0
    %303 = vst.msk [vmem:[#allocation3 + $0x80] sm:$0xff] %vm46, 0.0
    %304 = vst.msk [vmem:[#allocation3 + $0x88] sm:$0xff] %vm46, 0.0
    %305 = vst.msk [vmem:[#allocation3 + $0x90] sm:$0xff] %vm46, 0.0
    %306 = vst.msk [vmem:[#allocation3 + $0x98] sm:$0xff] %vm46, 0.0
    %307 = vst.msk [vmem:[#allocation3 + $0xa0] sm:$0xff] %vm46, 0.0
    %308 = vst.msk [vmem:[#allocation3 + $0xa8] sm:$0xff] %vm46, 0.0
    %309 = vst.msk [vmem:[#allocation3 + $0xb0] sm:$0xff] %vm46, 0.0
    %310 = vst.msk [vmem:[#allocation3 + $0xb8] sm:$0xff] %vm46, 0.0
    %311 = vst.msk [vmem:[#allocation3 + $0xc0] sm:$0xff] %vm46, 0.0
    %312 = vst.msk [vmem:[#allocation3 + $0xc8] sm:$0xff] %vm46, 0.0
    %313 = vst.msk [vmem:[#allocation3 + $0xd0] sm:$0xff] %vm46, 0.0
    %314 = vst.msk [vmem:[#allocation3 + $0xd8] sm:$0xff] %vm46, 0.0
    %315 = vst.msk [vmem:[#allocation3 + $0xe0] sm:$0xff] %vm46, 0.0
    %316 = vst.msk [vmem:[#allocation3 + $0xe8] sm:$0xff] %vm46, 0.0
    %317 = vst.msk [vmem:[#allocation3 + $0xf0] sm:$0xff] %vm46, 0.0
    %318 = vst.msk [vmem:[#allocation3 + $0xf8] sm:$0xff] %vm46, 0.0
    %319 = vst.msk [vmem:[#allocation3 + $0x100] sm:$0xff] %vm46, 0.0
    %320 = vst.msk [vmem:[#allocation3 + $0x108] sm:$0xff] %vm46, 0.0
    %321 = vst.msk [vmem:[#allocation3 + $0x110] sm:$0xff] %vm46, 0.0
    %322 = vst.msk [vmem:[#allocation3 + $0x118] sm:$0xff] %vm46, 0.0
    %323 = vst.msk [vmem:[#allocation3 + $0x120] sm:$0xff] %vm46, 0.0
    %324 = vst.msk [vmem:[#allocation3 + $0x128] sm:$0xff] %vm46, 0.0
    %325 = vst.msk [vmem:[#allocation3 + $0x130] sm:$0xff] %vm46, 0.0
    %326 = vst.msk [vmem:[#allocation3 + $0x138] sm:$0xff] %vm46, 0.0
    %327 = vst.msk [vmem:[#allocation3 + $0x140] sm:$0xff] %vm46, 0.0
    %328 = vst.msk [vmem:[#allocation3 + $0x148] sm:$0xff] %vm46, 0.0
    %329 = vst.msk [vmem:[#allocation3 + $0x150] sm:$0xff] %vm46, 0.0
    %330 = vst.msk [vmem:[#allocation3 + $0x158] sm:$0xff] %vm46, 0.0
    %331 = vst.msk [vmem:[#allocation3 + $0x160] sm:$0xff] %vm46, 0.0
    %332 = vst.msk [vmem:[#allocation3 + $0x168] sm:$0xff] %vm46, 0.0
    %333 = vst.msk [vmem:[#allocation3 + $0x170] sm:$0xff] %vm46, 0.0
    %334 = vst.msk [vmem:[#allocation3 + $0x178] sm:$0xff] %vm46, 0.0
    %335 = vst.msk [vmem:[#allocation3 + $0x180] sm:$0xff] %vm46, 0.0
    %336 = vst.msk [vmem:[#allocation3 + $0x188] sm:$0xff] %vm46, 0.0
    %337 = vst.msk [vmem:[#allocation3 + $0x190] sm:$0xff] %vm46, 0.0
    %338 = vst.msk [vmem:[#allocation3 + $0x198] sm:$0xff] %vm46, 0.0
    %339 = vst.msk [vmem:[#allocation3 + $0x1a0] sm:$0xff] %vm46, 0.0
    %340 = vst.msk [vmem:[#allocation3 + $0x1a8] sm:$0xff] %vm46, 0.0
    %341 = vst.msk [vmem:[#allocation3 + $0x1b0] sm:$0xff] %vm46, 0.0
    %342 = vst.msk [vmem:[#allocation3 + $0x1b8] sm:$0xff] %vm46, 0.0
    %343 = vst.msk [vmem:[#allocation3 + $0x1c0] sm:$0xff] %vm46, 0.0
    %344 = vst.msk [vmem:[#allocation3 + $0x1c8] sm:$0xff] %vm46, 0.0
    %345 = vst.msk [vmem:[#allocation3 + $0x1d0] sm:$0xff] %vm46, 0.0
    %346 = vst.msk [vmem:[#allocation3 + $0x1d8] sm:$0xff] %vm46, 0.0
    %347 = vst.msk [vmem:[#allocation3 + $0x1e0] sm:$0xff] %vm46, 0.0
    %348 = vst.msk [vmem:[#allocation3 + $0x1e8] sm:$0xff] %vm46, 0.0
    %349 = vst.msk [vmem:[#allocation3 + $0x1f0] sm:$0xff] %vm46, 0.0
    %350 = vst.msk [vmem:[#allocation3 + $0x1f8] sm:$0xff] %vm46, 0.0
    %351 = vst.msk [vmem:[#allocation3 + $0x200] sm:$0xff] %vm46, 0.0
    %352 = vst.msk [vmem:[#allocation3 + $0x208] sm:$0xff] %vm46, 0.0
    %353 = vst.msk [vmem:[#allocation3 + $0x210] sm:$0xff] %vm46, 0.0
    %354 = vst.msk [vmem:[#allocation3 + $0x218] sm:$0xff] %vm46, 0.0
    %355 = vst.msk [vmem:[#allocation3 + $0x220] sm:$0xff] %vm46, 0.0
    %356 = vst.msk [vmem:[#allocation3 + $0x228] sm:$0xff] %vm46, 0.0
    %357 = vst.msk [vmem:[#allocation3 + $0x230] sm:$0xff] %vm46, 0.0
    %358 = vst.msk [vmem:[#allocation3 + $0x238] sm:$0xff] %vm46, 0.0
    %359 = vst.msk [vmem:[#allocation3 + $0x240] sm:$0xff] %vm46, 0.0
    %360 = vst.msk [vmem:[#allocation3 + $0x248] sm:$0xff] %vm46, 0.0
    %361 = vst.msk [vmem:[#allocation3 + $0x250] sm:$0xff] %vm46, 0.0
    %362 = vst.msk [vmem:[#allocation3 + $0x258] sm:$0xff] %vm46, 0.0
    %363 = vst.msk [vmem:[#allocation3 + $0x260] sm:$0xff] %vm46, 0.0
    %364 = vst.msk [vmem:[#allocation3 + $0x268] sm:$0xff] %vm46, 0.0
    %365 = vst.msk [vmem:[#allocation3 + $0x270] sm:$0xff] %vm46, 0.0
    %366 = vst.msk [vmem:[#allocation3 + $0x278] sm:$0xff] %vm46, 0.0
    %367 = vst.msk [vmem:[#allocation3 + $0x280] sm:$0xff] %vm46, 0.0
    %368 = vst.msk [vmem:[#allocation3 + $0x288] sm:$0xff] %vm46, 0.0
    %369 = vst.msk [vmem:[#allocation3 + $0x290] sm:$0xff] %vm46, 0.0
    %370 = vst.msk [vmem:[#allocation3 + $0x298] sm:$0xff] %vm46, 0.0
    %371 = vst.msk [vmem:[#allocation3 + $0x2a0] sm:$0xff] %vm46, 0.0
    %372 = vst.msk [vmem:[#allocation3 + $0x2a8] sm:$0xff] %vm46, 0.0
    %373 = vst.msk [vmem:[#allocation3 + $0x2b0] sm:$0xff] %vm46, 0.0
    %374 = vst.msk [vmem:[#allocation3 + $0x2b8] sm:$0xff] %vm46, 0.0
    %375 = vst.msk [vmem:[#allocation3 + $0x2c0] sm:$0xff] %vm46, 0.0
    %376 = vst.msk [vmem:[#allocation3 + $0x2c8] sm:$0xff] %vm46, 0.0
    %377 = vst.msk [vmem:[#allocation3 + $0x2d0] sm:$0xff] %vm46, 0.0
    %378 = vst.msk [vmem:[#allocation3 + $0x2d8] sm:$0xff] %vm46, 0.0
    %379 = vst.msk [vmem:[#allocation3 + $0x2e0] sm:$0xff] %vm46, 0.0
    %380 = vst.msk [vmem:[#allocation3 + $0x2e8] sm:$0xff] %vm46, 0.0
    %381 = vst.msk [vmem:[#allocation3 + $0x2f0] sm:$0xff] %vm46, 0.0
    %382 = vst.msk [vmem:[#allocation3 + $0x2f8] sm:$0xff] %vm46, 0.0
    %383 = vst.msk [vmem:[#allocation3 + $0x300] sm:$0xff] %vm46, 0.0
    %384 = vst.msk [vmem:[#allocation3 + $0x308] sm:$0xff] %vm46, 0.0
    %385 = vst.msk [vmem:[#allocation3 + $0x310] sm:$0xff] %vm46, 0.0
    %386 = vst.msk [vmem:[#allocation3 + $0x318] sm:$0xff] %vm46, 0.0
    %387 = vst.msk [vmem:[#allocation3 + $0x320] sm:$0xff] %vm46, 0.0
    %388 = vst.msk [vmem:[#allocation3 + $0x328] sm:$0xff] %vm46, 0.0
    %389 = vst.msk [vmem:[#allocation3 + $0x330] sm:$0xff] %vm46, 0.0
    %390 = vst.msk [vmem:[#allocation3 + $0x338] sm:$0xff] %vm46, 0.0
    %391 = vst.msk [vmem:[#allocation3 + $0x340] sm:$0xff] %vm46, 0.0
    %392 = vst.msk [vmem:[#allocation3 + $0x348] sm:$0xff] %vm46, 0.0
    %393 = vst.msk [vmem:[#allocation3 + $0x350] sm:$0xff] %vm46, 0.0
    %394 = vst.msk [vmem:[#allocation3 + $0x358] sm:$0xff] %vm46, 0.0
    %395 = vst.msk [vmem:[#allocation3 + $0x360] sm:$0xff] %vm46, 0.0
    %396 = vst.msk [vmem:[#allocation3 + $0x368] sm:$0xff] %vm46, 0.0
    %397 = vst.msk [vmem:[#allocation3 + $0x370] sm:$0xff] %vm46, 0.0
    %398 = vst.msk [vmem:[#allocation3 + $0x378] sm:$0xff] %vm46, 0.0
    %399 = vst.msk [vmem:[#allocation3 + $0x380] sm:$0xff] %vm46, 0.0
    %400 = vst.msk [vmem:[#allocation3 + $0x388] sm:$0xff] %vm46, 0.0
    %401 = vst.msk [vmem:[#allocation3 + $0x390] sm:$0xff] %vm46, 0.0
    %402 = vst.msk [vmem:[#allocation3 + $0x398] sm:$0xff] %vm46, 0.0
    %403 = vst.msk [vmem:[#allocation3 + $0x3a0] sm:$0xff] %vm46, 0.0
    %404 = vst.msk [vmem:[#allocation3 + $0x3a8] sm:$0xff] %vm46, 0.0
    %405 = vst.msk [vmem:[#allocation3 + $0x3b0] sm:$0xff] %vm46, 0.0
    %406 = vst.msk [vmem:[#allocation3 + $0x3b8] sm:$0xff] %vm46, 0.0
    %407 = vst.msk [vmem:[#allocation3 + $0x3c0] sm:$0xff] %vm46, 0.0
    %408 = vst.msk [vmem:[#allocation3 + $0x3c8] sm:$0xff] %vm46, 0.0
    %409 = vst.msk [vmem:[#allocation3 + $0x3d0] sm:$0xff] %vm46, 0.0
    %410 = vst.msk [vmem:[#allocation3 + $0x3d8] sm:$0xff] %vm46, 0.0
    %411 = vst.msk [vmem:[#allocation3 + $0x3e0] sm:$0xff] %vm46, 0.0
    %412 = vst.msk [vmem:[#allocation3 + $0x3e8] sm:$0xff] %vm46, 0.0
    %413 = vst.msk [vmem:[#allocation3 + $0x3f0] sm:$0xff] %vm46, 0.0
    %414 = vst.msk [vmem:[#allocation3 + $0x3f8] sm:$0xff] %vm46, 0.0
    %415 = vst.msk [vmem:[#allocation3 + $0x400] sm:$0xff] %vm46, 0.0
    %416 = vst.msk [vmem:[#allocation3 + $0x408] sm:$0xff] %vm46, 0.0
    %417 = vst.msk [vmem:[#allocation3 + $0x410] sm:$0xff] %vm46, 0.0
    %418 = vst.msk [vmem:[#allocation3 + $0x418] sm:$0xff] %vm46, 0.0
    %419 = vst.msk [vmem:[#allocation3 + $0x420] sm:$0xff] %vm46, 0.0
    %420 = vst.msk [vmem:[#allocation3 + $0x428] sm:$0xff] %vm46, 0.0
    %421 = vst.msk [vmem:[#allocation3 + $0x430] sm:$0xff] %vm46, 0.0
    %422 = vst.msk [vmem:[#allocation3 + $0x438] sm:$0xff] %vm46, 0.0
    %423 = vst.msk [vmem:[#allocation3 + $0x440] sm:$0xff] %vm46, 0.0
    %424 = vst.msk [vmem:[#allocation3 + $0x448] sm:$0xff] %vm46, 0.0
    %425 = vst.msk [vmem:[#allocation3 + $0x450] sm:$0xff] %vm46, 0.0
    %426 = vst.msk [vmem:[#allocation3 + $0x458] sm:$0xff] %vm46, 0.0
    %427 = vst.msk [vmem:[#allocation3 + $0x460] sm:$0xff] %vm46, 0.0
    %428 = vst.msk [vmem:[#allocation3 + $0x468] sm:$0xff] %vm46, 0.0
    %429 = vst.msk [vmem:[#allocation3 + $0x470] sm:$0xff] %vm46, 0.0
    %430 = vst.msk [vmem:[#allocation3 + $0x478] sm:$0xff] %vm46, 0.0
    %431 = vst.msk [vmem:[#allocation3 + $0x480] sm:$0xff] %vm46, 0.0
    %432 = vst.msk [vmem:[#allocation3 + $0x488] sm:$0xff] %vm46, 0.0
    %433 = vst.msk [vmem:[#allocation3 + $0x490] sm:$0xff] %vm46, 0.0
    %434 = vst.msk [vmem:[#allocation3 + $0x498] sm:$0xff] %vm46, 0.0
    %435 = vst.msk [vmem:[#allocation3 + $0x4a0] sm:$0xff] %vm46, 0.0
    %436 = vst.msk [vmem:[#allocation3 + $0x4a8] sm:$0xff] %vm46, 0.0
    %437 = vst.msk [vmem:[#allocation3 + $0x4b0] sm:$0xff] %vm46, 0.0
    %438 = vst.msk [vmem:[#allocation3 + $0x4b8] sm:$0xff] %vm46, 0.0
    %439 = vst.msk [vmem:[#allocation3 + $0x4c0] sm:$0xff] %vm46, 0.0
    %440 = vst.msk [vmem:[#allocation3 + $0x4c8] sm:$0xff] %vm46, 0.0
    %441 = vst.msk [vmem:[#allocation3 + $0x4d0] sm:$0xff] %vm46, 0.0
    %442 = vst.msk [vmem:[#allocation3 + $0x4d8] sm:$0xff] %vm46, 0.0
    %443 = vst.msk [vmem:[#allocation3 + $0x4e0] sm:$0xff] %vm46, 0.0
    %444 = vst.msk [vmem:[#allocation3 + $0x4e8] sm:$0xff] %vm46, 0.0
    %445 = vst.msk [vmem:[#allocation3 + $0x4f0] sm:$0xff] %vm46, 0.0
    %446 = vst.msk [vmem:[#allocation3 + $0x4f8] sm:$0xff] %vm46, 0.0
    %447 = vst.msk [vmem:[#allocation3 + $0x500] sm:$0xff] %vm46, 0.0
    %448 = vst.msk [vmem:[#allocation3 + $0x508] sm:$0xff] %vm46, 0.0
    %449 = vst.msk [vmem:[#allocation3 + $0x510] sm:$0xff] %vm46, 0.0
    %450 = vst.msk [vmem:[#allocation3 + $0x518] sm:$0xff] %vm46, 0.0
    %451 = vst.msk [vmem:[#allocation3 + $0x520] sm:$0xff] %vm46, 0.0
    %452 = vst.msk [vmem:[#allocation3 + $0x528] sm:$0xff] %vm46, 0.0
    %453 = vst.msk [vmem:[#allocation3 + $0x530] sm:$0xff] %vm46, 0.0
    %454 = vst.msk [vmem:[#allocation3 + $0x538] sm:$0xff] %vm46, 0.0
    %455 = vst.msk [vmem:[#allocation3 + $0x540] sm:$0xff] %vm46, 0.0
    %456 = vst.msk [vmem:[#allocation3 + $0x548] sm:$0xff] %vm46, 0.0
    %457 = vst.msk [vmem:[#allocation3 + $0x550] sm:$0xff] %vm46, 0.0
    %458 = vst.msk [vmem:[#allocation3 + $0x558] sm:$0xff] %vm46, 0.0
    %459 = vst.msk [vmem:[#allocation3 + $0x560] sm:$0xff] %vm46, 0.0
    %460 = vst.msk [vmem:[#allocation3 + $0x568] sm:$0xff] %vm46, 0.0
    %461 = vst.msk [vmem:[#allocation3 + $0x570] sm:$0xff] %vm46, 0.0
    %462 = vst.msk [vmem:[#allocation3 + $0x578] sm:$0xff] %vm46, 0.0
    %463 = vst.msk [vmem:[#allocation3 + $0x580] sm:$0xff] %vm46, 0.0
    %464 = vst.msk [vmem:[#allocation3 + $0x588] sm:$0xff] %vm46, 0.0
    %465 = vst.msk [vmem:[#allocation3 + $0x590] sm:$0xff] %vm46, 0.0
    %466 = vst.msk [vmem:[#allocation3 + $0x598] sm:$0xff] %vm46, 0.0
    %467 = vst.msk [vmem:[#allocation3 + $0x5a0] sm:$0xff] %vm46, 0.0
    %468 = vst.msk [vmem:[#allocation3 + $0x5a8] sm:$0xff] %vm46, 0.0
    %469 = vst.msk [vmem:[#allocation3 + $0x5b0] sm:$0xff] %vm46, 0.0
    %470 = vst.msk [vmem:[#allocation3 + $0x5b8] sm:$0xff] %vm46, 0.0
    %471 = vst.msk [vmem:[#allocation3 + $0x5c0] sm:$0xff] %vm46, 0.0
    %472 = vst.msk [vmem:[#allocation3 + $0x5c8] sm:$0xff] %vm46, 0.0
    %473 = vst.msk [vmem:[#allocation3 + $0x5d0] sm:$0xff] %vm46, 0.0
    %474 = vst.msk [vmem:[#allocation3 + $0x5d8] sm:$0xff] %vm46, 0.0
    %475 = vst.msk [vmem:[#allocation3 + $0x5e0] sm:$0xff] %vm46, 0.0
    %476 = vst.msk [vmem:[#allocation3 + $0x5e8] sm:$0xff] %vm46, 0.0
    %477 = vst.msk [vmem:[#allocation3 + $0x5f0] sm:$0xff] %vm46, 0.0
    %478 = vst.msk [vmem:[#allocation3 + $0x5f8] sm:$0xff] %vm46, 0.0
    %479 = vst.msk [vmem:[#allocation3 + $0x600] sm:$0xff] %vm46, 0.0
    %480 = vst.msk [vmem:[#allocation3 + $0x608] sm:$0xff] %vm46, 0.0
    %481 = vst.msk [vmem:[#allocation3 + $0x610] sm:$0xff] %vm46, 0.0
    %482 = vst.msk [vmem:[#allocation3 + $0x618] sm:$0xff] %vm46, 0.0
    %483 = vst.msk [vmem:[#allocation3 + $0x620] sm:$0xff] %vm46, 0.0
    %484 = vst.msk [vmem:[#allocation3 + $0x628] sm:$0xff] %vm46, 0.0
    %485 = vst.msk [vmem:[#allocation3 + $0x630] sm:$0xff] %vm46, 0.0
    %486 = vst.msk [vmem:[#allocation3 + $0x638] sm:$0xff] %vm46, 0.0
    %487 = vst.msk [vmem:[#allocation3 + $0x640] sm:$0xff] %vm46, 0.0
    %488 = vst.msk [vmem:[#allocation3 + $0x648] sm:$0xff] %vm46, 0.0
    %489 = vst.msk [vmem:[#allocation3 + $0x650] sm:$0xff] %vm46, 0.0
    %490 = vst.msk [vmem:[#allocation3 + $0x658] sm:$0xff] %vm46, 0.0
    %491 = vst.msk [vmem:[#allocation3 + $0x660] sm:$0xff] %vm46, 0.0
    %492 = vst.msk [vmem:[#allocation3 + $0x668] sm:$0xff] %vm46, 0.0
    %493 = vst.msk [vmem:[#allocation3 + $0x670] sm:$0xff] %vm46, 0.0
    %494 = vst.msk [vmem:[#allocation3 + $0x678] sm:$0xff] %vm46, 0.0
    %495 = vst.msk [vmem:[#allocation3 + $0x680] sm:$0xff] %vm46, 0.0
    %496 = vst.msk [vmem:[#allocation3 + $0x688] sm:$0xff] %vm46, 0.0
    %497 = vst.msk [vmem:[#allocation3 + $0x690] sm:$0xff] %vm46, 0.0
    %498 = vst.msk [vmem:[#allocation3 + $0x698] sm:$0xff] %vm46, 0.0
    %499 = vst.msk [vmem:[#allocation3 + $0x6a0] sm:$0xff] %vm46, 0.0
    %500 = vst.msk [vmem:[#allocation3 + $0x6a8] sm:$0xff] %vm46, 0.0
    %501 = vst.msk [vmem:[#allocation3 + $0x6b0] sm:$0xff] %vm46, 0.0
    %502 = vst.msk [vmem:[#allocation3 + $0x6b8] sm:$0xff] %vm46, 0.0
    %503 = vst.msk [vmem:[#allocation3 + $0x6c0] sm:$0xff] %vm46, 0.0
    %504 = vst.msk [vmem:[#allocation3 + $0x6c8] sm:$0xff] %vm46, 0.0
    %505 = vst.msk [vmem:[#allocation3 + $0x6d0] sm:$0xff] %vm46, 0.0
    %506 = vst.msk [vmem:[#allocation3 + $0x6d8] sm:$0xff] %vm46, 0.0
    %507 = vst.msk [vmem:[#allocation3 + $0x6e0] sm:$0xff] %vm46, 0.0
    %508 = vst.msk [vmem:[#allocation3 + $0x6e8] sm:$0xff] %vm46, 0.0
    %509 = vst.msk [vmem:[#allocation3 + $0x6f0] sm:$0xff] %vm46, 0.0
    %510 = vst.msk [vmem:[#allocation3 + $0x6f8] sm:$0xff] %vm46, 0.0
    %511 = vst.msk [vmem:[#allocation3 + $0x700] sm:$0xff] %vm46, 0.0
    %512 = vst.msk [vmem:[#allocation3 + $0x708] sm:$0xff] %vm46, 0.0
    %513 = vst.msk [vmem:[#allocation3 + $0x710] sm:$0xff] %vm46, 0.0
    %514 = vst.msk [vmem:[#allocation3 + $0x718] sm:$0xff] %vm46, 0.0
    %515 = vst.msk [vmem:[#allocation3 + $0x720] sm:$0xff] %vm46, 0.0
    %516 = vst.msk [vmem:[#allocation3 + $0x728] sm:$0xff] %vm46, 0.0
    %517 = vst.msk [vmem:[#allocation3 + $0x730] sm:$0xff] %vm46, 0.0
    %518 = vst.msk [vmem:[#allocation3 + $0x738] sm:$0xff] %vm46, 0.0
    %519 = vst.msk [vmem:[#allocation3 + $0x740] sm:$0xff] %vm46, 0.0
    %520 = vst.msk [vmem:[#allocation3 + $0x748] sm:$0xff] %vm46, 0.0
    %521 = vst.msk [vmem:[#allocation3 + $0x750] sm:$0xff] %vm46, 0.0
    %522 = vst.msk [vmem:[#allocation3 + $0x758] sm:$0xff] %vm46, 0.0
    %523 = vst.msk [vmem:[#allocation3 + $0x760] sm:$0xff] %vm46, 0.0
    %524 = vst.msk [vmem:[#allocation3 + $0x768] sm:$0xff] %vm46, 0.0
    %525 = vst.msk [vmem:[#allocation3 + $0x770] sm:$0xff] %vm46, 0.0
    %526 = vst.msk [vmem:[#allocation3 + $0x778] sm:$0xff] %vm46, 0.0
    %v527 = vld [vmem:[%s1] sm:$0xff]
    %v528 = vld [vmem:[%s1 + $0x8] sm:$0x1]
    %v529 = vld [vmem:[%s2] sm:$0x1]
    loop: start=0, step=1, limit=14
    $region54: #{tpu_custom_call.1} parent=1 // loop_pre_header
      _
    $region55: #{tpu_custom_call.1} parent=1 // loop_header
      %s531 = sphi 0, %s535
      %p532 = scmp.ge.s32.totalorder %s531, 14
    $region56: #{tpu_custom_call.1} parent=1 // loop_header_branch
      %534 = sbr.rel (%p532) target = $region60
    $region57: #{tpu_custom_call.1} parent=1 // loop_body
      %s536 = smul.u32 %s531, 112
      %s537 = scalar_lea.vmem %s0, %s536
      %v538 = vld [vmem:[%s537] sm:$0xff]
      %v539 = vld [vmem:[%s537 + $0x8] sm:$0xff]
      %v540 = vld [vmem:[%s537 + $0x10] sm:$0xff]
      %v541 = vld [vmem:[%s537 + $0x18] sm:$0xff]
      %v542 = vld [vmem:[%s537 + $0x20] sm:$0xff]
      %v543 = vld [vmem:[%s537 + $0x28] sm:$0xff]
      %v544 = vld [vmem:[%s537 + $0x30] sm:$0xff]
      %v545 = vld [vmem:[%s537 + $0x38] sm:$0xff]
      %v546 = vld [vmem:[%s537 + $0x40] sm:$0xff]
      %v547 = vld [vmem:[%s537 + $0x48] sm:$0xff]
      %v548 = vld [vmem:[%s537 + $0x50] sm:$0xff]
      %v549 = vld [vmem:[%s537 + $0x58] sm:$0xff]
      %v550 = vld [vmem:[%s537 + $0x60] sm:$0xff]
      %v551 = vld [vmem:[%s537 + $0x68] sm:$0xff]
      %553 = vset.pattern.permute.xlu0 0
      %554 = vperm.xlu0 %553, %v538
      %v555 = vpop.permute.xlu0 %554
      %558 = vset.pattern.permute.xlu0 0
      %559 = vperm.xlu0 %558, %v539
      %v560 = vpop.permute.xlu0 %559
      %563 = vset.pattern.permute.xlu0 0
      %564 = vperm.xlu0 %563, %v540
      %v565 = vpop.permute.xlu0 %564
      %568 = vset.pattern.permute.xlu0 0
      %569 = vperm.xlu0 %568, %v541
      %v570 = vpop.permute.xlu0 %569
      %573 = vset.pattern.permute.xlu0 0
      %574 = vperm.xlu0 %573, %v542
      %v575 = vpop.permute.xlu0 %574
      %578 = vset.pattern.permute.xlu0 0
      %579 = vperm.xlu0 %578, %v543
      %v580 = vpop.permute.xlu0 %579
      %583 = vset.pattern.permute.xlu0 0
      %584 = vperm.xlu0 %583, %v544
      %v585 = vpop.permute.xlu0 %584
      %588 = vset.pattern.permute.xlu0 0
      %589 = vperm.xlu0 %588, %v545
      %v590 = vpop.permute.xlu0 %589
      %593 = vset.pattern.permute.xlu0 0
      %594 = vperm.xlu0 %593, %v546
      %v595 = vpop.permute.xlu0 %594
      %598 = vset.pattern.permute.xlu0 0
      %599 = vperm.xlu0 %598, %v547
      %v600 = vpop.permute.xlu0 %599
      %603 = vset.pattern.permute.xlu0 0
      %604 = vperm.xlu0 %603, %v548
      %v605 = vpop.permute.xlu0 %604
      %608 = vset.pattern.permute.xlu0 0
      %609 = vperm.xlu0 %608, %v549
      %v610 = vpop.permute.xlu0 %609
      %613 = vset.pattern.permute.xlu0 0
      %614 = vperm.xlu0 %613, %v550
      %v615 = vpop.permute.xlu0 %614
      %618 = vset.pattern.permute.xlu0 0
      %619 = vperm.xlu0 %618, %v551
      %v620 = vpop.permute.xlu0 %619
      %v622 = vlaneseq
      %v623 = vshrl.u32 %v622, 7
      %v624 = vsub.s32 0, %v623
      %v625 = vrot.slane %v527, %v624
      %v626 = vmul.f32 %v555, %v625
      %v627 = vmul.f32 %v560, %v625
      %v628 = vmul.f32 %v565, %v625
      %v629 = vmul.f32 %v570, %v625
      %v630 = vmul.f32 %v575, %v625
      %v631 = vmul.f32 %v580, %v625
      %v632 = vmul.f32 %v585, %v625
      %v633 = vmul.f32 %v590, %v625
      %v634 = vmul.f32 %v595, %v625
      %v635 = vmul.f32 %v600, %v625
      %v636 = vmul.f32 %v605, %v625
      %v637 = vmul.f32 %v610, %v625
      %v638 = vmul.f32 %v615, %v625
      %v639 = vmul.f32 %v620, %v625
      %v640 = vadd.f32 %v626, 0.0
      %v641 = vadd.f32 %v627, 0.0
      %v642 = vadd.f32 %v628, 0.0
      %v643 = vadd.f32 %v629, 0.0
      %v644 = vadd.f32 %v630, 0.0
      %v645 = vadd.f32 %v631, 0.0
      %v646 = vadd.f32 %v632, 0.0
      %v647 = vadd.f32 %v633, 0.0
      %v648 = vadd.f32 %v634, 0.0
      %v649 = vadd.f32 %v635, 0.0
      %v650 = vadd.f32 %v636, 0.0
      %v651 = vadd.f32 %v637, 0.0
      %v652 = vadd.f32 %v638, 0.0
      %v653 = vadd.f32 %v639, 0.0
      %s654 = sadd.s32 %s536, 1
      %s655 = scalar_lea.vmem %s0, %s654
      %v656 = vld [vmem:[%s655] sm:$0xff]
      %v657 = vld [vmem:[%s655 + $0x8] sm:$0xff]
      %v658 = vld [vmem:[%s655 + $0x10] sm:$0xff]
      %v659 = vld [vmem:[%s655 + $0x18] sm:$0xff]
      %v660 = vld [vmem:[%s655 + $0x20] sm:$0xff]
      %v661 = vld [vmem:[%s655 + $0x28] sm:$0xff]
      %v662 = vld [vmem:[%s655 + $0x30] sm:$0xff]
      %v663 = vld [vmem:[%s655 + $0x38] sm:$0xff]
      %v664 = vld [vmem:[%s655 + $0x40] sm:$0xff]
      %v665 = vld [vmem:[%s655 + $0x48] sm:$0xff]
      %v666 = vld [vmem:[%s655 + $0x50] sm:$0xff]
      %v667 = vld [vmem:[%s655 + $0x58] sm:$0xff]
      %v668 = vld [vmem:[%s655 + $0x60] sm:$0xff]
      %v669 = vld [vmem:[%s655 + $0x68] sm:$0xff]
      %671 = vset.pattern.permute.xlu0 0
      %672 = vperm.xlu0 %671, %v656
      %v673 = vpop.permute.xlu0 %672
      %676 = vset.pattern.permute.xlu0 0
      %677 = vperm.xlu0 %676, %v657
      %v678 = vpop.permute.xlu0 %677
      %681 = vset.pattern.permute.xlu0 0
      %682 = vperm.xlu0 %681, %v658
      %v683 = vpop.permute.xlu0 %682
      %686 = vset.pattern.permute.xlu0 0
      %687 = vperm.xlu0 %686, %v659
      %v688 = vpop.permute.xlu0 %687
      %691 = vset.pattern.permute.xlu0 0
      %692 = vperm.xlu0 %691, %v660
      %v693 = vpop.permute.xlu0 %692
      %696 = vset.pattern.permute.xlu0 0
      %697 = vperm.xlu0 %696, %v661
      %v698 = vpop.permute.xlu0 %697
      %701 = vset.pattern.permute.xlu0 0
      %702 = vperm.xlu0 %701, %v662
      %v703 = vpop.permute.xlu0 %702
      %706 = vset.pattern.permute.xlu0 0
      %707 = vperm.xlu0 %706, %v663
      %v708 = vpop.permute.xlu0 %707
      %711 = vset.pattern.permute.xlu0 0
      %712 = vperm.xlu0 %711, %v664
      %v713 = vpop.permute.xlu0 %712
      %716 = vset.pattern.permute.xlu0 0
      %717 = vperm.xlu0 %716, %v665
      %v718 = vpop.permute.xlu0 %717
      %721 = vset.pattern.permute.xlu0 0
      %722 = vperm.xlu0 %721, %v666
      %v723 = vpop.permute.xlu0 %722
      %726 = vset.pattern.permute.xlu0 0
      %727 = vperm.xlu0 %726, %v667
      %v728 = vpop.permute.xlu0 %727
      %731 = vset.pattern.permute.xlu0 0
      %732 = vperm.xlu0 %731, %v668
      %v733 = vpop.permute.xlu0 %732
      %736 = vset.pattern.permute.xlu0 0
      %737 = vperm.xlu0 %736, %v669
      %v738 = vpop.permute.xlu0 %737
      %v740 = vlaneseq
      %v741 = vshrl.u32 %v740, 7
      %v742 = vsub.s32 1, %v741
      %v743 = vrot.slane %v527, %v742
      %v744 = vmul.f32 %v673, %v743
      %v745 = vmul.f32 %v678, %v743
      %v746 = vmul.f32 %v683, %v743
      %v747 = vmul.f32 %v688, %v743
      %v748 = vmul.f32 %v693, %v743
      %v749 = vmul.f32 %v698, %v743
      %v750 = vmul.f32 %v703, %v743
      %v751 = vmul.f32 %v708, %v743
      %v752 = vmul.f32 %v713, %v743
      %v753 = vmul.f32 %v718, %v743
      %v754 = vmul.f32 %v723, %v743
      %v755 = vmul.f32 %v728, %v743
      %v756 = vmul.f32 %v733, %v743
      %v757 = vmul.f32 %v738, %v743
      %v758 = vadd.f32 %v640, %v744
      %v759 = vadd.f32 %v641, %v745
      %v760 = vadd.f32 %v642, %v746
      %v761 = vadd.f32 %v643, %v747
      %v762 = vadd.f32 %v644, %v748
      %v763 = vadd.f32 %v645, %v749
      %v764 = vadd.f32 %v646, %v750
      %v765 = vadd.f32 %v647, %v751
      %v766 = vadd.f32 %v648, %v752
      %v767 = vadd.f32 %v649, %v753
      %v768 = vadd.f32 %v650, %v754
      %v769 = vadd.f32 %v651, %v755
      %v770 = vadd.f32 %v652, %v756
      %v771 = vadd.f32 %v653, %v757
      %s772 = sadd.s32 %s536, 2
      %s773 = scalar_lea.vmem %s0, %s772
      %v774 = vld [vmem:[%s773] sm:$0xff]
      %v775 = vld [vmem:[%s773 + $0x8] sm:$0xff]
      %v776 = vld [vmem:[%s773 + $0x10] sm:$0xff]
      %v777 = vld [vmem:[%s773 + $0x18] sm:$0xff]
      %v778 = vld [vmem:[%s773 + $0x20] sm:$0xff]
      %v779 = vld [vmem:[%s773 + $0x28] sm:$0xff]
      %v780 = vld [vmem:[%s773 + $0x30] sm:$0xff]
      %v781 = vld [vmem:[%s773 + $0x38] sm:$0xff]
      %v782 = vld [vmem:[%s773 + $0x40] sm:$0xff]
      %v783 = vld [vmem:[%s773 + $0x48] sm:$0xff]
      %v784 = vld [vmem:[%s773 + $0x50] sm:$0xff]
      %v785 = vld [vmem:[%s773 + $0x58] sm:$0xff]
      %v786 = vld [vmem:[%s773 + $0x60] sm:$0xff]
      %v787 = vld [vmem:[%s773 + $0x68] sm:$0xff]
      %789 = vset.pattern.permute.xlu0 0
      %790 = vperm.xlu0 %789, %v774
      %v791 = vpop.permute.xlu0 %790
      %794 = vset.pattern.permute.xlu0 0
      %795 = vperm.xlu0 %794, %v775
      %v796 = vpop.permute.xlu0 %795
      %799 = vset.pattern.permute.xlu0 0
      %800 = vperm.xlu0 %799, %v776
      %v801 = vpop.permute.xlu0 %800
      %804 = vset.pattern.permute.xlu0 0
      %805 = vperm.xlu0 %804, %v777
      %v806 = vpop.permute.xlu0 %805
      %809 = vset.pattern.permute.xlu0 0
      %810 = vperm.xlu0 %809, %v778
      %v811 = vpop.permute.xlu0 %810
      %814 = vset.pattern.permute.xlu0 0
      %815 = vperm.xlu0 %814, %v779
      %v816 = vpop.permute.xlu0 %815
      %819 = vset.pattern.permute.xlu0 0
      %820 = vperm.xlu0 %819, %v780
      %v821 = vpop.permute.xlu0 %820
      %824 = vset.pattern.permute.xlu0 0
      %825 = vperm.xlu0 %824, %v781
      %v826 = vpop.permute.xlu0 %825
      %829 = vset.pattern.permute.xlu0 0
      %830 = vperm.xlu0 %829, %v782
      %v831 = vpop.permute.xlu0 %830
      %834 = vset.pattern.permute.xlu0 0
      %835 = vperm.xlu0 %834, %v783
      %v836 = vpop.permute.xlu0 %835
      %839 = vset.pattern.permute.xlu0 0
      %840 = vperm.xlu0 %839, %v784
      %v841 = vpop.permute.xlu0 %840
      %844 = vset.pattern.permute.xlu0 0
      %845 = vperm.xlu0 %844, %v785
      %v846 = vpop.permute.xlu0 %845
      %849 = vset.pattern.permute.xlu0 0
      %850 = vperm.xlu0 %849, %v786
      %v851 = vpop.permute.xlu0 %850
      %854 = vset.pattern.permute.xlu0 0
      %855 = vperm.xlu0 %854, %v787
      %v856 = vpop.permute.xlu0 %855
      %v858 = vlaneseq
      %v859 = vshrl.u32 %v858, 7
      %v860 = vsub.s32 2, %v859
      %v861 = vrot.slane %v527, %v860
      %v862 = vmul.f32 %v791, %v861
      %v863 = vmul.f32 %v796, %v861
      %v864 = vmul.f32 %v801, %v861
      %v865 = vmul.f32 %v806, %v861
      %v866 = vmul.f32 %v811, %v861
      %v867 = vmul.f32 %v816, %v861
      %v868 = vmul.f32 %v821, %v861
      %v869 = vmul.f32 %v826, %v861
      %v870 = vmul.f32 %v831, %v861
      %v871 = vmul.f32 %v836, %v861
      %v872 = vmul.f32 %v841, %v861
      %v873 = vmul.f32 %v846, %v861
      %v874 = vmul.f32 %v851, %v861
      %v875 = vmul.f32 %v856, %v861
      %v876 = vadd.f32 %v758, %v862
      %v877 = vadd.f32 %v759, %v863
      %v878 = vadd.f32 %v760, %v864
      %v879 = vadd.f32 %v761, %v865
      %v880 = vadd.f32 %v762, %v866
      %v881 = vadd.f32 %v763, %v867
      %v882 = vadd.f32 %v764, %v868
      %v883 = vadd.f32 %v765, %v869
      %v884 = vadd.f32 %v766, %v870
      %v885 = vadd.f32 %v767, %v871
      %v886 = vadd.f32 %v768, %v872
      %v887 = vadd.f32 %v769, %v873
      %v888 = vadd.f32 %v770, %v874
      %v889 = vadd.f32 %v771, %v875
      %s890 = sadd.s32 %s536, 28
      %s891 = scalar_lea.vmem %s0, %s890
      %v892 = vld [vmem:[%s891] sm:$0xff]
      %v893 = vld [vmem:[%s891 + $0x8] sm:$0xff]
      %v894 = vld [vmem:[%s891 + $0x10] sm:$0xff]
      %v895 = vld [vmem:[%s891 + $0x18] sm:$0xff]
      %v896 = vld [vmem:[%s891 + $0x20] sm:$0xff]
      %v897 = vld [vmem:[%s891 + $0x28] sm:$0xff]
      %v898 = vld [vmem:[%s891 + $0x30] sm:$0xff]
      %v899 = vld [vmem:[%s891 + $0x38] sm:$0xff]
      %v900 = vld [vmem:[%s891 + $0x40] sm:$0xff]
      %v901 = vld [vmem:[%s891 + $0x48] sm:$0xff]
      %v902 = vld [vmem:[%s891 + $0x50] sm:$0xff]
      %v903 = vld [vmem:[%s891 + $0x58] sm:$0xff]
      %v904 = vld [vmem:[%s891 + $0x60] sm:$0xff]
      %v905 = vld [vmem:[%s891 + $0x68] sm:$0xff]
      %907 = vset.pattern.permute.xlu0 0
      %908 = vperm.xlu0 %907, %v892
      %v909 = vpop.permute.xlu0 %908
      %912 = vset.pattern.permute.xlu0 0
      %913 = vperm.xlu0 %912, %v893
      %v914 = vpop.permute.xlu0 %913
      %917 = vset.pattern.permute.xlu0 0
      %918 = vperm.xlu0 %917, %v894
      %v919 = vpop.permute.xlu0 %918
      %922 = vset.pattern.permute.xlu0 0
      %923 = vperm.xlu0 %922, %v895
      %v924 = vpop.permute.xlu0 %923
      %927 = vset.pattern.permute.xlu0 0
      %928 = vperm.xlu0 %927, %v896
      %v929 = vpop.permute.xlu0 %928
      %932 = vset.pattern.permute.xlu0 0
      %933 = vperm.xlu0 %932, %v897
      %v934 = vpop.permute.xlu0 %933
      %937 = vset.pattern.permute.xlu0 0
      %938 = vperm.xlu0 %937, %v898
      %v939 = vpop.permute.xlu0 %938
      %942 = vset.pattern.permute.xlu0 0
      %943 = vperm.xlu0 %942, %v899
      %v944 = vpop.permute.xlu0 %943
      %947 = vset.pattern.permute.xlu0 0
      %948 = vperm.xlu0 %947, %v900
      %v949 = vpop.permute.xlu0 %948
      %952 = vset.pattern.permute.xlu0 0
      %953 = vperm.xlu0 %952, %v901
      %v954 = vpop.permute.xlu0 %953
      %957 = vset.pattern.permute.xlu0 0
      %958 = vperm.xlu0 %957, %v902
      %v959 = vpop.permute.xlu0 %958
      %962 = vset.pattern.permute.xlu0 0
      %963 = vperm.xlu0 %962, %v903
      %v964 = vpop.permute.xlu0 %963
      %967 = vset.pattern.permute.xlu0 0
      %968 = vperm.xlu0 %967, %v904
      %v969 = vpop.permute.xlu0 %968
      %972 = vset.pattern.permute.xlu0 0
      %973 = vperm.xlu0 %972, %v905
      %v974 = vpop.permute.xlu0 %973
      %v976 = vlaneseq
      %v977 = vshrl.u32 %v976, 7
      %v978 = vsub.s32 3, %v977
      %v979 = vrot.slane %v527, %v978
      %v980 = vmul.f32 %v909, %v979
      %v981 = vmul.f32 %v914, %v979
      %v982 = vmul.f32 %v919, %v979
      %v983 = vmul.f32 %v924, %v979
      %v984 = vmul.f32 %v929, %v979
      %v985 = vmul.f32 %v934, %v979
      %v986 = vmul.f32 %v939, %v979
      %v987 = vmul.f32 %v944, %v979
      %v988 = vmul.f32 %v949, %v979
      %v989 = vmul.f32 %v954, %v979
      %v990 = vmul.f32 %v959, %v979
      %v991 = vmul.f32 %v964, %v979
      %v992 = vmul.f32 %v969, %v979
      %v993 = vmul.f32 %v974, %v979
      %v994 = vadd.f32 %v876, %v980
      %v995 = vadd.f32 %v877, %v981
      %v996 = vadd.f32 %v878, %v982
      %v997 = vadd.f32 %v879, %v983
      %v998 = vadd.f32 %v880, %v984
      %v999 = vadd.f32 %v881, %v985
      %v1000 = vadd.f32 %v882, %v986
      %v1001 = vadd.f32 %v883, %v987
      %v1002 = vadd.f32 %v884, %v988
      %v1003 = vadd.f32 %v885, %v989
      %v1004 = vadd.f32 %v886, %v990
      %v1005 = vadd.f32 %v887, %v991
      %v1006 = vadd.f32 %v888, %v992
      %v1007 = vadd.f32 %v889, %v993
      %s1008 = sadd.s32 %s536, 29
      %s1009 = scalar_lea.vmem %s0, %s1008
      %v1010 = vld [vmem:[%s1009] sm:$0xff]
      %v1011 = vld [vmem:[%s1009 + $0x8] sm:$0xff]
      %v1012 = vld [vmem:[%s1009 + $0x10] sm:$0xff]
      %v1013 = vld [vmem:[%s1009 + $0x18] sm:$0xff]
      %v1014 = vld [vmem:[%s1009 + $0x20] sm:$0xff]
      %v1015 = vld [vmem:[%s1009 + $0x28] sm:$0xff]
      %v1016 = vld [vmem:[%s1009 + $0x30] sm:$0xff]
      %v1017 = vld [vmem:[%s1009 + $0x38] sm:$0xff]
      %v1018 = vld [vmem:[%s1009 + $0x40] sm:$0xff]
      %v1019 = vld [vmem:[%s1009 + $0x48] sm:$0xff]
      %v1020 = vld [vmem:[%s1009 + $0x50] sm:$0xff]
      %v1021 = vld [vmem:[%s1009 + $0x58] sm:$0xff]
      %v1022 = vld [vmem:[%s1009 + $0x60] sm:$0xff]
      %v1023 = vld [vmem:[%s1009 + $0x68] sm:$0xff]
      %1025 = vset.pattern.permute.xlu0 0
      %1026 = vperm.xlu0 %1025, %v1010
      %v1027 = vpop.permute.xlu0 %1026
      %1030 = vset.pattern.permute.xlu0 0
      %1031 = vperm.xlu0 %1030, %v1011
      %v1032 = vpop.permute.xlu0 %1031
      %1035 = vset.pattern.permute.xlu0 0
      %1036 = vperm.xlu0 %1035, %v1012
      %v1037 = vpop.permute.xlu0 %1036
      %1040 = vset.pattern.permute.xlu0 0
      %1041 = vperm.xlu0 %1040, %v1013
      %v1042 = vpop.permute.xlu0 %1041
      %1045 = vset.pattern.permute.xlu0 0
      %1046 = vperm.xlu0 %1045, %v1014
      %v1047 = vpop.permute.xlu0 %1046
      %1050 = vset.pattern.permute.xlu0 0
      %1051 = vperm.xlu0 %1050, %v1015
      %v1052 = vpop.permute.xlu0 %1051
      %1055 = vset.pattern.permute.xlu0 0
      %1056 = vperm.xlu0 %1055, %v1016
      %v1057 = vpop.permute.xlu0 %1056
      %1060 = vset.pattern.permute.xlu0 0
      %1061 = vperm.xlu0 %1060, %v1017
      %v1062 = vpop.permute.xlu0 %1061
      %1065 = vset.pattern.permute.xlu0 0
      %1066 = vperm.xlu0 %1065, %v1018
      %v1067 = vpop.permute.xlu0 %1066
      %1070 = vset.pattern.permute.xlu0 0
      %1071 = vperm.xlu0 %1070, %v1019
      %v1072 = vpop.permute.xlu0 %1071
      %1075 = vset.pattern.permute.xlu0 0
      %1076 = vperm.xlu0 %1075, %v1020
      %v1077 = vpop.permute.xlu0 %1076
      %1080 = vset.pattern.permute.xlu0 0
      %1081 = vperm.xlu0 %1080, %v1021
      %v1082 = vpop.permute.xlu0 %1081
      %1085 = vset.pattern.permute.xlu0 0
      %1086 = vperm.xlu0 %1085, %v1022
      %v1087 = vpop.permute.xlu0 %1086
      %1090 = vset.pattern.permute.xlu0 0
      %1091 = vperm.xlu0 %1090, %v1023
      %v1092 = vpop.permute.xlu0 %1091
      %v1094 = vlaneseq
      %v1095 = vshrl.u32 %v1094, 7
      %v1096 = vsub.s32 4, %v1095
      %v1097 = vrot.slane %v527, %v1096
      %v1098 = vmul.f32 %v1027, %v1097
      %v1099 = vmul.f32 %v1032, %v1097
      %v1100 = vmul.f32 %v1037, %v1097
      %v1101 = vmul.f32 %v1042, %v1097
      %v1102 = vmul.f32 %v1047, %v1097
      %v1103 = vmul.f32 %v1052, %v1097
      %v1104 = vmul.f32 %v1057, %v1097
      %v1105 = vmul.f32 %v1062, %v1097
      %v1106 = vmul.f32 %v1067, %v1097
      %v1107 = vmul.f32 %v1072, %v1097
      %v1108 = vmul.f32 %v1077, %v1097
      %v1109 = vmul.f32 %v1082, %v1097
      %v1110 = vmul.f32 %v1087, %v1097
      %v1111 = vmul.f32 %v1092, %v1097
      %v1112 = vadd.f32 %v994, %v1098
      %v1113 = vadd.f32 %v995, %v1099
      %v1114 = vadd.f32 %v996, %v1100
      %v1115 = vadd.f32 %v997, %v1101
      %v1116 = vadd.f32 %v998, %v1102
      %v1117 = vadd.f32 %v999, %v1103
      %v1118 = vadd.f32 %v1000, %v1104
      %v1119 = vadd.f32 %v1001, %v1105
      %v1120 = vadd.f32 %v1002, %v1106
      %v1121 = vadd.f32 %v1003, %v1107
      %v1122 = vadd.f32 %v1004, %v1108
      %v1123 = vadd.f32 %v1005, %v1109
      %v1124 = vadd.f32 %v1006, %v1110
      %v1125 = vadd.f32 %v1007, %v1111
      %s1126 = sadd.s32 %s536, 30
      %s1127 = scalar_lea.vmem %s0, %s1126
      %v1128 = vld [vmem:[%s1127] sm:$0xff]
      %v1129 = vld [vmem:[%s1127 + $0x8] sm:$0xff]
      %v1130 = vld [vmem:[%s1127 + $0x10] sm:$0xff]
      %v1131 = vld [vmem:[%s1127 + $0x18] sm:$0xff]
      %v1132 = vld [vmem:[%s1127 + $0x20] sm:$0xff]
      %v1133 = vld [vmem:[%s1127 + $0x28] sm:$0xff]
      %v1134 = vld [vmem:[%s1127 + $0x30] sm:$0xff]
      %v1135 = vld [vmem:[%s1127 + $0x38] sm:$0xff]
      %v1136 = vld [vmem:[%s1127 + $0x40] sm:$0xff]
      %v1137 = vld [vmem:[%s1127 + $0x48] sm:$0xff]
      %v1138 = vld [vmem:[%s1127 + $0x50] sm:$0xff]
      %v1139 = vld [vmem:[%s1127 + $0x58] sm:$0xff]
      %v1140 = vld [vmem:[%s1127 + $0x60] sm:$0xff]
      %v1141 = vld [vmem:[%s1127 + $0x68] sm:$0xff]
      %1143 = vset.pattern.permute.xlu0 0
      %1144 = vperm.xlu0 %1143, %v1128
      %v1145 = vpop.permute.xlu0 %1144
      %1148 = vset.pattern.permute.xlu0 0
      %1149 = vperm.xlu0 %1148, %v1129
      %v1150 = vpop.permute.xlu0 %1149
      %1153 = vset.pattern.permute.xlu0 0
      %1154 = vperm.xlu0 %1153, %v1130
      %v1155 = vpop.permute.xlu0 %1154
      %1158 = vset.pattern.permute.xlu0 0
      %1159 = vperm.xlu0 %1158, %v1131
      %v1160 = vpop.permute.xlu0 %1159
      %1163 = vset.pattern.permute.xlu0 0
      %1164 = vperm.xlu0 %1163, %v1132
      %v1165 = vpop.permute.xlu0 %1164
      %1168 = vset.pattern.permute.xlu0 0
      %1169 = vperm.xlu0 %1168, %v1133
      %v1170 = vpop.permute.xlu0 %1169
      %1173 = vset.pattern.permute.xlu0 0
      %1174 = vperm.xlu0 %1173, %v1134
      %v1175 = vpop.permute.xlu0 %1174
      %1178 = vset.pattern.permute.xlu0 0
      %1179 = vperm.xlu0 %1178, %v1135
      %v1180 = vpop.permute.xlu0 %1179
      %1183 = vset.pattern.permute.xlu0 0
      %1184 = vperm.xlu0 %1183, %v1136
      %v1185 = vpop.permute.xlu0 %1184
      %1188 = vset.pattern.permute.xlu0 0
      %1189 = vperm.xlu0 %1188, %v1137
      %v1190 = vpop.permute.xlu0 %1189
      %1193 = vset.pattern.permute.xlu0 0
      %1194 = vperm.xlu0 %1193, %v1138
      %v1195 = vpop.permute.xlu0 %1194
      %1198 = vset.pattern.permute.xlu0 0
      %1199 = vperm.xlu0 %1198, %v1139
      %v1200 = vpop.permute.xlu0 %1199
      %1203 = vset.pattern.permute.xlu0 0
      %1204 = vperm.xlu0 %1203, %v1140
      %v1205 = vpop.permute.xlu0 %1204
      %1208 = vset.pattern.permute.xlu0 0
      %1209 = vperm.xlu0 %1208, %v1141
      %v1210 = vpop.permute.xlu0 %1209
      %v1212 = vlaneseq
      %v1213 = vshrl.u32 %v1212, 7
      %v1214 = vsub.s32 5, %v1213
      %v1215 = vrot.slane %v527, %v1214
      %v1216 = vmul.f32 %v1145, %v1215
      %v1217 = vmul.f32 %v1150, %v1215
      %v1218 = vmul.f32 %v1155, %v1215
      %v1219 = vmul.f32 %v1160, %v1215
      %v1220 = vmul.f32 %v1165, %v1215
      %v1221 = vmul.f32 %v1170, %v1215
      %v1222 = vmul.f32 %v1175, %v1215
      %v1223 = vmul.f32 %v1180, %v1215
      %v1224 = vmul.f32 %v1185, %v1215
      %v1225 = vmul.f32 %v1190, %v1215
      %v1226 = vmul.f32 %v1195, %v1215
      %v1227 = vmul.f32 %v1200, %v1215
      %v1228 = vmul.f32 %v1205, %v1215
      %v1229 = vmul.f32 %v1210, %v1215
      %v1230 = vadd.f32 %v1112, %v1216
      %v1231 = vadd.f32 %v1113, %v1217
      %v1232 = vadd.f32 %v1114, %v1218
      %v1233 = vadd.f32 %v1115, %v1219
      %v1234 = vadd.f32 %v1116, %v1220
      %v1235 = vadd.f32 %v1117, %v1221
      %v1236 = vadd.f32 %v1118, %v1222
      %v1237 = vadd.f32 %v1119, %v1223
      %v1238 = vadd.f32 %v1120, %v1224
      %v1239 = vadd.f32 %v1121, %v1225
      %v1240 = vadd.f32 %v1122, %v1226
      %v1241 = vadd.f32 %v1123, %v1227
      %v1242 = vadd.f32 %v1124, %v1228
      %v1243 = vadd.f32 %v1125, %v1229
      %s1244 = sadd.s32 %s536, 56
      %s1245 = scalar_lea.vmem %s0, %s1244
      %v1246 = vld [vmem:[%s1245] sm:$0xff]
      %v1247 = vld [vmem:[%s1245 + $0x8] sm:$0xff]
      %v1248 = vld [vmem:[%s1245 + $0x10] sm:$0xff]
      %v1249 = vld [vmem:[%s1245 + $0x18] sm:$0xff]
      %v1250 = vld [vmem:[%s1245 + $0x20] sm:$0xff]
      %v1251 = vld [vmem:[%s1245 + $0x28] sm:$0xff]
      %v1252 = vld [vmem:[%s1245 + $0x30] sm:$0xff]
      %v1253 = vld [vmem:[%s1245 + $0x38] sm:$0xff]
      %v1254 = vld [vmem:[%s1245 + $0x40] sm:$0xff]
      %v1255 = vld [vmem:[%s1245 + $0x48] sm:$0xff]
      %v1256 = vld [vmem:[%s1245 + $0x50] sm:$0xff]
      %v1257 = vld [vmem:[%s1245 + $0x58] sm:$0xff]
      %v1258 = vld [vmem:[%s1245 + $0x60] sm:$0xff]
      %v1259 = vld [vmem:[%s1245 + $0x68] sm:$0xff]
      %1261 = vset.pattern.permute.xlu0 0
      %1262 = vperm.xlu0 %1261, %v1246
      %v1263 = vpop.permute.xlu0 %1262
      %1266 = vset.pattern.permute.xlu0 0
      %1267 = vperm.xlu0 %1266, %v1247
      %v1268 = vpop.permute.xlu0 %1267
      %1271 = vset.pattern.permute.xlu0 0
      %1272 = vperm.xlu0 %1271, %v1248
      %v1273 = vpop.permute.xlu0 %1272
      %1276 = vset.pattern.permute.xlu0 0
      %1277 = vperm.xlu0 %1276, %v1249
      %v1278 = vpop.permute.xlu0 %1277
      %1281 = vset.pattern.permute.xlu0 0
      %1282 = vperm.xlu0 %1281, %v1250
      %v1283 = vpop.permute.xlu0 %1282
      %1286 = vset.pattern.permute.xlu0 0
      %1287 = vperm.xlu0 %1286, %v1251
      %v1288 = vpop.permute.xlu0 %1287
      %1291 = vset.pattern.permute.xlu0 0
      %1292 = vperm.xlu0 %1291, %v1252
      %v1293 = vpop.permute.xlu0 %1292
      %1296 = vset.pattern.permute.xlu0 0
      %1297 = vperm.xlu0 %1296, %v1253
      %v1298 = vpop.permute.xlu0 %1297
      %1301 = vset.pattern.permute.xlu0 0
      %1302 = vperm.xlu0 %1301, %v1254
      %v1303 = vpop.permute.xlu0 %1302
      %1306 = vset.pattern.permute.xlu0 0
      %1307 = vperm.xlu0 %1306, %v1255
      %v1308 = vpop.permute.xlu0 %1307
      %1311 = vset.pattern.permute.xlu0 0
      %1312 = vperm.xlu0 %1311, %v1256
      %v1313 = vpop.permute.xlu0 %1312
      %1316 = vset.pattern.permute.xlu0 0
      %1317 = vperm.xlu0 %1316, %v1257
      %v1318 = vpop.permute.xlu0 %1317
      %1321 = vset.pattern.permute.xlu0 0
      %1322 = vperm.xlu0 %1321, %v1258
      %v1323 = vpop.permute.xlu0 %1322
      %1326 = vset.pattern.permute.xlu0 0
      %1327 = vperm.xlu0 %1326, %v1259
      %v1328 = vpop.permute.xlu0 %1327
      %v1330 = vlaneseq
      %v1331 = vshrl.u32 %v1330, 7
      %v1332 = vsub.s32 6, %v1331
      %v1333 = vrot.slane %v527, %v1332
      %v1334 = vmul.f32 %v1263, %v1333
      %v1335 = vmul.f32 %v1268, %v1333
      %v1336 = vmul.f32 %v1273, %v1333
      %v1337 = vmul.f32 %v1278, %v1333
      %v1338 = vmul.f32 %v1283, %v1333
      %v1339 = vmul.f32 %v1288, %v1333
      %v1340 = vmul.f32 %v1293, %v1333
      %v1341 = vmul.f32 %v1298, %v1333
      %v1342 = vmul.f32 %v1303, %v1333
      %v1343 = vmul.f32 %v1308, %v1333
      %v1344 = vmul.f32 %v1313, %v1333
      %v1345 = vmul.f32 %v1318, %v1333
      %v1346 = vmul.f32 %v1323, %v1333
      %v1347 = vmul.f32 %v1328, %v1333
      %v1348 = vadd.f32 %v1230, %v1334
      %v1349 = vadd.f32 %v1231, %v1335
      %v1350 = vadd.f32 %v1232, %v1336
      %v1351 = vadd.f32 %v1233, %v1337
      %v1352 = vadd.f32 %v1234, %v1338
      %v1353 = vadd.f32 %v1235, %v1339
      %v1354 = vadd.f32 %v1236, %v1340
      %v1355 = vadd.f32 %v1237, %v1341
      %v1356 = vadd.f32 %v1238, %v1342
      %v1357 = vadd.f32 %v1239, %v1343
      %v1358 = vadd.f32 %v1240, %v1344
      %v1359 = vadd.f32 %v1241, %v1345
      %v1360 = vadd.f32 %v1242, %v1346
      %v1361 = vadd.f32 %v1243, %v1347
      %s1362 = sadd.s32 %s536, 57
      %s1363 = scalar_lea.vmem %s0, %s1362
      %v1364 = vld [vmem:[%s1363] sm:$0xff]
      %v1365 = vld [vmem:[%s1363 + $0x8] sm:$0xff]
      %v1366 = vld [vmem:[%s1363 + $0x10] sm:$0xff]
      %v1367 = vld [vmem:[%s1363 + $0x18] sm:$0xff]
      %v1368 = vld [vmem:[%s1363 + $0x20] sm:$0xff]
      %v1369 = vld [vmem:[%s1363 + $0x28] sm:$0xff]
      %v1370 = vld [vmem:[%s1363 + $0x30] sm:$0xff]
      %v1371 = vld [vmem:[%s1363 + $0x38] sm:$0xff]
      %v1372 = vld [vmem:[%s1363 + $0x40] sm:$0xff]
      %v1373 = vld [vmem:[%s1363 + $0x48] sm:$0xff]
      %v1374 = vld [vmem:[%s1363 + $0x50] sm:$0xff]
      %v1375 = vld [vmem:[%s1363 + $0x58] sm:$0xff]
      %v1376 = vld [vmem:[%s1363 + $0x60] sm:$0xff]
      %v1377 = vld [vmem:[%s1363 + $0x68] sm:$0xff]
      %1379 = vset.pattern.permute.xlu0 0
      %1380 = vperm.xlu0 %1379, %v1364
      %v1381 = vpop.permute.xlu0 %1380
      %1384 = vset.pattern.permute.xlu0 0
      %1385 = vperm.xlu0 %1384, %v1365
      %v1386 = vpop.permute.xlu0 %1385
      %1389 = vset.pattern.permute.xlu0 0
      %1390 = vperm.xlu0 %1389, %v1366
      %v1391 = vpop.permute.xlu0 %1390
      %1394 = vset.pattern.permute.xlu0 0
      %1395 = vperm.xlu0 %1394, %v1367
      %v1396 = vpop.permute.xlu0 %1395
      %1399 = vset.pattern.permute.xlu0 0
      %1400 = vperm.xlu0 %1399, %v1368
      %v1401 = vpop.permute.xlu0 %1400
      %1404 = vset.pattern.permute.xlu0 0
      %1405 = vperm.xlu0 %1404, %v1369
      %v1406 = vpop.permute.xlu0 %1405
      %1409 = vset.pattern.permute.xlu0 0
      %1410 = vperm.xlu0 %1409, %v1370
      %v1411 = vpop.permute.xlu0 %1410
      %1414 = vset.pattern.permute.xlu0 0
      %1415 = vperm.xlu0 %1414, %v1371
      %v1416 = vpop.permute.xlu0 %1415
      %1419 = vset.pattern.permute.xlu0 0
      %1420 = vperm.xlu0 %1419, %v1372
      %v1421 = vpop.permute.xlu0 %1420
      %1424 = vset.pattern.permute.xlu0 0
      %1425 = vperm.xlu0 %1424, %v1373
      %v1426 = vpop.permute.xlu0 %1425
      %1429 = vset.pattern.permute.xlu0 0
      %1430 = vperm.xlu0 %1429, %v1374
      %v1431 = vpop.permute.xlu0 %1430
      %1434 = vset.pattern.permute.xlu0 0
      %1435 = vperm.xlu0 %1434, %v1375
      %v1436 = vpop.permute.xlu0 %1435
      %1439 = vset.pattern.permute.xlu0 0
      %1440 = vperm.xlu0 %1439, %v1376
      %v1441 = vpop.permute.xlu0 %1440
      %1444 = vset.pattern.permute.xlu0 0
      %1445 = vperm.xlu0 %1444, %v1377
      %v1446 = vpop.permute.xlu0 %1445
      %v1448 = vlaneseq
      %v1449 = vshrl.u32 %v1448, 7
      %v1450 = vsub.s32 7, %v1449
      %v1451 = vrot.slane %v527, %v1450
      %v1452 = vmul.f32 %v1381, %v1451
      %v1453 = vmul.f32 %v1386, %v1451
      %v1454 = vmul.f32 %v1391, %v1451
      %v1455 = vmul.f32 %v1396, %v1451
      %v1456 = vmul.f32 %v1401, %v1451
      %v1457 = vmul.f32 %v1406, %v1451
      %v1458 = vmul.f32 %v1411, %v1451
      %v1459 = vmul.f32 %v1416, %v1451
      %v1460 = vmul.f32 %v1421, %v1451
      %v1461 = vmul.f32 %v1426, %v1451
      %v1462 = vmul.f32 %v1431, %v1451
      %v1463 = vmul.f32 %v1436, %v1451
      %v1464 = vmul.f32 %v1441, %v1451
      %v1465 = vmul.f32 %v1446, %v1451
      %v1466 = vadd.f32 %v1348, %v1452
      %v1467 = vadd.f32 %v1349, %v1453
      %v1468 = vadd.f32 %v1350, %v1454
      %v1469 = vadd.f32 %v1351, %v1455
      %v1470 = vadd.f32 %v1352, %v1456
      %v1471 = vadd.f32 %v1353, %v1457
      %v1472 = vadd.f32 %v1354, %v1458
      %v1473 = vadd.f32 %v1355, %v1459
      %v1474 = vadd.f32 %v1356, %v1460
      %v1475 = vadd.f32 %v1357, %v1461
      %v1476 = vadd.f32 %v1358, %v1462
      %v1477 = vadd.f32 %v1359, %v1463
      %v1478 = vadd.f32 %v1360, %v1464
      %v1479 = vadd.f32 %v1361, %v1465
      %s1480 = sadd.s32 %s536, 58
      %s1481 = scalar_lea.vmem %s0, %s1480
      %v1482 = vld [vmem:[%s1481] sm:$0xff]
      %v1483 = vld [vmem:[%s1481 + $0x8] sm:$0xff]
      %v1484 = vld [vmem:[%s1481 + $0x10] sm:$0xff]
      %v1485 = vld [vmem:[%s1481 + $0x18] sm:$0xff]
      %v1486 = vld [vmem:[%s1481 + $0x20] sm:$0xff]
      %v1487 = vld [vmem:[%s1481 + $0x28] sm:$0xff]
      %v1488 = vld [vmem:[%s1481 + $0x30] sm:$0xff]
      %v1489 = vld [vmem:[%s1481 + $0x38] sm:$0xff]
      %v1490 = vld [vmem:[%s1481 + $0x40] sm:$0xff]
      %v1491 = vld [vmem:[%s1481 + $0x48] sm:$0xff]
      %v1492 = vld [vmem:[%s1481 + $0x50] sm:$0xff]
      %v1493 = vld [vmem:[%s1481 + $0x58] sm:$0xff]
      %v1494 = vld [vmem:[%s1481 + $0x60] sm:$0xff]
      %v1495 = vld [vmem:[%s1481 + $0x68] sm:$0xff]
      %1497 = vset.pattern.permute.xlu0 0
      %1498 = vperm.xlu0 %1497, %v1482
      %v1499 = vpop.permute.xlu0 %1498
      %1502 = vset.pattern.permute.xlu0 0
      %1503 = vperm.xlu0 %1502, %v1483
      %v1504 = vpop.permute.xlu0 %1503
      %1507 = vset.pattern.permute.xlu0 0
      %1508 = vperm.xlu0 %1507, %v1484
      %v1509 = vpop.permute.xlu0 %1508
      %1512 = vset.pattern.permute.xlu0 0
      %1513 = vperm.xlu0 %1512, %v1485
      %v1514 = vpop.permute.xlu0 %1513
      %1517 = vset.pattern.permute.xlu0 0
      %1518 = vperm.xlu0 %1517, %v1486
      %v1519 = vpop.permute.xlu0 %1518
      %1522 = vset.pattern.permute.xlu0 0
      %1523 = vperm.xlu0 %1522, %v1487
      %v1524 = vpop.permute.xlu0 %1523
      %1527 = vset.pattern.permute.xlu0 0
      %1528 = vperm.xlu0 %1527, %v1488
      %v1529 = vpop.permute.xlu0 %1528
      %1532 = vset.pattern.permute.xlu0 0
      %1533 = vperm.xlu0 %1532, %v1489
      %v1534 = vpop.permute.xlu0 %1533
      %1537 = vset.pattern.permute.xlu0 0
      %1538 = vperm.xlu0 %1537, %v1490
      %v1539 = vpop.permute.xlu0 %1538
      %1542 = vset.pattern.permute.xlu0 0
      %1543 = vperm.xlu0 %1542, %v1491
      %v1544 = vpop.permute.xlu0 %1543
      %1547 = vset.pattern.permute.xlu0 0
      %1548 = vperm.xlu0 %1547, %v1492
      %v1549 = vpop.permute.xlu0 %1548
      %1552 = vset.pattern.permute.xlu0 0
      %1553 = vperm.xlu0 %1552, %v1493
      %v1554 = vpop.permute.xlu0 %1553
      %1557 = vset.pattern.permute.xlu0 0
      %1558 = vperm.xlu0 %1557, %v1494
      %v1559 = vpop.permute.xlu0 %1558
      %1562 = vset.pattern.permute.xlu0 0
      %1563 = vperm.xlu0 %1562, %v1495
      %v1564 = vpop.permute.xlu0 %1563
      %v1566 = vlaneseq
      %v1567 = vshrl.u32 %v1566, 7
      %v1568 = vsub.s32 0, %v1567
      %v1569 = vrot.slane %v528, %v1568
      %v1570 = vmul.f32 %v1499, %v1569
      %v1571 = vmul.f32 %v1504, %v1569
      %v1572 = vmul.f32 %v1509, %v1569
      %v1573 = vmul.f32 %v1514, %v1569
      %v1574 = vmul.f32 %v1519, %v1569
      %v1575 = vmul.f32 %v1524, %v1569
      %v1576 = vmul.f32 %v1529, %v1569
      %v1577 = vmul.f32 %v1534, %v1569
      %v1578 = vmul.f32 %v1539, %v1569
      %v1579 = vmul.f32 %v1544, %v1569
      %v1580 = vmul.f32 %v1549, %v1569
      %v1581 = vmul.f32 %v1554, %v1569
      %v1582 = vmul.f32 %v1559, %v1569
      %v1583 = vmul.f32 %v1564, %v1569
      %v1584 = vadd.f32 %v1466, %v1570
      %v1585 = vadd.f32 %v1467, %v1571
      %v1586 = vadd.f32 %v1468, %v1572
      %v1587 = vadd.f32 %v1469, %v1573
      %v1588 = vadd.f32 %v1470, %v1574
      %v1589 = vadd.f32 %v1471, %v1575
      %v1590 = vadd.f32 %v1472, %v1576
      %v1591 = vadd.f32 %v1473, %v1577
      %v1592 = vadd.f32 %v1474, %v1578
      %v1593 = vadd.f32 %v1475, %v1579
      %v1594 = vadd.f32 %v1476, %v1580
      %v1595 = vadd.f32 %v1477, %v1581
      %v1596 = vadd.f32 %v1478, %v1582
      %v1597 = vadd.f32 %v1479, %v1583
      %v1599 = vlaneseq
      %v1600 = vshrl.u32 %v1599, 7
      %v1601 = vsub.s32 0, %v1600
      %v1602 = vrot.slane %v529, %v1601
      %v1604 = vadd.f32 %v1584, %v1602
      %v1605 = vadd.f32 %v1585, %v1602
      %v1606 = vadd.f32 %v1586, %v1602
      %v1607 = vadd.f32 %v1587, %v1602
      %v1608 = vadd.f32 %v1588, %v1602
      %v1609 = vadd.f32 %v1589, %v1602
      %v1610 = vadd.f32 %v1590, %v1602
      %v1611 = vadd.f32 %v1591, %v1602
      %v1612 = vadd.f32 %v1592, %v1602
      %v1613 = vadd.f32 %v1593, %v1602
      %v1614 = vadd.f32 %v1594, %v1602
      %v1615 = vadd.f32 %v1595, %v1602
      %v1616 = vadd.f32 %v1596, %v1602
      %v1617 = vadd.f32 %v1597, %v1602
      %v1618 = vmax.f32 %v1604, 0.0
      %v1619 = vmax.f32 %v1605, 0.0
      %v1620 = vmax.f32 %v1606, 0.0
      %v1621 = vmax.f32 %v1607, 0.0
      %v1622 = vmax.f32 %v1608, 0.0
      %v1623 = vmax.f32 %v1609, 0.0
      %v1624 = vmax.f32 %v1610, 0.0
      %v1625 = vmax.f32 %v1611, 0.0
      %v1626 = vmax.f32 %v1612, 0.0
      %v1627 = vmax.f32 %v1613, 0.0
      %v1628 = vmax.f32 %v1614, 0.0
      %v1629 = vmax.f32 %v1615, 0.0
      %v1630 = vmax.f32 %v1616, 0.0
      %v1631 = vmax.f32 %v1617, 0.0
      %s1632 = scalar_lea.vmem [#allocation2], %s536
      %vm1633 = vcmask 130048
      %1634 = vst.msk [vmem:[%s1632] sm:$0xff] %vm1633, %v1618
      %1635 = vst.msk [vmem:[%s1632 + $0x8] sm:$0xff] %vm1633, %v1619
      %1636 = vst.msk [vmem:[%s1632 + $0x10] sm:$0xff] %vm1633, %v1620
      %1637 = vst.msk [vmem:[%s1632 + $0x18] sm:$0xff] %vm1633, %v1621
      %1638 = vst.msk [vmem:[%s1632 + $0x20] sm:$0xff] %vm1633, %v1622
      %1639 = vst.msk [vmem:[%s1632 + $0x28] sm:$0xff] %vm1633, %v1623
      %1640 = vst.msk [vmem:[%s1632 + $0x30] sm:$0xff] %vm1633, %v1624
      %1641 = vst.msk [vmem:[%s1632 + $0x38] sm:$0xff] %vm1633, %v1625
      %1642 = vst.msk [vmem:[%s1632 + $0x40] sm:$0xff] %vm1633, %v1626
      %1643 = vst.msk [vmem:[%s1632 + $0x48] sm:$0xff] %vm1633, %v1627
      %1644 = vst.msk [vmem:[%s1632 + $0x50] sm:$0xff] %vm1633, %v1628
      %1645 = vst.msk [vmem:[%s1632 + $0x58] sm:$0xff] %vm1633, %v1629
      %1646 = vst.msk [vmem:[%s1632 + $0x60] sm:$0xff] %vm1633, %v1630
      %1647 = vst.msk [vmem:[%s1632 + $0x68] sm:$0xff] %vm1633, %v1631
    $region58: #{tpu_custom_call.1} parent=1 // loop_footer
      %s535 = sadd.s32 1, %s531
    $region59: #{tpu_custom_call.1} parent=1 // loop_footer_branch
      %530 = sbr.rel target = $region55
    $region60: #{tpu_custom_call.1} parent=1 // loop_exit
      _
    %v1648 = vld [vmem:[%s3] sm:$0xff]
    %v1649 = vld [vmem:[%s3 + $0x8] sm:$0xff]
    %v1650 = vld [vmem:[%s3 + $0x10] sm:$0xff]
    %v1651 = vld [vmem:[%s3 + $0x18] sm:$0xff]
    %v1652 = vld [vmem:[%s3 + $0x20] sm:$0xff]
    %v1653 = vld [vmem:[%s3 + $0x28] sm:$0xff]
    %v1654 = vld [vmem:[%s3 + $0x30] sm:$0xff]
    %v1655 = vld [vmem:[%s3 + $0x38] sm:$0xff]
    %v1656 = vld [vmem:[%s3 + $0x40] sm:$0xff]
    %v1657 = vld [vmem:[%s3 + $0x48] sm:$0xff]
    %v1658 = vld [vmem:[%s3 + $0x50] sm:$0xff]
    %v1659 = vld [vmem:[%s3 + $0x58] sm:$0xff]
    %v1660 = vld [vmem:[%s3 + $0x60] sm:$0xff]
    %v1661 = vld [vmem:[%s3 + $0x68] sm:$0xff]
    %v1662 = vld [vmem:[%s3 + $0x70] sm:$0xff]
    %v1663 = vld [vmem:[%s3 + $0x78] sm:$0xff]
    %v1664 = vld [vmem:[%s3 + $0x80] sm:$0xff]
    %v1665 = vld [vmem:[%s3 + $0x88] sm:$0xff]
    %v1666 = vld [vmem:[%s4] sm:$0x1]
    %v1667 = vpack.c.bf16 %v1649, %v1648
    %v1668 = vpack.c.bf16 %v1651, %v1650
    %v1669 = vpack.c.bf16 %v1653, %v1652
    %v1670 = vpack.c.bf16 %v1655, %v1654
    %v1671 = vpack.c.bf16 %v1657, %v1656
    %v1672 = vpack.c.bf16 %v1659, %v1658
    %v1673 = vpack.c.bf16 %v1661, %v1660
    %v1674 = vpack.c.bf16 %v1663, %v1662
    %v1675 = vpack.c.bf16 %v1665, %v1664
    loop: start=0, step=1, limit=14
    $region61: #{tpu_custom_call.1} parent=1 // loop_pre_header
      _
    $region62: #{tpu_custom_call.1} parent=1 // loop_header
      %s1677 = sphi 0, %s1681
      %p1678 = scmp.ge.s32.totalorder %s1677, 14
    $region63: #{tpu_custom_call.1} parent=1 // loop_header_branch
      %1680 = sbr.rel (%p1678) target = $region67
    $region64: #{tpu_custom_call.1} parent=1 // loop_body
      %s1682 = smul.u32 %s1677, 112
      %s1683 = scalar_lea.vmem [#allocation2], %s1682
      %v1684 = vld [vmem:[%s1683] sm:$0xff]
      %v1685 = vld [vmem:[%s1683 + $0x8] sm:$0xff]
      %v1686 = vld [vmem:[%s1683 + $0x10] sm:$0xff]
      %v1687 = vld [vmem:[%s1683 + $0x18] sm:$0xff]
      %v1688 = vld [vmem:[%s1683 + $0x20] sm:$0xff]
      %v1689 = vld [vmem:[%s1683 + $0x28] sm:$0xff]
      %v1690 = vld [vmem:[%s1683 + $0x30] sm:$0xff]
      %v1691 = vld [vmem:[%s1683 + $0x38] sm:$0xff]
      %v1692 = vld [vmem:[%s1683 + $0x40] sm:$0xff]
      %v1693 = vld [vmem:[%s1683 + $0x48] sm:$0xff]
      %v1694 = vld [vmem:[%s1683 + $0x50] sm:$0xff]
      %v1695 = vld [vmem:[%s1683 + $0x58] sm:$0xff]
      %v1696 = vld [vmem:[%s1683 + $0x60] sm:$0xff]
      %v1697 = vld [vmem:[%s1683 + $0x68] sm:$0xff]
      %v1698 = vpack.c.bf16 %v1685, %v1684
      %v1699 = vpack.c.bf16 %v1687, %v1686
      %v1700 = vpack.c.bf16 %v1689, %v1688
      %v1701 = vpack.c.bf16 %v1691, %v1690
      %v1702 = vpack.c.bf16 %v1693, %v1692
      %v1703 = vpack.c.bf16 %v1695, %v1694
      %v1704 = vpack.c.bf16 %v1697, %v1696
      %s1705 = sadd.s32 %s1682, 1
      %s1706 = scalar_lea.vmem [#allocation2], %s1705
      %v1707 = vld [vmem:[%s1706] sm:$0xff]
      %v1708 = vld [vmem:[%s1706 + $0x8] sm:$0xff]
      %v1709 = vld [vmem:[%s1706 + $0x10] sm:$0xff]
      %v1710 = vld [vmem:[%s1706 + $0x18] sm:$0xff]
      %v1711 = vld [vmem:[%s1706 + $0x20] sm:$0xff]
      %v1712 = vld [vmem:[%s1706 + $0x28] sm:$0xff]
      %v1713 = vld [vmem:[%s1706 + $0x30] sm:$0xff]
      %v1714 = vld [vmem:[%s1706 + $0x38] sm:$0xff]
      %v1715 = vld [vmem:[%s1706 + $0x40] sm:$0xff]
      %v1716 = vld [vmem:[%s1706 + $0x48] sm:$0xff]
      %v1717 = vld [vmem:[%s1706 + $0x50] sm:$0xff]
      %v1718 = vld [vmem:[%s1706 + $0x58] sm:$0xff]
      %v1719 = vld [vmem:[%s1706 + $0x60] sm:$0xff]
      %v1720 = vld [vmem:[%s1706 + $0x68] sm:$0xff]
      %v1721 = vpack.c.bf16 %v1708, %v1707
      %v1722 = vpack.c.bf16 %v1710, %v1709
      %v1723 = vpack.c.bf16 %v1712, %v1711
      %v1724 = vpack.c.bf16 %v1714, %v1713
      %v1725 = vpack.c.bf16 %v1716, %v1715
      %v1726 = vpack.c.bf16 %v1718, %v1717
      %v1727 = vpack.c.bf16 %v1720, %v1719
      %vm1728 = vcmask 130048
      %v1730 = vsel %vm1728, %v1721, 0
      %v1733 = vsel %vm1728, %v1722, 0
      %v1736 = vsel %vm1728, %v1723, 0
      %v1739 = vsel %vm1728, %v1724, 0
      %v1742 = vsel %vm1728, %v1725, 0
      %v1745 = vsel %vm1728, %v1726, 0
      %v1748 = vsel %vm1728, %v1727, 0
      %1750 = vmatprep.subr.bf16.mxu0 0
      %1751 = vmatpush1.bf16.msra.mxu0 0
      %1752 = vmatprep.subr.bf16.mxu0 0
      %1753 = vmatpush1.bf16.msra.mxu0 0
      %1754 = vmatprep.subr.bf16.mxu0 0
      %1755 = vmatpush1.bf16.msra.mxu0 0
      %1756 = vmatprep.subr.bf16.mxu0 0
      %1757 = vmatpush1.bf16.msra.mxu0 0
      %1758 = vmatprep.subr.bf16.mxu0 0
      %1759 = vmatpush1.bf16.msra.mxu0 0
      %1760 = vmatprep.subr.bf16.mxu0 0
      %1761 = vmatpush1.bf16.msra.mxu0 0
      %1762 = vmatprep.subr.bf16.mxu0 0
      %1763 = vmatpush1.bf16.msra.mxu0 0
      %1764 = vmatprep.subr.bf16.mxu0 0
      %1765 = vmatpush1.bf16.msra.mxu0 %v1668
      %1766 = vmatprep.subr.bf16.mxu0 0
      %1767 = vmatpush2.bf16.msra.mxu0 0
      %1768 = vmatprep.subr.bf16.mxu0 0
      %1769 = vmatpush2.bf16.msra.mxu0 0
      %1770 = vmatprep.subr.bf16.mxu0 0
      %1771 = vmatpush2.bf16.msra.mxu0 0
      %1772 = vmatprep.subr.bf16.mxu0 0
      %1773 = vmatpush2.bf16.msra.mxu0 0
      %1774 = vmatprep.subr.bf16.mxu0 0
      %1775 = vmatpush2.bf16.msra.mxu0 0
      %1776 = vmatprep.subr.bf16.mxu0 0
      %1777 = vmatpush2.bf16.msra.mxu0 0
      %1778 = vmatprep.subr.bf16.mxu0 0
      %1779 = vmatpush2.bf16.msra.mxu0 0
      %1780 = vmatprep.subr.bf16.mxu0 0
      %1781 = vmatpush2.bf16.msra.mxu0 0
      %1782 = vmatprep.mubr.bf16.mxu0 0
      %1783 = vmatmul.mubr.bf16.gmra.mxu0 %v1730
      %v1784 = vpop.f32.mrf.mxu0
      %v1785 = vadd.f32 0.0, %v1784
      %v1786 = vpop.f32.mrf.mxu0
      %v1787 = vpop.f32.mrf.mxu0
      %v1788 = vadd.f32 0.0, %v1787
      %v1789 = vpop.f32.mrf.mxu0
      %1790 = vmatprep.mubr.bf16.mxu0 0
      %1791 = vmatmul.mubr.bf16.gmra.mxu0 %v1733
      %v1792 = vpop.f32.mrf.mxu0
      %v1793 = vadd.f32 0.0, %v1792
      %v1794 = vpop.f32.mrf.mxu0
      %v1795 = vpop.f32.mrf.mxu0
      %v1796 = vadd.f32 0.0, %v1795
      %v1797 = vpop.f32.mrf.mxu0
      %1798 = vmatprep.mubr.bf16.mxu0 0
      %1799 = vmatmul.mubr.bf16.gmra.mxu0 %v1736
      %v1800 = vpop.f32.mrf.mxu0
      %v1801 = vadd.f32 0.0, %v1800
      %v1802 = vpop.f32.mrf.mxu0
      %v1803 = vpop.f32.mrf.mxu0
      %v1804 = vadd.f32 0.0, %v1803
      %v1805 = vpop.f32.mrf.mxu0
      %1806 = vmatprep.mubr.bf16.mxu0 0
      %1807 = vmatmul.mubr.bf16.gmra.mxu0 %v1739
      %v1808 = vpop.f32.mrf.mxu0
      %v1809 = vadd.f32 0.0, %v1808
      %v1810 = vpop.f32.mrf.mxu0
      %v1811 = vpop.f32.mrf.mxu0
      %v1812 = vadd.f32 0.0, %v1811
      %v1813 = vpop.f32.mrf.mxu0
      %1814 = vmatprep.mubr.bf16.mxu0 0
      %1815 = vmatmul.mubr.bf16.gmra.mxu0 %v1742
      %v1816 = vpop.f32.mrf.mxu0
      %v1817 = vadd.f32 0.0, %v1816
      %v1818 = vpop.f32.mrf.mxu0
      %v1819 = vpop.f32.mrf.mxu0
      %v1820 = vadd.f32 0.0, %v1819
      %v1821 = vpop.f32.mrf.mxu0
      %1822 = vmatprep.mubr.bf16.mxu0 0
      %1823 = vmatmul.mubr.bf16.gmra.mxu0 %v1745
      %v1824 = vpop.f32.mrf.mxu0
      %v1825 = vadd.f32 0.0, %v1824
      %v1826 = vpop.f32.mrf.mxu0
      %v1827 = vpop.f32.mrf.mxu0
      %v1828 = vadd.f32 0.0, %v1827
      %v1829 = vpop.f32.mrf.mxu0
      %1830 = vmatprep.mubr.bf16.mxu0 0
      %1831 = vmatmul.mubr.bf16.gmra.mxu0 %v1748
      %v1832 = vpop.f32.mrf.mxu0
      %v1833 = vadd.f32 0.0, %v1832
      %v1834 = vpop.f32.mrf.mxu0
      %v1835 = vpop.f32.mrf.mxu0
      %v1836 = vadd.f32 0.0, %v1835
      %v1837 = vpop.f32.mrf.mxu0
      %1838 = vdwg.mxu0
      %v1840 = vsel %vm1728, %v1698, 0
      %v1843 = vsel %vm1728, %v1699, 0
      %v1846 = vsel %vm1728, %v1700, 0
      %v1849 = vsel %vm1728, %v1701, 0
      %v1852 = vsel %vm1728, %v1702, 0
      %v1855 = vsel %vm1728, %v1703, 0
      %v1858 = vsel %vm1728, %v1704, 0
      %1860 = vmatprep.subr.bf16.mxu0 0
      %1861 = vmatpush1.bf16.msra.mxu0 0
      %1862 = vmatprep.subr.bf16.mxu0 0
      %1863 = vmatpush1.bf16.msra.mxu0 0
      %1864 = vmatprep.subr.bf16.mxu0 0
      %1865 = vmatpush1.bf16.msra.mxu0 0
      %1866 = vmatprep.subr.bf16.mxu0 0
      %1867 = vmatpush1.bf16.msra.mxu0 0
      %1868 = vmatprep.subr.bf16.mxu0 0
      %1869 = vmatpush1.bf16.msra.mxu0 0
      %1870 = vmatprep.subr.bf16.mxu0 0
      %1871 = vmatpush1.bf16.msra.mxu0 0
      %1872 = vmatprep.subr.bf16.mxu0 0
      %1873 = vmatpush1.bf16.msra.mxu0 0
      %1874 = vmatprep.subr.bf16.mxu0 0
      %1875 = vmatpush1.bf16.msra.mxu0 %v1667
      %1876 = vmatprep.subr.bf16.mxu0 0
      %1877 = vmatpush2.bf16.msra.mxu0 0
      %1878 = vmatprep.subr.bf16.mxu0 0
      %1879 = vmatpush2.bf16.msra.mxu0 0
      %1880 = vmatprep.subr.bf16.mxu0 0
      %1881 = vmatpush2.bf16.msra.mxu0 0
      %1882 = vmatprep.subr.bf16.mxu0 0
      %1883 = vmatpush2.bf16.msra.mxu0 0
      %1884 = vmatprep.subr.bf16.mxu0 0
      %1885 = vmatpush2.bf16.msra.mxu0 0
      %1886 = vmatprep.subr.bf16.mxu0 0
      %1887 = vmatpush2.bf16.msra.mxu0 0
      %1888 = vmatprep.subr.bf16.mxu0 0
      %1889 = vmatpush2.bf16.msra.mxu0 0
      %1890 = vmatprep.subr.bf16.mxu0 0
      %1891 = vmatpush2.bf16.msra.mxu0 0
      %1892 = vmatprep.mubr.bf16.mxu0 0
      %1893 = vmatmul.mubr.bf16.gmra.mxu0 %v1840
      %v1894 = vpop.f32.mrf.mxu0
      %v1895 = vadd.f32 %v1785, %v1894
      %v1896 = vpop.f32.mrf.mxu0
      %v1897 = vpop.f32.mrf.mxu0
      %v1898 = vadd.f32 %v1788, %v1897
      %v1899 = vpop.f32.mrf.mxu0
      %1900 = vmatprep.mubr.bf16.mxu0 0
      %1901 = vmatmul.mubr.bf16.gmra.mxu0 %v1843
      %v1902 = vpop.f32.mrf.mxu0
      %v1903 = vadd.f32 %v1793, %v1902
      %v1904 = vpop.f32.mrf.mxu0
      %v1905 = vpop.f32.mrf.mxu0
      %v1906 = vadd.f32 %v1796, %v1905
      %v1907 = vpop.f32.mrf.mxu0
      %1908 = vmatprep.mubr.bf16.mxu0 0
      %1909 = vmatmul.mubr.bf16.gmra.mxu0 %v1846
      %v1910 = vpop.f32.mrf.mxu0
      %v1911 = vadd.f32 %v1801, %v1910
      %v1912 = vpop.f32.mrf.mxu0
      %v1913 = vpop.f32.mrf.mxu0
      %v1914 = vadd.f32 %v1804, %v1913
      %v1915 = vpop.f32.mrf.mxu0
      %1916 = vmatprep.mubr.bf16.mxu0 0
      %1917 = vmatmul.mubr.bf16.gmra.mxu0 %v1849
      %v1918 = vpop.f32.mrf.mxu0
      %v1919 = vadd.f32 %v1809, %v1918
      %v1920 = vpop.f32.mrf.mxu0
      %v1921 = vpop.f32.mrf.mxu0
      %v1922 = vadd.f32 %v1812, %v1921
      %v1923 = vpop.f32.mrf.mxu0
      %1924 = vmatprep.mubr.bf16.mxu0 0
      %1925 = vmatmul.mubr.bf16.gmra.mxu0 %v1852
      %v1926 = vpop.f32.mrf.mxu0
      %v1927 = vadd.f32 %v1817, %v1926
      %v1928 = vpop.f32.mrf.mxu0
      %v1929 = vpop.f32.mrf.mxu0
      %v1930 = vadd.f32 %v1820, %v1929
      %v1931 = vpop.f32.mrf.mxu0
      %1932 = vmatprep.mubr.bf16.mxu0 0
      %1933 = vmatmul.mubr.bf16.gmra.mxu0 %v1855
      %v1934 = vpop.f32.mrf.mxu0
      %v1935 = vadd.f32 %v1825, %v1934
      %v1936 = vpop.f32.mrf.mxu0
      %v1937 = vpop.f32.mrf.mxu0
      %v1938 = vadd.f32 %v1828, %v1937
      %v1939 = vpop.f32.mrf.mxu0
      %1940 = vmatprep.mubr.bf16.mxu0 0
      %1941 = vmatmul.mubr.bf16.gmra.mxu0 %v1858
      %v1942 = vpop.f32.mrf.mxu0
      %v1943 = vadd.f32 %v1833, %v1942
      %v1944 = vpop.f32.mrf.mxu0
      %v1945 = vpop.f32.mrf.mxu0
      %v1946 = vadd.f32 %v1836, %v1945
      %v1947 = vpop.f32.mrf.mxu0
      %1948 = vdwg.mxu0
      %s1949 = sadd.s32 %s1682, 2
      %s1950 = scalar_lea.vmem [#allocation2], %s1949
      %v1951 = vld [vmem:[%s1950] sm:$0xff]
      %v1952 = vld [vmem:[%s1950 + $0x8] sm:$0xff]
      %v1953 = vld [vmem:[%s1950 + $0x10] sm:$0xff]
      %v1954 = vld [vmem:[%s1950 + $0x18] sm:$0xff]
      %v1955 = vld [vmem:[%s1950 + $0x20] sm:$0xff]
      %v1956 = vld [vmem:[%s1950 + $0x28] sm:$0xff]
      %v1957 = vld [vmem:[%s1950 + $0x30] sm:$0xff]
      %v1958 = vld [vmem:[%s1950 + $0x38] sm:$0xff]
      %v1959 = vld [vmem:[%s1950 + $0x40] sm:$0xff]
      %v1960 = vld [vmem:[%s1950 + $0x48] sm:$0xff]
      %v1961 = vld [vmem:[%s1950 + $0x50] sm:$0xff]
      %v1962 = vld [vmem:[%s1950 + $0x58] sm:$0xff]
      %v1963 = vld [vmem:[%s1950 + $0x60] sm:$0xff]
      %v1964 = vld [vmem:[%s1950 + $0x68] sm:$0xff]
      %v1965 = vpack.c.bf16 %v1952, %v1951
      %v1966 = vpack.c.bf16 %v1954, %v1953
      %v1967 = vpack.c.bf16 %v1956, %v1955
      %v1968 = vpack.c.bf16 %v1958, %v1957
      %v1969 = vpack.c.bf16 %v1960, %v1959
      %v1970 = vpack.c.bf16 %v1962, %v1961
      %v1971 = vpack.c.bf16 %v1964, %v1963
      %v1973 = vsel %vm1728, %v1965, 0
      %v1976 = vsel %vm1728, %v1966, 0
      %v1979 = vsel %vm1728, %v1967, 0
      %v1982 = vsel %vm1728, %v1968, 0
      %v1985 = vsel %vm1728, %v1969, 0
      %v1988 = vsel %vm1728, %v1970, 0
      %v1991 = vsel %vm1728, %v1971, 0
      %1993 = vmatprep.subr.bf16.mxu0 0
      %1994 = vmatpush1.bf16.msra.mxu0 0
      %1995 = vmatprep.subr.bf16.mxu0 0
      %1996 = vmatpush1.bf16.msra.mxu0 0
      %1997 = vmatprep.subr.bf16.mxu0 0
      %1998 = vmatpush1.bf16.msra.mxu0 0
      %1999 = vmatprep.subr.bf16.mxu0 0
      %2000 = vmatpush1.bf16.msra.mxu0 0
      %2001 = vmatprep.subr.bf16.mxu0 0
      %2002 = vmatpush1.bf16.msra.mxu0 0
      %2003 = vmatprep.subr.bf16.mxu0 0
      %2004 = vmatpush1.bf16.msra.mxu0 0
      %2005 = vmatprep.subr.bf16.mxu0 0
      %2006 = vmatpush1.bf16.msra.mxu0 0
      %2007 = vmatprep.subr.bf16.mxu0 0
      %2008 = vmatpush1.bf16.msra.mxu0 %v1669
      %2009 = vmatprep.subr.bf16.mxu0 0
      %2010 = vmatpush2.bf16.msra.mxu0 0
      %2011 = vmatprep.subr.bf16.mxu0 0
      %2012 = vmatpush2.bf16.msra.mxu0 0
      %2013 = vmatprep.subr.bf16.mxu0 0
      %2014 = vmatpush2.bf16.msra.mxu0 0
      %2015 = vmatprep.subr.bf16.mxu0 0
      %2016 = vmatpush2.bf16.msra.mxu0 0
      %2017 = vmatprep.subr.bf16.mxu0 0
      %2018 = vmatpush2.bf16.msra.mxu0 0
      %2019 = vmatprep.subr.bf16.mxu0 0
      %2020 = vmatpush2.bf16.msra.mxu0 0
      %2021 = vmatprep.subr.bf16.mxu0 0
      %2022 = vmatpush2.bf16.msra.mxu0 0
      %2023 = vmatprep.subr.bf16.mxu0 0
      %2024 = vmatpush2.bf16.msra.mxu0 0
      %2025 = vmatprep.mubr.bf16.mxu0 0
      %2026 = vmatmul.mubr.bf16.gmra.mxu0 %v1973
      %v2027 = vpop.f32.mrf.mxu0
      %v2028 = vadd.f32 0.0, %v2027
      %v2029 = vpop.f32.mrf.mxu0
      %v2030 = vpop.f32.mrf.mxu0
      %v2031 = vadd.f32 0.0, %v2030
      %v2032 = vpop.f32.mrf.mxu0
      %2033 = vmatprep.mubr.bf16.mxu0 0
      %2034 = vmatmul.mubr.bf16.gmra.mxu0 %v1976
      %v2035 = vpop.f32.mrf.mxu0
      %v2036 = vadd.f32 0.0, %v2035
      %v2037 = vpop.f32.mrf.mxu0
      %v2038 = vpop.f32.mrf.mxu0
      %v2039 = vadd.f32 0.0, %v2038
      %v2040 = vpop.f32.mrf.mxu0
      %2041 = vmatprep.mubr.bf16.mxu0 0
      %2042 = vmatmul.mubr.bf16.gmra.mxu0 %v1979
      %v2043 = vpop.f32.mrf.mxu0
      %v2044 = vadd.f32 0.0, %v2043
      %v2045 = vpop.f32.mrf.mxu0
      %v2046 = vpop.f32.mrf.mxu0
      %v2047 = vadd.f32 0.0, %v2046
      %v2048 = vpop.f32.mrf.mxu0
      %2049 = vmatprep.mubr.bf16.mxu0 0
      %2050 = vmatmul.mubr.bf16.gmra.mxu0 %v1982
      %v2051 = vpop.f32.mrf.mxu0
      %v2052 = vadd.f32 0.0, %v2051
      %v2053 = vpop.f32.mrf.mxu0
      %v2054 = vpop.f32.mrf.mxu0
      %v2055 = vadd.f32 0.0, %v2054
      %v2056 = vpop.f32.mrf.mxu0
      %2057 = vmatprep.mubr.bf16.mxu0 0
      %2058 = vmatmul.mubr.bf16.gmra.mxu0 %v1985
      %v2059 = vpop.f32.mrf.mxu0
      %v2060 = vadd.f32 0.0, %v2059
      %v2061 = vpop.f32.mrf.mxu0
      %v2062 = vpop.f32.mrf.mxu0
      %v2063 = vadd.f32 0.0, %v2062
      %v2064 = vpop.f32.mrf.mxu0
      %2065 = vmatprep.mubr.bf16.mxu0 0
      %2066 = vmatmul.mubr.bf16.gmra.mxu0 %v1988
      %v2067 = vpop.f32.mrf.mxu0
      %v2068 = vadd.f32 0.0, %v2067
      %v2069 = vpop.f32.mrf.mxu0
      %v2070 = vpop.f32.mrf.mxu0
      %v2071 = vadd.f32 0.0, %v2070
      %v2072 = vpop.f32.mrf.mxu0
      %2073 = vmatprep.mubr.bf16.mxu0 0
      %2074 = vmatmul.mubr.bf16.gmra.mxu0 %v1991
      %v2075 = vpop.f32.mrf.mxu0
      %v2076 = vadd.f32 0.0, %v2075
      %v2077 = vpop.f32.mrf.mxu0
      %v2078 = vpop.f32.mrf.mxu0
      %v2079 = vadd.f32 0.0, %v2078
      %v2080 = vpop.f32.mrf.mxu0
      %2081 = vdwg.mxu0
      %v2082 = vadd.f32 %v1895, %v2028
      %v2083 = vadd.f32 %v1898, %v2031
      %v2084 = vadd.f32 %v1903, %v2036
      %v2085 = vadd.f32 %v1906, %v2039
      %v2086 = vadd.f32 %v1911, %v2044
      %v2087 = vadd.f32 %v1914, %v2047
      %v2088 = vadd.f32 %v1919, %v2052
      %v2089 = vadd.f32 %v1922, %v2055
      %v2090 = vadd.f32 %v1927, %v2060
      %v2091 = vadd.f32 %v1930, %v2063
      %v2092 = vadd.f32 %v1935, %v2068
      %v2093 = vadd.f32 %v1938, %v2071
      %v2094 = vadd.f32 %v1943, %v2076
      %v2095 = vadd.f32 %v1946, %v2079
      %s2096 = sadd.s32 %s1682, 28
      %s2097 = scalar_lea.vmem [#allocation2], %s2096
      %v2098 = vld [vmem:[%s2097] sm:$0xff]
      %v2099 = vld [vmem:[%s2097 + $0x8] sm:$0xff]
      %v2100 = vld [vmem:[%s2097 + $0x10] sm:$0xff]
      %v2101 = vld [vmem:[%s2097 + $0x18] sm:$0xff]
      %v2102 = vld [vmem:[%s2097 + $0x20] sm:$0xff]
      %v2103 = vld [vmem:[%s2097 + $0x28] sm:$0xff]
      %v2104 = vld [vmem:[%s2097 + $0x30] sm:$0xff]
      %v2105 = vld [vmem:[%s2097 + $0x38] sm:$0xff]
      %v2106 = vld [vmem:[%s2097 + $0x40] sm:$0xff]
      %v2107 = vld [vmem:[%s2097 + $0x48] sm:$0xff]
      %v2108 = vld [vmem:[%s2097 + $0x50] sm:$0xff]
      %v2109 = vld [vmem:[%s2097 + $0x58] sm:$0xff]
      %v2110 = vld [vmem:[%s2097 + $0x60] sm:$0xff]
      %v2111 = vld [vmem:[%s2097 + $0x68] sm:$0xff]
      %v2112 = vpack.c.bf16 %v2099, %v2098
      %v2113 = vpack.c.bf16 %v2101, %v2100
      %v2114 = vpack.c.bf16 %v2103, %v2102
      %v2115 = vpack.c.bf16 %v2105, %v2104
      %v2116 = vpack.c.bf16 %v2107, %v2106
      %v2117 = vpack.c.bf16 %v2109, %v2108
      %v2118 = vpack.c.bf16 %v2111, %v2110
      %v2120 = vsel %vm1728, %v2112, 0
      %v2123 = vsel %vm1728, %v2113, 0
      %v2126 = vsel %vm1728, %v2114, 0
      %v2129 = vsel %vm1728, %v2115, 0
      %v2132 = vsel %vm1728, %v2116, 0
      %v2135 = vsel %vm1728, %v2117, 0
      %v2138 = vsel %vm1728, %v2118, 0
      %2140 = vmatprep.subr.bf16.mxu0 0
      %2141 = vmatpush1.bf16.msra.mxu0 0
      %2142 = vmatprep.subr.bf16.mxu0 0
      %2143 = vmatpush1.bf16.msra.mxu0 0
      %2144 = vmatprep.subr.bf16.mxu0 0
      %2145 = vmatpush1.bf16.msra.mxu0 0
      %2146 = vmatprep.subr.bf16.mxu0 0
      %2147 = vmatpush1.bf16.msra.mxu0 0
      %2148 = vmatprep.subr.bf16.mxu0 0
      %2149 = vmatpush1.bf16.msra.mxu0 0
      %2150 = vmatprep.subr.bf16.mxu0 0
      %2151 = vmatpush1.bf16.msra.mxu0 0
      %2152 = vmatprep.subr.bf16.mxu0 0
      %2153 = vmatpush1.bf16.msra.mxu0 0
      %2154 = vmatprep.subr.bf16.mxu0 0
      %2155 = vmatpush1.bf16.msra.mxu0 %v1670
      %2156 = vmatprep.subr.bf16.mxu0 0
      %2157 = vmatpush2.bf16.msra.mxu0 0
      %2158 = vmatprep.subr.bf16.mxu0 0
      %2159 = vmatpush2.bf16.msra.mxu0 0
      %2160 = vmatprep.subr.bf16.mxu0 0
      %2161 = vmatpush2.bf16.msra.mxu0 0
      %2162 = vmatprep.subr.bf16.mxu0 0
      %2163 = vmatpush2.bf16.msra.mxu0 0
      %2164 = vmatprep.subr.bf16.mxu0 0
      %2165 = vmatpush2.bf16.msra.mxu0 0
      %2166 = vmatprep.subr.bf16.mxu0 0
      %2167 = vmatpush2.bf16.msra.mxu0 0
      %2168 = vmatprep.subr.bf16.mxu0 0
      %2169 = vmatpush2.bf16.msra.mxu0 0
      %2170 = vmatprep.subr.bf16.mxu0 0
      %2171 = vmatpush2.bf16.msra.mxu0 0
      %2172 = vmatprep.mubr.bf16.mxu0 0
      %2173 = vmatmul.mubr.bf16.gmra.mxu0 %v2120
      %v2174 = vpop.f32.mrf.mxu0
      %v2175 = vadd.f32 0.0, %v2174
      %v2176 = vpop.f32.mrf.mxu0
      %v2177 = vpop.f32.mrf.mxu0
      %v2178 = vadd.f32 0.0, %v2177
      %v2179 = vpop.f32.mrf.mxu0
      %2180 = vmatprep.mubr.bf16.mxu0 0
      %2181 = vmatmul.mubr.bf16.gmra.mxu0 %v2123
      %v2182 = vpop.f32.mrf.mxu0
      %v2183 = vadd.f32 0.0, %v2182
      %v2184 = vpop.f32.mrf.mxu0
      %v2185 = vpop.f32.mrf.mxu0
      %v2186 = vadd.f32 0.0, %v2185
      %v2187 = vpop.f32.mrf.mxu0
      %2188 = vmatprep.mubr.bf16.mxu0 0
      %2189 = vmatmul.mubr.bf16.gmra.mxu0 %v2126
      %v2190 = vpop.f32.mrf.mxu0
      %v2191 = vadd.f32 0.0, %v2190
      %v2192 = vpop.f32.mrf.mxu0
      %v2193 = vpop.f32.mrf.mxu0
      %v2194 = vadd.f32 0.0, %v2193
      %v2195 = vpop.f32.mrf.mxu0
      %2196 = vmatprep.mubr.bf16.mxu0 0
      %2197 = vmatmul.mubr.bf16.gmra.mxu0 %v2129
      %v2198 = vpop.f32.mrf.mxu0
      %v2199 = vadd.f32 0.0, %v2198
      %v2200 = vpop.f32.mrf.mxu0
      %v2201 = vpop.f32.mrf.mxu0
      %v2202 = vadd.f32 0.0, %v2201
      %v2203 = vpop.f32.mrf.mxu0
      %2204 = vmatprep.mubr.bf16.mxu0 0
      %2205 = vmatmul.mubr.bf16.gmra.mxu0 %v2132
      %v2206 = vpop.f32.mrf.mxu0
      %v2207 = vadd.f32 0.0, %v2206
      %v2208 = vpop.f32.mrf.mxu0
      %v2209 = vpop.f32.mrf.mxu0
      %v2210 = vadd.f32 0.0, %v2209
      %v2211 = vpop.f32.mrf.mxu0
      %2212 = vmatprep.mubr.bf16.mxu0 0
      %2213 = vmatmul.mubr.bf16.gmra.mxu0 %v2135
      %v2214 = vpop.f32.mrf.mxu0
      %v2215 = vadd.f32 0.0, %v2214
      %v2216 = vpop.f32.mrf.mxu0
      %v2217 = vpop.f32.mrf.mxu0
      %v2218 = vadd.f32 0.0, %v2217
      %v2219 = vpop.f32.mrf.mxu0
      %2220 = vmatprep.mubr.bf16.mxu0 0
      %2221 = vmatmul.mubr.bf16.gmra.mxu0 %v2138
      %v2222 = vpop.f32.mrf.mxu0
      %v2223 = vadd.f32 0.0, %v2222
      %v2224 = vpop.f32.mrf.mxu0
      %v2225 = vpop.f32.mrf.mxu0
      %v2226 = vadd.f32 0.0, %v2225
      %v2227 = vpop.f32.mrf.mxu0
      %2228 = vdwg.mxu0
      %v2229 = vadd.f32 %v2082, %v2175
      %v2230 = vadd.f32 %v2083, %v2178
      %v2231 = vadd.f32 %v2084, %v2183
      %v2232 = vadd.f32 %v2085, %v2186
      %v2233 = vadd.f32 %v2086, %v2191
      %v2234 = vadd.f32 %v2087, %v2194
      %v2235 = vadd.f32 %v2088, %v2199
      %v2236 = vadd.f32 %v2089, %v2202
      %v2237 = vadd.f32 %v2090, %v2207
      %v2238 = vadd.f32 %v2091, %v2210
      %v2239 = vadd.f32 %v2092, %v2215
      %v2240 = vadd.f32 %v2093, %v2218
      %v2241 = vadd.f32 %v2094, %v2223
      %v2242 = vadd.f32 %v2095, %v2226
      %s2243 = sadd.s32 %s1682, 29
      %s2244 = scalar_lea.vmem [#allocation2], %s2243
      %v2245 = vld [vmem:[%s2244] sm:$0xff]
      %v2246 = vld [vmem:[%s2244 + $0x8] sm:$0xff]
      %v2247 = vld [vmem:[%s2244 + $0x10] sm:$0xff]
      %v2248 = vld [vmem:[%s2244 + $0x18] sm:$0xff]
      %v2249 = vld [vmem:[%s2244 + $0x20] sm:$0xff]
      %v2250 = vld [vmem:[%s2244 + $0x28] sm:$0xff]
      %v2251 = vld [vmem:[%s2244 + $0x30] sm:$0xff]
      %v2252 = vld [vmem:[%s2244 + $0x38] sm:$0xff]
      %v2253 = vld [vmem:[%s2244 + $0x40] sm:$0xff]
      %v2254 = vld [vmem:[%s2244 + $0x48] sm:$0xff]
      %v2255 = vld [vmem:[%s2244 + $0x50] sm:$0xff]
      %v2256 = vld [vmem:[%s2244 + $0x58] sm:$0xff]
      %v2257 = vld [vmem:[%s2244 + $0x60] sm:$0xff]
      %v2258 = vld [vmem:[%s2244 + $0x68] sm:$0xff]
      %v2259 = vpack.c.bf16 %v2246, %v2245
      %v2260 = vpack.c.bf16 %v2248, %v2247
      %v2261 = vpack.c.bf16 %v2250, %v2249
      %v2262 = vpack.c.bf16 %v2252, %v2251
      %v2263 = vpack.c.bf16 %v2254, %v2253
      %v2264 = vpack.c.bf16 %v2256, %v2255
      %v2265 = vpack.c.bf16 %v2258, %v2257
      %v2267 = vsel %vm1728, %v2259, 0
      %v2270 = vsel %vm1728, %v2260, 0
      %v2273 = vsel %vm1728, %v2261, 0
      %v2276 = vsel %vm1728, %v2262, 0
      %v2279 = vsel %vm1728, %v2263, 0
      %v2282 = vsel %vm1728, %v2264, 0
      %v2285 = vsel %vm1728, %v2265, 0
      %2287 = vmatprep.subr.bf16.mxu0 0
      %2288 = vmatpush1.bf16.msra.mxu0 0
      %2289 = vmatprep.subr.bf16.mxu0 0
      %2290 = vmatpush1.bf16.msra.mxu0 0
      %2291 = vmatprep.subr.bf16.mxu0 0
      %2292 = vmatpush1.bf16.msra.mxu0 0
      %2293 = vmatprep.subr.bf16.mxu0 0
      %2294 = vmatpush1.bf16.msra.mxu0 0
      %2295 = vmatprep.subr.bf16.mxu0 0
      %2296 = vmatpush1.bf16.msra.mxu0 0
      %2297 = vmatprep.subr.bf16.mxu0 0
      %2298 = vmatpush1.bf16.msra.mxu0 0
      %2299 = vmatprep.subr.bf16.mxu0 0
      %2300 = vmatpush1.bf16.msra.mxu0 0
      %2301 = vmatprep.subr.bf16.mxu0 0
      %2302 = vmatpush1.bf16.msra.mxu0 %v1671
      %2303 = vmatprep.subr.bf16.mxu0 0
      %2304 = vmatpush2.bf16.msra.mxu0 0
      %2305 = vmatprep.subr.bf16.mxu0 0
      %2306 = vmatpush2.bf16.msra.mxu0 0
      %2307 = vmatprep.subr.bf16.mxu0 0
      %2308 = vmatpush2.bf16.msra.mxu0 0
      %2309 = vmatprep.subr.bf16.mxu0 0
      %2310 = vmatpush2.bf16.msra.mxu0 0
      %2311 = vmatprep.subr.bf16.mxu0 0
      %2312 = vmatpush2.bf16.msra.mxu0 0
      %2313 = vmatprep.subr.bf16.mxu0 0
      %2314 = vmatpush2.bf16.msra.mxu0 0
      %2315 = vmatprep.subr.bf16.mxu0 0
      %2316 = vmatpush2.bf16.msra.mxu0 0
      %2317 = vmatprep.subr.bf16.mxu0 0
      %2318 = vmatpush2.bf16.msra.mxu0 0
      %2319 = vmatprep.mubr.bf16.mxu0 0
      %2320 = vmatmul.mubr.bf16.gmra.mxu0 %v2267
      %v2321 = vpop.f32.mrf.mxu0
      %v2322 = vadd.f32 0.0, %v2321
      %v2323 = vpop.f32.mrf.mxu0
      %v2324 = vpop.f32.mrf.mxu0
      %v2325 = vadd.f32 0.0, %v2324
      %v2326 = vpop.f32.mrf.mxu0
      %2327 = vmatprep.mubr.bf16.mxu0 0
      %2328 = vmatmul.mubr.bf16.gmra.mxu0 %v2270
      %v2329 = vpop.f32.mrf.mxu0
      %v2330 = vadd.f32 0.0, %v2329
      %v2331 = vpop.f32.mrf.mxu0
      %v2332 = vpop.f32.mrf.mxu0
      %v2333 = vadd.f32 0.0, %v2332
      %v2334 = vpop.f32.mrf.mxu0
      %2335 = vmatprep.mubr.bf16.mxu0 0
      %2336 = vmatmul.mubr.bf16.gmra.mxu0 %v2273
      %v2337 = vpop.f32.mrf.mxu0
      %v2338 = vadd.f32 0.0, %v2337
      %v2339 = vpop.f32.mrf.mxu0
      %v2340 = vpop.f32.mrf.mxu0
      %v2341 = vadd.f32 0.0, %v2340
      %v2342 = vpop.f32.mrf.mxu0
      %2343 = vmatprep.mubr.bf16.mxu0 0
      %2344 = vmatmul.mubr.bf16.gmra.mxu0 %v2276
      %v2345 = vpop.f32.mrf.mxu0
      %v2346 = vadd.f32 0.0, %v2345
      %v2347 = vpop.f32.mrf.mxu0
      %v2348 = vpop.f32.mrf.mxu0
      %v2349 = vadd.f32 0.0, %v2348
      %v2350 = vpop.f32.mrf.mxu0
      %2351 = vmatprep.mubr.bf16.mxu0 0
      %2352 = vmatmul.mubr.bf16.gmra.mxu0 %v2279
      %v2353 = vpop.f32.mrf.mxu0
      %v2354 = vadd.f32 0.0, %v2353
      %v2355 = vpop.f32.mrf.mxu0
      %v2356 = vpop.f32.mrf.mxu0
      %v2357 = vadd.f32 0.0, %v2356
      %v2358 = vpop.f32.mrf.mxu0
      %2359 = vmatprep.mubr.bf16.mxu0 0
      %2360 = vmatmul.mubr.bf16.gmra.mxu0 %v2282
      %v2361 = vpop.f32.mrf.mxu0
      %v2362 = vadd.f32 0.0, %v2361
      %v2363 = vpop.f32.mrf.mxu0
      %v2364 = vpop.f32.mrf.mxu0
      %v2365 = vadd.f32 0.0, %v2364
      %v2366 = vpop.f32.mrf.mxu0
      %2367 = vmatprep.mubr.bf16.mxu0 0
      %2368 = vmatmul.mubr.bf16.gmra.mxu0 %v2285
      %v2369 = vpop.f32.mrf.mxu0
      %v2370 = vadd.f32 0.0, %v2369
      %v2371 = vpop.f32.mrf.mxu0
      %v2372 = vpop.f32.mrf.mxu0
      %v2373 = vadd.f32 0.0, %v2372
      %v2374 = vpop.f32.mrf.mxu0
      %2375 = vdwg.mxu0
      %v2376 = vadd.f32 %v2229, %v2322
      %v2377 = vadd.f32 %v2230, %v2325
      %v2378 = vadd.f32 %v2231, %v2330
      %v2379 = vadd.f32 %v2232, %v2333
      %v2380 = vadd.f32 %v2233, %v2338
      %v2381 = vadd.f32 %v2234, %v2341
      %v2382 = vadd.f32 %v2235, %v2346
      %v2383 = vadd.f32 %v2236, %v2349
      %v2384 = vadd.f32 %v2237, %v2354
      %v2385 = vadd.f32 %v2238, %v2357
      %v2386 = vadd.f32 %v2239, %v2362
      %v2387 = vadd.f32 %v2240, %v2365
      %v2388 = vadd.f32 %v2241, %v2370
      %v2389 = vadd.f32 %v2242, %v2373
      %s2390 = sadd.s32 %s1682, 30
      %s2391 = scalar_lea.vmem [#allocation2], %s2390
      %v2392 = vld [vmem:[%s2391] sm:$0xff]
      %v2393 = vld [vmem:[%s2391 + $0x8] sm:$0xff]
      %v2394 = vld [vmem:[%s2391 + $0x10] sm:$0xff]
      %v2395 = vld [vmem:[%s2391 + $0x18] sm:$0xff]
      %v2396 = vld [vmem:[%s2391 + $0x20] sm:$0xff]
      %v2397 = vld [vmem:[%s2391 + $0x28] sm:$0xff]
      %v2398 = vld [vmem:[%s2391 + $0x30] sm:$0xff]
      %v2399 = vld [vmem:[%s2391 + $0x38] sm:$0xff]
      %v2400 = vld [vmem:[%s2391 + $0x40] sm:$0xff]
      %v2401 = vld [vmem:[%s2391 + $0x48] sm:$0xff]
      %v2402 = vld [vmem:[%s2391 + $0x50] sm:$0xff]
      %v2403 = vld [vmem:[%s2391 + $0x58] sm:$0xff]
      %v2404 = vld [vmem:[%s2391 + $0x60] sm:$0xff]
      %v2405 = vld [vmem:[%s2391 + $0x68] sm:$0xff]
      %v2406 = vpack.c.bf16 %v2393, %v2392
      %v2407 = vpack.c.bf16 %v2395, %v2394
      %v2408 = vpack.c.bf16 %v2397, %v2396
      %v2409 = vpack.c.bf16 %v2399, %v2398
      %v2410 = vpack.c.bf16 %v2401, %v2400
      %v2411 = vpack.c.bf16 %v2403, %v2402
      %v2412 = vpack.c.bf16 %v2405, %v2404
      %v2414 = vsel %vm1728, %v2406, 0
      %v2417 = vsel %vm1728, %v2407, 0
      %v2420 = vsel %vm1728, %v2408, 0
      %v2423 = vsel %vm1728, %v2409, 0
      %v2426 = vsel %vm1728, %v2410, 0
      %v2429 = vsel %vm1728, %v2411, 0
      %v2432 = vsel %vm1728, %v2412, 0
      %2434 = vmatprep.subr.bf16.mxu0 0
      %2435 = vmatpush1.bf16.msra.mxu0 0
      %2436 = vmatprep.subr.bf16.mxu0 0
      %2437 = vmatpush1.bf16.msra.mxu0 0
      %2438 = vmatprep.subr.bf16.mxu0 0
      %2439 = vmatpush1.bf16.msra.mxu0 0
      %2440 = vmatprep.subr.bf16.mxu0 0
      %2441 = vmatpush1.bf16.msra.mxu0 0
      %2442 = vmatprep.subr.bf16.mxu0 0
      %2443 = vmatpush1.bf16.msra.mxu0 0
      %2444 = vmatprep.subr.bf16.mxu0 0
      %2445 = vmatpush1.bf16.msra.mxu0 0
      %2446 = vmatprep.subr.bf16.mxu0 0
      %2447 = vmatpush1.bf16.msra.mxu0 0
      %2448 = vmatprep.subr.bf16.mxu0 0
      %2449 = vmatpush1.bf16.msra.mxu0 %v1672
      %2450 = vmatprep.subr.bf16.mxu0 0
      %2451 = vmatpush2.bf16.msra.mxu0 0
      %2452 = vmatprep.subr.bf16.mxu0 0
      %2453 = vmatpush2.bf16.msra.mxu0 0
      %2454 = vmatprep.subr.bf16.mxu0 0
      %2455 = vmatpush2.bf16.msra.mxu0 0
      %2456 = vmatprep.subr.bf16.mxu0 0
      %2457 = vmatpush2.bf16.msra.mxu0 0
      %2458 = vmatprep.subr.bf16.mxu0 0
      %2459 = vmatpush2.bf16.msra.mxu0 0
      %2460 = vmatprep.subr.bf16.mxu0 0
      %2461 = vmatpush2.bf16.msra.mxu0 0
      %2462 = vmatprep.subr.bf16.mxu0 0
      %2463 = vmatpush2.bf16.msra.mxu0 0
      %2464 = vmatprep.subr.bf16.mxu0 0
      %2465 = vmatpush2.bf16.msra.mxu0 0
      %2466 = vmatprep.mubr.bf16.mxu0 0
      %2467 = vmatmul.mubr.bf16.gmra.mxu0 %v2414
      %v2468 = vpop.f32.mrf.mxu0
      %v2469 = vadd.f32 0.0, %v2468
      %v2470 = vpop.f32.mrf.mxu0
      %v2471 = vpop.f32.mrf.mxu0
      %v2472 = vadd.f32 0.0, %v2471
      %v2473 = vpop.f32.mrf.mxu0
      %2474 = vmatprep.mubr.bf16.mxu0 0
      %2475 = vmatmul.mubr.bf16.gmra.mxu0 %v2417
      %v2476 = vpop.f32.mrf.mxu0
      %v2477 = vadd.f32 0.0, %v2476
      %v2478 = vpop.f32.mrf.mxu0
      %v2479 = vpop.f32.mrf.mxu0
      %v2480 = vadd.f32 0.0, %v2479
      %v2481 = vpop.f32.mrf.mxu0
      %2482 = vmatprep.mubr.bf16.mxu0 0
      %2483 = vmatmul.mubr.bf16.gmra.mxu0 %v2420
      %v2484 = vpop.f32.mrf.mxu0
      %v2485 = vadd.f32 0.0, %v2484
      %v2486 = vpop.f32.mrf.mxu0
      %v2487 = vpop.f32.mrf.mxu0
      %v2488 = vadd.f32 0.0, %v2487
      %v2489 = vpop.f32.mrf.mxu0
      %2490 = vmatprep.mubr.bf16.mxu0 0
      %2491 = vmatmul.mubr.bf16.gmra.mxu0 %v2423
      %v2492 = vpop.f32.mrf.mxu0
      %v2493 = vadd.f32 0.0, %v2492
      %v2494 = vpop.f32.mrf.mxu0
      %v2495 = vpop.f32.mrf.mxu0
      %v2496 = vadd.f32 0.0, %v2495
      %v2497 = vpop.f32.mrf.mxu0
      %2498 = vmatprep.mubr.bf16.mxu0 0
      %2499 = vmatmul.mubr.bf16.gmra.mxu0 %v2426
      %v2500 = vpop.f32.mrf.mxu0
      %v2501 = vadd.f32 0.0, %v2500
      %v2502 = vpop.f32.mrf.mxu0
      %v2503 = vpop.f32.mrf.mxu0
      %v2504 = vadd.f32 0.0, %v2503
      %v2505 = vpop.f32.mrf.mxu0
      %2506 = vmatprep.mubr.bf16.mxu0 0
      %2507 = vmatmul.mubr.bf16.gmra.mxu0 %v2429
      %v2508 = vpop.f32.mrf.mxu0
      %v2509 = vadd.f32 0.0, %v2508
      %v2510 = vpop.f32.mrf.mxu0
      %v2511 = vpop.f32.mrf.mxu0
      %v2512 = vadd.f32 0.0, %v2511
      %v2513 = vpop.f32.mrf.mxu0
      %2514 = vmatprep.mubr.bf16.mxu0 0
      %2515 = vmatmul.mubr.bf16.gmra.mxu0 %v2432
      %v2516 = vpop.f32.mrf.mxu0
      %v2517 = vadd.f32 0.0, %v2516
      %v2518 = vpop.f32.mrf.mxu0
      %v2519 = vpop.f32.mrf.mxu0
      %v2520 = vadd.f32 0.0, %v2519
      %v2521 = vpop.f32.mrf.mxu0
      %2522 = vdwg.mxu0
      %v2523 = vadd.f32 %v2376, %v2469
      %v2524 = vadd.f32 %v2377, %v2472
      %v2525 = vadd.f32 %v2378, %v2477
      %v2526 = vadd.f32 %v2379, %v2480
      %v2527 = vadd.f32 %v2380, %v2485
      %v2528 = vadd.f32 %v2381, %v2488
      %v2529 = vadd.f32 %v2382, %v2493
      %v2530 = vadd.f32 %v2383, %v2496
      %v2531 = vadd.f32 %v2384, %v2501
      %v2532 = vadd.f32 %v2385, %v2504
      %v2533 = vadd.f32 %v2386, %v2509
      %v2534 = vadd.f32 %v2387, %v2512
      %v2535 = vadd.f32 %v2388, %v2517
      %v2536 = vadd.f32 %v2389, %v2520
      %s2537 = sadd.s32 %s1682, 56
      %s2538 = scalar_lea.vmem [#allocation2], %s2537
      %v2539 = vld [vmem:[%s2538] sm:$0xff]
      %v2540 = vld [vmem:[%s2538 + $0x8] sm:$0xff]
      %v2541 = vld [vmem:[%s2538 + $0x10] sm:$0xff]
      %v2542 = vld [vmem:[%s2538 + $0x18] sm:$0xff]
      %v2543 = vld [vmem:[%s2538 + $0x20] sm:$0xff]
      %v2544 = vld [vmem:[%s2538 + $0x28] sm:$0xff]
      %v2545 = vld [vmem:[%s2538 + $0x30] sm:$0xff]
      %v2546 = vld [vmem:[%s2538 + $0x38] sm:$0xff]
      %v2547 = vld [vmem:[%s2538 + $0x40] sm:$0xff]
      %v2548 = vld [vmem:[%s2538 + $0x48] sm:$0xff]
      %v2549 = vld [vmem:[%s2538 + $0x50] sm:$0xff]
      %v2550 = vld [vmem:[%s2538 + $0x58] sm:$0xff]
      %v2551 = vld [vmem:[%s2538 + $0x60] sm:$0xff]
      %v2552 = vld [vmem:[%s2538 + $0x68] sm:$0xff]
      %v2553 = vpack.c.bf16 %v2540, %v2539
      %v2554 = vpack.c.bf16 %v2542, %v2541
      %v2555 = vpack.c.bf16 %v2544, %v2543
      %v2556 = vpack.c.bf16 %v2546, %v2545
      %v2557 = vpack.c.bf16 %v2548, %v2547
      %v2558 = vpack.c.bf16 %v2550, %v2549
      %v2559 = vpack.c.bf16 %v2552, %v2551
      %v2561 = vsel %vm1728, %v2553, 0
      %v2564 = vsel %vm1728, %v2554, 0
      %v2567 = vsel %vm1728, %v2555, 0
      %v2570 = vsel %vm1728, %v2556, 0
      %v2573 = vsel %vm1728, %v2557, 0
      %v2576 = vsel %vm1728, %v2558, 0
      %v2579 = vsel %vm1728, %v2559, 0
      %2581 = vmatprep.subr.bf16.mxu0 0
      %2582 = vmatpush1.bf16.msra.mxu0 0
      %2583 = vmatprep.subr.bf16.mxu0 0
      %2584 = vmatpush1.bf16.msra.mxu0 0
      %2585 = vmatprep.subr.bf16.mxu0 0
      %2586 = vmatpush1.bf16.msra.mxu0 0
      %2587 = vmatprep.subr.bf16.mxu0 0
      %2588 = vmatpush1.bf16.msra.mxu0 0
      %2589 = vmatprep.subr.bf16.mxu0 0
      %2590 = vmatpush1.bf16.msra.mxu0 0
      %2591 = vmatprep.subr.bf16.mxu0 0
      %2592 = vmatpush1.bf16.msra.mxu0 0
      %2593 = vmatprep.subr.bf16.mxu0 0
      %2594 = vmatpush1.bf16.msra.mxu0 0
      %2595 = vmatprep.subr.bf16.mxu0 0
      %2596 = vmatpush1.bf16.msra.mxu0 %v1673
      %2597 = vmatprep.subr.bf16.mxu0 0
      %2598 = vmatpush2.bf16.msra.mxu0 0
      %2599 = vmatprep.subr.bf16.mxu0 0
      %2600 = vmatpush2.bf16.msra.mxu0 0
      %2601 = vmatprep.subr.bf16.mxu0 0
      %2602 = vmatpush2.bf16.msra.mxu0 0
      %2603 = vmatprep.subr.bf16.mxu0 0
      %2604 = vmatpush2.bf16.msra.mxu0 0
      %2605 = vmatprep.subr.bf16.mxu0 0
      %2606 = vmatpush2.bf16.msra.mxu0 0
      %2607 = vmatprep.subr.bf16.mxu0 0
      %2608 = vmatpush2.bf16.msra.mxu0 0
      %2609 = vmatprep.subr.bf16.mxu0 0
      %2610 = vmatpush2.bf16.msra.mxu0 0
      %2611 = vmatprep.subr.bf16.mxu0 0
      %2612 = vmatpush2.bf16.msra.mxu0 0
      %2613 = vmatprep.mubr.bf16.mxu0 0
      %2614 = vmatmul.mubr.bf16.gmra.mxu0 %v2561
      %v2615 = vpop.f32.mrf.mxu0
      %v2616 = vadd.f32 0.0, %v2615
      %v2617 = vpop.f32.mrf.mxu0
      %v2618 = vpop.f32.mrf.mxu0
      %v2619 = vadd.f32 0.0, %v2618
      %v2620 = vpop.f32.mrf.mxu0
      %2621 = vmatprep.mubr.bf16.mxu0 0
      %2622 = vmatmul.mubr.bf16.gmra.mxu0 %v2564
      %v2623 = vpop.f32.mrf.mxu0
      %v2624 = vadd.f32 0.0, %v2623
      %v2625 = vpop.f32.mrf.mxu0
      %v2626 = vpop.f32.mrf.mxu0
      %v2627 = vadd.f32 0.0, %v2626
      %v2628 = vpop.f32.mrf.mxu0
      %2629 = vmatprep.mubr.bf16.mxu0 0
      %2630 = vmatmul.mubr.bf16.gmra.mxu0 %v2567
      %v2631 = vpop.f32.mrf.mxu0
      %v2632 = vadd.f32 0.0, %v2631
      %v2633 = vpop.f32.mrf.mxu0
      %v2634 = vpop.f32.mrf.mxu0
      %v2635 = vadd.f32 0.0, %v2634
      %v2636 = vpop.f32.mrf.mxu0
      %2637 = vmatprep.mubr.bf16.mxu0 0
      %2638 = vmatmul.mubr.bf16.gmra.mxu0 %v2570
      %v2639 = vpop.f32.mrf.mxu0
      %v2640 = vadd.f32 0.0, %v2639
      %v2641 = vpop.f32.mrf.mxu0
      %v2642 = vpop.f32.mrf.mxu0
      %v2643 = vadd.f32 0.0, %v2642
      %v2644 = vpop.f32.mrf.mxu0
      %2645 = vmatprep.mubr.bf16.mxu0 0
      %2646 = vmatmul.mubr.bf16.gmra.mxu0 %v2573
      %v2647 = vpop.f32.mrf.mxu0
      %v2648 = vadd.f32 0.0, %v2647
      %v2649 = vpop.f32.mrf.mxu0
      %v2650 = vpop.f32.mrf.mxu0
      %v2651 = vadd.f32 0.0, %v2650
      %v2652 = vpop.f32.mrf.mxu0
      %2653 = vmatprep.mubr.bf16.mxu0 0
      %2654 = vmatmul.mubr.bf16.gmra.mxu0 %v2576
      %v2655 = vpop.f32.mrf.mxu0
      %v2656 = vadd.f32 0.0, %v2655
      %v2657 = vpop.f32.mrf.mxu0
      %v2658 = vpop.f32.mrf.mxu0
      %v2659 = vadd.f32 0.0, %v2658
      %v2660 = vpop.f32.mrf.mxu0
      %2661 = vmatprep.mubr.bf16.mxu0 0
      %2662 = vmatmul.mubr.bf16.gmra.mxu0 %v2579
      %v2663 = vpop.f32.mrf.mxu0
      %v2664 = vadd.f32 0.0, %v2663
      %v2665 = vpop.f32.mrf.mxu0
      %v2666 = vpop.f32.mrf.mxu0
      %v2667 = vadd.f32 0.0, %v2666
      %v2668 = vpop.f32.mrf.mxu0
      %2669 = vdwg.mxu0
      %v2670 = vadd.f32 %v2523, %v2616
      %v2671 = vadd.f32 %v2524, %v2619
      %v2672 = vadd.f32 %v2525, %v2624
      %v2673 = vadd.f32 %v2526, %v2627
      %v2674 = vadd.f32 %v2527, %v2632
      %v2675 = vadd.f32 %v2528, %v2635
      %v2676 = vadd.f32 %v2529, %v2640
      %v2677 = vadd.f32 %v2530, %v2643
      %v2678 = vadd.f32 %v2531, %v2648
      %v2679 = vadd.f32 %v2532, %v2651
      %v2680 = vadd.f32 %v2533, %v2656
      %v2681 = vadd.f32 %v2534, %v2659
      %v2682 = vadd.f32 %v2535, %v2664
      %v2683 = vadd.f32 %v2536, %v2667
      %s2684 = sadd.s32 %s1682, 57
      %s2685 = scalar_lea.vmem [#allocation2], %s2684
      %v2686 = vld [vmem:[%s2685] sm:$0xff]
      %v2687 = vld [vmem:[%s2685 + $0x8] sm:$0xff]
      %v2688 = vld [vmem:[%s2685 + $0x10] sm:$0xff]
      %v2689 = vld [vmem:[%s2685 + $0x18] sm:$0xff]
      %v2690 = vld [vmem:[%s2685 + $0x20] sm:$0xff]
      %v2691 = vld [vmem:[%s2685 + $0x28] sm:$0xff]
      %v2692 = vld [vmem:[%s2685 + $0x30] sm:$0xff]
      %v2693 = vld [vmem:[%s2685 + $0x38] sm:$0xff]
      %v2694 = vld [vmem:[%s2685 + $0x40] sm:$0xff]
      %v2695 = vld [vmem:[%s2685 + $0x48] sm:$0xff]
      %v2696 = vld [vmem:[%s2685 + $0x50] sm:$0xff]
      %v2697 = vld [vmem:[%s2685 + $0x58] sm:$0xff]
      %v2698 = vld [vmem:[%s2685 + $0x60] sm:$0xff]
      %v2699 = vld [vmem:[%s2685 + $0x68] sm:$0xff]
      %v2700 = vpack.c.bf16 %v2687, %v2686
      %v2701 = vpack.c.bf16 %v2689, %v2688
      %v2702 = vpack.c.bf16 %v2691, %v2690
      %v2703 = vpack.c.bf16 %v2693, %v2692
      %v2704 = vpack.c.bf16 %v2695, %v2694
      %v2705 = vpack.c.bf16 %v2697, %v2696
      %v2706 = vpack.c.bf16 %v2699, %v2698
      %v2708 = vsel %vm1728, %v2700, 0
      %v2711 = vsel %vm1728, %v2701, 0
      %v2714 = vsel %vm1728, %v2702, 0
      %v2717 = vsel %vm1728, %v2703, 0
      %v2720 = vsel %vm1728, %v2704, 0
      %v2723 = vsel %vm1728, %v2705, 0
      %v2726 = vsel %vm1728, %v2706, 0
      %2728 = vmatprep.subr.bf16.mxu0 0
      %2729 = vmatpush1.bf16.msra.mxu0 0
      %2730 = vmatprep.subr.bf16.mxu0 0
      %2731 = vmatpush1.bf16.msra.mxu0 0
      %2732 = vmatprep.subr.bf16.mxu0 0
      %2733 = vmatpush1.bf16.msra.mxu0 0
      %2734 = vmatprep.subr.bf16.mxu0 0
      %2735 = vmatpush1.bf16.msra.mxu0 0
      %2736 = vmatprep.subr.bf16.mxu0 0
      %2737 = vmatpush1.bf16.msra.mxu0 0
      %2738 = vmatprep.subr.bf16.mxu0 0
      %2739 = vmatpush1.bf16.msra.mxu0 0
      %2740 = vmatprep.subr.bf16.mxu0 0
      %2741 = vmatpush1.bf16.msra.mxu0 0
      %2742 = vmatprep.subr.bf16.mxu0 0
      %2743 = vmatpush1.bf16.msra.mxu0 %v1674
      %2744 = vmatprep.subr.bf16.mxu0 0
      %2745 = vmatpush2.bf16.msra.mxu0 0
      %2746 = vmatprep.subr.bf16.mxu0 0
      %2747 = vmatpush2.bf16.msra.mxu0 0
      %2748 = vmatprep.subr.bf16.mxu0 0
      %2749 = vmatpush2.bf16.msra.mxu0 0
      %2750 = vmatprep.subr.bf16.mxu0 0
      %2751 = vmatpush2.bf16.msra.mxu0 0
      %2752 = vmatprep.subr.bf16.mxu0 0
      %2753 = vmatpush2.bf16.msra.mxu0 0
      %2754 = vmatprep.subr.bf16.mxu0 0
      %2755 = vmatpush2.bf16.msra.mxu0 0
      %2756 = vmatprep.subr.bf16.mxu0 0
      %2757 = vmatpush2.bf16.msra.mxu0 0
      %2758 = vmatprep.subr.bf16.mxu0 0
      %2759 = vmatpush2.bf16.msra.mxu0 0
      %2760 = vmatprep.mubr.bf16.mxu0 0
      %2761 = vmatmul.mubr.bf16.gmra.mxu0 %v2708
      %v2762 = vpop.f32.mrf.mxu0
      %v2763 = vadd.f32 0.0, %v2762
      %v2764 = vpop.f32.mrf.mxu0
      %v2765 = vpop.f32.mrf.mxu0
      %v2766 = vadd.f32 0.0, %v2765
      %v2767 = vpop.f32.mrf.mxu0
      %2768 = vmatprep.mubr.bf16.mxu0 0
      %2769 = vmatmul.mubr.bf16.gmra.mxu0 %v2711
      %v2770 = vpop.f32.mrf.mxu0
      %v2771 = vadd.f32 0.0, %v2770
      %v2772 = vpop.f32.mrf.mxu0
      %v2773 = vpop.f32.mrf.mxu0
      %v2774 = vadd.f32 0.0, %v2773
      %v2775 = vpop.f32.mrf.mxu0
      %2776 = vmatprep.mubr.bf16.mxu0 0
      %2777 = vmatmul.mubr.bf16.gmra.mxu0 %v2714
      %v2778 = vpop.f32.mrf.mxu0
      %v2779 = vadd.f32 0.0, %v2778
      %v2780 = vpop.f32.mrf.mxu0
      %v2781 = vpop.f32.mrf.mxu0
      %v2782 = vadd.f32 0.0, %v2781
      %v2783 = vpop.f32.mrf.mxu0
      %2784 = vmatprep.mubr.bf16.mxu0 0
      %2785 = vmatmul.mubr.bf16.gmra.mxu0 %v2717
      %v2786 = vpop.f32.mrf.mxu0
      %v2787 = vadd.f32 0.0, %v2786
      %v2788 = vpop.f32.mrf.mxu0
      %v2789 = vpop.f32.mrf.mxu0
      %v2790 = vadd.f32 0.0, %v2789
      %v2791 = vpop.f32.mrf.mxu0
      %2792 = vmatprep.mubr.bf16.mxu0 0
      %2793 = vmatmul.mubr.bf16.gmra.mxu0 %v2720
      %v2794 = vpop.f32.mrf.mxu0
      %v2795 = vadd.f32 0.0, %v2794
      %v2796 = vpop.f32.mrf.mxu0
      %v2797 = vpop.f32.mrf.mxu0
      %v2798 = vadd.f32 0.0, %v2797
      %v2799 = vpop.f32.mrf.mxu0
      %2800 = vmatprep.mubr.bf16.mxu0 0
      %2801 = vmatmul.mubr.bf16.gmra.mxu0 %v2723
      %v2802 = vpop.f32.mrf.mxu0
      %v2803 = vadd.f32 0.0, %v2802
      %v2804 = vpop.f32.mrf.mxu0
      %v2805 = vpop.f32.mrf.mxu0
      %v2806 = vadd.f32 0.0, %v2805
      %v2807 = vpop.f32.mrf.mxu0
      %2808 = vmatprep.mubr.bf16.mxu0 0
      %2809 = vmatmul.mubr.bf16.gmra.mxu0 %v2726
      %v2810 = vpop.f32.mrf.mxu0
      %v2811 = vadd.f32 0.0, %v2810
      %v2812 = vpop.f32.mrf.mxu0
      %v2813 = vpop.f32.mrf.mxu0
      %v2814 = vadd.f32 0.0, %v2813
      %v2815 = vpop.f32.mrf.mxu0
      %2816 = vdwg.mxu0
      %v2817 = vadd.f32 %v2670, %v2763
      %v2818 = vadd.f32 %v2671, %v2766
      %v2819 = vadd.f32 %v2672, %v2771
      %v2820 = vadd.f32 %v2673, %v2774
      %v2821 = vadd.f32 %v2674, %v2779
      %v2822 = vadd.f32 %v2675, %v2782
      %v2823 = vadd.f32 %v2676, %v2787
      %v2824 = vadd.f32 %v2677, %v2790
      %v2825 = vadd.f32 %v2678, %v2795
      %v2826 = vadd.f32 %v2679, %v2798
      %v2827 = vadd.f32 %v2680, %v2803
      %v2828 = vadd.f32 %v2681, %v2806
      %v2829 = vadd.f32 %v2682, %v2811
      %v2830 = vadd.f32 %v2683, %v2814
      %s2831 = sadd.s32 %s1682, 58
      %s2832 = scalar_lea.vmem [#allocation2], %s2831
      %v2833 = vld [vmem:[%s2832] sm:$0xff]
      %v2834 = vld [vmem:[%s2832 + $0x8] sm:$0xff]
      %v2835 = vld [vmem:[%s2832 + $0x10] sm:$0xff]
      %v2836 = vld [vmem:[%s2832 + $0x18] sm:$0xff]
      %v2837 = vld [vmem:[%s2832 + $0x20] sm:$0xff]
      %v2838 = vld [vmem:[%s2832 + $0x28] sm:$0xff]
      %v2839 = vld [vmem:[%s2832 + $0x30] sm:$0xff]
      %v2840 = vld [vmem:[%s2832 + $0x38] sm:$0xff]
      %v2841 = vld [vmem:[%s2832 + $0x40] sm:$0xff]
      %v2842 = vld [vmem:[%s2832 + $0x48] sm:$0xff]
      %v2843 = vld [vmem:[%s2832 + $0x50] sm:$0xff]
      %v2844 = vld [vmem:[%s2832 + $0x58] sm:$0xff]
      %v2845 = vld [vmem:[%s2832 + $0x60] sm:$0xff]
      %v2846 = vld [vmem:[%s2832 + $0x68] sm:$0xff]
      %v2847 = vpack.c.bf16 %v2834, %v2833
      %v2848 = vpack.c.bf16 %v2836, %v2835
      %v2849 = vpack.c.bf16 %v2838, %v2837
      %v2850 = vpack.c.bf16 %v2840, %v2839
      %v2851 = vpack.c.bf16 %v2842, %v2841
      %v2852 = vpack.c.bf16 %v2844, %v2843
      %v2853 = vpack.c.bf16 %v2846, %v2845
      %v2855 = vsel %vm1728, %v2847, 0
      %v2858 = vsel %vm1728, %v2848, 0
      %v2861 = vsel %vm1728, %v2849, 0
      %v2864 = vsel %vm1728, %v2850, 0
      %v2867 = vsel %vm1728, %v2851, 0
      %v2870 = vsel %vm1728, %v2852, 0
      %v2873 = vsel %vm1728, %v2853, 0
      %2875 = vmatprep.subr.bf16.mxu0 0
      %2876 = vmatpush1.bf16.msra.mxu0 0
      %2877 = vmatprep.subr.bf16.mxu0 0
      %2878 = vmatpush1.bf16.msra.mxu0 0
      %2879 = vmatprep.subr.bf16.mxu0 0
      %2880 = vmatpush1.bf16.msra.mxu0 0
      %2881 = vmatprep.subr.bf16.mxu0 0
      %2882 = vmatpush1.bf16.msra.mxu0 0
      %2883 = vmatprep.subr.bf16.mxu0 0
      %2884 = vmatpush1.bf16.msra.mxu0 0
      %2885 = vmatprep.subr.bf16.mxu0 0
      %2886 = vmatpush1.bf16.msra.mxu0 0
      %2887 = vmatprep.subr.bf16.mxu0 0
      %2888 = vmatpush1.bf16.msra.mxu0 0
      %2889 = vmatprep.subr.bf16.mxu0 0
      %2890 = vmatpush1.bf16.msra.mxu0 %v1675
      %2891 = vmatprep.subr.bf16.mxu0 0
      %2892 = vmatpush2.bf16.msra.mxu0 0
      %2893 = vmatprep.subr.bf16.mxu0 0
      %2894 = vmatpush2.bf16.msra.mxu0 0
      %2895 = vmatprep.subr.bf16.mxu0 0
      %2896 = vmatpush2.bf16.msra.mxu0 0
      %2897 = vmatprep.subr.bf16.mxu0 0
      %2898 = vmatpush2.bf16.msra.mxu0 0
      %2899 = vmatprep.subr.bf16.mxu0 0
      %2900 = vmatpush2.bf16.msra.mxu0 0
      %2901 = vmatprep.subr.bf16.mxu0 0
      %2902 = vmatpush2.bf16.msra.mxu0 0
      %2903 = vmatprep.subr.bf16.mxu0 0
      %2904 = vmatpush2.bf16.msra.mxu0 0
      %2905 = vmatprep.subr.bf16.mxu0 0
      %2906 = vmatpush2.bf16.msra.mxu0 0
      %2907 = vmatprep.mubr.bf16.mxu0 0
      %2908 = vmatmul.mubr.bf16.gmra.mxu0 %v2855
      %v2909 = vpop.f32.mrf.mxu0
      %v2910 = vadd.f32 0.0, %v2909
      %v2911 = vpop.f32.mrf.mxu0
      %v2912 = vpop.f32.mrf.mxu0
      %v2913 = vadd.f32 0.0, %v2912
      %v2914 = vpop.f32.mrf.mxu0
      %2915 = vmatprep.mubr.bf16.mxu0 0
      %2916 = vmatmul.mubr.bf16.gmra.mxu0 %v2858
      %v2917 = vpop.f32.mrf.mxu0
      %v2918 = vadd.f32 0.0, %v2917
      %v2919 = vpop.f32.mrf.mxu0
      %v2920 = vpop.f32.mrf.mxu0
      %v2921 = vadd.f32 0.0, %v2920
      %v2922 = vpop.f32.mrf.mxu0
      %2923 = vmatprep.mubr.bf16.mxu0 0
      %2924 = vmatmul.mubr.bf16.gmra.mxu0 %v2861
      %v2925 = vpop.f32.mrf.mxu0
      %v2926 = vadd.f32 0.0, %v2925
      %v2927 = vpop.f32.mrf.mxu0
      %v2928 = vpop.f32.mrf.mxu0
      %v2929 = vadd.f32 0.0, %v2928
      %v2930 = vpop.f32.mrf.mxu0
      %2931 = vmatprep.mubr.bf16.mxu0 0
      %2932 = vmatmul.mubr.bf16.gmra.mxu0 %v2864
      %v2933 = vpop.f32.mrf.mxu0
      %v2934 = vadd.f32 0.0, %v2933
      %v2935 = vpop.f32.mrf.mxu0
      %v2936 = vpop.f32.mrf.mxu0
      %v2937 = vadd.f32 0.0, %v2936
      %v2938 = vpop.f32.mrf.mxu0
      %2939 = vmatprep.mubr.bf16.mxu0 0
      %2940 = vmatmul.mubr.bf16.gmra.mxu0 %v2867
      %v2941 = vpop.f32.mrf.mxu0
      %v2942 = vadd.f32 0.0, %v2941
      %v2943 = vpop.f32.mrf.mxu0
      %v2944 = vpop.f32.mrf.mxu0
      %v2945 = vadd.f32 0.0, %v2944
      %v2946 = vpop.f32.mrf.mxu0
      %2947 = vmatprep.mubr.bf16.mxu0 0
      %2948 = vmatmul.mubr.bf16.gmra.mxu0 %v2870
      %v2949 = vpop.f32.mrf.mxu0
      %v2950 = vadd.f32 0.0, %v2949
      %v2951 = vpop.f32.mrf.mxu0
      %v2952 = vpop.f32.mrf.mxu0
      %v2953 = vadd.f32 0.0, %v2952
      %v2954 = vpop.f32.mrf.mxu0
      %2955 = vmatprep.mubr.bf16.mxu0 0
      %2956 = vmatmul.mubr.bf16.gmra.mxu0 %v2873
      %v2957 = vpop.f32.mrf.mxu0
      %v2958 = vadd.f32 0.0, %v2957
      %v2959 = vpop.f32.mrf.mxu0
      %v2960 = vpop.f32.mrf.mxu0
      %v2961 = vadd.f32 0.0, %v2960
      %v2962 = vpop.f32.mrf.mxu0
      %2963 = vdwg.mxu0
      %v2964 = vadd.f32 %v2817, %v2910
      %v2965 = vadd.f32 %v2818, %v2913
      %v2966 = vadd.f32 %v2819, %v2918
      %v2967 = vadd.f32 %v2820, %v2921
      %v2968 = vadd.f32 %v2821, %v2926
      %v2969 = vadd.f32 %v2822, %v2929
      %v2970 = vadd.f32 %v2823, %v2934
      %v2971 = vadd.f32 %v2824, %v2937
      %v2972 = vadd.f32 %v2825, %v2942
      %v2973 = vadd.f32 %v2826, %v2945
      %v2974 = vadd.f32 %v2827, %v2950
      %v2975 = vadd.f32 %v2828, %v2953
      %v2976 = vadd.f32 %v2829, %v2958
      %v2977 = vadd.f32 %v2830, %v2961
      %v2979 = vlaneseq
      %v2980 = vshrl.u32 %v2979, 7
      %v2981 = vsub.s32 0, %v2980
      %v2982 = vrot.slane %v1666, %v2981
      %v2984 = vadd.f32 %v2964, %v2982
      %v2985 = vadd.f32 %v2965, %v2982
      %v2986 = vadd.f32 %v2966, %v2982
      %v2987 = vadd.f32 %v2967, %v2982
      %v2988 = vadd.f32 %v2968, %v2982
      %v2989 = vadd.f32 %v2969, %v2982
      %v2990 = vadd.f32 %v2970, %v2982
      %v2991 = vadd.f32 %v2971, %v2982
      %v2992 = vadd.f32 %v2972, %v2982
      %v2993 = vadd.f32 %v2973, %v2982
      %v2994 = vadd.f32 %v2974, %v2982
      %v2995 = vadd.f32 %v2975, %v2982
      %v2996 = vadd.f32 %v2976, %v2982
      %v2997 = vadd.f32 %v2977, %v2982
      %v2998 = vmax.f32 %v2984, 0.0
      %v2999 = vmax.f32 %v2985, 0.0
      %v3000 = vmax.f32 %v2986, 0.0
      %v3001 = vmax.f32 %v2987, 0.0
      %v3002 = vmax.f32 %v2988, 0.0
      %v3003 = vmax.f32 %v2989, 0.0
      %v3004 = vmax.f32 %v2990, 0.0
      %v3005 = vmax.f32 %v2991, 0.0
      %v3006 = vmax.f32 %v2992, 0.0
      %v3007 = vmax.f32 %v2993, 0.0
      %v3008 = vmax.f32 %v2994, 0.0
      %v3009 = vmax.f32 %v2995, 0.0
      %v3010 = vmax.f32 %v2996, 0.0
      %v3011 = vmax.f32 %v2997, 0.0
      %s3012 = scalar_lea.vmem [#allocation3], %s1682
      %vm3013 = vcmask 261120
      %3014 = vst.msk [vmem:[%s3012] sm:$0xff] %vm3013, %v2998
      %3015 = vst.msk [vmem:[%s3012 + $0x8] sm:$0xff] %vm3013, %v2999
      %3016 = vst.msk [vmem:[%s3012 + $0x10] sm:$0xff] %vm3013, %v3000
      %3017 = vst.msk [vmem:[%s3012 + $0x18] sm:$0xff] %vm3013, %v3001
      %3018 = vst.msk [vmem:[%s3012 + $0x20] sm:$0xff] %vm3013, %v3002
      %3019 = vst.msk [vmem:[%s3012 + $0x28] sm:$0xff] %vm3013, %v3003
      %3020 = vst.msk [vmem:[%s3012 + $0x30] sm:$0xff] %vm3013, %v3004
      %3021 = vst.msk [vmem:[%s3012 + $0x38] sm:$0xff] %vm3013, %v3005
      %3022 = vst.msk [vmem:[%s3012 + $0x40] sm:$0xff] %vm3013, %v3006
      %3023 = vst.msk [vmem:[%s3012 + $0x48] sm:$0xff] %vm3013, %v3007
      %3024 = vst.msk [vmem:[%s3012 + $0x50] sm:$0xff] %vm3013, %v3008
      %3025 = vst.msk [vmem:[%s3012 + $0x58] sm:$0xff] %vm3013, %v3009
      %3026 = vst.msk [vmem:[%s3012 + $0x60] sm:$0xff] %vm3013, %v3010
      %3027 = vst.msk [vmem:[%s3012 + $0x68] sm:$0xff] %vm3013, %v3011
    $region65: #{tpu_custom_call.1} parent=1 // loop_footer
      %s1681 = sadd.s32 1, %s1677
    $region66: #{tpu_custom_call.1} parent=1 // loop_footer_branch
      %1676 = sbr.rel target = $region62
    $region67: #{tpu_custom_call.1} parent=1 // loop_exit
      _
    loop: start=0, step=1, limit=14
    $region68: #{tpu_custom_call.1} parent=1 // loop_pre_header
      _
    $region69: #{tpu_custom_call.1} parent=1 // loop_header
      %s3029 = sphi 0, %s3033
      %p3030 = scmp.ge.s32.totalorder %s3029, 14
    $region70: #{tpu_custom_call.1} parent=1 // loop_header_branch
      %3032 = sbr.rel (%p3030) target = $region74
    $region71: #{tpu_custom_call.1} parent=1 // loop_body
      %s3034 = smul.u32 %s3029, 112
      %s3035 = scalar_lea.vmem [#allocation3], %s3034
      %v3036 = vld [vmem:[%s3035] sm:$0xff]
      %v3037 = vld [vmem:[%s3035 + $0x8] sm:$0xff]
      %v3038 = vld [vmem:[%s3035 + $0x10] sm:$0xff]
      %v3039 = vld [vmem:[%s3035 + $0x18] sm:$0xff]
      %v3040 = vld [vmem:[%s3035 + $0x20] sm:$0xff]
      %v3041 = vld [vmem:[%s3035 + $0x28] sm:$0xff]
      %v3042 = vld [vmem:[%s3035 + $0x30] sm:$0xff]
      %v3043 = vld [vmem:[%s3035 + $0x38] sm:$0xff]
      %v3044 = vld [vmem:[%s3035 + $0x40] sm:$0xff]
      %v3045 = vld [vmem:[%s3035 + $0x48] sm:$0xff]
      %v3046 = vld [vmem:[%s3035 + $0x50] sm:$0xff]
      %v3047 = vld [vmem:[%s3035 + $0x58] sm:$0xff]
      %v3048 = vld [vmem:[%s3035 + $0x60] sm:$0xff]
      %v3049 = vld [vmem:[%s3035 + $0x68] sm:$0xff]
      %s3050 = sadd.s32 %s3034, 1
      %s3051 = scalar_lea.vmem [#allocation3], %s3050
      %v3052 = vld [vmem:[%s3051] sm:$0xff]
      %v3053 = vld [vmem:[%s3051 + $0x8] sm:$0xff]
      %v3054 = vld [vmem:[%s3051 + $0x10] sm:$0xff]
      %v3055 = vld [vmem:[%s3051 + $0x18] sm:$0xff]
      %v3056 = vld [vmem:[%s3051 + $0x20] sm:$0xff]
      %v3057 = vld [vmem:[%s3051 + $0x28] sm:$0xff]
      %v3058 = vld [vmem:[%s3051 + $0x30] sm:$0xff]
      %v3059 = vld [vmem:[%s3051 + $0x38] sm:$0xff]
      %v3060 = vld [vmem:[%s3051 + $0x40] sm:$0xff]
      %v3061 = vld [vmem:[%s3051 + $0x48] sm:$0xff]
      %v3062 = vld [vmem:[%s3051 + $0x50] sm:$0xff]
      %v3063 = vld [vmem:[%s3051 + $0x58] sm:$0xff]
      %v3064 = vld [vmem:[%s3051 + $0x60] sm:$0xff]
      %v3065 = vld [vmem:[%s3051 + $0x68] sm:$0xff]
      %v3066 = vmax.f32 %v3036, %v3052
      %v3067 = vmax.f32 %v3037, %v3053
      %v3068 = vmax.f32 %v3038, %v3054
      %v3069 = vmax.f32 %v3039, %v3055
      %v3070 = vmax.f32 %v3040, %v3056
      %v3071 = vmax.f32 %v3041, %v3057
      %v3072 = vmax.f32 %v3042, %v3058
      %v3073 = vmax.f32 %v3043, %v3059
      %v3074 = vmax.f32 %v3044, %v3060
      %v3075 = vmax.f32 %v3045, %v3061
      %v3076 = vmax.f32 %v3046, %v3062
      %v3077 = vmax.f32 %v3047, %v3063
      %v3078 = vmax.f32 %v3048, %v3064
      %v3079 = vmax.f32 %v3049, %v3065
      %s3080 = sadd.s32 %s3034, 28
      %s3081 = scalar_lea.vmem [#allocation3], %s3080
      %v3082 = vld [vmem:[%s3081] sm:$0xff]
      %v3083 = vld [vmem:[%s3081 + $0x8] sm:$0xff]
      %v3084 = vld [vmem:[%s3081 + $0x10] sm:$0xff]
      %v3085 = vld [vmem:[%s3081 + $0x18] sm:$0xff]
      %v3086 = vld [vmem:[%s3081 + $0x20] sm:$0xff]
      %v3087 = vld [vmem:[%s3081 + $0x28] sm:$0xff]
      %v3088 = vld [vmem:[%s3081 + $0x30] sm:$0xff]
      %v3089 = vld [vmem:[%s3081 + $0x38] sm:$0xff]
      %v3090 = vld [vmem:[%s3081 + $0x40] sm:$0xff]
      %v3091 = vld [vmem:[%s3081 + $0x48] sm:$0xff]
      %v3092 = vld [vmem:[%s3081 + $0x50] sm:$0xff]
      %v3093 = vld [vmem:[%s3081 + $0x58] sm:$0xff]
      %v3094 = vld [vmem:[%s3081 + $0x60] sm:$0xff]
      %v3095 = vld [vmem:[%s3081 + $0x68] sm:$0xff]
      %v3096 = vmax.f32 %v3066, %v3082
      %v3097 = vmax.f32 %v3067, %v3083
      %v3098 = vmax.f32 %v3068, %v3084
      %v3099 = vmax.f32 %v3069, %v3085
      %v3100 = vmax.f32 %v3070, %v3086
      %v3101 = vmax.f32 %v3071, %v3087
      %v3102 = vmax.f32 %v3072, %v3088
      %v3103 = vmax.f32 %v3073, %v3089
      %v3104 = vmax.f32 %v3074, %v3090
      %v3105 = vmax.f32 %v3075, %v3091
      %v3106 = vmax.f32 %v3076, %v3092
      %v3107 = vmax.f32 %v3077, %v3093
      %v3108 = vmax.f32 %v3078, %v3094
      %v3109 = vmax.f32 %v3079, %v3095
      %s3110 = sadd.s32 %s3034, 29
      %s3111 = scalar_lea.vmem [#allocation3], %s3110
      %v3112 = vld [vmem:[%s3111] sm:$0xff]
      %v3113 = vld [vmem:[%s3111 + $0x8] sm:$0xff]
      %v3114 = vld [vmem:[%s3111 + $0x10] sm:$0xff]
      %v3115 = vld [vmem:[%s3111 + $0x18] sm:$0xff]
      %v3116 = vld [vmem:[%s3111 + $0x20] sm:$0xff]
      %v3117 = vld [vmem:[%s3111 + $0x28] sm:$0xff]
      %v3118 = vld [vmem:[%s3111 + $0x30] sm:$0xff]
      %v3119 = vld [vmem:[%s3111 + $0x38] sm:$0xff]
      %v3120 = vld [vmem:[%s3111 + $0x40] sm:$0xff]
      %v3121 = vld [vmem:[%s3111 + $0x48] sm:$0xff]
      %v3122 = vld [vmem:[%s3111 + $0x50] sm:$0xff]
      %v3123 = vld [vmem:[%s3111 + $0x58] sm:$0xff]
      %v3124 = vld [vmem:[%s3111 + $0x60] sm:$0xff]
      %v3125 = vld [vmem:[%s3111 + $0x68] sm:$0xff]
      %v3126 = vmax.f32 %v3096, %v3112
      %v3127 = vmax.f32 %v3097, %v3113
      %v3128 = vmax.f32 %v3098, %v3114
      %v3129 = vmax.f32 %v3099, %v3115
      %v3130 = vmax.f32 %v3100, %v3116
      %v3131 = vmax.f32 %v3101, %v3117
      %v3132 = vmax.f32 %v3102, %v3118
      %v3133 = vmax.f32 %v3103, %v3119
      %v3134 = vmax.f32 %v3104, %v3120
      %v3135 = vmax.f32 %v3105, %v3121
      %v3136 = vmax.f32 %v3106, %v3122
      %v3137 = vmax.f32 %v3107, %v3123
      %v3138 = vmax.f32 %v3108, %v3124
      %v3139 = vmax.f32 %v3109, %v3125
      %s3140 = scalar_lea.vmem [#allocation2], %s3034
      %vm3141 = vcmask 261120
      %3142 = vst.msk [vmem:[%s3140] sm:$0xff] %vm3141, %v3126
      %3143 = vst.msk [vmem:[%s3140 + $0x8] sm:$0xff] %vm3141, %v3127
      %3144 = vst.msk [vmem:[%s3140 + $0x10] sm:$0xff] %vm3141, %v3128
      %3145 = vst.msk [vmem:[%s3140 + $0x18] sm:$0xff] %vm3141, %v3129
      %3146 = vst.msk [vmem:[%s3140 + $0x20] sm:$0xff] %vm3141, %v3130
      %3147 = vst.msk [vmem:[%s3140 + $0x28] sm:$0xff] %vm3141, %v3131
      %3148 = vst.msk [vmem:[%s3140 + $0x30] sm:$0xff] %vm3141, %v3132
      %3149 = vst.msk [vmem:[%s3140 + $0x38] sm:$0xff] %vm3141, %v3133
      %3150 = vst.msk [vmem:[%s3140 + $0x40] sm:$0xff] %vm3141, %v3134
      %3151 = vst.msk [vmem:[%s3140 + $0x48] sm:$0xff] %vm3141, %v3135
      %3152 = vst.msk [vmem:[%s3140 + $0x50] sm:$0xff] %vm3141, %v3136
      %3153 = vst.msk [vmem:[%s3140 + $0x58] sm:$0xff] %vm3141, %v3137
      %3154 = vst.msk [vmem:[%s3140 + $0x60] sm:$0xff] %vm3141, %v3138
      %3155 = vst.msk [vmem:[%s3140 + $0x68] sm:$0xff] %vm3141, %v3139
    $region72: #{tpu_custom_call.1} parent=1 // loop_footer
      %s3033 = sadd.s32 1, %s3029
    $region73: #{tpu_custom_call.1} parent=1 // loop_footer_branch
      %3028 = sbr.rel target = $region69
    $region74: #{tpu_custom_call.1} parent=1 // loop_exit
      _
    %v3156 = vld [vmem:[%s5] sm:$0xff]
    %v3157 = vld [vmem:[%s5 + $0x8] sm:$0xff]
    %v3158 = vld [vmem:[%s5 + $0x10] sm:$0xff]
    %v3159 = vld [vmem:[%s5 + $0x18] sm:$0xff]
    %v3160 = vld [vmem:[%s5 + $0x20] sm:$0xff]
    %v3161 = vld [vmem:[%s5 + $0x28] sm:$0xff]
    %v3162 = vld [vmem:[%s5 + $0x30] sm:$0xff]
    %v3163 = vld [vmem:[%s5 + $0x38] sm:$0xff]
    %v3164 = vld [vmem:[%s5 + $0x40] sm:$0xff]
    %v3165 = vld [vmem:[%s5 + $0x48] sm:$0xff]
    %v3166 = vld [vmem:[%s5 + $0x50] sm:$0xff]
    %v3167 = vld [vmem:[%s5 + $0x58] sm:$0xff]
    %v3168 = vld [vmem:[%s5 + $0x60] sm:$0xff]
    %v3169 = vld [vmem:[%s5 + $0x68] sm:$0xff]
    %v3170 = vld [vmem:[%s5 + $0x70] sm:$0xff]
    %v3171 = vld [vmem:[%s5 + $0x78] sm:$0xff]
    %v3172 = vld [vmem:[%s5 + $0x80] sm:$0xff]
    %v3173 = vld [vmem:[%s5 + $0x88] sm:$0xff]
    %v3174 = vld [vmem:[%s5 + $0x90] sm:$0xff]
    %v3175 = vld [vmem:[%s5 + $0x98] sm:$0xff]
    %v3176 = vld [vmem:[%s5 + $0xa0] sm:$0xff]
    %v3177 = vld [vmem:[%s5 + $0xa8] sm:$0xff]
    %v3178 = vld [vmem:[%s5 + $0xb0] sm:$0xff]
    %v3179 = vld [vmem:[%s5 + $0xb8] sm:$0xff]
    %v3180 = vld [vmem:[%s5 + $0xc0] sm:$0xff]
    %v3181 = vld [vmem:[%s5 + $0xc8] sm:$0xff]
    %v3182 = vld [vmem:[%s5 + $0xd0] sm:$0xff]
    %v3183 = vld [vmem:[%s5 + $0xd8] sm:$0xff]
    %v3184 = vld [vmem:[%s5 + $0xe0] sm:$0xff]
    %v3185 = vld [vmem:[%s5 + $0xe8] sm:$0xff]
    %v3186 = vld [vmem:[%s5 + $0xf0] sm:$0xff]
    %v3187 = vld [vmem:[%s5 + $0xf8] sm:$0xff]
    %v3188 = vld [vmem:[%s5 + $0x100] sm:$0xff]
    %v3189 = vld [vmem:[%s5 + $0x108] sm:$0xff]
    %v3190 = vld [vmem:[%s5 + $0x110] sm:$0xff]
    %v3191 = vld [vmem:[%s5 + $0x118] sm:$0xff]
    %v3192 = vld [vmem:[%s6] sm:$0x1]
    %v3193 = vpack.c.bf16 %v3157, %v3156
    %v3194 = vpack.c.bf16 %v3159, %v3158
    %v3195 = vpack.c.bf16 %v3161, %v3160
    %v3196 = vpack.c.bf16 %v3163, %v3162
    %v3197 = vpack.c.bf16 %v3165, %v3164
    %v3198 = vpack.c.bf16 %v3167, %v3166
    %v3199 = vpack.c.bf16 %v3169, %v3168
    %v3200 = vpack.c.bf16 %v3171, %v3170
    %v3201 = vpack.c.bf16 %v3173, %v3172
    %v3202 = vpack.c.bf16 %v3175, %v3174
    %v3203 = vpack.c.bf16 %v3177, %v3176
    %v3204 = vpack.c.bf16 %v3179, %v3178
    %v3205 = vpack.c.bf16 %v3181, %v3180
    %v3206 = vpack.c.bf16 %v3183, %v3182
    %v3207 = vpack.c.bf16 %v3185, %v3184
    %v3208 = vpack.c.bf16 %v3187, %v3186
    %v3209 = vpack.c.bf16 %v3189, %v3188
    %v3210 = vpack.c.bf16 %v3191, %v3190
    loop: start=0, step=1, limit=14
    $region75: #{tpu_custom_call.1} parent=1 // loop_pre_header
      _
    $region76: #{tpu_custom_call.1} parent=1 // loop_header
      %s3212 = sphi 0, %s3216
      %p3213 = scmp.ge.s32.totalorder %s3212, 14
    $region77: #{tpu_custom_call.1} parent=1 // loop_header_branch
      %3215 = sbr.rel (%p3213) target = $region81
    $region78: #{tpu_custom_call.1} parent=1 // loop_body
      %s3217 = smul.u32 %s3212, 112
      %s3218 = scalar_lea.vmem [#allocation2], %s3217
      %v3219 = vld [vmem:[%s3218] sm:$0xff]
      %v3220 = vld [vmem:[%s3218 + $0x8] sm:$0xff]
      %v3221 = vld [vmem:[%s3218 + $0x10] sm:$0xff]
      %v3222 = vld [vmem:[%s3218 + $0x18] sm:$0xff]
      %v3223 = vld [vmem:[%s3218 + $0x20] sm:$0xff]
      %v3224 = vld [vmem:[%s3218 + $0x28] sm:$0xff]
      %v3225 = vld [vmem:[%s3218 + $0x30] sm:$0xff]
      %v3226 = vld [vmem:[%s3218 + $0x38] sm:$0xff]
      %v3227 = vld [vmem:[%s3218 + $0x40] sm:$0xff]
      %v3228 = vld [vmem:[%s3218 + $0x48] sm:$0xff]
      %v3229 = vld [vmem:[%s3218 + $0x50] sm:$0xff]
      %v3230 = vld [vmem:[%s3218 + $0x58] sm:$0xff]
      %v3231 = vld [vmem:[%s3218 + $0x60] sm:$0xff]
      %v3232 = vld [vmem:[%s3218 + $0x68] sm:$0xff]
      %v3233 = vpack.c.bf16 %v3220, %v3219
      %v3234 = vpack.c.bf16 %v3222, %v3221
      %v3235 = vpack.c.bf16 %v3224, %v3223
      %v3236 = vpack.c.bf16 %v3226, %v3225
      %v3237 = vpack.c.bf16 %v3228, %v3227
      %v3238 = vpack.c.bf16 %v3230, %v3229
      %v3239 = vpack.c.bf16 %v3232, %v3231
      %s3240 = sadd.s32 %s3217, 2
      %s3241 = scalar_lea.vmem [#allocation2], %s3240
      %v3242 = vld [vmem:[%s3241] sm:$0xff]
      %v3243 = vld [vmem:[%s3241 + $0x8] sm:$0xff]
      %v3244 = vld [vmem:[%s3241 + $0x10] sm:$0xff]
      %v3245 = vld [vmem:[%s3241 + $0x18] sm:$0xff]
      %v3246 = vld [vmem:[%s3241 + $0x20] sm:$0xff]
      %v3247 = vld [vmem:[%s3241 + $0x28] sm:$0xff]
      %v3248 = vld [vmem:[%s3241 + $0x30] sm:$0xff]
      %v3249 = vld [vmem:[%s3241 + $0x38] sm:$0xff]
      %v3250 = vld [vmem:[%s3241 + $0x40] sm:$0xff]
      %v3251 = vld [vmem:[%s3241 + $0x48] sm:$0xff]
      %v3252 = vld [vmem:[%s3241 + $0x50] sm:$0xff]
      %v3253 = vld [vmem:[%s3241 + $0x58] sm:$0xff]
      %v3254 = vld [vmem:[%s3241 + $0x60] sm:$0xff]
      %v3255 = vld [vmem:[%s3241 + $0x68] sm:$0xff]
      %v3256 = vpack.c.bf16 %v3243, %v3242
      %v3257 = vpack.c.bf16 %v3245, %v3244
      %v3258 = vpack.c.bf16 %v3247, %v3246
      %v3259 = vpack.c.bf16 %v3249, %v3248
      %v3260 = vpack.c.bf16 %v3251, %v3250
      %v3261 = vpack.c.bf16 %v3253, %v3252
      %v3262 = vpack.c.bf16 %v3255, %v3254
      %vm3263 = vcmask 261120
      %v3265 = vsel %vm3263, %v3256, 0
      %v3268 = vsel %vm3263, %v3257, 0
      %v3271 = vsel %vm3263, %v3258, 0
      %v3274 = vsel %vm3263, %v3259, 0
      %v3277 = vsel %vm3263, %v3260, 0
      %v3280 = vsel %vm3263, %v3261, 0
      %v3283 = vsel %vm3263, %v3262, 0
      %3285 = vmatprep.subr.bf16.mxu0 0
      %3286 = vmatpush1.bf16.msra.mxu0 0
      %3287 = vmatprep.subr.bf16.mxu0 0
      %3288 = vmatpush1.bf16.msra.mxu0 0
      %3289 = vmatprep.subr.bf16.mxu0 0
      %3290 = vmatpush1.bf16.msra.mxu0 0
      %3291 = vmatprep.subr.bf16.mxu0 0
      %3292 = vmatpush1.bf16.msra.mxu0 0
      %3293 = vmatprep.subr.bf16.mxu0 0
      %3294 = vmatpush1.bf16.msra.mxu0 0
      %3295 = vmatprep.subr.bf16.mxu0 0
      %3296 = vmatpush1.bf16.msra.mxu0 0
      %3297 = vmatprep.subr.bf16.mxu0 0
      %3298 = vmatpush1.bf16.msra.mxu0 %v3196
      %3299 = vmatprep.subr.bf16.mxu0 0
      %3300 = vmatpush1.bf16.msra.mxu0 %v3195
      %3301 = vmatprep.subr.bf16.mxu0 0
      %3302 = vmatpush2.bf16.msra.mxu0 0
      %3303 = vmatprep.subr.bf16.mxu0 0
      %3304 = vmatpush2.bf16.msra.mxu0 0
      %3305 = vmatprep.subr.bf16.mxu0 0
      %3306 = vmatpush2.bf16.msra.mxu0 0
      %3307 = vmatprep.subr.bf16.mxu0 0
      %3308 = vmatpush2.bf16.msra.mxu0 0
      %3309 = vmatprep.subr.bf16.mxu0 0
      %3310 = vmatpush2.bf16.msra.mxu0 0
      %3311 = vmatprep.subr.bf16.mxu0 0
      %3312 = vmatpush2.bf16.msra.mxu0 0
      %3313 = vmatprep.subr.bf16.mxu0 0
      %3314 = vmatpush2.bf16.msra.mxu0 0
      %3315 = vmatprep.subr.bf16.mxu0 0
      %3316 = vmatpush2.bf16.msra.mxu0 0
      %3317 = vmatprep.mubr.bf16.mxu0 0
      %3318 = vmatmul.mubr.bf16.gmra.mxu0 %v3265
      %v3319 = vpop.f32.mrf.mxu0
      %v3320 = vadd.f32 0.0, %v3319
      %v3321 = vpop.f32.mrf.mxu0
      %v3322 = vpop.f32.mrf.mxu0
      %v3323 = vadd.f32 0.0, %v3322
      %v3324 = vpop.f32.mrf.mxu0
      %3325 = vmatprep.mubr.bf16.mxu0 0
      %3326 = vmatmul.mubr.bf16.gmra.mxu0 %v3268
      %v3327 = vpop.f32.mrf.mxu0
      %v3328 = vadd.f32 0.0, %v3327
      %v3329 = vpop.f32.mrf.mxu0
      %v3330 = vpop.f32.mrf.mxu0
      %v3331 = vadd.f32 0.0, %v3330
      %v3332 = vpop.f32.mrf.mxu0
      %3333 = vmatprep.mubr.bf16.mxu0 0
      %3334 = vmatmul.mubr.bf16.gmra.mxu0 %v3271
      %v3335 = vpop.f32.mrf.mxu0
      %v3336 = vadd.f32 0.0, %v3335
      %v3337 = vpop.f32.mrf.mxu0
      %v3338 = vpop.f32.mrf.mxu0
      %v3339 = vadd.f32 0.0, %v3338
      %v3340 = vpop.f32.mrf.mxu0
      %3341 = vmatprep.mubr.bf16.mxu0 0
      %3342 = vmatmul.mubr.bf16.gmra.mxu0 %v3274
      %v3343 = vpop.f32.mrf.mxu0
      %v3344 = vadd.f32 0.0, %v3343
      %v3345 = vpop.f32.mrf.mxu0
      %v3346 = vpop.f32.mrf.mxu0
      %v3347 = vadd.f32 0.0, %v3346
      %v3348 = vpop.f32.mrf.mxu0
      %3349 = vmatprep.mubr.bf16.mxu0 0
      %3350 = vmatmul.mubr.bf16.gmra.mxu0 %v3277
      %v3351 = vpop.f32.mrf.mxu0
      %v3352 = vadd.f32 0.0, %v3351
      %v3353 = vpop.f32.mrf.mxu0
      %v3354 = vpop.f32.mrf.mxu0
      %v3355 = vadd.f32 0.0, %v3354
      %v3356 = vpop.f32.mrf.mxu0
      %3357 = vmatprep.mubr.bf16.mxu0 0
      %3358 = vmatmul.mubr.bf16.gmra.mxu0 %v3280
      %v3359 = vpop.f32.mrf.mxu0
      %v3360 = vadd.f32 0.0, %v3359
      %v3361 = vpop.f32.mrf.mxu0
      %v3362 = vpop.f32.mrf.mxu0
      %v3363 = vadd.f32 0.0, %v3362
      %v3364 = vpop.f32.mrf.mxu0
      %3365 = vmatprep.mubr.bf16.mxu0 0
      %3366 = vmatmul.mubr.bf16.gmra.mxu0 %v3283
      %v3367 = vpop.f32.mrf.mxu0
      %v3368 = vadd.f32 0.0, %v3367
      %v3369 = vpop.f32.mrf.mxu0
      %v3370 = vpop.f32.mrf.mxu0
      %v3371 = vadd.f32 0.0, %v3370
      %v3372 = vpop.f32.mrf.mxu0
      %3373 = vdwg.mxu0
      %v3375 = vsel %vm3263, %v3233, 0
      %v3378 = vsel %vm3263, %v3234, 0
      %v3381 = vsel %vm3263, %v3235, 0
      %v3384 = vsel %vm3263, %v3236, 0
      %v3387 = vsel %vm3263, %v3237, 0
      %v3390 = vsel %vm3263, %v3238, 0
      %v3393 = vsel %vm3263, %v3239, 0
      %3395 = vmatprep.subr.bf16.mxu0 0
      %3396 = vmatpush1.bf16.msra.mxu0 0
      %3397 = vmatprep.subr.bf16.mxu0 0
      %3398 = vmatpush1.bf16.msra.mxu0 0
      %3399 = vmatprep.subr.bf16.mxu0 0
      %3400 = vmatpush1.bf16.msra.mxu0 0
      %3401 = vmatprep.subr.bf16.mxu0 0
      %3402 = vmatpush1.bf16.msra.mxu0 0
      %3403 = vmatprep.subr.bf16.mxu0 0
      %3404 = vmatpush1.bf16.msra.mxu0 0
      %3405 = vmatprep.subr.bf16.mxu0 0
      %3406 = vmatpush1.bf16.msra.mxu0 0
      %3407 = vmatprep.subr.bf16.mxu0 0
      %3408 = vmatpush1.bf16.msra.mxu0 %v3194
      %3409 = vmatprep.subr.bf16.mxu0 0
      %3410 = vmatpush1.bf16.msra.mxu0 %v3193
      %3411 = vmatprep.subr.bf16.mxu0 0
      %3412 = vmatpush2.bf16.msra.mxu0 0
      %3413 = vmatprep.subr.bf16.mxu0 0
      %3414 = vmatpush2.bf16.msra.mxu0 0
      %3415 = vmatprep.subr.bf16.mxu0 0
      %3416 = vmatpush2.bf16.msra.mxu0 0
      %3417 = vmatprep.subr.bf16.mxu0 0
      %3418 = vmatpush2.bf16.msra.mxu0 0
      %3419 = vmatprep.subr.bf16.mxu0 0
      %3420 = vmatpush2.bf16.msra.mxu0 0
      %3421 = vmatprep.subr.bf16.mxu0 0
      %3422 = vmatpush2.bf16.msra.mxu0 0
      %3423 = vmatprep.subr.bf16.mxu0 0
      %3424 = vmatpush2.bf16.msra.mxu0 0
      %3425 = vmatprep.subr.bf16.mxu0 0
      %3426 = vmatpush2.bf16.msra.mxu0 0
      %3427 = vmatprep.mubr.bf16.mxu0 0
      %3428 = vmatmul.mubr.bf16.gmra.mxu0 %v3375
      %v3429 = vpop.f32.mrf.mxu0
      %v3430 = vadd.f32 %v3320, %v3429
      %v3431 = vpop.f32.mrf.mxu0
      %v3432 = vpop.f32.mrf.mxu0
      %v3433 = vadd.f32 %v3323, %v3432
      %v3434 = vpop.f32.mrf.mxu0
      %3435 = vmatprep.mubr.bf16.mxu0 0
      %3436 = vmatmul.mubr.bf16.gmra.mxu0 %v3378
      %v3437 = vpop.f32.mrf.mxu0
      %v3438 = vadd.f32 %v3328, %v3437
      %v3439 = vpop.f32.mrf.mxu0
      %v3440 = vpop.f32.mrf.mxu0
      %v3441 = vadd.f32 %v3331, %v3440
      %v3442 = vpop.f32.mrf.mxu0
      %3443 = vmatprep.mubr.bf16.mxu0 0
      %3444 = vmatmul.mubr.bf16.gmra.mxu0 %v3381
      %v3445 = vpop.f32.mrf.mxu0
      %v3446 = vadd.f32 %v3336, %v3445
      %v3447 = vpop.f32.mrf.mxu0
      %v3448 = vpop.f32.mrf.mxu0
      %v3449 = vadd.f32 %v3339, %v3448
      %v3450 = vpop.f32.mrf.mxu0
      %3451 = vmatprep.mubr.bf16.mxu0 0
      %3452 = vmatmul.mubr.bf16.gmra.mxu0 %v3384
      %v3453 = vpop.f32.mrf.mxu0
      %v3454 = vadd.f32 %v3344, %v3453
      %v3455 = vpop.f32.mrf.mxu0
      %v3456 = vpop.f32.mrf.mxu0
      %v3457 = vadd.f32 %v3347, %v3456
      %v3458 = vpop.f32.mrf.mxu0
      %3459 = vmatprep.mubr.bf16.mxu0 0
      %3460 = vmatmul.mubr.bf16.gmra.mxu0 %v3387
      %v3461 = vpop.f32.mrf.mxu0
      %v3462 = vadd.f32 %v3352, %v3461
      %v3463 = vpop.f32.mrf.mxu0
      %v3464 = vpop.f32.mrf.mxu0
      %v3465 = vadd.f32 %v3355, %v3464
      %v3466 = vpop.f32.mrf.mxu0
      %3467 = vmatprep.mubr.bf16.mxu0 0
      %3468 = vmatmul.mubr.bf16.gmra.mxu0 %v3390
      %v3469 = vpop.f32.mrf.mxu0
      %v3470 = vadd.f32 %v3360, %v3469
      %v3471 = vpop.f32.mrf.mxu0
      %v3472 = vpop.f32.mrf.mxu0
      %v3473 = vadd.f32 %v3363, %v3472
      %v3474 = vpop.f32.mrf.mxu0
      %3475 = vmatprep.mubr.bf16.mxu0 0
      %3476 = vmatmul.mubr.bf16.gmra.mxu0 %v3393
      %v3477 = vpop.f32.mrf.mxu0
      %v3478 = vadd.f32 %v3368, %v3477
      %v3479 = vpop.f32.mrf.mxu0
      %v3480 = vpop.f32.mrf.mxu0
      %v3481 = vadd.f32 %v3371, %v3480
      %v3482 = vpop.f32.mrf.mxu0
      %3483 = vdwg.mxu0
      %s3484 = sadd.s32 %s3217, 4
      %s3485 = scalar_lea.vmem [#allocation2], %s3484
      %v3486 = vld [vmem:[%s3485] sm:$0xff]
      %v3487 = vld [vmem:[%s3485 + $0x8] sm:$0xff]
      %v3488 = vld [vmem:[%s3485 + $0x10] sm:$0xff]
      %v3489 = vld [vmem:[%s3485 + $0x18] sm:$0xff]
      %v3490 = vld [vmem:[%s3485 + $0x20] sm:$0xff]
      %v3491 = vld [vmem:[%s3485 + $0x28] sm:$0xff]
      %v3492 = vld [vmem:[%s3485 + $0x30] sm:$0xff]
      %v3493 = vld [vmem:[%s3485 + $0x38] sm:$0xff]
      %v3494 = vld [vmem:[%s3485 + $0x40] sm:$0xff]
      %v3495 = vld [vmem:[%s3485 + $0x48] sm:$0xff]
      %v3496 = vld [vmem:[%s3485 + $0x50] sm:$0xff]
      %v3497 = vld [vmem:[%s3485 + $0x58] sm:$0xff]
      %v3498 = vld [vmem:[%s3485 + $0x60] sm:$0xff]
      %v3499 = vld [vmem:[%s3485 + $0x68] sm:$0xff]
      %v3500 = vpack.c.bf16 %v3487, %v3486
      %v3501 = vpack.c.bf16 %v3489, %v3488
      %v3502 = vpack.c.bf16 %v3491, %v3490
      %v3503 = vpack.c.bf16 %v3493, %v3492
      %v3504 = vpack.c.bf16 %v3495, %v3494
      %v3505 = vpack.c.bf16 %v3497, %v3496
      %v3506 = vpack.c.bf16 %v3499, %v3498
      %v3508 = vsel %vm3263, %v3500, 0
      %v3511 = vsel %vm3263, %v3501, 0
      %v3514 = vsel %vm3263, %v3502, 0
      %v3517 = vsel %vm3263, %v3503, 0
      %v3520 = vsel %vm3263, %v3504, 0
      %v3523 = vsel %vm3263, %v3505, 0
      %v3526 = vsel %vm3263, %v3506, 0
      %3528 = vmatprep.subr.bf16.mxu0 0
      %3529 = vmatpush1.bf16.msra.mxu0 0
      %3530 = vmatprep.subr.bf16.mxu0 0
      %3531 = vmatpush1.bf16.msra.mxu0 0
      %3532 = vmatprep.subr.bf16.mxu0 0
      %3533 = vmatpush1.bf16.msra.mxu0 0
      %3534 = vmatprep.subr.bf16.mxu0 0
      %3535 = vmatpush1.bf16.msra.mxu0 0
      %3536 = vmatprep.subr.bf16.mxu0 0
      %3537 = vmatpush1.bf16.msra.mxu0 0
      %3538 = vmatprep.subr.bf16.mxu0 0
      %3539 = vmatpush1.bf16.msra.mxu0 0
      %3540 = vmatprep.subr.bf16.mxu0 0
      %3541 = vmatpush1.bf16.msra.mxu0 %v3198
      %3542 = vmatprep.subr.bf16.mxu0 0
      %3543 = vmatpush1.bf16.msra.mxu0 %v3197
      %3544 = vmatprep.subr.bf16.mxu0 0
      %3545 = vmatpush2.bf16.msra.mxu0 0
      %3546 = vmatprep.subr.bf16.mxu0 0
      %3547 = vmatpush2.bf16.msra.mxu0 0
      %3548 = vmatprep.subr.bf16.mxu0 0
      %3549 = vmatpush2.bf16.msra.mxu0 0
      %3550 = vmatprep.subr.bf16.mxu0 0
      %3551 = vmatpush2.bf16.msra.mxu0 0
      %3552 = vmatprep.subr.bf16.mxu0 0
      %3553 = vmatpush2.bf16.msra.mxu0 0
      %3554 = vmatprep.subr.bf16.mxu0 0
      %3555 = vmatpush2.bf16.msra.mxu0 0
      %3556 = vmatprep.subr.bf16.mxu0 0
      %3557 = vmatpush2.bf16.msra.mxu0 0
      %3558 = vmatprep.subr.bf16.mxu0 0
      %3559 = vmatpush2.bf16.msra.mxu0 0
      %3560 = vmatprep.mubr.bf16.mxu0 0
      %3561 = vmatmul.mubr.bf16.gmra.mxu0 %v3508
      %v3562 = vpop.f32.mrf.mxu0
      %v3563 = vadd.f32 0.0, %v3562
      %v3564 = vpop.f32.mrf.mxu0
      %v3565 = vpop.f32.mrf.mxu0
      %v3566 = vadd.f32 0.0, %v3565
      %v3567 = vpop.f32.mrf.mxu0
      %3568 = vmatprep.mubr.bf16.mxu0 0
      %3569 = vmatmul.mubr.bf16.gmra.mxu0 %v3511
      %v3570 = vpop.f32.mrf.mxu0
      %v3571 = vadd.f32 0.0, %v3570
      %v3572 = vpop.f32.mrf.mxu0
      %v3573 = vpop.f32.mrf.mxu0
      %v3574 = vadd.f32 0.0, %v3573
      %v3575 = vpop.f32.mrf.mxu0
      %3576 = vmatprep.mubr.bf16.mxu0 0
      %3577 = vmatmul.mubr.bf16.gmra.mxu0 %v3514
      %v3578 = vpop.f32.mrf.mxu0
      %v3579 = vadd.f32 0.0, %v3578
      %v3580 = vpop.f32.mrf.mxu0
      %v3581 = vpop.f32.mrf.mxu0
      %v3582 = vadd.f32 0.0, %v3581
      %v3583 = vpop.f32.mrf.mxu0
      %3584 = vmatprep.mubr.bf16.mxu0 0
      %3585 = vmatmul.mubr.bf16.gmra.mxu0 %v3517
      %v3586 = vpop.f32.mrf.mxu0
      %v3587 = vadd.f32 0.0, %v3586
      %v3588 = vpop.f32.mrf.mxu0
      %v3589 = vpop.f32.mrf.mxu0
      %v3590 = vadd.f32 0.0, %v3589
      %v3591 = vpop.f32.mrf.mxu0
      %3592 = vmatprep.mubr.bf16.mxu0 0
      %3593 = vmatmul.mubr.bf16.gmra.mxu0 %v3520
      %v3594 = vpop.f32.mrf.mxu0
      %v3595 = vadd.f32 0.0, %v3594
      %v3596 = vpop.f32.mrf.mxu0
      %v3597 = vpop.f32.mrf.mxu0
      %v3598 = vadd.f32 0.0, %v3597
      %v3599 = vpop.f32.mrf.mxu0
      %3600 = vmatprep.mubr.bf16.mxu0 0
      %3601 = vmatmul.mubr.bf16.gmra.mxu0 %v3523
      %v3602 = vpop.f32.mrf.mxu0
      %v3603 = vadd.f32 0.0, %v3602
      %v3604 = vpop.f32.mrf.mxu0
      %v3605 = vpop.f32.mrf.mxu0
      %v3606 = vadd.f32 0.0, %v3605
      %v3607 = vpop.f32.mrf.mxu0
      %3608 = vmatprep.mubr.bf16.mxu0 0
      %3609 = vmatmul.mubr.bf16.gmra.mxu0 %v3526
      %v3610 = vpop.f32.mrf.mxu0
      %v3611 = vadd.f32 0.0, %v3610
      %v3612 = vpop.f32.mrf.mxu0
      %v3613 = vpop.f32.mrf.mxu0
      %v3614 = vadd.f32 0.0, %v3613
      %v3615 = vpop.f32.mrf.mxu0
      %3616 = vdwg.mxu0
      %v3617 = vadd.f32 %v3430, %v3563
      %v3618 = vadd.f32 %v3433, %v3566
      %v3619 = vadd.f32 %v3438, %v3571
      %v3620 = vadd.f32 %v3441, %v3574
      %v3621 = vadd.f32 %v3446, %v3579
      %v3622 = vadd.f32 %v3449, %v3582
      %v3623 = vadd.f32 %v3454, %v3587
      %v3624 = vadd.f32 %v3457, %v3590
      %v3625 = vadd.f32 %v3462, %v3595
      %v3626 = vadd.f32 %v3465, %v3598
      %v3627 = vadd.f32 %v3470, %v3603
      %v3628 = vadd.f32 %v3473, %v3606
      %v3629 = vadd.f32 %v3478, %v3611
      %v3630 = vadd.f32 %v3481, %v3614
      %s3631 = sadd.s32 %s3217, 56
      %s3632 = scalar_lea.vmem [#allocation2], %s3631
      %v3633 = vld [vmem:[%s3632] sm:$0xff]
      %v3634 = vld [vmem:[%s3632 + $0x8] sm:$0xff]
      %v3635 = vld [vmem:[%s3632 + $0x10] sm:$0xff]
      %v3636 = vld [vmem:[%s3632 + $0x18] sm:$0xff]
      %v3637 = vld [vmem:[%s3632 + $0x20] sm:$0xff]
      %v3638 = vld [vmem:[%s3632 + $0x28] sm:$0xff]
      %v3639 = vld [vmem:[%s3632 + $0x30] sm:$0xff]
      %v3640 = vld [vmem:[%s3632 + $0x38] sm:$0xff]
      %v3641 = vld [vmem:[%s3632 + $0x40] sm:$0xff]
      %v3642 = vld [vmem:[%s3632 + $0x48] sm:$0xff]
      %v3643 = vld [vmem:[%s3632 + $0x50] sm:$0xff]
      %v3644 = vld [vmem:[%s3632 + $0x58] sm:$0xff]
      %v3645 = vld [vmem:[%s3632 + $0x60] sm:$0xff]
      %v3646 = vld [vmem:[%s3632 + $0x68] sm:$0xff]
      %v3647 = vpack.c.bf16 %v3634, %v3633
      %v3648 = vpack.c.bf16 %v3636, %v3635
      %v3649 = vpack.c.bf16 %v3638, %v3637
      %v3650 = vpack.c.bf16 %v3640, %v3639
      %v3651 = vpack.c.bf16 %v3642, %v3641
      %v3652 = vpack.c.bf16 %v3644, %v3643
      %v3653 = vpack.c.bf16 %v3646, %v3645
      %v3655 = vsel %vm3263, %v3647, 0
      %v3658 = vsel %vm3263, %v3648, 0
      %v3661 = vsel %vm3263, %v3649, 0
      %v3664 = vsel %vm3263, %v3650, 0
      %v3667 = vsel %vm3263, %v3651, 0
      %v3670 = vsel %vm3263, %v3652, 0
      %v3673 = vsel %vm3263, %v3653, 0
      %3675 = vmatprep.subr.bf16.mxu0 0
      %3676 = vmatpush1.bf16.msra.mxu0 0
      %3677 = vmatprep.subr.bf16.mxu0 0
      %3678 = vmatpush1.bf16.msra.mxu0 0
      %3679 = vmatprep.subr.bf16.mxu0 0
      %3680 = vmatpush1.bf16.msra.mxu0 0
      %3681 = vmatprep.subr.bf16.mxu0 0
      %3682 = vmatpush1.bf16.msra.mxu0 0
      %3683 = vmatprep.subr.bf16.mxu0 0
      %3684 = vmatpush1.bf16.msra.mxu0 0
      %3685 = vmatprep.subr.bf16.mxu0 0
      %3686 = vmatpush1.bf16.msra.mxu0 0
      %3687 = vmatprep.subr.bf16.mxu0 0
      %3688 = vmatpush1.bf16.msra.mxu0 %v3200
      %3689 = vmatprep.subr.bf16.mxu0 0
      %3690 = vmatpush1.bf16.msra.mxu0 %v3199
      %3691 = vmatprep.subr.bf16.mxu0 0
      %3692 = vmatpush2.bf16.msra.mxu0 0
      %3693 = vmatprep.subr.bf16.mxu0 0
      %3694 = vmatpush2.bf16.msra.mxu0 0
      %3695 = vmatprep.subr.bf16.mxu0 0
      %3696 = vmatpush2.bf16.msra.mxu0 0
      %3697 = vmatprep.subr.bf16.mxu0 0
      %3698 = vmatpush2.bf16.msra.mxu0 0
      %3699 = vmatprep.subr.bf16.mxu0 0
      %3700 = vmatpush2.bf16.msra.mxu0 0
      %3701 = vmatprep.subr.bf16.mxu0 0
      %3702 = vmatpush2.bf16.msra.mxu0 0
      %3703 = vmatprep.subr.bf16.mxu0 0
      %3704 = vmatpush2.bf16.msra.mxu0 0
      %3705 = vmatprep.subr.bf16.mxu0 0
      %3706 = vmatpush2.bf16.msra.mxu0 0
      %3707 = vmatprep.mubr.bf16.mxu0 0
      %3708 = vmatmul.mubr.bf16.gmra.mxu0 %v3655
      %v3709 = vpop.f32.mrf.mxu0
      %v3710 = vadd.f32 0.0, %v3709
      %v3711 = vpop.f32.mrf.mxu0
      %v3712 = vpop.f32.mrf.mxu0
      %v3713 = vadd.f32 0.0, %v3712
      %v3714 = vpop.f32.mrf.mxu0
      %3715 = vmatprep.mubr.bf16.mxu0 0
      %3716 = vmatmul.mubr.bf16.gmra.mxu0 %v3658
      %v3717 = vpop.f32.mrf.mxu0
      %v3718 = vadd.f32 0.0, %v3717
      %v3719 = vpop.f32.mrf.mxu0
      %v3720 = vpop.f32.mrf.mxu0
      %v3721 = vadd.f32 0.0, %v3720
      %v3722 = vpop.f32.mrf.mxu0
      %3723 = vmatprep.mubr.bf16.mxu0 0
      %3724 = vmatmul.mubr.bf16.gmra.mxu0 %v3661
      %v3725 = vpop.f32.mrf.mxu0
      %v3726 = vadd.f32 0.0, %v3725
      %v3727 = vpop.f32.mrf.mxu0
      %v3728 = vpop.f32.mrf.mxu0
      %v3729 = vadd.f32 0.0, %v3728
      %v3730 = vpop.f32.mrf.mxu0
      %3731 = vmatprep.mubr.bf16.mxu0 0
      %3732 = vmatmul.mubr.bf16.gmra.mxu0 %v3664
      %v3733 = vpop.f32.mrf.mxu0
      %v3734 = vadd.f32 0.0, %v3733
      %v3735 = vpop.f32.mrf.mxu0
      %v3736 = vpop.f32.mrf.mxu0
      %v3737 = vadd.f32 0.0, %v3736
      %v3738 = vpop.f32.mrf.mxu0
      %3739 = vmatprep.mubr.bf16.mxu0 0
      %3740 = vmatmul.mubr.bf16.gmra.mxu0 %v3667
      %v3741 = vpop.f32.mrf.mxu0
      %v3742 = vadd.f32 0.0, %v3741
      %v3743 = vpop.f32.mrf.mxu0
      %v3744 = vpop.f32.mrf.mxu0
      %v3745 = vadd.f32 0.0, %v3744
      %v3746 = vpop.f32.mrf.mxu0
      %3747 = vmatprep.mubr.bf16.mxu0 0
      %3748 = vmatmul.mubr.bf16.gmra.mxu0 %v3670
      %v3749 = vpop.f32.mrf.mxu0
      %v3750 = vadd.f32 0.0, %v3749
      %v3751 = vpop.f32.mrf.mxu0
      %v3752 = vpop.f32.mrf.mxu0
      %v3753 = vadd.f32 0.0, %v3752
      %v3754 = vpop.f32.mrf.mxu0
      %3755 = vmatprep.mubr.bf16.mxu0 0
      %3756 = vmatmul.mubr.bf16.gmra.mxu0 %v3673
      %v3757 = vpop.f32.mrf.mxu0
      %v3758 = vadd.f32 0.0, %v3757
      %v3759 = vpop.f32.mrf.mxu0
      %v3760 = vpop.f32.mrf.mxu0
      %v3761 = vadd.f32 0.0, %v3760
      %v3762 = vpop.f32.mrf.mxu0
      %3763 = vdwg.mxu0
      %v3764 = vadd.f32 %v3617, %v3710
      %v3765 = vadd.f32 %v3618, %v3713
      %v3766 = vadd.f32 %v3619, %v3718
      %v3767 = vadd.f32 %v3620, %v3721
      %v3768 = vadd.f32 %v3621, %v3726
      %v3769 = vadd.f32 %v3622, %v3729
      %v3770 = vadd.f32 %v3623, %v3734
      %v3771 = vadd.f32 %v3624, %v3737
      %v3772 = vadd.f32 %v3625, %v3742
      %v3773 = vadd.f32 %v3626, %v3745
      %v3774 = vadd.f32 %v3627, %v3750
      %v3775 = vadd.f32 %v3628, %v3753
      %v3776 = vadd.f32 %v3629, %v3758
      %v3777 = vadd.f32 %v3630, %v3761
      %s3778 = sadd.s32 %s3217, 58
      %s3779 = scalar_lea.vmem [#allocation2], %s3778
      %v3780 = vld [vmem:[%s3779] sm:$0xff]
      %v3781 = vld [vmem:[%s3779 + $0x8] sm:$0xff]
      %v3782 = vld [vmem:[%s3779 + $0x10] sm:$0xff]
      %v3783 = vld [vmem:[%s3779 + $0x18] sm:$0xff]
      %v3784 = vld [vmem:[%s3779 + $0x20] sm:$0xff]
      %v3785 = vld [vmem:[%s3779 + $0x28] sm:$0xff]
      %v3786 = vld [vmem:[%s3779 + $0x30] sm:$0xff]
      %v3787 = vld [vmem:[%s3779 + $0x38] sm:$0xff]
      %v3788 = vld [vmem:[%s3779 + $0x40] sm:$0xff]
      %v3789 = vld [vmem:[%s3779 + $0x48] sm:$0xff]
      %v3790 = vld [vmem:[%s3779 + $0x50] sm:$0xff]
      %v3791 = vld [vmem:[%s3779 + $0x58] sm:$0xff]
      %v3792 = vld [vmem:[%s3779 + $0x60] sm:$0xff]
      %v3793 = vld [vmem:[%s3779 + $0x68] sm:$0xff]
      %v3794 = vpack.c.bf16 %v3781, %v3780
      %v3795 = vpack.c.bf16 %v3783, %v3782
      %v3796 = vpack.c.bf16 %v3785, %v3784
      %v3797 = vpack.c.bf16 %v3787, %v3786
      %v3798 = vpack.c.bf16 %v3789, %v3788
      %v3799 = vpack.c.bf16 %v3791, %v3790
      %v3800 = vpack.c.bf16 %v3793, %v3792
      %v3802 = vsel %vm3263, %v3794, 0
      %v3805 = vsel %vm3263, %v3795, 0
      %v3808 = vsel %vm3263, %v3796, 0
      %v3811 = vsel %vm3263, %v3797, 0
      %v3814 = vsel %vm3263, %v3798, 0
      %v3817 = vsel %vm3263, %v3799, 0
      %v3820 = vsel %vm3263, %v3800, 0
      %3822 = vmatprep.subr.bf16.mxu0 0
      %3823 = vmatpush1.bf16.msra.mxu0 0
      %3824 = vmatprep.subr.bf16.mxu0 0
      %3825 = vmatpush1.bf16.msra.mxu0 0
      %3826 = vmatprep.subr.bf16.mxu0 0
      %3827 = vmatpush1.bf16.msra.mxu0 0
      %3828 = vmatprep.subr.bf16.mxu0 0
      %3829 = vmatpush1.bf16.msra.mxu0 0
      %3830 = vmatprep.subr.bf16.mxu0 0
      %3831 = vmatpush1.bf16.msra.mxu0 0
      %3832 = vmatprep.subr.bf16.mxu0 0
      %3833 = vmatpush1.bf16.msra.mxu0 0
      %3834 = vmatprep.subr.bf16.mxu0 0
      %3835 = vmatpush1.bf16.msra.mxu0 %v3202
      %3836 = vmatprep.subr.bf16.mxu0 0
      %3837 = vmatpush1.bf16.msra.mxu0 %v3201
      %3838 = vmatprep.subr.bf16.mxu0 0
      %3839 = vmatpush2.bf16.msra.mxu0 0
      %3840 = vmatprep.subr.bf16.mxu0 0
      %3841 = vmatpush2.bf16.msra.mxu0 0
      %3842 = vmatprep.subr.bf16.mxu0 0
      %3843 = vmatpush2.bf16.msra.mxu0 0
      %3844 = vmatprep.subr.bf16.mxu0 0
      %3845 = vmatpush2.bf16.msra.mxu0 0
      %3846 = vmatprep.subr.bf16.mxu0 0
      %3847 = vmatpush2.bf16.msra.mxu0 0
      %3848 = vmatprep.subr.bf16.mxu0 0
      %3849 = vmatpush2.bf16.msra.mxu0 0
      %3850 = vmatprep.subr.bf16.mxu0 0
      %3851 = vmatpush2.bf16.msra.mxu0 0
      %3852 = vmatprep.subr.bf16.mxu0 0
      %3853 = vmatpush2.bf16.msra.mxu0 0
      %3854 = vmatprep.mubr.bf16.mxu0 0
      %3855 = vmatmul.mubr.bf16.gmra.mxu0 %v3802
      %v3856 = vpop.f32.mrf.mxu0
      %v3857 = vadd.f32 0.0, %v3856
      %v3858 = vpop.f32.mrf.mxu0
      %v3859 = vpop.f32.mrf.mxu0
      %v3860 = vadd.f32 0.0, %v3859
      %v3861 = vpop.f32.mrf.mxu0
      %3862 = vmatprep.mubr.bf16.mxu0 0
      %3863 = vmatmul.mubr.bf16.gmra.mxu0 %v3805
      %v3864 = vpop.f32.mrf.mxu0
      %v3865 = vadd.f32 0.0, %v3864
      %v3866 = vpop.f32.mrf.mxu0
      %v3867 = vpop.f32.mrf.mxu0
      %v3868 = vadd.f32 0.0, %v3867
      %v3869 = vpop.f32.mrf.mxu0
      %3870 = vmatprep.mubr.bf16.mxu0 0
      %3871 = vmatmul.mubr.bf16.gmra.mxu0 %v3808
      %v3872 = vpop.f32.mrf.mxu0
      %v3873 = vadd.f32 0.0, %v3872
      %v3874 = vpop.f32.mrf.mxu0
      %v3875 = vpop.f32.mrf.mxu0
      %v3876 = vadd.f32 0.0, %v3875
      %v3877 = vpop.f32.mrf.mxu0
      %3878 = vmatprep.mubr.bf16.mxu0 0
      %3879 = vmatmul.mubr.bf16.gmra.mxu0 %v3811
      %v3880 = vpop.f32.mrf.mxu0
      %v3881 = vadd.f32 0.0, %v3880
      %v3882 = vpop.f32.mrf.mxu0
      %v3883 = vpop.f32.mrf.mxu0
      %v3884 = vadd.f32 0.0, %v3883
      %v3885 = vpop.f32.mrf.mxu0
      %3886 = vmatprep.mubr.bf16.mxu0 0
      %3887 = vmatmul.mubr.bf16.gmra.mxu0 %v3814
      %v3888 = vpop.f32.mrf.mxu0
      %v3889 = vadd.f32 0.0, %v3888
      %v3890 = vpop.f32.mrf.mxu0
      %v3891 = vpop.f32.mrf.mxu0
      %v3892 = vadd.f32 0.0, %v3891
      %v3893 = vpop.f32.mrf.mxu0
      %3894 = vmatprep.mubr.bf16.mxu0 0
      %3895 = vmatmul.mubr.bf16.gmra.mxu0 %v3817
      %v3896 = vpop.f32.mrf.mxu0
      %v3897 = vadd.f32 0.0, %v3896
      %v3898 = vpop.f32.mrf.mxu0
      %v3899 = vpop.f32.mrf.mxu0
      %v3900 = vadd.f32 0.0, %v3899
      %v3901 = vpop.f32.mrf.mxu0
      %3902 = vmatprep.mubr.bf16.mxu0 0
      %3903 = vmatmul.mubr.bf16.gmra.mxu0 %v3820
      %v3904 = vpop.f32.mrf.mxu0
      %v3905 = vadd.f32 0.0, %v3904
      %v3906 = vpop.f32.mrf.mxu0
      %v3907 = vpop.f32.mrf.mxu0
      %v3908 = vadd.f32 0.0, %v3907
      %v3909 = vpop.f32.mrf.mxu0
      %3910 = vdwg.mxu0
      %v3911 = vadd.f32 %v3764, %v3857
      %v3912 = vadd.f32 %v3765, %v3860
      %v3913 = vadd.f32 %v3766, %v3865
      %v3914 = vadd.f32 %v3767, %v3868
      %v3915 = vadd.f32 %v3768, %v3873
      %v3916 = vadd.f32 %v3769, %v3876
      %v3917 = vadd.f32 %v3770, %v3881
      %v3918 = vadd.f32 %v3771, %v3884
      %v3919 = vadd.f32 %v3772, %v3889
      %v3920 = vadd.f32 %v3773, %v3892
      %v3921 = vadd.f32 %v3774, %v3897
      %v3922 = vadd.f32 %v3775, %v3900
      %v3923 = vadd.f32 %v3776, %v3905
      %v3924 = vadd.f32 %v3777, %v3908
      %s3925 = sadd.s32 %s3217, 60
      %s3926 = scalar_lea.vmem [#allocation2], %s3925
      %v3927 = vld [vmem:[%s3926] sm:$0xff]
      %v3928 = vld [vmem:[%s3926 + $0x8] sm:$0xff]
      %v3929 = vld [vmem:[%s3926 + $0x10] sm:$0xff]
      %v3930 = vld [vmem:[%s3926 + $0x18] sm:$0xff]
      %v3931 = vld [vmem:[%s3926 + $0x20] sm:$0xff]
      %v3932 = vld [vmem:[%s3926 + $0x28] sm:$0xff]
      %v3933 = vld [vmem:[%s3926 + $0x30] sm:$0xff]
      %v3934 = vld [vmem:[%s3926 + $0x38] sm:$0xff]
      %v3935 = vld [vmem:[%s3926 + $0x40] sm:$0xff]
      %v3936 = vld [vmem:[%s3926 + $0x48] sm:$0xff]
      %v3937 = vld [vmem:[%s3926 + $0x50] sm:$0xff]
      %v3938 = vld [vmem:[%s3926 + $0x58] sm:$0xff]
      %v3939 = vld [vmem:[%s3926 + $0x60] sm:$0xff]
      %v3940 = vld [vmem:[%s3926 + $0x68] sm:$0xff]
      %v3941 = vpack.c.bf16 %v3928, %v3927
      %v3942 = vpack.c.bf16 %v3930, %v3929
      %v3943 = vpack.c.bf16 %v3932, %v3931
      %v3944 = vpack.c.bf16 %v3934, %v3933
      %v3945 = vpack.c.bf16 %v3936, %v3935
      %v3946 = vpack.c.bf16 %v3938, %v3937
      %v3947 = vpack.c.bf16 %v3940, %v3939
      %v3949 = vsel %vm3263, %v3941, 0
      %v3952 = vsel %vm3263, %v3942, 0
      %v3955 = vsel %vm3263, %v3943, 0
      %v3958 = vsel %vm3263, %v3944, 0
      %v3961 = vsel %vm3263, %v3945, 0
      %v3964 = vsel %vm3263, %v3946, 0
      %v3967 = vsel %vm3263, %v3947, 0
      %3969 = vmatprep.subr.bf16.mxu0 0
      %3970 = vmatpush1.bf16.msra.mxu0 0
      %3971 = vmatprep.subr.bf16.mxu0 0
      %3972 = vmatpush1.bf16.msra.mxu0 0
      %3973 = vmatprep.subr.bf16.mxu0 0
      %3974 = vmatpush1.bf16.msra.mxu0 0
      %3975 = vmatprep.subr.bf16.mxu0 0
      %3976 = vmatpush1.bf16.msra.mxu0 0
      %3977 = vmatprep.subr.bf16.mxu0 0
      %3978 = vmatpush1.bf16.msra.mxu0 0
      %3979 = vmatprep.subr.bf16.mxu0 0
      %3980 = vmatpush1.bf16.msra.mxu0 0
      %3981 = vmatprep.subr.bf16.mxu0 0
      %3982 = vmatpush1.bf16.msra.mxu0 %v3204
      %3983 = vmatprep.subr.bf16.mxu0 0
      %3984 = vmatpush1.bf16.msra.mxu0 %v3203
      %3985 = vmatprep.subr.bf16.mxu0 0
      %3986 = vmatpush2.bf16.msra.mxu0 0
      %3987 = vmatprep.subr.bf16.mxu0 0
      %3988 = vmatpush2.bf16.msra.mxu0 0
      %3989 = vmatprep.subr.bf16.mxu0 0
      %3990 = vmatpush2.bf16.msra.mxu0 0
      %3991 = vmatprep.subr.bf16.mxu0 0
      %3992 = vmatpush2.bf16.msra.mxu0 0
      %3993 = vmatprep.subr.bf16.mxu0 0
      %3994 = vmatpush2.bf16.msra.mxu0 0
      %3995 = vmatprep.subr.bf16.mxu0 0
      %3996 = vmatpush2.bf16.msra.mxu0 0
      %3997 = vmatprep.subr.bf16.mxu0 0
      %3998 = vmatpush2.bf16.msra.mxu0 0
      %3999 = vmatprep.subr.bf16.mxu0 0
      %4000 = vmatpush2.bf16.msra.mxu0 0
      %4001 = vmatprep.mubr.bf16.mxu0 0
      %4002 = vmatmul.mubr.bf16.gmra.mxu0 %v3949
      %v4003 = vpop.f32.mrf.mxu0
      %v4004 = vadd.f32 0.0, %v4003
      %v4005 = vpop.f32.mrf.mxu0
      %v4006 = vpop.f32.mrf.mxu0
      %v4007 = vadd.f32 0.0, %v4006
      %v4008 = vpop.f32.mrf.mxu0
      %4009 = vmatprep.mubr.bf16.mxu0 0
      %4010 = vmatmul.mubr.bf16.gmra.mxu0 %v3952
      %v4011 = vpop.f32.mrf.mxu0
      %v4012 = vadd.f32 0.0, %v4011
      %v4013 = vpop.f32.mrf.mxu0
      %v4014 = vpop.f32.mrf.mxu0
      %v4015 = vadd.f32 0.0, %v4014
      %v4016 = vpop.f32.mrf.mxu0
      %4017 = vmatprep.mubr.bf16.mxu0 0
      %4018 = vmatmul.mubr.bf16.gmra.mxu0 %v3955
      %v4019 = vpop.f32.mrf.mxu0
      %v4020 = vadd.f32 0.0, %v4019
      %v4021 = vpop.f32.mrf.mxu0
      %v4022 = vpop.f32.mrf.mxu0
      %v4023 = vadd.f32 0.0, %v4022
      %v4024 = vpop.f32.mrf.mxu0
      %4025 = vmatprep.mubr.bf16.mxu0 0
      %4026 = vmatmul.mubr.bf16.gmra.mxu0 %v3958
      %v4027 = vpop.f32.mrf.mxu0
      %v4028 = vadd.f32 0.0, %v4027
      %v4029 = vpop.f32.mrf.mxu0
      %v4030 = vpop.f32.mrf.mxu0
      %v4031 = vadd.f32 0.0, %v4030
      %v4032 = vpop.f32.mrf.mxu0
      %4033 = vmatprep.mubr.bf16.mxu0 0
      %4034 = vmatmul.mubr.bf16.gmra.mxu0 %v3961
      %v4035 = vpop.f32.mrf.mxu0
      %v4036 = vadd.f32 0.0, %v4035
      %v4037 = vpop.f32.mrf.mxu0
      %v4038 = vpop.f32.mrf.mxu0
      %v4039 = vadd.f32 0.0, %v4038
      %v4040 = vpop.f32.mrf.mxu0
      %4041 = vmatprep.mubr.bf16.mxu0 0
      %4042 = vmatmul.mubr.bf16.gmra.mxu0 %v3964
      %v4043 = vpop.f32.mrf.mxu0
      %v4044 = vadd.f32 0.0, %v4043
      %v4045 = vpop.f32.mrf.mxu0
      %v4046 = vpop.f32.mrf.mxu0
      %v4047 = vadd.f32 0.0, %v4046
      %v4048 = vpop.f32.mrf.mxu0
      %4049 = vmatprep.mubr.bf16.mxu0 0
      %4050 = vmatmul.mubr.bf16.gmra.mxu0 %v3967
      %v4051 = vpop.f32.mrf.mxu0
      %v4052 = vadd.f32 0.0, %v4051
      %v4053 = vpop.f32.mrf.mxu0
      %v4054 = vpop.f32.mrf.mxu0
      %v4055 = vadd.f32 0.0, %v4054
      %v4056 = vpop.f32.mrf.mxu0
      %4057 = vdwg.mxu0
      %v4058 = vadd.f32 %v3911, %v4004
      %v4059 = vadd.f32 %v3912, %v4007
      %v4060 = vadd.f32 %v3913, %v4012
      %v4061 = vadd.f32 %v3914, %v4015
      %v4062 = vadd.f32 %v3915, %v4020
      %v4063 = vadd.f32 %v3916, %v4023
      %v4064 = vadd.f32 %v3917, %v4028
      %v4065 = vadd.f32 %v3918, %v4031
      %v4066 = vadd.f32 %v3919, %v4036
      %v4067 = vadd.f32 %v3920, %v4039
      %v4068 = vadd.f32 %v3921, %v4044
      %v4069 = vadd.f32 %v3922, %v4047
      %v4070 = vadd.f32 %v3923, %v4052
      %v4071 = vadd.f32 %v3924, %v4055
      %s4072 = sadd.s32 %s3217, 112
      %s4073 = scalar_lea.vmem [#allocation2], %s4072
      %v4074 = vld [vmem:[%s4073] sm:$0xff]
      %v4075 = vld [vmem:[%s4073 + $0x8] sm:$0xff]
      %v4076 = vld [vmem:[%s4073 + $0x10] sm:$0xff]
      %v4077 = vld [vmem:[%s4073 + $0x18] sm:$0xff]
      %v4078 = vld [vmem:[%s4073 + $0x20] sm:$0xff]
      %v4079 = vld [vmem:[%s4073 + $0x28] sm:$0xff]
      %v4080 = vld [vmem:[%s4073 + $0x30] sm:$0xff]
      %v4081 = vld [vmem:[%s4073 + $0x38] sm:$0xff]
      %v4082 = vld [vmem:[%s4073 + $0x40] sm:$0xff]
      %v4083 = vld [vmem:[%s4073 + $0x48] sm:$0xff]
      %v4084 = vld [vmem:[%s4073 + $0x50] sm:$0xff]
      %v4085 = vld [vmem:[%s4073 + $0x58] sm:$0xff]
      %v4086 = vld [vmem:[%s4073 + $0x60] sm:$0xff]
      %v4087 = vld [vmem:[%s4073 + $0x68] sm:$0xff]
      %v4088 = vpack.c.bf16 %v4075, %v4074
      %v4089 = vpack.c.bf16 %v4077, %v4076
      %v4090 = vpack.c.bf16 %v4079, %v4078
      %v4091 = vpack.c.bf16 %v4081, %v4080
      %v4092 = vpack.c.bf16 %v4083, %v4082
      %v4093 = vpack.c.bf16 %v4085, %v4084
      %v4094 = vpack.c.bf16 %v4087, %v4086
      %v4096 = vsel %vm3263, %v4088, 0
      %v4099 = vsel %vm3263, %v4089, 0
      %v4102 = vsel %vm3263, %v4090, 0
      %v4105 = vsel %vm3263, %v4091, 0
      %v4108 = vsel %vm3263, %v4092, 0
      %v4111 = vsel %vm3263, %v4093, 0
      %v4114 = vsel %vm3263, %v4094, 0
      %4116 = vmatprep.subr.bf16.mxu0 0
      %4117 = vmatpush1.bf16.msra.mxu0 0
      %4118 = vmatprep.subr.bf16.mxu0 0
      %4119 = vmatpush1.bf16.msra.mxu0 0
      %4120 = vmatprep.subr.bf16.mxu0 0
      %4121 = vmatpush1.bf16.msra.mxu0 0
      %4122 = vmatprep.subr.bf16.mxu0 0
      %4123 = vmatpush1.bf16.msra.mxu0 0
      %4124 = vmatprep.subr.bf16.mxu0 0
      %4125 = vmatpush1.bf16.msra.mxu0 0
      %4126 = vmatprep.subr.bf16.mxu0 0
      %4127 = vmatpush1.bf16.msra.mxu0 0
      %4128 = vmatprep.subr.bf16.mxu0 0
      %4129 = vmatpush1.bf16.msra.mxu0 %v3206
      %4130 = vmatprep.subr.bf16.mxu0 0
      %4131 = vmatpush1.bf16.msra.mxu0 %v3205
      %4132 = vmatprep.subr.bf16.mxu0 0
      %4133 = vmatpush2.bf16.msra.mxu0 0
      %4134 = vmatprep.subr.bf16.mxu0 0
      %4135 = vmatpush2.bf16.msra.mxu0 0
      %4136 = vmatprep.subr.bf16.mxu0 0
      %4137 = vmatpush2.bf16.msra.mxu0 0
      %4138 = vmatprep.subr.bf16.mxu0 0
      %4139 = vmatpush2.bf16.msra.mxu0 0
      %4140 = vmatprep.subr.bf16.mxu0 0
      %4141 = vmatpush2.bf16.msra.mxu0 0
      %4142 = vmatprep.subr.bf16.mxu0 0
      %4143 = vmatpush2.bf16.msra.mxu0 0
      %4144 = vmatprep.subr.bf16.mxu0 0
      %4145 = vmatpush2.bf16.msra.mxu0 0
      %4146 = vmatprep.subr.bf16.mxu0 0
      %4147 = vmatpush2.bf16.msra.mxu0 0
      %4148 = vmatprep.mubr.bf16.mxu0 0
      %4149 = vmatmul.mubr.bf16.gmra.mxu0 %v4096
      %v4150 = vpop.f32.mrf.mxu0
      %v4151 = vadd.f32 0.0, %v4150
      %v4152 = vpop.f32.mrf.mxu0
      %v4153 = vpop.f32.mrf.mxu0
      %v4154 = vadd.f32 0.0, %v4153
      %v4155 = vpop.f32.mrf.mxu0
      %4156 = vmatprep.mubr.bf16.mxu0 0
      %4157 = vmatmul.mubr.bf16.gmra.mxu0 %v4099
      %v4158 = vpop.f32.mrf.mxu0
      %v4159 = vadd.f32 0.0, %v4158
      %v4160 = vpop.f32.mrf.mxu0
      %v4161 = vpop.f32.mrf.mxu0
      %v4162 = vadd.f32 0.0, %v4161
      %v4163 = vpop.f32.mrf.mxu0
      %4164 = vmatprep.mubr.bf16.mxu0 0
      %4165 = vmatmul.mubr.bf16.gmra.mxu0 %v4102
      %v4166 = vpop.f32.mrf.mxu0
      %v4167 = vadd.f32 0.0, %v4166
      %v4168 = vpop.f32.mrf.mxu0
      %v4169 = vpop.f32.mrf.mxu0
      %v4170 = vadd.f32 0.0, %v4169
      %v4171 = vpop.f32.mrf.mxu0
      %4172 = vmatprep.mubr.bf16.mxu0 0
      %4173 = vmatmul.mubr.bf16.gmra.mxu0 %v4105
      %v4174 = vpop.f32.mrf.mxu0
      %v4175 = vadd.f32 0.0, %v4174
      %v4176 = vpop.f32.mrf.mxu0
      %v4177 = vpop.f32.mrf.mxu0
      %v4178 = vadd.f32 0.0, %v4177
      %v4179 = vpop.f32.mrf.mxu0
      %4180 = vmatprep.mubr.bf16.mxu0 0
      %4181 = vmatmul.mubr.bf16.gmra.mxu0 %v4108
      %v4182 = vpop.f32.mrf.mxu0
      %v4183 = vadd.f32 0.0, %v4182
      %v4184 = vpop.f32.mrf.mxu0
      %v4185 = vpop.f32.mrf.mxu0
      %v4186 = vadd.f32 0.0, %v4185
      %v4187 = vpop.f32.mrf.mxu0
      %4188 = vmatprep.mubr.bf16.mxu0 0
      %4189 = vmatmul.mubr.bf16.gmra.mxu0 %v4111
      %v4190 = vpop.f32.mrf.mxu0
      %v4191 = vadd.f32 0.0, %v4190
      %v4192 = vpop.f32.mrf.mxu0
      %v4193 = vpop.f32.mrf.mxu0
      %v4194 = vadd.f32 0.0, %v4193
      %v4195 = vpop.f32.mrf.mxu0
      %4196 = vmatprep.mubr.bf16.mxu0 0
      %4197 = vmatmul.mubr.bf16.gmra.mxu0 %v4114
      %v4198 = vpop.f32.mrf.mxu0
      %v4199 = vadd.f32 0.0, %v4198
      %v4200 = vpop.f32.mrf.mxu0
      %v4201 = vpop.f32.mrf.mxu0
      %v4202 = vadd.f32 0.0, %v4201
      %v4203 = vpop.f32.mrf.mxu0
      %4204 = vdwg.mxu0
      %v4205 = vadd.f32 %v4058, %v4151
      %v4206 = vadd.f32 %v4059, %v4154
      %v4207 = vadd.f32 %v4060, %v4159
      %v4208 = vadd.f32 %v4061, %v4162
      %v4209 = vadd.f32 %v4062, %v4167
      %v4210 = vadd.f32 %v4063, %v4170
      %v4211 = vadd.f32 %v4064, %v4175
      %v4212 = vadd.f32 %v4065, %v4178
      %v4213 = vadd.f32 %v4066, %v4183
      %v4214 = vadd.f32 %v4067, %v4186
      %v4215 = vadd.f32 %v4068, %v4191
      %v4216 = vadd.f32 %v4069, %v4194
      %v4217 = vadd.f32 %v4070, %v4199
      %v4218 = vadd.f32 %v4071, %v4202
      %s4219 = sadd.s32 %s3217, 114
      %s4220 = scalar_lea.vmem [#allocation2], %s4219
      %v4221 = vld [vmem:[%s4220] sm:$0xff]
      %v4222 = vld [vmem:[%s4220 + $0x8] sm:$0xff]
      %v4223 = vld [vmem:[%s4220 + $0x10] sm:$0xff]
      %v4224 = vld [vmem:[%s4220 + $0x18] sm:$0xff]
      %v4225 = vld [vmem:[%s4220 + $0x20] sm:$0xff]
      %v4226 = vld [vmem:[%s4220 + $0x28] sm:$0xff]
      %v4227 = vld [vmem:[%s4220 + $0x30] sm:$0xff]
      %v4228 = vld [vmem:[%s4220 + $0x38] sm:$0xff]
      %v4229 = vld [vmem:[%s4220 + $0x40] sm:$0xff]
      %v4230 = vld [vmem:[%s4220 + $0x48] sm:$0xff]
      %v4231 = vld [vmem:[%s4220 + $0x50] sm:$0xff]
      %v4232 = vld [vmem:[%s4220 + $0x58] sm:$0xff]
      %v4233 = vld [vmem:[%s4220 + $0x60] sm:$0xff]
      %v4234 = vld [vmem:[%s4220 + $0x68] sm:$0xff]
      %v4235 = vpack.c.bf16 %v4222, %v4221
      %v4236 = vpack.c.bf16 %v4224, %v4223
      %v4237 = vpack.c.bf16 %v4226, %v4225
      %v4238 = vpack.c.bf16 %v4228, %v4227
      %v4239 = vpack.c.bf16 %v4230, %v4229
      %v4240 = vpack.c.bf16 %v4232, %v4231
      %v4241 = vpack.c.bf16 %v4234, %v4233
      %v4243 = vsel %vm3263, %v4235, 0
      %v4246 = vsel %vm3263, %v4236, 0
      %v4249 = vsel %vm3263, %v4237, 0
      %v4252 = vsel %vm3263, %v4238, 0
      %v4255 = vsel %vm3263, %v4239, 0
      %v4258 = vsel %vm3263, %v4240, 0
      %v4261 = vsel %vm3263, %v4241, 0
      %4263 = vmatprep.subr.bf16.mxu0 0
      %4264 = vmatpush1.bf16.msra.mxu0 0
      %4265 = vmatprep.subr.bf16.mxu0 0
      %4266 = vmatpush1.bf16.msra.mxu0 0
      %4267 = vmatprep.subr.bf16.mxu0 0
      %4268 = vmatpush1.bf16.msra.mxu0 0
      %4269 = vmatprep.subr.bf16.mxu0 0
      %4270 = vmatpush1.bf16.msra.mxu0 0
      %4271 = vmatprep.subr.bf16.mxu0 0
      %4272 = vmatpush1.bf16.msra.mxu0 0
      %4273 = vmatprep.subr.bf16.mxu0 0
      %4274 = vmatpush1.bf16.msra.mxu0 0
      %4275 = vmatprep.subr.bf16.mxu0 0
      %4276 = vmatpush1.bf16.msra.mxu0 %v3208
      %4277 = vmatprep.subr.bf16.mxu0 0
      %4278 = vmatpush1.bf16.msra.mxu0 %v3207
      %4279 = vmatprep.subr.bf16.mxu0 0
      %4280 = vmatpush2.bf16.msra.mxu0 0
      %4281 = vmatprep.subr.bf16.mxu0 0
      %4282 = vmatpush2.bf16.msra.mxu0 0
      %4283 = vmatprep.subr.bf16.mxu0 0
      %4284 = vmatpush2.bf16.msra.mxu0 0
      %4285 = vmatprep.subr.bf16.mxu0 0
      %4286 = vmatpush2.bf16.msra.mxu0 0
      %4287 = vmatprep.subr.bf16.mxu0 0
      %4288 = vmatpush2.bf16.msra.mxu0 0
      %4289 = vmatprep.subr.bf16.mxu0 0
      %4290 = vmatpush2.bf16.msra.mxu0 0
      %4291 = vmatprep.subr.bf16.mxu0 0
      %4292 = vmatpush2.bf16.msra.mxu0 0
      %4293 = vmatprep.subr.bf16.mxu0 0
      %4294 = vmatpush2.bf16.msra.mxu0 0
      %4295 = vmatprep.mubr.bf16.mxu0 0
      %4296 = vmatmul.mubr.bf16.gmra.mxu0 %v4243
      %v4297 = vpop.f32.mrf.mxu0
      %v4298 = vadd.f32 0.0, %v4297
      %v4299 = vpop.f32.mrf.mxu0
      %v4300 = vpop.f32.mrf.mxu0
      %v4301 = vadd.f32 0.0, %v4300
      %v4302 = vpop.f32.mrf.mxu0
      %4303 = vmatprep.mubr.bf16.mxu0 0
      %4304 = vmatmul.mubr.bf16.gmra.mxu0 %v4246
      %v4305 = vpop.f32.mrf.mxu0
      %v4306 = vadd.f32 0.0, %v4305
      %v4307 = vpop.f32.mrf.mxu0
      %v4308 = vpop.f32.mrf.mxu0
      %v4309 = vadd.f32 0.0, %v4308
      %v4310 = vpop.f32.mrf.mxu0
      %4311 = vmatprep.mubr.bf16.mxu0 0
      %4312 = vmatmul.mubr.bf16.gmra.mxu0 %v4249
      %v4313 = vpop.f32.mrf.mxu0
      %v4314 = vadd.f32 0.0, %v4313
      %v4315 = vpop.f32.mrf.mxu0
      %v4316 = vpop.f32.mrf.mxu0
      %v4317 = vadd.f32 0.0, %v4316
      %v4318 = vpop.f32.mrf.mxu0
      %4319 = vmatprep.mubr.bf16.mxu0 0
      %4320 = vmatmul.mubr.bf16.gmra.mxu0 %v4252
      %v4321 = vpop.f32.mrf.mxu0
      %v4322 = vadd.f32 0.0, %v4321
      %v4323 = vpop.f32.mrf.mxu0
      %v4324 = vpop.f32.mrf.mxu0
      %v4325 = vadd.f32 0.0, %v4324
      %v4326 = vpop.f32.mrf.mxu0
      %4327 = vmatprep.mubr.bf16.mxu0 0
      %4328 = vmatmul.mubr.bf16.gmra.mxu0 %v4255
      %v4329 = vpop.f32.mrf.mxu0
      %v4330 = vadd.f32 0.0, %v4329
      %v4331 = vpop.f32.mrf.mxu0
      %v4332 = vpop.f32.mrf.mxu0
      %v4333 = vadd.f32 0.0, %v4332
      %v4334 = vpop.f32.mrf.mxu0
      %4335 = vmatprep.mubr.bf16.mxu0 0
      %4336 = vmatmul.mubr.bf16.gmra.mxu0 %v4258
      %v4337 = vpop.f32.mrf.mxu0
      %v4338 = vadd.f32 0.0, %v4337
      %v4339 = vpop.f32.mrf.mxu0
      %v4340 = vpop.f32.mrf.mxu0
      %v4341 = vadd.f32 0.0, %v4340
      %v4342 = vpop.f32.mrf.mxu0
      %4343 = vmatprep.mubr.bf16.mxu0 0
      %4344 = vmatmul.mubr.bf16.gmra.mxu0 %v4261
      %v4345 = vpop.f32.mrf.mxu0
      %v4346 = vadd.f32 0.0, %v4345
      %v4347 = vpop.f32.mrf.mxu0
      %v4348 = vpop.f32.mrf.mxu0
      %v4349 = vadd.f32 0.0, %v4348
      %v4350 = vpop.f32.mrf.mxu0
      %4351 = vdwg.mxu0
      %v4352 = vadd.f32 %v4205, %v4298
      %v4353 = vadd.f32 %v4206, %v4301
      %v4354 = vadd.f32 %v4207, %v4306
      %v4355 = vadd.f32 %v4208, %v4309
      %v4356 = vadd.f32 %v4209, %v4314
      %v4357 = vadd.f32 %v4210, %v4317
      %v4358 = vadd.f32 %v4211, %v4322
      %v4359 = vadd.f32 %v4212, %v4325
      %v4360 = vadd.f32 %v4213, %v4330
      %v4361 = vadd.f32 %v4214, %v4333
      %v4362 = vadd.f32 %v4215, %v4338
      %v4363 = vadd.f32 %v4216, %v4341
      %v4364 = vadd.f32 %v4217, %v4346
      %v4365 = vadd.f32 %v4218, %v4349
      %s4366 = sadd.s32 %s3217, 116
      %s4367 = scalar_lea.vmem [#allocation2], %s4366
      %v4368 = vld [vmem:[%s4367] sm:$0xff]
      %v4369 = vld [vmem:[%s4367 + $0x8] sm:$0xff]
      %v4370 = vld [vmem:[%s4367 + $0x10] sm:$0xff]
      %v4371 = vld [vmem:[%s4367 + $0x18] sm:$0xff]
      %v4372 = vld [vmem:[%s4367 + $0x20] sm:$0xff]
      %v4373 = vld [vmem:[%s4367 + $0x28] sm:$0xff]
      %v4374 = vld [vmem:[%s4367 + $0x30] sm:$0xff]
      %v4375 = vld [vmem:[%s4367 + $0x38] sm:$0xff]
      %v4376 = vld [vmem:[%s4367 + $0x40] sm:$0xff]
      %v4377 = vld [vmem:[%s4367 + $0x48] sm:$0xff]
      %v4378 = vld [vmem:[%s4367 + $0x50] sm:$0xff]
      %v4379 = vld [vmem:[%s4367 + $0x58] sm:$0xff]
      %v4380 = vld [vmem:[%s4367 + $0x60] sm:$0xff]
      %v4381 = vld [vmem:[%s4367 + $0x68] sm:$0xff]
      %v4382 = vpack.c.bf16 %v4369, %v4368
      %v4383 = vpack.c.bf16 %v4371, %v4370
      %v4384 = vpack.c.bf16 %v4373, %v4372
      %v4385 = vpack.c.bf16 %v4375, %v4374
      %v4386 = vpack.c.bf16 %v4377, %v4376
      %v4387 = vpack.c.bf16 %v4379, %v4378
      %v4388 = vpack.c.bf16 %v4381, %v4380
      %v4390 = vsel %vm3263, %v4382, 0
      %v4393 = vsel %vm3263, %v4383, 0
      %v4396 = vsel %vm3263, %v4384, 0
      %v4399 = vsel %vm3263, %v4385, 0
      %v4402 = vsel %vm3263, %v4386, 0
      %v4405 = vsel %vm3263, %v4387, 0
      %v4408 = vsel %vm3263, %v4388, 0
      %4410 = vmatprep.subr.bf16.mxu0 0
      %4411 = vmatpush1.bf16.msra.mxu0 0
      %4412 = vmatprep.subr.bf16.mxu0 0
      %4413 = vmatpush1.bf16.msra.mxu0 0
      %4414 = vmatprep.subr.bf16.mxu0 0
      %4415 = vmatpush1.bf16.msra.mxu0 0
      %4416 = vmatprep.subr.bf16.mxu0 0
      %4417 = vmatpush1.bf16.msra.mxu0 0
      %4418 = vmatprep.subr.bf16.mxu0 0
      %4419 = vmatpush1.bf16.msra.mxu0 0
      %4420 = vmatprep.subr.bf16.mxu0 0
      %4421 = vmatpush1.bf16.msra.mxu0 0
      %4422 = vmatprep.subr.bf16.mxu0 0
      %4423 = vmatpush1.bf16.msra.mxu0 %v3210
      %4424 = vmatprep.subr.bf16.mxu0 0
      %4425 = vmatpush1.bf16.msra.mxu0 %v3209
      %4426 = vmatprep.subr.bf16.mxu0 0
      %4427 = vmatpush2.bf16.msra.mxu0 0
      %4428 = vmatprep.subr.bf16.mxu0 0
      %4429 = vmatpush2.bf16.msra.mxu0 0
      %4430 = vmatprep.subr.bf16.mxu0 0
      %4431 = vmatpush2.bf16.msra.mxu0 0
      %4432 = vmatprep.subr.bf16.mxu0 0
      %4433 = vmatpush2.bf16.msra.mxu0 0
      %4434 = vmatprep.subr.bf16.mxu0 0
      %4435 = vmatpush2.bf16.msra.mxu0 0
      %4436 = vmatprep.subr.bf16.mxu0 0
      %4437 = vmatpush2.bf16.msra.mxu0 0
      %4438 = vmatprep.subr.bf16.mxu0 0
      %4439 = vmatpush2.bf16.msra.mxu0 0
      %4440 = vmatprep.subr.bf16.mxu0 0
      %4441 = vmatpush2.bf16.msra.mxu0 0
      %4442 = vmatprep.mubr.bf16.mxu0 0
      %4443 = vmatmul.mubr.bf16.gmra.mxu0 %v4390
      %v4444 = vpop.f32.mrf.mxu0
      %v4445 = vadd.f32 0.0, %v4444
      %v4446 = vpop.f32.mrf.mxu0
      %v4447 = vpop.f32.mrf.mxu0
      %v4448 = vadd.f32 0.0, %v4447
      %v4449 = vpop.f32.mrf.mxu0
      %4450 = vmatprep.mubr.bf16.mxu0 0
      %4451 = vmatmul.mubr.bf16.gmra.mxu0 %v4393
      %v4452 = vpop.f32.mrf.mxu0
      %v4453 = vadd.f32 0.0, %v4452
      %v4454 = vpop.f32.mrf.mxu0
      %v4455 = vpop.f32.mrf.mxu0
      %v4456 = vadd.f32 0.0, %v4455
      %v4457 = vpop.f32.mrf.mxu0
      %4458 = vmatprep.mubr.bf16.mxu0 0
      %4459 = vmatmul.mubr.bf16.gmra.mxu0 %v4396
      %v4460 = vpop.f32.mrf.mxu0
      %v4461 = vadd.f32 0.0, %v4460
      %v4462 = vpop.f32.mrf.mxu0
      %v4463 = vpop.f32.mrf.mxu0
      %v4464 = vadd.f32 0.0, %v4463
      %v4465 = vpop.f32.mrf.mxu0
      %4466 = vmatprep.mubr.bf16.mxu0 0
      %4467 = vmatmul.mubr.bf16.gmra.mxu0 %v4399
      %v4468 = vpop.f32.mrf.mxu0
      %v4469 = vadd.f32 0.0, %v4468
      %v4470 = vpop.f32.mrf.mxu0
      %v4471 = vpop.f32.mrf.mxu0
      %v4472 = vadd.f32 0.0, %v4471
      %v4473 = vpop.f32.mrf.mxu0
      %4474 = vmatprep.mubr.bf16.mxu0 0
      %4475 = vmatmul.mubr.bf16.gmra.mxu0 %v4402
      %v4476 = vpop.f32.mrf.mxu0
      %v4477 = vadd.f32 0.0, %v4476
      %v4478 = vpop.f32.mrf.mxu0
      %v4479 = vpop.f32.mrf.mxu0
      %v4480 = vadd.f32 0.0, %v4479
      %v4481 = vpop.f32.mrf.mxu0
      %4482 = vmatprep.mubr.bf16.mxu0 0
      %4483 = vmatmul.mubr.bf16.gmra.mxu0 %v4405
      %v4484 = vpop.f32.mrf.mxu0
      %v4485 = vadd.f32 0.0, %v4484
      %v4486 = vpop.f32.mrf.mxu0
      %v4487 = vpop.f32.mrf.mxu0
      %v4488 = vadd.f32 0.0, %v4487
      %v4489 = vpop.f32.mrf.mxu0
      %4490 = vmatprep.mubr.bf16.mxu0 0
      %4491 = vmatmul.mubr.bf16.gmra.mxu0 %v4408
      %v4492 = vpop.f32.mrf.mxu0
      %v4493 = vadd.f32 0.0, %v4492
      %v4494 = vpop.f32.mrf.mxu0
      %v4495 = vpop.f32.mrf.mxu0
      %v4496 = vadd.f32 0.0, %v4495
      %v4497 = vpop.f32.mrf.mxu0
      %4498 = vdwg.mxu0
      %v4499 = vadd.f32 %v4352, %v4445
      %v4500 = vadd.f32 %v4353, %v4448
      %v4501 = vadd.f32 %v4354, %v4453
      %v4502 = vadd.f32 %v4355, %v4456
      %v4503 = vadd.f32 %v4356, %v4461
      %v4504 = vadd.f32 %v4357, %v4464
      %v4505 = vadd.f32 %v4358, %v4469
      %v4506 = vadd.f32 %v4359, %v4472
      %v4507 = vadd.f32 %v4360, %v4477
      %v4508 = vadd.f32 %v4361, %v4480
      %v4509 = vadd.f32 %v4362, %v4485
      %v4510 = vadd.f32 %v4363, %v4488
      %v4511 = vadd.f32 %v4364, %v4493
      %v4512 = vadd.f32 %v4365, %v4496
      %v4514 = vlaneseq
      %v4515 = vshrl.u32 %v4514, 7
      %v4516 = vsub.s32 0, %v4515
      %v4517 = vrot.slane %v3192, %v4516
      %v4519 = vadd.f32 %v4499, %v4517
      %v4520 = vadd.f32 %v4500, %v4517
      %v4521 = vadd.f32 %v4501, %v4517
      %v4522 = vadd.f32 %v4502, %v4517
      %v4523 = vadd.f32 %v4503, %v4517
      %v4524 = vadd.f32 %v4504, %v4517
      %v4525 = vadd.f32 %v4505, %v4517
      %v4526 = vadd.f32 %v4506, %v4517
      %v4527 = vadd.f32 %v4507, %v4517
      %v4528 = vadd.f32 %v4508, %v4517
      %v4529 = vadd.f32 %v4509, %v4517
      %v4530 = vadd.f32 %v4510, %v4517
      %v4531 = vadd.f32 %v4511, %v4517
      %v4532 = vadd.f32 %v4512, %v4517
      %v4533 = vmax.f32 %v4519, 0.0
      %v4534 = vmax.f32 %v4520, 0.0
      %v4535 = vmax.f32 %v4521, 0.0
      %v4536 = vmax.f32 %v4522, 0.0
      %v4537 = vmax.f32 %v4523, 0.0
      %v4538 = vmax.f32 %v4524, 0.0
      %v4539 = vmax.f32 %v4525, 0.0
      %v4540 = vmax.f32 %v4526, 0.0
      %v4541 = vmax.f32 %v4527, 0.0
      %v4542 = vmax.f32 %v4528, 0.0
      %v4543 = vmax.f32 %v4529, 0.0
      %v4544 = vmax.f32 %v4530, 0.0
      %v4545 = vmax.f32 %v4531, 0.0
      %v4546 = vmax.f32 %v4532, 0.0
      %s4547 = scalar_lea.vmem [#allocation3], %s3217
      %4548 = vst.msk [vmem:[%s4547] sm:$0xff] %vm3263, %v4533
      %4549 = vst.msk [vmem:[%s4547 + $0x8] sm:$0xff] %vm3263, %v4534
      %4550 = vst.msk [vmem:[%s4547 + $0x10] sm:$0xff] %vm3263, %v4535
      %4551 = vst.msk [vmem:[%s4547 + $0x18] sm:$0xff] %vm3263, %v4536
      %4552 = vst.msk [vmem:[%s4547 + $0x20] sm:$0xff] %vm3263, %v4537
      %4553 = vst.msk [vmem:[%s4547 + $0x28] sm:$0xff] %vm3263, %v4538
      %4554 = vst.msk [vmem:[%s4547 + $0x30] sm:$0xff] %vm3263, %v4539
      %4555 = vst.msk [vmem:[%s4547 + $0x38] sm:$0xff] %vm3263, %v4540
      %4556 = vst.msk [vmem:[%s4547 + $0x40] sm:$0xff] %vm3263, %v4541
      %4557 = vst.msk [vmem:[%s4547 + $0x48] sm:$0xff] %vm3263, %v4542
      %4558 = vst.msk [vmem:[%s4547 + $0x50] sm:$0xff] %vm3263, %v4543
      %4559 = vst.msk [vmem:[%s4547 + $0x58] sm:$0xff] %vm3263, %v4544
      %4560 = vst.msk [vmem:[%s4547 + $0x60] sm:$0xff] %vm3263, %v4545
      %4561 = vst.msk [vmem:[%s4547 + $0x68] sm:$0xff] %vm3263, %v4546
    $region79: #{tpu_custom_call.1} parent=1 // loop_footer
      %s3216 = sadd.s32 1, %s3212
    $region80: #{tpu_custom_call.1} parent=1 // loop_footer_branch
      %3211 = sbr.rel target = $region76
    $region81: #{tpu_custom_call.1} parent=1 // loop_exit
      _
    %v4562 = vld [vmem:[%s7] sm:$0xff]
    %v4563 = vld [vmem:[%s7 + $0x8] sm:$0xff]
    %v4564 = vld [vmem:[%s7 + $0x10] sm:$0xff]
    %v4565 = vld [vmem:[%s7 + $0x18] sm:$0xff]
    %v4566 = vld [vmem:[%s7 + $0x20] sm:$0xff]
    %v4567 = vld [vmem:[%s7 + $0x28] sm:$0xff]
    %v4568 = vld [vmem:[%s7 + $0x30] sm:$0xff]
    %v4569 = vld [vmem:[%s7 + $0x38] sm:$0xff]
    %v4570 = vld [vmem:[%s7 + $0x40] sm:$0xff]
    %v4571 = vld [vmem:[%s7 + $0x48] sm:$0xff]
    %v4572 = vld [vmem:[%s7 + $0x50] sm:$0xff]
    %v4573 = vld [vmem:[%s7 + $0x58] sm:$0xff]
    %v4574 = vld [vmem:[%s7 + $0x60] sm:$0xff]
    %v4575 = vld [vmem:[%s7 + $0x68] sm:$0xff]
    %v4576 = vld [vmem:[%s7 + $0x70] sm:$0xff]
    %v4577 = vld [vmem:[%s7 + $0x78] sm:$0xff]
    %v4578 = vld [vmem:[%s7 + $0x80] sm:$0xff]
    %v4579 = vld [vmem:[%s7 + $0x88] sm:$0xff]
    %v4580 = vld [vmem:[%s7 + $0x90] sm:$0xff]
    %v4581 = vld [vmem:[%s7 + $0x98] sm:$0xff]
    %v4582 = vld [vmem:[%s7 + $0xa0] sm:$0xff]
    %v4583 = vld [vmem:[%s7 + $0xa8] sm:$0xff]
    %v4584 = vld [vmem:[%s7 + $0xb0] sm:$0xff]
    %v4585 = vld [vmem:[%s7 + $0xb8] sm:$0xff]
    %v4586 = vld [vmem:[%s7 + $0xc0] sm:$0xff]
    %v4587 = vld [vmem:[%s7 + $0xc8] sm:$0xff]
    %v4588 = vld [vmem:[%s7 + $0xd0] sm:$0xff]
    %v4589 = vld [vmem:[%s7 + $0xd8] sm:$0xff]
    %v4590 = vld [vmem:[%s7 + $0xe0] sm:$0xff]
    %v4591 = vld [vmem:[%s7 + $0xe8] sm:$0xff]
    %v4592 = vld [vmem:[%s7 + $0xf0] sm:$0xff]
    %v4593 = vld [vmem:[%s7 + $0xf8] sm:$0xff]
    %v4594 = vld [vmem:[%s7 + $0x100] sm:$0xff]
    %v4595 = vld [vmem:[%s7 + $0x108] sm:$0xff]
    %v4596 = vld [vmem:[%s7 + $0x110] sm:$0xff]
    %v4597 = vld [vmem:[%s7 + $0x118] sm:$0xff]
    %v4598 = vld [vmem:[%s8] sm:$0x1]
    %v4599 = vpack.c.bf16 %v4563, %v4562
    %v4600 = vpack.c.bf16 %v4565, %v4564
    %v4601 = vpack.c.bf16 %v4567, %v4566
    %v4602 = vpack.c.bf16 %v4569, %v4568
    %v4603 = vpack.c.bf16 %v4571, %v4570
    %v4604 = vpack.c.bf16 %v4573, %v4572
    %v4605 = vpack.c.bf16 %v4575, %v4574
    %v4606 = vpack.c.bf16 %v4577, %v4576
    %v4607 = vpack.c.bf16 %v4579, %v4578
    %v4608 = vpack.c.bf16 %v4581, %v4580
    %v4609 = vpack.c.bf16 %v4583, %v4582
    %v4610 = vpack.c.bf16 %v4585, %v4584
    %v4611 = vpack.c.bf16 %v4587, %v4586
    %v4612 = vpack.c.bf16 %v4589, %v4588
    %v4613 = vpack.c.bf16 %v4591, %v4590
    %v4614 = vpack.c.bf16 %v4593, %v4592
    %v4615 = vpack.c.bf16 %v4595, %v4594
    %v4616 = vpack.c.bf16 %v4597, %v4596
    loop: start=0, step=1, limit=14
    $region82: #{tpu_custom_call.1} parent=1 // loop_pre_header
      _
    $region83: #{tpu_custom_call.1} parent=1 // loop_header
      %s4618 = sphi 0, %s4622
      %p4619 = scmp.ge.s32.totalorder %s4618, 14
    $region84: #{tpu_custom_call.1} parent=1 // loop_header_branch
      %4621 = sbr.rel (%p4619) target = $region88
    $region85: #{tpu_custom_call.1} parent=1 // loop_body
      %s4623 = smul.u32 %s4618, 112
      %s4624 = scalar_lea.vmem [#allocation3], %s4623
      %v4625 = vld [vmem:[%s4624] sm:$0xff]
      %v4626 = vld [vmem:[%s4624 + $0x8] sm:$0xff]
      %v4627 = vld [vmem:[%s4624 + $0x10] sm:$0xff]
      %v4628 = vld [vmem:[%s4624 + $0x18] sm:$0xff]
      %v4629 = vld [vmem:[%s4624 + $0x20] sm:$0xff]
      %v4630 = vld [vmem:[%s4624 + $0x28] sm:$0xff]
      %v4631 = vld [vmem:[%s4624 + $0x30] sm:$0xff]
      %v4632 = vld [vmem:[%s4624 + $0x38] sm:$0xff]
      %v4633 = vld [vmem:[%s4624 + $0x40] sm:$0xff]
      %v4634 = vld [vmem:[%s4624 + $0x48] sm:$0xff]
      %v4635 = vld [vmem:[%s4624 + $0x50] sm:$0xff]
      %v4636 = vld [vmem:[%s4624 + $0x58] sm:$0xff]
      %v4637 = vld [vmem:[%s4624 + $0x60] sm:$0xff]
      %v4638 = vld [vmem:[%s4624 + $0x68] sm:$0xff]
      %v4639 = vpack.c.bf16 %v4626, %v4625
      %v4640 = vpack.c.bf16 %v4628, %v4627
      %v4641 = vpack.c.bf16 %v4630, %v4629
      %v4642 = vpack.c.bf16 %v4632, %v4631
      %v4643 = vpack.c.bf16 %v4634, %v4633
      %v4644 = vpack.c.bf16 %v4636, %v4635
      %v4645 = vpack.c.bf16 %v4638, %v4637
      %s4646 = sadd.s32 %s4623, 2
      %s4647 = scalar_lea.vmem [#allocation3], %s4646
      %v4648 = vld [vmem:[%s4647] sm:$0xff]
      %v4649 = vld [vmem:[%s4647 + $0x8] sm:$0xff]
      %v4650 = vld [vmem:[%s4647 + $0x10] sm:$0xff]
      %v4651 = vld [vmem:[%s4647 + $0x18] sm:$0xff]
      %v4652 = vld [vmem:[%s4647 + $0x20] sm:$0xff]
      %v4653 = vld [vmem:[%s4647 + $0x28] sm:$0xff]
      %v4654 = vld [vmem:[%s4647 + $0x30] sm:$0xff]
      %v4655 = vld [vmem:[%s4647 + $0x38] sm:$0xff]
      %v4656 = vld [vmem:[%s4647 + $0x40] sm:$0xff]
      %v4657 = vld [vmem:[%s4647 + $0x48] sm:$0xff]
      %v4658 = vld [vmem:[%s4647 + $0x50] sm:$0xff]
      %v4659 = vld [vmem:[%s4647 + $0x58] sm:$0xff]
      %v4660 = vld [vmem:[%s4647 + $0x60] sm:$0xff]
      %v4661 = vld [vmem:[%s4647 + $0x68] sm:$0xff]
      %v4662 = vpack.c.bf16 %v4649, %v4648
      %v4663 = vpack.c.bf16 %v4651, %v4650
      %v4664 = vpack.c.bf16 %v4653, %v4652
      %v4665 = vpack.c.bf16 %v4655, %v4654
      %v4666 = vpack.c.bf16 %v4657, %v4656
      %v4667 = vpack.c.bf16 %v4659, %v4658
      %v4668 = vpack.c.bf16 %v4661, %v4660
      %vm4669 = vcmask 261120
      %v4671 = vsel %vm4669, %v4662, 0
      %v4674 = vsel %vm4669, %v4663, 0
      %v4677 = vsel %vm4669, %v4664, 0
      %v4680 = vsel %vm4669, %v4665, 0
      %v4683 = vsel %vm4669, %v4666, 0
      %v4686 = vsel %vm4669, %v4667, 0
      %v4689 = vsel %vm4669, %v4668, 0
      %4691 = vmatprep.subr.bf16.mxu0 0
      %4692 = vmatpush1.bf16.msra.mxu0 0
      %4693 = vmatprep.subr.bf16.mxu0 0
      %4694 = vmatpush1.bf16.msra.mxu0 0
      %4695 = vmatprep.subr.bf16.mxu0 0
      %4696 = vmatpush1.bf16.msra.mxu0 0
      %4697 = vmatprep.subr.bf16.mxu0 0
      %4698 = vmatpush1.bf16.msra.mxu0 0
      %4699 = vmatprep.subr.bf16.mxu0 0
      %4700 = vmatpush1.bf16.msra.mxu0 0
      %4701 = vmatprep.subr.bf16.mxu0 0
      %4702 = vmatpush1.bf16.msra.mxu0 0
      %4703 = vmatprep.subr.bf16.mxu0 0
      %4704 = vmatpush1.bf16.msra.mxu0 %v4602
      %4705 = vmatprep.subr.bf16.mxu0 0
      %4706 = vmatpush1.bf16.msra.mxu0 %v4601
      %4707 = vmatprep.subr.bf16.mxu0 0
      %4708 = vmatpush2.bf16.msra.mxu0 0
      %4709 = vmatprep.subr.bf16.mxu0 0
      %4710 = vmatpush2.bf16.msra.mxu0 0
      %4711 = vmatprep.subr.bf16.mxu0 0
      %4712 = vmatpush2.bf16.msra.mxu0 0
      %4713 = vmatprep.subr.bf16.mxu0 0
      %4714 = vmatpush2.bf16.msra.mxu0 0
      %4715 = vmatprep.subr.bf16.mxu0 0
      %4716 = vmatpush2.bf16.msra.mxu0 0
      %4717 = vmatprep.subr.bf16.mxu0 0
      %4718 = vmatpush2.bf16.msra.mxu0 0
      %4719 = vmatprep.subr.bf16.mxu0 0
      %4720 = vmatpush2.bf16.msra.mxu0 0
      %4721 = vmatprep.subr.bf16.mxu0 0
      %4722 = vmatpush2.bf16.msra.mxu0 0
      %4723 = vmatprep.mubr.bf16.mxu0 0
      %4724 = vmatmul.mubr.bf16.gmra.mxu0 %v4671
      %v4725 = vpop.f32.mrf.mxu0
      %v4726 = vadd.f32 0.0, %v4725
      %v4727 = vpop.f32.mrf.mxu0
      %v4728 = vpop.f32.mrf.mxu0
      %v4729 = vadd.f32 0.0, %v4728
      %v4730 = vpop.f32.mrf.mxu0
      %4731 = vmatprep.mubr.bf16.mxu0 0
      %4732 = vmatmul.mubr.bf16.gmra.mxu0 %v4674
      %v4733 = vpop.f32.mrf.mxu0
      %v4734 = vadd.f32 0.0, %v4733
      %v4735 = vpop.f32.mrf.mxu0
      %v4736 = vpop.f32.mrf.mxu0
      %v4737 = vadd.f32 0.0, %v4736
      %v4738 = vpop.f32.mrf.mxu0
      %4739 = vmatprep.mubr.bf16.mxu0 0
      %4740 = vmatmul.mubr.bf16.gmra.mxu0 %v4677
      %v4741 = vpop.f32.mrf.mxu0
      %v4742 = vadd.f32 0.0, %v4741
      %v4743 = vpop.f32.mrf.mxu0
      %v4744 = vpop.f32.mrf.mxu0
      %v4745 = vadd.f32 0.0, %v4744
      %v4746 = vpop.f32.mrf.mxu0
      %4747 = vmatprep.mubr.bf16.mxu0 0
      %4748 = vmatmul.mubr.bf16.gmra.mxu0 %v4680
      %v4749 = vpop.f32.mrf.mxu0
      %v4750 = vadd.f32 0.0, %v4749
      %v4751 = vpop.f32.mrf.mxu0
      %v4752 = vpop.f32.mrf.mxu0
      %v4753 = vadd.f32 0.0, %v4752
      %v4754 = vpop.f32.mrf.mxu0
      %4755 = vmatprep.mubr.bf16.mxu0 0
      %4756 = vmatmul.mubr.bf16.gmra.mxu0 %v4683
      %v4757 = vpop.f32.mrf.mxu0
      %v4758 = vadd.f32 0.0, %v4757
      %v4759 = vpop.f32.mrf.mxu0
      %v4760 = vpop.f32.mrf.mxu0
      %v4761 = vadd.f32 0.0, %v4760
      %v4762 = vpop.f32.mrf.mxu0
      %4763 = vmatprep.mubr.bf16.mxu0 0
      %4764 = vmatmul.mubr.bf16.gmra.mxu0 %v4686
      %v4765 = vpop.f32.mrf.mxu0
      %v4766 = vadd.f32 0.0, %v4765
      %v4767 = vpop.f32.mrf.mxu0
      %v4768 = vpop.f32.mrf.mxu0
      %v4769 = vadd.f32 0.0, %v4768
      %v4770 = vpop.f32.mrf.mxu0
      %4771 = vmatprep.mubr.bf16.mxu0 0
      %4772 = vmatmul.mubr.bf16.gmra.mxu0 %v4689
      %v4773 = vpop.f32.mrf.mxu0
      %v4774 = vadd.f32 0.0, %v4773
      %v4775 = vpop.f32.mrf.mxu0
      %v4776 = vpop.f32.mrf.mxu0
      %v4777 = vadd.f32 0.0, %v4776
      %v4778 = vpop.f32.mrf.mxu0
      %4779 = vdwg.mxu0
      %v4781 = vsel %vm4669, %v4639, 0
      %v4784 = vsel %vm4669, %v4640, 0
      %v4787 = vsel %vm4669, %v4641, 0
      %v4790 = vsel %vm4669, %v4642, 0
      %v4793 = vsel %vm4669, %v4643, 0
      %v4796 = vsel %vm4669, %v4644, 0
      %v4799 = vsel %vm4669, %v4645, 0
      %4801 = vmatprep.subr.bf16.mxu0 0
      %4802 = vmatpush1.bf16.msra.mxu0 0
      %4803 = vmatprep.subr.bf16.mxu0 0
      %4804 = vmatpush1.bf16.msra.mxu0 0
      %4805 = vmatprep.subr.bf16.mxu0 0
      %4806 = vmatpush1.bf16.msra.mxu0 0
      %4807 = vmatprep.subr.bf16.mxu0 0
      %4808 = vmatpush1.bf16.msra.mxu0 0
      %4809 = vmatprep.subr.bf16.mxu0 0
      %4810 = vmatpush1.bf16.msra.mxu0 0
      %4811 = vmatprep.subr.bf16.mxu0 0
      %4812 = vmatpush1.bf16.msra.mxu0 0
      %4813 = vmatprep.subr.bf16.mxu0 0
      %4814 = vmatpush1.bf16.msra.mxu0 %v4600
      %4815 = vmatprep.subr.bf16.mxu0 0
      %4816 = vmatpush1.bf16.msra.mxu0 %v4599
      %4817 = vmatprep.subr.bf16.mxu0 0
      %4818 = vmatpush2.bf16.msra.mxu0 0
      %4819 = vmatprep.subr.bf16.mxu0 0
      %4820 = vmatpush2.bf16.msra.mxu0 0
      %4821 = vmatprep.subr.bf16.mxu0 0
      %4822 = vmatpush2.bf16.msra.mxu0 0
      %4823 = vmatprep.subr.bf16.mxu0 0
      %4824 = vmatpush2.bf16.msra.mxu0 0
      %4825 = vmatprep.subr.bf16.mxu0 0
      %4826 = vmatpush2.bf16.msra.mxu0 0
      %4827 = vmatprep.subr.bf16.mxu0 0
      %4828 = vmatpush2.bf16.msra.mxu0 0
      %4829 = vmatprep.subr.bf16.mxu0 0
      %4830 = vmatpush2.bf16.msra.mxu0 0
      %4831 = vmatprep.subr.bf16.mxu0 0
      %4832 = vmatpush2.bf16.msra.mxu0 0
      %4833 = vmatprep.mubr.bf16.mxu0 0
      %4834 = vmatmul.mubr.bf16.gmra.mxu0 %v4781
      %v4835 = vpop.f32.mrf.mxu0
      %v4836 = vadd.f32 %v4726, %v4835
      %v4837 = vpop.f32.mrf.mxu0
      %v4838 = vpop.f32.mrf.mxu0
      %v4839 = vadd.f32 %v4729, %v4838
      %v4840 = vpop.f32.mrf.mxu0
      %4841 = vmatprep.mubr.bf16.mxu0 0
      %4842 = vmatmul.mubr.bf16.gmra.mxu0 %v4784
      %v4843 = vpop.f32.mrf.mxu0
      %v4844 = vadd.f32 %v4734, %v4843
      %v4845 = vpop.f32.mrf.mxu0
      %v4846 = vpop.f32.mrf.mxu0
      %v4847 = vadd.f32 %v4737, %v4846
      %v4848 = vpop.f32.mrf.mxu0
      %4849 = vmatprep.mubr.bf16.mxu0 0
      %4850 = vmatmul.mubr.bf16.gmra.mxu0 %v4787
      %v4851 = vpop.f32.mrf.mxu0
      %v4852 = vadd.f32 %v4742, %v4851
      %v4853 = vpop.f32.mrf.mxu0
      %v4854 = vpop.f32.mrf.mxu0
      %v4855 = vadd.f32 %v4745, %v4854
      %v4856 = vpop.f32.mrf.mxu0
      %4857 = vmatprep.mubr.bf16.mxu0 0
      %4858 = vmatmul.mubr.bf16.gmra.mxu0 %v4790
      %v4859 = vpop.f32.mrf.mxu0
      %v4860 = vadd.f32 %v4750, %v4859
      %v4861 = vpop.f32.mrf.mxu0
      %v4862 = vpop.f32.mrf.mxu0
      %v4863 = vadd.f32 %v4753, %v4862
      %v4864 = vpop.f32.mrf.mxu0
      %4865 = vmatprep.mubr.bf16.mxu0 0
      %4866 = vmatmul.mubr.bf16.gmra.mxu0 %v4793
      %v4867 = vpop.f32.mrf.mxu0
      %v4868 = vadd.f32 %v4758, %v4867
      %v4869 = vpop.f32.mrf.mxu0
      %v4870 = vpop.f32.mrf.mxu0
      %v4871 = vadd.f32 %v4761, %v4870
      %v4872 = vpop.f32.mrf.mxu0
      %4873 = vmatprep.mubr.bf16.mxu0 0
      %4874 = vmatmul.mubr.bf16.gmra.mxu0 %v4796
      %v4875 = vpop.f32.mrf.mxu0
      %v4876 = vadd.f32 %v4766, %v4875
      %v4877 = vpop.f32.mrf.mxu0
      %v4878 = vpop.f32.mrf.mxu0
      %v4879 = vadd.f32 %v4769, %v4878
      %v4880 = vpop.f32.mrf.mxu0
      %4881 = vmatprep.mubr.bf16.mxu0 0
      %4882 = vmatmul.mubr.bf16.gmra.mxu0 %v4799
      %v4883 = vpop.f32.mrf.mxu0
      %v4884 = vadd.f32 %v4774, %v4883
      %v4885 = vpop.f32.mrf.mxu0
      %v4886 = vpop.f32.mrf.mxu0
      %v4887 = vadd.f32 %v4777, %v4886
      %v4888 = vpop.f32.mrf.mxu0
      %4889 = vdwg.mxu0
      %s4890 = sadd.s32 %s4623, 4
      %s4891 = scalar_lea.vmem [#allocation3], %s4890
      %v4892 = vld [vmem:[%s4891] sm:$0xff]
      %v4893 = vld [vmem:[%s4891 + $0x8] sm:$0xff]
      %v4894 = vld [vmem:[%s4891 + $0x10] sm:$0xff]
      %v4895 = vld [vmem:[%s4891 + $0x18] sm:$0xff]
      %v4896 = vld [vmem:[%s4891 + $0x20] sm:$0xff]
      %v4897 = vld [vmem:[%s4891 + $0x28] sm:$0xff]
      %v4898 = vld [vmem:[%s4891 + $0x30] sm:$0xff]
      %v4899 = vld [vmem:[%s4891 + $0x38] sm:$0xff]
      %v4900 = vld [vmem:[%s4891 + $0x40] sm:$0xff]
      %v4901 = vld [vmem:[%s4891 + $0x48] sm:$0xff]
      %v4902 = vld [vmem:[%s4891 + $0x50] sm:$0xff]
      %v4903 = vld [vmem:[%s4891 + $0x58] sm:$0xff]
      %v4904 = vld [vmem:[%s4891 + $0x60] sm:$0xff]
      %v4905 = vld [vmem:[%s4891 + $0x68] sm:$0xff]
      %v4906 = vpack.c.bf16 %v4893, %v4892
      %v4907 = vpack.c.bf16 %v4895, %v4894
      %v4908 = vpack.c.bf16 %v4897, %v4896
      %v4909 = vpack.c.bf16 %v4899, %v4898
      %v4910 = vpack.c.bf16 %v4901, %v4900
      %v4911 = vpack.c.bf16 %v4903, %v4902
      %v4912 = vpack.c.bf16 %v4905, %v4904
      %v4914 = vsel %vm4669, %v4906, 0
      %v4917 = vsel %vm4669, %v4907, 0
      %v4920 = vsel %vm4669, %v4908, 0
      %v4923 = vsel %vm4669, %v4909, 0
      %v4926 = vsel %vm4669, %v4910, 0
      %v4929 = vsel %vm4669, %v4911, 0
      %v4932 = vsel %vm4669, %v4912, 0
      %4934 = vmatprep.subr.bf16.mxu0 0
      %4935 = vmatpush1.bf16.msra.mxu0 0
      %4936 = vmatprep.subr.bf16.mxu0 0
      %4937 = vmatpush1.bf16.msra.mxu0 0
      %4938 = vmatprep.subr.bf16.mxu0 0
      %4939 = vmatpush1.bf16.msra.mxu0 0
      %4940 = vmatprep.subr.bf16.mxu0 0
      %4941 = vmatpush1.bf16.msra.mxu0 0
      %4942 = vmatprep.subr.bf16.mxu0 0
      %4943 = vmatpush1.bf16.msra.mxu0 0
      %4944 = vmatprep.subr.bf16.mxu0 0
      %4945 = vmatpush1.bf16.msra.mxu0 0
      %4946 = vmatprep.subr.bf16.mxu0 0
      %4947 = vmatpush1.bf16.msra.mxu0 %v4604
      %4948 = vmatprep.subr.bf16.mxu0 0
      %4949 = vmatpush1.bf16.msra.mxu0 %v4603
      %4950 = vmatprep.subr.bf16.mxu0 0
      %4951 = vmatpush2.bf16.msra.mxu0 0
      %4952 = vmatprep.subr.bf16.mxu0 0
      %4953 = vmatpush2.bf16.msra.mxu0 0
      %4954 = vmatprep.subr.bf16.mxu0 0
      %4955 = vmatpush2.bf16.msra.mxu0 0
      %4956 = vmatprep.subr.bf16.mxu0 0
      %4957 = vmatpush2.bf16.msra.mxu0 0
      %4958 = vmatprep.subr.bf16.mxu0 0
      %4959 = vmatpush2.bf16.msra.mxu0 0
      %4960 = vmatprep.subr.bf16.mxu0 0
      %4961 = vmatpush2.bf16.msra.mxu0 0
      %4962 = vmatprep.subr.bf16.mxu0 0
      %4963 = vmatpush2.bf16.msra.mxu0 0
      %4964 = vmatprep.subr.bf16.mxu0 0
      %4965 = vmatpush2.bf16.msra.mxu0 0
      %4966 = vmatprep.mubr.bf16.mxu0 0
      %4967 = vmatmul.mubr.bf16.gmra.mxu0 %v4914
      %v4968 = vpop.f32.mrf.mxu0
      %v4969 = vadd.f32 0.0, %v4968
      %v4970 = vpop.f32.mrf.mxu0
      %v4971 = vpop.f32.mrf.mxu0
      %v4972 = vadd.f32 0.0, %v4971
      %v4973 = vpop.f32.mrf.mxu0
      %4974 = vmatprep.mubr.bf16.mxu0 0
      %4975 = vmatmul.mubr.bf16.gmra.mxu0 %v4917
      %v4976 = vpop.f32.mrf.mxu0
      %v4977 = vadd.f32 0.0, %v4976
      %v4978 = vpop.f32.mrf.mxu0
      %v4979 = vpop.f32.mrf.mxu0
      %v4980 = vadd.f32 0.0, %v4979
      %v4981 = vpop.f32.mrf.mxu0
      %4982 = vmatprep.mubr.bf16.mxu0 0
      %4983 = vmatmul.mubr.bf16.gmra.mxu0 %v4920
      %v4984 = vpop.f32.mrf.mxu0
      %v4985 = vadd.f32 0.0, %v4984
      %v4986 = vpop.f32.mrf.mxu0
      %v4987 = vpop.f32.mrf.mxu0
      %v4988 = vadd.f32 0.0, %v4987
      %v4989 = vpop.f32.mrf.mxu0
      %4990 = vmatprep.mubr.bf16.mxu0 0
      %4991 = vmatmul.mubr.bf16.gmra.mxu0 %v4923
      %v4992 = vpop.f32.mrf.mxu0
      %v4993 = vadd.f32 0.0, %v4992
      %v4994 = vpop.f32.mrf.mxu0
      %v4995 = vpop.f32.mrf.mxu0
      %v4996 = vadd.f32 0.0, %v4995
      %v4997 = vpop.f32.mrf.mxu0
      %4998 = vmatprep.mubr.bf16.mxu0 0
      %4999 = vmatmul.mubr.bf16.gmra.mxu0 %v4926
      %v5000 = vpop.f32.mrf.mxu0
      %v5001 = vadd.f32 0.0, %v5000
      %v5002 = vpop.f32.mrf.mxu0
      %v5003 = vpop.f32.mrf.mxu0
      %v5004 = vadd.f32 0.0, %v5003
      %v5005 = vpop.f32.mrf.mxu0
      %5006 = vmatprep.mubr.bf16.mxu0 0
      %5007 = vmatmul.mubr.bf16.gmra.mxu0 %v4929
      %v5008 = vpop.f32.mrf.mxu0
      %v5009 = vadd.f32 0.0, %v5008
      %v5010 = vpop.f32.mrf.mxu0
      %v5011 = vpop.f32.mrf.mxu0
      %v5012 = vadd.f32 0.0, %v5011
      %v5013 = vpop.f32.mrf.mxu0
      %5014 = vmatprep.mubr.bf16.mxu0 0
      %5015 = vmatmul.mubr.bf16.gmra.mxu0 %v4932
      %v5016 = vpop.f32.mrf.mxu0
      %v5017 = vadd.f32 0.0, %v5016
      %v5018 = vpop.f32.mrf.mxu0
      %v5019 = vpop.f32.mrf.mxu0
      %v5020 = vadd.f32 0.0, %v5019
      %v5021 = vpop.f32.mrf.mxu0
      %5022 = vdwg.mxu0
      %v5023 = vadd.f32 %v4836, %v4969
      %v5024 = vadd.f32 %v4839, %v4972
      %v5025 = vadd.f32 %v4844, %v4977
      %v5026 = vadd.f32 %v4847, %v4980
      %v5027 = vadd.f32 %v4852, %v4985
      %v5028 = vadd.f32 %v4855, %v4988
      %v5029 = vadd.f32 %v4860, %v4993
      %v5030 = vadd.f32 %v4863, %v4996
      %v5031 = vadd.f32 %v4868, %v5001
      %v5032 = vadd.f32 %v4871, %v5004
      %v5033 = vadd.f32 %v4876, %v5009
      %v5034 = vadd.f32 %v4879, %v5012
      %v5035 = vadd.f32 %v4884, %v5017
      %v5036 = vadd.f32 %v4887, %v5020
      %s5037 = sadd.s32 %s4623, 56
      %s5038 = scalar_lea.vmem [#allocation3], %s5037
      %v5039 = vld [vmem:[%s5038] sm:$0xff]
      %v5040 = vld [vmem:[%s5038 + $0x8] sm:$0xff]
      %v5041 = vld [vmem:[%s5038 + $0x10] sm:$0xff]
      %v5042 = vld [vmem:[%s5038 + $0x18] sm:$0xff]
      %v5043 = vld [vmem:[%s5038 + $0x20] sm:$0xff]
      %v5044 = vld [vmem:[%s5038 + $0x28] sm:$0xff]
      %v5045 = vld [vmem:[%s5038 + $0x30] sm:$0xff]
      %v5046 = vld [vmem:[%s5038 + $0x38] sm:$0xff]
      %v5047 = vld [vmem:[%s5038 + $0x40] sm:$0xff]
      %v5048 = vld [vmem:[%s5038 + $0x48] sm:$0xff]
      %v5049 = vld [vmem:[%s5038 + $0x50] sm:$0xff]
      %v5050 = vld [vmem:[%s5038 + $0x58] sm:$0xff]
      %v5051 = vld [vmem:[%s5038 + $0x60] sm:$0xff]
      %v5052 = vld [vmem:[%s5038 + $0x68] sm:$0xff]
      %v5053 = vpack.c.bf16 %v5040, %v5039
      %v5054 = vpack.c.bf16 %v5042, %v5041
      %v5055 = vpack.c.bf16 %v5044, %v5043
      %v5056 = vpack.c.bf16 %v5046, %v5045
      %v5057 = vpack.c.bf16 %v5048, %v5047
      %v5058 = vpack.c.bf16 %v5050, %v5049
      %v5059 = vpack.c.bf16 %v5052, %v5051
      %v5061 = vsel %vm4669, %v5053, 0
      %v5064 = vsel %vm4669, %v5054, 0
      %v5067 = vsel %vm4669, %v5055, 0
      %v5070 = vsel %vm4669, %v5056, 0
      %v5073 = vsel %vm4669, %v5057, 0
      %v5076 = vsel %vm4669, %v5058, 0
      %v5079 = vsel %vm4669, %v5059, 0
      %5081 = vmatprep.subr.bf16.mxu0 0
      %5082 = vmatpush1.bf16.msra.mxu0 0
      %5083 = vmatprep.subr.bf16.mxu0 0
      %5084 = vmatpush1.bf16.msra.mxu0 0
      %5085 = vmatprep.subr.bf16.mxu0 0
      %5086 = vmatpush1.bf16.msra.mxu0 0
      %5087 = vmatprep.subr.bf16.mxu0 0
      %5088 = vmatpush1.bf16.msra.mxu0 0
      %5089 = vmatprep.subr.bf16.mxu0 0
      %5090 = vmatpush1.bf16.msra.mxu0 0
      %5091 = vmatprep.subr.bf16.mxu0 0
      %5092 = vmatpush1.bf16.msra.mxu0 0
      %5093 = vmatprep.subr.bf16.mxu0 0
      %5094 = vmatpush1.bf16.msra.mxu0 %v4606
      %5095 = vmatprep.subr.bf16.mxu0 0
      %5096 = vmatpush1.bf16.msra.mxu0 %v4605
      %5097 = vmatprep.subr.bf16.mxu0 0
      %5098 = vmatpush2.bf16.msra.mxu0 0
      %5099 = vmatprep.subr.bf16.mxu0 0
      %5100 = vmatpush2.bf16.msra.mxu0 0
      %5101 = vmatprep.subr.bf16.mxu0 0
      %5102 = vmatpush2.bf16.msra.mxu0 0
      %5103 = vmatprep.subr.bf16.mxu0 0
      %5104 = vmatpush2.bf16.msra.mxu0 0
      %5105 = vmatprep.subr.bf16.mxu0 0
      %5106 = vmatpush2.bf16.msra.mxu0 0
      %5107 = vmatprep.subr.bf16.mxu0 0
      %5108 = vmatpush2.bf16.msra.mxu0 0
      %5109 = vmatprep.subr.bf16.mxu0 0
      %5110 = vmatpush2.bf16.msra.mxu0 0
      %5111 = vmatprep.subr.bf16.mxu0 0
      %5112 = vmatpush2.bf16.msra.mxu0 0
      %5113 = vmatprep.mubr.bf16.mxu0 0
      %5114 = vmatmul.mubr.bf16.gmra.mxu0 %v5061
      %v5115 = vpop.f32.mrf.mxu0
      %v5116 = vadd.f32 0.0, %v5115
      %v5117 = vpop.f32.mrf.mxu0
      %v5118 = vpop.f32.mrf.mxu0
      %v5119 = vadd.f32 0.0, %v5118
      %v5120 = vpop.f32.mrf.mxu0
      %5121 = vmatprep.mubr.bf16.mxu0 0
      %5122 = vmatmul.mubr.bf16.gmra.mxu0 %v5064
      %v5123 = vpop.f32.mrf.mxu0
      %v5124 = vadd.f32 0.0, %v5123
      %v5125 = vpop.f32.mrf.mxu0
      %v5126 = vpop.f32.mrf.mxu0
      %v5127 = vadd.f32 0.0, %v5126
      %v5128 = vpop.f32.mrf.mxu0
      %5129 = vmatprep.mubr.bf16.mxu0 0
      %5130 = vmatmul.mubr.bf16.gmra.mxu0 %v5067
      %v5131 = vpop.f32.mrf.mxu0
      %v5132 = vadd.f32 0.0, %v5131
      %v5133 = vpop.f32.mrf.mxu0
      %v5134 = vpop.f32.mrf.mxu0
      %v5135 = vadd.f32 0.0, %v5134
      %v5136 = vpop.f32.mrf.mxu0
      %5137 = vmatprep.mubr.bf16.mxu0 0
      %5138 = vmatmul.mubr.bf16.gmra.mxu0 %v5070
      %v5139 = vpop.f32.mrf.mxu0
      %v5140 = vadd.f32 0.0, %v5139
      %v5141 = vpop.f32.mrf.mxu0
      %v5142 = vpop.f32.mrf.mxu0
      %v5143 = vadd.f32 0.0, %v5142
      %v5144 = vpop.f32.mrf.mxu0
      %5145 = vmatprep.mubr.bf16.mxu0 0
      %5146 = vmatmul.mubr.bf16.gmra.mxu0 %v5073
      %v5147 = vpop.f32.mrf.mxu0
      %v5148 = vadd.f32 0.0, %v5147
      %v5149 = vpop.f32.mrf.mxu0
      %v5150 = vpop.f32.mrf.mxu0
      %v5151 = vadd.f32 0.0, %v5150
      %v5152 = vpop.f32.mrf.mxu0
      %5153 = vmatprep.mubr.bf16.mxu0 0
      %5154 = vmatmul.mubr.bf16.gmra.mxu0 %v5076
      %v5155 = vpop.f32.mrf.mxu0
      %v5156 = vadd.f32 0.0, %v5155
      %v5157 = vpop.f32.mrf.mxu0
      %v5158 = vpop.f32.mrf.mxu0
      %v5159 = vadd.f32 0.0, %v5158
      %v5160 = vpop.f32.mrf.mxu0
      %5161 = vmatprep.mubr.bf16.mxu0 0
      %5162 = vmatmul.mubr.bf16.gmra.mxu0 %v5079
      %v5163 = vpop.f32.mrf.mxu0
      %v5164 = vadd.f32 0.0, %v5163
      %v5165 = vpop.f32.mrf.mxu0
      %v5166 = vpop.f32.mrf.mxu0
      %v5167 = vadd.f32 0.0, %v5166
      %v5168 = vpop.f32.mrf.mxu0
      %5169 = vdwg.mxu0
      %v5170 = vadd.f32 %v5023, %v5116
      %v5171 = vadd.f32 %v5024, %v5119
      %v5172 = vadd.f32 %v5025, %v5124
      %v5173 = vadd.f32 %v5026, %v5127
      %v5174 = vadd.f32 %v5027, %v5132
      %v5175 = vadd.f32 %v5028, %v5135
      %v5176 = vadd.f32 %v5029, %v5140
      %v5177 = vadd.f32 %v5030, %v5143
      %v5178 = vadd.f32 %v5031, %v5148
      %v5179 = vadd.f32 %v5032, %v5151
      %v5180 = vadd.f32 %v5033, %v5156
      %v5181 = vadd.f32 %v5034, %v5159
      %v5182 = vadd.f32 %v5035, %v5164
      %v5183 = vadd.f32 %v5036, %v5167
      %s5184 = sadd.s32 %s4623, 58
      %s5185 = scalar_lea.vmem [#allocation3], %s5184
      %v5186 = vld [vmem:[%s5185] sm:$0xff]
      %v5187 = vld [vmem:[%s5185 + $0x8] sm:$0xff]
      %v5188 = vld [vmem:[%s5185 + $0x10] sm:$0xff]
      %v5189 = vld [vmem:[%s5185 + $0x18] sm:$0xff]
      %v5190 = vld [vmem:[%s5185 + $0x20] sm:$0xff]
      %v5191 = vld [vmem:[%s5185 + $0x28] sm:$0xff]
      %v5192 = vld [vmem:[%s5185 + $0x30] sm:$0xff]
      %v5193 = vld [vmem:[%s5185 + $0x38] sm:$0xff]
      %v5194 = vld [vmem:[%s5185 + $0x40] sm:$0xff]
      %v5195 = vld [vmem:[%s5185 + $0x48] sm:$0xff]
      %v5196 = vld [vmem:[%s5185 + $0x50] sm:$0xff]
      %v5197 = vld [vmem:[%s5185 + $0x58] sm:$0xff]
      %v5198 = vld [vmem:[%s5185 + $0x60] sm:$0xff]
      %v5199 = vld [vmem:[%s5185 + $0x68] sm:$0xff]
      %v5200 = vpack.c.bf16 %v5187, %v5186
      %v5201 = vpack.c.bf16 %v5189, %v5188
      %v5202 = vpack.c.bf16 %v5191, %v5190
      %v5203 = vpack.c.bf16 %v5193, %v5192
      %v5204 = vpack.c.bf16 %v5195, %v5194
      %v5205 = vpack.c.bf16 %v5197, %v5196
      %v5206 = vpack.c.bf16 %v5199, %v5198
      %v5208 = vsel %vm4669, %v5200, 0
      %v5211 = vsel %vm4669, %v5201, 0
      %v5214 = vsel %vm4669, %v5202, 0
      %v5217 = vsel %vm4669, %v5203, 0
      %v5220 = vsel %vm4669, %v5204, 0
      %v5223 = vsel %vm4669, %v5205, 0
      %v5226 = vsel %vm4669, %v5206, 0
      %5228 = vmatprep.subr.bf16.mxu0 0
      %5229 = vmatpush1.bf16.msra.mxu0 0
      %5230 = vmatprep.subr.bf16.mxu0 0
      %5231 = vmatpush1.bf16.msra.mxu0 0
      %5232 = vmatprep.subr.bf16.mxu0 0
      %5233 = vmatpush1.bf16.msra.mxu0 0
      %5234 = vmatprep.subr.bf16.mxu0 0
      %5235 = vmatpush1.bf16.msra.mxu0 0
      %5236 = vmatprep.subr.bf16.mxu0 0
      %5237 = vmatpush1.bf16.msra.mxu0 0
      %5238 = vmatprep.subr.bf16.mxu0 0
      %5239 = vmatpush1.bf16.msra.mxu0 0
      %5240 = vmatprep.subr.bf16.mxu0 0
      %5241 = vmatpush1.bf16.msra.mxu0 %v4608
      %5242 = vmatprep.subr.bf16.mxu0 0
      %5243 = vmatpush1.bf16.msra.mxu0 %v4607
      %5244 = vmatprep.subr.bf16.mxu0 0
      %5245 = vmatpush2.bf16.msra.mxu0 0
      %5246 = vmatprep.subr.bf16.mxu0 0
      %5247 = vmatpush2.bf16.msra.mxu0 0
      %5248 = vmatprep.subr.bf16.mxu0 0
      %5249 = vmatpush2.bf16.msra.mxu0 0
      %5250 = vmatprep.subr.bf16.mxu0 0
      %5251 = vmatpush2.bf16.msra.mxu0 0
      %5252 = vmatprep.subr.bf16.mxu0 0
      %5253 = vmatpush2.bf16.msra.mxu0 0
      %5254 = vmatprep.subr.bf16.mxu0 0
      %5255 = vmatpush2.bf16.msra.mxu0 0
      %5256 = vmatprep.subr.bf16.mxu0 0
      %5257 = vmatpush2.bf16.msra.mxu0 0
      %5258 = vmatprep.subr.bf16.mxu0 0
      %5259 = vmatpush2.bf16.msra.mxu0 0
      %5260 = vmatprep.mubr.bf16.mxu0 0
      %5261 = vmatmul.mubr.bf16.gmra.mxu0 %v5208
      %v5262 = vpop.f32.mrf.mxu0
      %v5263 = vadd.f32 0.0, %v5262
      %v5264 = vpop.f32.mrf.mxu0
      %v5265 = vpop.f32.mrf.mxu0
      %v5266 = vadd.f32 0.0, %v5265
      %v5267 = vpop.f32.mrf.mxu0
      %5268 = vmatprep.mubr.bf16.mxu0 0
      %5269 = vmatmul.mubr.bf16.gmra.mxu0 %v5211
      %v5270 = vpop.f32.mrf.mxu0
      %v5271 = vadd.f32 0.0, %v5270
      %v5272 = vpop.f32.mrf.mxu0
      %v5273 = vpop.f32.mrf.mxu0
      %v5274 = vadd.f32 0.0, %v5273
      %v5275 = vpop.f32.mrf.mxu0
      %5276 = vmatprep.mubr.bf16.mxu0 0
      %5277 = vmatmul.mubr.bf16.gmra.mxu0 %v5214
      %v5278 = vpop.f32.mrf.mxu0
      %v5279 = vadd.f32 0.0, %v5278
      %v5280 = vpop.f32.mrf.mxu0
      %v5281 = vpop.f32.mrf.mxu0
      %v5282 = vadd.f32 0.0, %v5281
      %v5283 = vpop.f32.mrf.mxu0
      %5284 = vmatprep.mubr.bf16.mxu0 0
      %5285 = vmatmul.mubr.bf16.gmra.mxu0 %v5217
      %v5286 = vpop.f32.mrf.mxu0
      %v5287 = vadd.f32 0.0, %v5286
      %v5288 = vpop.f32.mrf.mxu0
      %v5289 = vpop.f32.mrf.mxu0
      %v5290 = vadd.f32 0.0, %v5289
      %v5291 = vpop.f32.mrf.mxu0
      %5292 = vmatprep.mubr.bf16.mxu0 0
      %5293 = vmatmul.mubr.bf16.gmra.mxu0 %v5220
      %v5294 = vpop.f32.mrf.mxu0
      %v5295 = vadd.f32 0.0, %v5294
      %v5296 = vpop.f32.mrf.mxu0
      %v5297 = vpop.f32.mrf.mxu0
      %v5298 = vadd.f32 0.0, %v5297
      %v5299 = vpop.f32.mrf.mxu0
      %5300 = vmatprep.mubr.bf16.mxu0 0
      %5301 = vmatmul.mubr.bf16.gmra.mxu0 %v5223
      %v5302 = vpop.f32.mrf.mxu0
      %v5303 = vadd.f32 0.0, %v5302
      %v5304 = vpop.f32.mrf.mxu0
      %v5305 = vpop.f32.mrf.mxu0
      %v5306 = vadd.f32 0.0, %v5305
      %v5307 = vpop.f32.mrf.mxu0
      %5308 = vmatprep.mubr.bf16.mxu0 0
      %5309 = vmatmul.mubr.bf16.gmra.mxu0 %v5226
      %v5310 = vpop.f32.mrf.mxu0
      %v5311 = vadd.f32 0.0, %v5310
      %v5312 = vpop.f32.mrf.mxu0
      %v5313 = vpop.f32.mrf.mxu0
      %v5314 = vadd.f32 0.0, %v5313
      %v5315 = vpop.f32.mrf.mxu0
      %5316 = vdwg.mxu0
      %v5317 = vadd.f32 %v5170, %v5263
      %v5318 = vadd.f32 %v5171, %v5266
      %v5319 = vadd.f32 %v5172, %v5271
      %v5320 = vadd.f32 %v5173, %v5274
      %v5321 = vadd.f32 %v5174, %v5279
      %v5322 = vadd.f32 %v5175, %v5282
      %v5323 = vadd.f32 %v5176, %v5287
      %v5324 = vadd.f32 %v5177, %v5290
      %v5325 = vadd.f32 %v5178, %v5295
      %v5326 = vadd.f32 %v5179, %v5298
      %v5327 = vadd.f32 %v5180, %v5303
      %v5328 = vadd.f32 %v5181, %v5306
      %v5329 = vadd.f32 %v5182, %v5311
      %v5330 = vadd.f32 %v5183, %v5314
      %s5331 = sadd.s32 %s4623, 60
      %s5332 = scalar_lea.vmem [#allocation3], %s5331
      %v5333 = vld [vmem:[%s5332] sm:$0xff]
      %v5334 = vld [vmem:[%s5332 + $0x8] sm:$0xff]
      %v5335 = vld [vmem:[%s5332 + $0x10] sm:$0xff]
      %v5336 = vld [vmem:[%s5332 + $0x18] sm:$0xff]
      %v5337 = vld [vmem:[%s5332 + $0x20] sm:$0xff]
      %v5338 = vld [vmem:[%s5332 + $0x28] sm:$0xff]
      %v5339 = vld [vmem:[%s5332 + $0x30] sm:$0xff]
      %v5340 = vld [vmem:[%s5332 + $0x38] sm:$0xff]
      %v5341 = vld [vmem:[%s5332 + $0x40] sm:$0xff]
      %v5342 = vld [vmem:[%s5332 + $0x48] sm:$0xff]
      %v5343 = vld [vmem:[%s5332 + $0x50] sm:$0xff]
      %v5344 = vld [vmem:[%s5332 + $0x58] sm:$0xff]
      %v5345 = vld [vmem:[%s5332 + $0x60] sm:$0xff]
      %v5346 = vld [vmem:[%s5332 + $0x68] sm:$0xff]
      %v5347 = vpack.c.bf16 %v5334, %v5333
      %v5348 = vpack.c.bf16 %v5336, %v5335
      %v5349 = vpack.c.bf16 %v5338, %v5337
      %v5350 = vpack.c.bf16 %v5340, %v5339
      %v5351 = vpack.c.bf16 %v5342, %v5341
      %v5352 = vpack.c.bf16 %v5344, %v5343
      %v5353 = vpack.c.bf16 %v5346, %v5345
      %v5355 = vsel %vm4669, %v5347, 0
      %v5358 = vsel %vm4669, %v5348, 0
      %v5361 = vsel %vm4669, %v5349, 0
      %v5364 = vsel %vm4669, %v5350, 0
      %v5367 = vsel %vm4669, %v5351, 0
      %v5370 = vsel %vm4669, %v5352, 0
      %v5373 = vsel %vm4669, %v5353, 0
      %5375 = vmatprep.subr.bf16.mxu0 0
      %5376 = vmatpush1.bf16.msra.mxu0 0
      %5377 = vmatprep.subr.bf16.mxu0 0
      %5378 = vmatpush1.bf16.msra.mxu0 0
      %5379 = vmatprep.subr.bf16.mxu0 0
      %5380 = vmatpush1.bf16.msra.mxu0 0
      %5381 = vmatprep.subr.bf16.mxu0 0
      %5382 = vmatpush1.bf16.msra.mxu0 0
      %5383 = vmatprep.subr.bf16.mxu0 0
      %5384 = vmatpush1.bf16.msra.mxu0 0
      %5385 = vmatprep.subr.bf16.mxu0 0
      %5386 = vmatpush1.bf16.msra.mxu0 0
      %5387 = vmatprep.subr.bf16.mxu0 0
      %5388 = vmatpush1.bf16.msra.mxu0 %v4610
      %5389 = vmatprep.subr.bf16.mxu0 0
      %5390 = vmatpush1.bf16.msra.mxu0 %v4609
      %5391 = vmatprep.subr.bf16.mxu0 0
      %5392 = vmatpush2.bf16.msra.mxu0 0
      %5393 = vmatprep.subr.bf16.mxu0 0
      %5394 = vmatpush2.bf16.msra.mxu0 0
      %5395 = vmatprep.subr.bf16.mxu0 0
      %5396 = vmatpush2.bf16.msra.mxu0 0
      %5397 = vmatprep.subr.bf16.mxu0 0
      %5398 = vmatpush2.bf16.msra.mxu0 0
      %5399 = vmatprep.subr.bf16.mxu0 0
      %5400 = vmatpush2.bf16.msra.mxu0 0
      %5401 = vmatprep.subr.bf16.mxu0 0
      %5402 = vmatpush2.bf16.msra.mxu0 0
      %5403 = vmatprep.subr.bf16.mxu0 0
      %5404 = vmatpush2.bf16.msra.mxu0 0
      %5405 = vmatprep.subr.bf16.mxu0 0
      %5406 = vmatpush2.bf16.msra.mxu0 0
      %5407 = vmatprep.mubr.bf16.mxu0 0
      %5408 = vmatmul.mubr.bf16.gmra.mxu0 %v5355
      %v5409 = vpop.f32.mrf.mxu0
      %v5410 = vadd.f32 0.0, %v5409
      %v5411 = vpop.f32.mrf.mxu0
      %v5412 = vpop.f32.mrf.mxu0
      %v5413 = vadd.f32 0.0, %v5412
      %v5414 = vpop.f32.mrf.mxu0
      %5415 = vmatprep.mubr.bf16.mxu0 0
      %5416 = vmatmul.mubr.bf16.gmra.mxu0 %v5358
      %v5417 = vpop.f32.mrf.mxu0
      %v5418 = vadd.f32 0.0, %v5417
      %v5419 = vpop.f32.mrf.mxu0
      %v5420 = vpop.f32.mrf.mxu0
      %v5421 = vadd.f32 0.0, %v5420
      %v5422 = vpop.f32.mrf.mxu0
      %5423 = vmatprep.mubr.bf16.mxu0 0
      %5424 = vmatmul.mubr.bf16.gmra.mxu0 %v5361
      %v5425 = vpop.f32.mrf.mxu0
      %v5426 = vadd.f32 0.0, %v5425
      %v5427 = vpop.f32.mrf.mxu0
      %v5428 = vpop.f32.mrf.mxu0
      %v5429 = vadd.f32 0.0, %v5428
      %v5430 = vpop.f32.mrf.mxu0
      %5431 = vmatprep.mubr.bf16.mxu0 0
      %5432 = vmatmul.mubr.bf16.gmra.mxu0 %v5364
      %v5433 = vpop.f32.mrf.mxu0
      %v5434 = vadd.f32 0.0, %v5433
      %v5435 = vpop.f32.mrf.mxu0
      %v5436 = vpop.f32.mrf.mxu0
      %v5437 = vadd.f32 0.0, %v5436
      %v5438 = vpop.f32.mrf.mxu0
      %5439 = vmatprep.mubr.bf16.mxu0 0
      %5440 = vmatmul.mubr.bf16.gmra.mxu0 %v5367
      %v5441 = vpop.f32.mrf.mxu0
      %v5442 = vadd.f32 0.0, %v5441
      %v5443 = vpop.f32.mrf.mxu0
      %v5444 = vpop.f32.mrf.mxu0
      %v5445 = vadd.f32 0.0, %v5444
      %v5446 = vpop.f32.mrf.mxu0
      %5447 = vmatprep.mubr.bf16.mxu0 0
      %5448 = vmatmul.mubr.bf16.gmra.mxu0 %v5370
      %v5449 = vpop.f32.mrf.mxu0
      %v5450 = vadd.f32 0.0, %v5449
      %v5451 = vpop.f32.mrf.mxu0
      %v5452 = vpop.f32.mrf.mxu0
      %v5453 = vadd.f32 0.0, %v5452
      %v5454 = vpop.f32.mrf.mxu0
      %5455 = vmatprep.mubr.bf16.mxu0 0
      %5456 = vmatmul.mubr.bf16.gmra.mxu0 %v5373
      %v5457 = vpop.f32.mrf.mxu0
      %v5458 = vadd.f32 0.0, %v5457
      %v5459 = vpop.f32.mrf.mxu0
      %v5460 = vpop.f32.mrf.mxu0
      %v5461 = vadd.f32 0.0, %v5460
      %v5462 = vpop.f32.mrf.mxu0
      %5463 = vdwg.mxu0
      %v5464 = vadd.f32 %v5317, %v5410
      %v5465 = vadd.f32 %v5318, %v5413
      %v5466 = vadd.f32 %v5319, %v5418
      %v5467 = vadd.f32 %v5320, %v5421
      %v5468 = vadd.f32 %v5321, %v5426
      %v5469 = vadd.f32 %v5322, %v5429
      %v5470 = vadd.f32 %v5323, %v5434
      %v5471 = vadd.f32 %v5324, %v5437
      %v5472 = vadd.f32 %v5325, %v5442
      %v5473 = vadd.f32 %v5326, %v5445
      %v5474 = vadd.f32 %v5327, %v5450
      %v5475 = vadd.f32 %v5328, %v5453
      %v5476 = vadd.f32 %v5329, %v5458
      %v5477 = vadd.f32 %v5330, %v5461
      %s5478 = sadd.s32 %s4623, 112
      %s5479 = scalar_lea.vmem [#allocation3], %s5478
      %v5480 = vld [vmem:[%s5479] sm:$0xff]
      %v5481 = vld [vmem:[%s5479 + $0x8] sm:$0xff]
      %v5482 = vld [vmem:[%s5479 + $0x10] sm:$0xff]
      %v5483 = vld [vmem:[%s5479 + $0x18] sm:$0xff]
      %v5484 = vld [vmem:[%s5479 + $0x20] sm:$0xff]
      %v5485 = vld [vmem:[%s5479 + $0x28] sm:$0xff]
      %v5486 = vld [vmem:[%s5479 + $0x30] sm:$0xff]
      %v5487 = vld [vmem:[%s5479 + $0x38] sm:$0xff]
      %v5488 = vld [vmem:[%s5479 + $0x40] sm:$0xff]
      %v5489 = vld [vmem:[%s5479 + $0x48] sm:$0xff]
      %v5490 = vld [vmem:[%s5479 + $0x50] sm:$0xff]
      %v5491 = vld [vmem:[%s5479 + $0x58] sm:$0xff]
      %v5492 = vld [vmem:[%s5479 + $0x60] sm:$0xff]
      %v5493 = vld [vmem:[%s5479 + $0x68] sm:$0xff]
      %v5494 = vpack.c.bf16 %v5481, %v5480
      %v5495 = vpack.c.bf16 %v5483, %v5482
      %v5496 = vpack.c.bf16 %v5485, %v5484
      %v5497 = vpack.c.bf16 %v5487, %v5486
      %v5498 = vpack.c.bf16 %v5489, %v5488
      %v5499 = vpack.c.bf16 %v5491, %v5490
      %v5500 = vpack.c.bf16 %v5493, %v5492
      %v5502 = vsel %vm4669, %v5494, 0
      %v5505 = vsel %vm4669, %v5495, 0
      %v5508 = vsel %vm4669, %v5496, 0
      %v5511 = vsel %vm4669, %v5497, 0
      %v5514 = vsel %vm4669, %v5498, 0
      %v5517 = vsel %vm4669, %v5499, 0
      %v5520 = vsel %vm4669, %v5500, 0
      %5522 = vmatprep.subr.bf16.mxu0 0
      %5523 = vmatpush1.bf16.msra.mxu0 0
      %5524 = vmatprep.subr.bf16.mxu0 0
      %5525 = vmatpush1.bf16.msra.mxu0 0
      %5526 = vmatprep.subr.bf16.mxu0 0
      %5527 = vmatpush1.bf16.msra.mxu0 0
      %5528 = vmatprep.subr.bf16.mxu0 0
      %5529 = vmatpush1.bf16.msra.mxu0 0
      %5530 = vmatprep.subr.bf16.mxu0 0
      %5531 = vmatpush1.bf16.msra.mxu0 0
      %5532 = vmatprep.subr.bf16.mxu0 0
      %5533 = vmatpush1.bf16.msra.mxu0 0
      %5534 = vmatprep.subr.bf16.mxu0 0
      %5535 = vmatpush1.bf16.msra.mxu0 %v4612
      %5536 = vmatprep.subr.bf16.mxu0 0
      %5537 = vmatpush1.bf16.msra.mxu0 %v4611
      %5538 = vmatprep.subr.bf16.mxu0 0
      %5539 = vmatpush2.bf16.msra.mxu0 0
      %5540 = vmatprep.subr.bf16.mxu0 0
      %5541 = vmatpush2.bf16.msra.mxu0 0
      %5542 = vmatprep.subr.bf16.mxu0 0
      %5543 = vmatpush2.bf16.msra.mxu0 0
      %5544 = vmatprep.subr.bf16.mxu0 0
      %5545 = vmatpush2.bf16.msra.mxu0 0
      %5546 = vmatprep.subr.bf16.mxu0 0
      %5547 = vmatpush2.bf16.msra.mxu0 0
      %5548 = vmatprep.subr.bf16.mxu0 0
      %5549 = vmatpush2.bf16.msra.mxu0 0
      %5550 = vmatprep.subr.bf16.mxu0 0
      %5551 = vmatpush2.bf16.msra.mxu0 0
      %5552 = vmatprep.subr.bf16.mxu0 0
      %5553 = vmatpush2.bf16.msra.mxu0 0
      %5554 = vmatprep.mubr.bf16.mxu0 0
      %5555 = vmatmul.mubr.bf16.gmra.mxu0 %v5502
      %v5556 = vpop.f32.mrf.mxu0
      %v5557 = vadd.f32 0.0, %v5556
      %v5558 = vpop.f32.mrf.mxu0
      %v5559 = vpop.f32.mrf.mxu0
      %v5560 = vadd.f32 0.0, %v5559
      %v5561 = vpop.f32.mrf.mxu0
      %5562 = vmatprep.mubr.bf16.mxu0 0
      %5563 = vmatmul.mubr.bf16.gmra.mxu0 %v5505
      %v5564 = vpop.f32.mrf.mxu0
      %v5565 = vadd.f32 0.0, %v5564
      %v5566 = vpop.f32.mrf.mxu0
      %v5567 = vpop.f32.mrf.mxu0
      %v5568 = vadd.f32 0.0, %v5567
      %v5569 = vpop.f32.mrf.mxu0
      %5570 = vmatprep.mubr.bf16.mxu0 0
      %5571 = vmatmul.mubr.bf16.gmra.mxu0 %v5508
      %v5572 = vpop.f32.mrf.mxu0
      %v5573 = vadd.f32 0.0, %v5572
      %v5574 = vpop.f32.mrf.mxu0
      %v5575 = vpop.f32.mrf.mxu0
      %v5576 = vadd.f32 0.0, %v5575
      %v5577 = vpop.f32.mrf.mxu0
      %5578 = vmatprep.mubr.bf16.mxu0 0
      %5579 = vmatmul.mubr.bf16.gmra.mxu0 %v5511
      %v5580 = vpop.f32.mrf.mxu0
      %v5581 = vadd.f32 0.0, %v5580
      %v5582 = vpop.f32.mrf.mxu0
      %v5583 = vpop.f32.mrf.mxu0
      %v5584 = vadd.f32 0.0, %v5583
      %v5585 = vpop.f32.mrf.mxu0
      %5586 = vmatprep.mubr.bf16.mxu0 0
      %5587 = vmatmul.mubr.bf16.gmra.mxu0 %v5514
      %v5588 = vpop.f32.mrf.mxu0
      %v5589 = vadd.f32 0.0, %v5588
      %v5590 = vpop.f32.mrf.mxu0
      %v5591 = vpop.f32.mrf.mxu0
      %v5592 = vadd.f32 0.0, %v5591
      %v5593 = vpop.f32.mrf.mxu0
      %5594 = vmatprep.mubr.bf16.mxu0 0
      %5595 = vmatmul.mubr.bf16.gmra.mxu0 %v5517
      %v5596 = vpop.f32.mrf.mxu0
      %v5597 = vadd.f32 0.0, %v5596
      %v5598 = vpop.f32.mrf.mxu0
      %v5599 = vpop.f32.mrf.mxu0
      %v5600 = vadd.f32 0.0, %v5599
      %v5601 = vpop.f32.mrf.mxu0
      %5602 = vmatprep.mubr.bf16.mxu0 0
      %5603 = vmatmul.mubr.bf16.gmra.mxu0 %v5520
      %v5604 = vpop.f32.mrf.mxu0
      %v5605 = vadd.f32 0.0, %v5604
      %v5606 = vpop.f32.mrf.mxu0
      %v5607 = vpop.f32.mrf.mxu0
      %v5608 = vadd.f32 0.0, %v5607
      %v5609 = vpop.f32.mrf.mxu0
      %5610 = vdwg.mxu0
      %v5611 = vadd.f32 %v5464, %v5557
      %v5612 = vadd.f32 %v5465, %v5560
      %v5613 = vadd.f32 %v5466, %v5565
      %v5614 = vadd.f32 %v5467, %v5568
      %v5615 = vadd.f32 %v5468, %v5573
      %v5616 = vadd.f32 %v5469, %v5576
      %v5617 = vadd.f32 %v5470, %v5581
      %v5618 = vadd.f32 %v5471, %v5584
      %v5619 = vadd.f32 %v5472, %v5589
      %v5620 = vadd.f32 %v5473, %v5592
      %v5621 = vadd.f32 %v5474, %v5597
      %v5622 = vadd.f32 %v5475, %v5600
      %v5623 = vadd.f32 %v5476, %v5605
      %v5624 = vadd.f32 %v5477, %v5608
      %s5625 = sadd.s32 %s4623, 114
      %s5626 = scalar_lea.vmem [#allocation3], %s5625
      %v5627 = vld [vmem:[%s5626] sm:$0xff]
      %v5628 = vld [vmem:[%s5626 + $0x8] sm:$0xff]
      %v5629 = vld [vmem:[%s5626 + $0x10] sm:$0xff]
      %v5630 = vld [vmem:[%s5626 + $0x18] sm:$0xff]
      %v5631 = vld [vmem:[%s5626 + $0x20] sm:$0xff]
      %v5632 = vld [vmem:[%s5626 + $0x28] sm:$0xff]
      %v5633 = vld [vmem:[%s5626 + $0x30] sm:$0xff]
      %v5634 = vld [vmem:[%s5626 + $0x38] sm:$0xff]
      %v5635 = vld [vmem:[%s5626 + $0x40] sm:$0xff]
      %v5636 = vld [vmem:[%s5626 + $0x48] sm:$0xff]
      %v5637 = vld [vmem:[%s5626 + $0x50] sm:$0xff]
      %v5638 = vld [vmem:[%s5626 + $0x58] sm:$0xff]
      %v5639 = vld [vmem:[%s5626 + $0x60] sm:$0xff]
      %v5640 = vld [vmem:[%s5626 + $0x68] sm:$0xff]
      %v5641 = vpack.c.bf16 %v5628, %v5627
      %v5642 = vpack.c.bf16 %v5630, %v5629
      %v5643 = vpack.c.bf16 %v5632, %v5631
      %v5644 = vpack.c.bf16 %v5634, %v5633
      %v5645 = vpack.c.bf16 %v5636, %v5635
      %v5646 = vpack.c.bf16 %v5638, %v5637
      %v5647 = vpack.c.bf16 %v5640, %v5639
      %v5649 = vsel %vm4669, %v5641, 0
      %v5652 = vsel %vm4669, %v5642, 0
      %v5655 = vsel %vm4669, %v5643, 0
      %v5658 = vsel %vm4669, %v5644, 0
      %v5661 = vsel %vm4669, %v5645, 0
      %v5664 = vsel %vm4669, %v5646, 0
      %v5667 = vsel %vm4669, %v5647, 0
      %5669 = vmatprep.subr.bf16.mxu0 0
      %5670 = vmatpush1.bf16.msra.mxu0 0
      %5671 = vmatprep.subr.bf16.mxu0 0
      %5672 = vmatpush1.bf16.msra.mxu0 0
      %5673 = vmatprep.subr.bf16.mxu0 0
      %5674 = vmatpush1.bf16.msra.mxu0 0
      %5675 = vmatprep.subr.bf16.mxu0 0
      %5676 = vmatpush1.bf16.msra.mxu0 0
      %5677 = vmatprep.subr.bf16.mxu0 0
      %5678 = vmatpush1.bf16.msra.mxu0 0
      %5679 = vmatprep.subr.bf16.mxu0 0
      %5680 = vmatpush1.bf16.msra.mxu0 0
      %5681 = vmatprep.subr.bf16.mxu0 0
      %5682 = vmatpush1.bf16.msra.mxu0 %v4614
      %5683 = vmatprep.subr.bf16.mxu0 0
      %5684 = vmatpush1.bf16.msra.mxu0 %v4613
      %5685 = vmatprep.subr.bf16.mxu0 0
      %5686 = vmatpush2.bf16.msra.mxu0 0
      %5687 = vmatprep.subr.bf16.mxu0 0
      %5688 = vmatpush2.bf16.msra.mxu0 0
      %5689 = vmatprep.subr.bf16.mxu0 0
      %5690 = vmatpush2.bf16.msra.mxu0 0
      %5691 = vmatprep.subr.bf16.mxu0 0
      %5692 = vmatpush2.bf16.msra.mxu0 0
      %5693 = vmatprep.subr.bf16.mxu0 0
      %5694 = vmatpush2.bf16.msra.mxu0 0
      %5695 = vmatprep.subr.bf16.mxu0 0
      %5696 = vmatpush2.bf16.msra.mxu0 0
      %5697 = vmatprep.subr.bf16.mxu0 0
      %5698 = vmatpush2.bf16.msra.mxu0 0
      %5699 = vmatprep.subr.bf16.mxu0 0
      %5700 = vmatpush2.bf16.msra.mxu0 0
      %5701 = vmatprep.mubr.bf16.mxu0 0
      %5702 = vmatmul.mubr.bf16.gmra.mxu0 %v5649
      %v5703 = vpop.f32.mrf.mxu0
      %v5704 = vadd.f32 0.0, %v5703
      %v5705 = vpop.f32.mrf.mxu0
      %v5706 = vpop.f32.mrf.mxu0
      %v5707 = vadd.f32 0.0, %v5706
      %v5708 = vpop.f32.mrf.mxu0
      %5709 = vmatprep.mubr.bf16.mxu0 0
      %5710 = vmatmul.mubr.bf16.gmra.mxu0 %v5652
      %v5711 = vpop.f32.mrf.mxu0
      %v5712 = vadd.f32 0.0, %v5711
      %v5713 = vpop.f32.mrf.mxu0
      %v5714 = vpop.f32.mrf.mxu0
      %v5715 = vadd.f32 0.0, %v5714
      %v5716 = vpop.f32.mrf.mxu0
      %5717 = vmatprep.mubr.bf16.mxu0 0
      %5718 = vmatmul.mubr.bf16.gmra.mxu0 %v5655
      %v5719 = vpop.f32.mrf.mxu0
      %v5720 = vadd.f32 0.0, %v5719
      %v5721 = vpop.f32.mrf.mxu0
      %v5722 = vpop.f32.mrf.mxu0
      %v5723 = vadd.f32 0.0, %v5722
      %v5724 = vpop.f32.mrf.mxu0
      %5725 = vmatprep.mubr.bf16.mxu0 0
      %5726 = vmatmul.mubr.bf16.gmra.mxu0 %v5658
      %v5727 = vpop.f32.mrf.mxu0
      %v5728 = vadd.f32 0.0, %v5727
      %v5729 = vpop.f32.mrf.mxu0
      %v5730 = vpop.f32.mrf.mxu0
      %v5731 = vadd.f32 0.0, %v5730
      %v5732 = vpop.f32.mrf.mxu0
      %5733 = vmatprep.mubr.bf16.mxu0 0
      %5734 = vmatmul.mubr.bf16.gmra.mxu0 %v5661
      %v5735 = vpop.f32.mrf.mxu0
      %v5736 = vadd.f32 0.0, %v5735
      %v5737 = vpop.f32.mrf.mxu0
      %v5738 = vpop.f32.mrf.mxu0
      %v5739 = vadd.f32 0.0, %v5738
      %v5740 = vpop.f32.mrf.mxu0
      %5741 = vmatprep.mubr.bf16.mxu0 0
      %5742 = vmatmul.mubr.bf16.gmra.mxu0 %v5664
      %v5743 = vpop.f32.mrf.mxu0
      %v5744 = vadd.f32 0.0, %v5743
      %v5745 = vpop.f32.mrf.mxu0
      %v5746 = vpop.f32.mrf.mxu0
      %v5747 = vadd.f32 0.0, %v5746
      %v5748 = vpop.f32.mrf.mxu0
      %5749 = vmatprep.mubr.bf16.mxu0 0
      %5750 = vmatmul.mubr.bf16.gmra.mxu0 %v5667
      %v5751 = vpop.f32.mrf.mxu0
      %v5752 = vadd.f32 0.0, %v5751
      %v5753 = vpop.f32.mrf.mxu0
      %v5754 = vpop.f32.mrf.mxu0
      %v5755 = vadd.f32 0.0, %v5754
      %v5756 = vpop.f32.mrf.mxu0
      %5757 = vdwg.mxu0
      %v5758 = vadd.f32 %v5611, %v5704
      %v5759 = vadd.f32 %v5612, %v5707
      %v5760 = vadd.f32 %v5613, %v5712
      %v5761 = vadd.f32 %v5614, %v5715
      %v5762 = vadd.f32 %v5615, %v5720
      %v5763 = vadd.f32 %v5616, %v5723
      %v5764 = vadd.f32 %v5617, %v5728
      %v5765 = vadd.f32 %v5618, %v5731
      %v5766 = vadd.f32 %v5619, %v5736
      %v5767 = vadd.f32 %v5620, %v5739
      %v5768 = vadd.f32 %v5621, %v5744
      %v5769 = vadd.f32 %v5622, %v5747
      %v5770 = vadd.f32 %v5623, %v5752
      %v5771 = vadd.f32 %v5624, %v5755
      %s5772 = sadd.s32 %s4623, 116
      %s5773 = scalar_lea.vmem [#allocation3], %s5772
      %v5774 = vld [vmem:[%s5773] sm:$0xff]
      %v5775 = vld [vmem:[%s5773 + $0x8] sm:$0xff]
      %v5776 = vld [vmem:[%s5773 + $0x10] sm:$0xff]
      %v5777 = vld [vmem:[%s5773 + $0x18] sm:$0xff]
      %v5778 = vld [vmem:[%s5773 + $0x20] sm:$0xff]
      %v5779 = vld [vmem:[%s5773 + $0x28] sm:$0xff]
      %v5780 = vld [vmem:[%s5773 + $0x30] sm:$0xff]
      %v5781 = vld [vmem:[%s5773 + $0x38] sm:$0xff]
      %v5782 = vld [vmem:[%s5773 + $0x40] sm:$0xff]
      %v5783 = vld [vmem:[%s5773 + $0x48] sm:$0xff]
      %v5784 = vld [vmem:[%s5773 + $0x50] sm:$0xff]
      %v5785 = vld [vmem:[%s5773 + $0x58] sm:$0xff]
      %v5786 = vld [vmem:[%s5773 + $0x60] sm:$0xff]
      %v5787 = vld [vmem:[%s5773 + $0x68] sm:$0xff]
      %v5788 = vpack.c.bf16 %v5775, %v5774
      %v5789 = vpack.c.bf16 %v5777, %v5776
      %v5790 = vpack.c.bf16 %v5779, %v5778
      %v5791 = vpack.c.bf16 %v5781, %v5780
      %v5792 = vpack.c.bf16 %v5783, %v5782
      %v5793 = vpack.c.bf16 %v5785, %v5784
      %v5794 = vpack.c.bf16 %v5787, %v5786
      %v5796 = vsel %vm4669, %v5788, 0
      %v5799 = vsel %vm4669, %v5789, 0
      %v5802 = vsel %vm4669, %v5790, 0
      %v5805 = vsel %vm4669, %v5791, 0
      %v5808 = vsel %vm4669, %v5792, 0
      %v5811 = vsel %vm4669, %v5793, 0
      %v5814 = vsel %vm4669, %v5794, 0
      %5816 = vmatprep.subr.bf16.mxu0 0
      %5817 = vmatpush1.bf16.msra.mxu0 0
      %5818 = vmatprep.subr.bf16.mxu0 0
      %5819 = vmatpush1.bf16.msra.mxu0 0
      %5820 = vmatprep.subr.bf16.mxu0 0
      %5821 = vmatpush1.bf16.msra.mxu0 0
      %5822 = vmatprep.subr.bf16.mxu0 0
      %5823 = vmatpush1.bf16.msra.mxu0 0
      %5824 = vmatprep.subr.bf16.mxu0 0
      %5825 = vmatpush1.bf16.msra.mxu0 0
      %5826 = vmatprep.subr.bf16.mxu0 0
      %5827 = vmatpush1.bf16.msra.mxu0 0
      %5828 = vmatprep.subr.bf16.mxu0 0
      %5829 = vmatpush1.bf16.msra.mxu0 %v4616
      %5830 = vmatprep.subr.bf16.mxu0 0
      %5831 = vmatpush1.bf16.msra.mxu0 %v4615
      %5832 = vmatprep.subr.bf16.mxu0 0
      %5833 = vmatpush2.bf16.msra.mxu0 0
      %5834 = vmatprep.subr.bf16.mxu0 0
      %5835 = vmatpush2.bf16.msra.mxu0 0
      %5836 = vmatprep.subr.bf16.mxu0 0
      %5837 = vmatpush2.bf16.msra.mxu0 0
      %5838 = vmatprep.subr.bf16.mxu0 0
      %5839 = vmatpush2.bf16.msra.mxu0 0
      %5840 = vmatprep.subr.bf16.mxu0 0
      %5841 = vmatpush2.bf16.msra.mxu0 0
      %5842 = vmatprep.subr.bf16.mxu0 0
      %5843 = vmatpush2.bf16.msra.mxu0 0
      %5844 = vmatprep.subr.bf16.mxu0 0
      %5845 = vmatpush2.bf16.msra.mxu0 0
      %5846 = vmatprep.subr.bf16.mxu0 0
      %5847 = vmatpush2.bf16.msra.mxu0 0
      %5848 = vmatprep.mubr.bf16.mxu0 0
      %5849 = vmatmul.mubr.bf16.gmra.mxu0 %v5796
      %v5850 = vpop.f32.mrf.mxu0
      %v5851 = vadd.f32 0.0, %v5850
      %v5852 = vpop.f32.mrf.mxu0
      %v5853 = vpop.f32.mrf.mxu0
      %v5854 = vadd.f32 0.0, %v5853
      %v5855 = vpop.f32.mrf.mxu0
      %5856 = vmatprep.mubr.bf16.mxu0 0
      %5857 = vmatmul.mubr.bf16.gmra.mxu0 %v5799
      %v5858 = vpop.f32.mrf.mxu0
      %v5859 = vadd.f32 0.0, %v5858
      %v5860 = vpop.f32.mrf.mxu0
      %v5861 = vpop.f32.mrf.mxu0
      %v5862 = vadd.f32 0.0, %v5861
      %v5863 = vpop.f32.mrf.mxu0
      %5864 = vmatprep.mubr.bf16.mxu0 0
      %5865 = vmatmul.mubr.bf16.gmra.mxu0 %v5802
      %v5866 = vpop.f32.mrf.mxu0
      %v5867 = vadd.f32 0.0, %v5866
      %v5868 = vpop.f32.mrf.mxu0
      %v5869 = vpop.f32.mrf.mxu0
      %v5870 = vadd.f32 0.0, %v5869
      %v5871 = vpop.f32.mrf.mxu0
      %5872 = vmatprep.mubr.bf16.mxu0 0
      %5873 = vmatmul.mubr.bf16.gmra.mxu0 %v5805
      %v5874 = vpop.f32.mrf.mxu0
      %v5875 = vadd.f32 0.0, %v5874
      %v5876 = vpop.f32.mrf.mxu0
      %v5877 = vpop.f32.mrf.mxu0
      %v5878 = vadd.f32 0.0, %v5877
      %v5879 = vpop.f32.mrf.mxu0
      %5880 = vmatprep.mubr.bf16.mxu0 0
      %5881 = vmatmul.mubr.bf16.gmra.mxu0 %v5808
      %v5882 = vpop.f32.mrf.mxu0
      %v5883 = vadd.f32 0.0, %v5882
      %v5884 = vpop.f32.mrf.mxu0
      %v5885 = vpop.f32.mrf.mxu0
      %v5886 = vadd.f32 0.0, %v5885
      %v5887 = vpop.f32.mrf.mxu0
      %5888 = vmatprep.mubr.bf16.mxu0 0
      %5889 = vmatmul.mubr.bf16.gmra.mxu0 %v5811
      %v5890 = vpop.f32.mrf.mxu0
      %v5891 = vadd.f32 0.0, %v5890
      %v5892 = vpop.f32.mrf.mxu0
      %v5893 = vpop.f32.mrf.mxu0
      %v5894 = vadd.f32 0.0, %v5893
      %v5895 = vpop.f32.mrf.mxu0
      %5896 = vmatprep.mubr.bf16.mxu0 0
      %5897 = vmatmul.mubr.bf16.gmra.mxu0 %v5814
      %v5898 = vpop.f32.mrf.mxu0
      %v5899 = vadd.f32 0.0, %v5898
      %v5900 = vpop.f32.mrf.mxu0
      %v5901 = vpop.f32.mrf.mxu0
      %v5902 = vadd.f32 0.0, %v5901
      %v5903 = vpop.f32.mrf.mxu0
      %5904 = vdwg.mxu0
      %v5905 = vadd.f32 %v5758, %v5851
      %v5906 = vadd.f32 %v5759, %v5854
      %v5907 = vadd.f32 %v5760, %v5859
      %v5908 = vadd.f32 %v5761, %v5862
      %v5909 = vadd.f32 %v5762, %v5867
      %v5910 = vadd.f32 %v5763, %v5870
      %v5911 = vadd.f32 %v5764, %v5875
      %v5912 = vadd.f32 %v5765, %v5878
      %v5913 = vadd.f32 %v5766, %v5883
      %v5914 = vadd.f32 %v5767, %v5886
      %v5915 = vadd.f32 %v5768, %v5891
      %v5916 = vadd.f32 %v5769, %v5894
      %v5917 = vadd.f32 %v5770, %v5899
      %v5918 = vadd.f32 %v5771, %v5902
      %v5920 = vlaneseq
      %v5921 = vshrl.u32 %v5920, 7
      %v5922 = vsub.s32 0, %v5921
      %v5923 = vrot.slane %v4598, %v5922
      %v5925 = vadd.f32 %v5905, %v5923
      %v5926 = vadd.f32 %v5906, %v5923
      %v5927 = vadd.f32 %v5907, %v5923
      %v5928 = vadd.f32 %v5908, %v5923
      %v5929 = vadd.f32 %v5909, %v5923
      %v5930 = vadd.f32 %v5910, %v5923
      %v5931 = vadd.f32 %v5911, %v5923
      %v5932 = vadd.f32 %v5912, %v5923
      %v5933 = vadd.f32 %v5913, %v5923
      %v5934 = vadd.f32 %v5914, %v5923
      %v5935 = vadd.f32 %v5915, %v5923
      %v5936 = vadd.f32 %v5916, %v5923
      %v5937 = vadd.f32 %v5917, %v5923
      %v5938 = vadd.f32 %v5918, %v5923
      %v5939 = vmax.f32 %v5925, 0.0
      %v5940 = vmax.f32 %v5926, 0.0
      %v5941 = vmax.f32 %v5927, 0.0
      %v5942 = vmax.f32 %v5928, 0.0
      %v5943 = vmax.f32 %v5929, 0.0
      %v5944 = vmax.f32 %v5930, 0.0
      %v5945 = vmax.f32 %v5931, 0.0
      %v5946 = vmax.f32 %v5932, 0.0
      %v5947 = vmax.f32 %v5933, 0.0
      %v5948 = vmax.f32 %v5934, 0.0
      %v5949 = vmax.f32 %v5935, 0.0
      %v5950 = vmax.f32 %v5936, 0.0
      %v5951 = vmax.f32 %v5937, 0.0
      %v5952 = vmax.f32 %v5938, 0.0
      %s5953 = scalar_lea.vmem [#allocation2], %s4623
      %5954 = vst.msk [vmem:[%s5953] sm:$0xff] %vm46, %v5939
      %5955 = vst.msk [vmem:[%s5953 + $0x8] sm:$0xff] %vm46, %v5940
      %5956 = vst.msk [vmem:[%s5953 + $0x10] sm:$0xff] %vm46, %v5941
      %5957 = vst.msk [vmem:[%s5953 + $0x18] sm:$0xff] %vm46, %v5942
      %5958 = vst.msk [vmem:[%s5953 + $0x20] sm:$0xff] %vm46, %v5943
      %5959 = vst.msk [vmem:[%s5953 + $0x28] sm:$0xff] %vm46, %v5944
      %5960 = vst.msk [vmem:[%s5953 + $0x30] sm:$0xff] %vm46, %v5945
      %5961 = vst.msk [vmem:[%s5953 + $0x38] sm:$0xff] %vm46, %v5946
      %5962 = vst.msk [vmem:[%s5953 + $0x40] sm:$0xff] %vm46, %v5947
      %5963 = vst.msk [vmem:[%s5953 + $0x48] sm:$0xff] %vm46, %v5948
      %5964 = vst.msk [vmem:[%s5953 + $0x50] sm:$0xff] %vm46, %v5949
      %5965 = vst.msk [vmem:[%s5953 + $0x58] sm:$0xff] %vm46, %v5950
      %5966 = vst.msk [vmem:[%s5953 + $0x60] sm:$0xff] %vm46, %v5951
      %5967 = vst.msk [vmem:[%s5953 + $0x68] sm:$0xff] %vm46, %v5952
    $region86: #{tpu_custom_call.1} parent=1 // loop_footer
      %s4622 = sadd.s32 1, %s4618
    $region87: #{tpu_custom_call.1} parent=1 // loop_footer_branch
      %4617 = sbr.rel target = $region83
    $region88: #{tpu_custom_call.1} parent=1 // loop_exit
      _
    loop: start=0, step=1, limit=14
    $region89: #{tpu_custom_call.1} parent=1 // loop_pre_header
      _
    $region90: #{tpu_custom_call.1} parent=1 // loop_header
      %s5969 = sphi 0, %s5973
      %p5970 = scmp.ge.s32.totalorder %s5969, 14
    $region91: #{tpu_custom_call.1} parent=1 // loop_header_branch
      %5972 = sbr.rel (%p5970) target = $region95
    $region92: #{tpu_custom_call.1} parent=1 // loop_body
      %s5974 = smul.u32 %s5969, 112
      %s5975 = scalar_lea.vmem [#allocation2], %s5974
      %v5976 = vld [vmem:[%s5975] sm:$0xff]
      %v5977 = vld [vmem:[%s5975 + $0x8] sm:$0xff]
      %v5978 = vld [vmem:[%s5975 + $0x10] sm:$0xff]
      %v5979 = vld [vmem:[%s5975 + $0x18] sm:$0xff]
      %v5980 = vld [vmem:[%s5975 + $0x20] sm:$0xff]
      %v5981 = vld [vmem:[%s5975 + $0x28] sm:$0xff]
      %v5982 = vld [vmem:[%s5975 + $0x30] sm:$0xff]
      %v5983 = vld [vmem:[%s5975 + $0x38] sm:$0xff]
      %v5984 = vld [vmem:[%s5975 + $0x40] sm:$0xff]
      %v5985 = vld [vmem:[%s5975 + $0x48] sm:$0xff]
      %v5986 = vld [vmem:[%s5975 + $0x50] sm:$0xff]
      %v5987 = vld [vmem:[%s5975 + $0x58] sm:$0xff]
      %v5988 = vld [vmem:[%s5975 + $0x60] sm:$0xff]
      %v5989 = vld [vmem:[%s5975 + $0x68] sm:$0xff]
      %s5990 = sadd.s32 %s5974, 2
      %s5991 = scalar_lea.vmem [#allocation2], %s5990
      %v5992 = vld [vmem:[%s5991] sm:$0xff]
      %v5993 = vld [vmem:[%s5991 + $0x8] sm:$0xff]
      %v5994 = vld [vmem:[%s5991 + $0x10] sm:$0xff]
      %v5995 = vld [vmem:[%s5991 + $0x18] sm:$0xff]
      %v5996 = vld [vmem:[%s5991 + $0x20] sm:$0xff]
      %v5997 = vld [vmem:[%s5991 + $0x28] sm:$0xff]
      %v5998 = vld [vmem:[%s5991 + $0x30] sm:$0xff]
      %v5999 = vld [vmem:[%s5991 + $0x38] sm:$0xff]
      %v6000 = vld [vmem:[%s5991 + $0x40] sm:$0xff]
      %v6001 = vld [vmem:[%s5991 + $0x48] sm:$0xff]
      %v6002 = vld [vmem:[%s5991 + $0x50] sm:$0xff]
      %v6003 = vld [vmem:[%s5991 + $0x58] sm:$0xff]
      %v6004 = vld [vmem:[%s5991 + $0x60] sm:$0xff]
      %v6005 = vld [vmem:[%s5991 + $0x68] sm:$0xff]
      %v6006 = vmax.f32 %v5976, %v5992
      %v6007 = vmax.f32 %v5977, %v5993
      %v6008 = vmax.f32 %v5978, %v5994
      %v6009 = vmax.f32 %v5979, %v5995
      %v6010 = vmax.f32 %v5980, %v5996
      %v6011 = vmax.f32 %v5981, %v5997
      %v6012 = vmax.f32 %v5982, %v5998
      %v6013 = vmax.f32 %v5983, %v5999
      %v6014 = vmax.f32 %v5984, %v6000
      %v6015 = vmax.f32 %v5985, %v6001
      %v6016 = vmax.f32 %v5986, %v6002
      %v6017 = vmax.f32 %v5987, %v6003
      %v6018 = vmax.f32 %v5988, %v6004
      %v6019 = vmax.f32 %v5989, %v6005
      %s6020 = sadd.s32 %s5974, 56
      %s6021 = scalar_lea.vmem [#allocation2], %s6020
      %v6022 = vld [vmem:[%s6021] sm:$0xff]
      %v6023 = vld [vmem:[%s6021 + $0x8] sm:$0xff]
      %v6024 = vld [vmem:[%s6021 + $0x10] sm:$0xff]
      %v6025 = vld [vmem:[%s6021 + $0x18] sm:$0xff]
      %v6026 = vld [vmem:[%s6021 + $0x20] sm:$0xff]
      %v6027 = vld [vmem:[%s6021 + $0x28] sm:$0xff]
      %v6028 = vld [vmem:[%s6021 + $0x30] sm:$0xff]
      %v6029 = vld [vmem:[%s6021 + $0x38] sm:$0xff]
      %v6030 = vld [vmem:[%s6021 + $0x40] sm:$0xff]
      %v6031 = vld [vmem:[%s6021 + $0x48] sm:$0xff]
      %v6032 = vld [vmem:[%s6021 + $0x50] sm:$0xff]
      %v6033 = vld [vmem:[%s6021 + $0x58] sm:$0xff]
      %v6034 = vld [vmem:[%s6021 + $0x60] sm:$0xff]
      %v6035 = vld [vmem:[%s6021 + $0x68] sm:$0xff]
      %v6036 = vmax.f32 %v6006, %v6022
      %v6037 = vmax.f32 %v6007, %v6023
      %v6038 = vmax.f32 %v6008, %v6024
      %v6039 = vmax.f32 %v6009, %v6025
      %v6040 = vmax.f32 %v6010, %v6026
      %v6041 = vmax.f32 %v6011, %v6027
      %v6042 = vmax.f32 %v6012, %v6028
      %v6043 = vmax.f32 %v6013, %v6029
      %v6044 = vmax.f32 %v6014, %v6030
      %v6045 = vmax.f32 %v6015, %v6031
      %v6046 = vmax.f32 %v6016, %v6032
      %v6047 = vmax.f32 %v6017, %v6033
      %v6048 = vmax.f32 %v6018, %v6034
      %v6049 = vmax.f32 %v6019, %v6035
      %s6050 = sadd.s32 %s5974, 58
      %s6051 = scalar_lea.vmem [#allocation2], %s6050
      %v6052 = vld [vmem:[%s6051] sm:$0xff]
      %v6053 = vld [vmem:[%s6051 + $0x8] sm:$0xff]
      %v6054 = vld [vmem:[%s6051 + $0x10] sm:$0xff]
      %v6055 = vld [vmem:[%s6051 + $0x18] sm:$0xff]
      %v6056 = vld [vmem:[%s6051 + $0x20] sm:$0xff]
      %v6057 = vld [vmem:[%s6051 + $0x28] sm:$0xff]
      %v6058 = vld [vmem:[%s6051 + $0x30] sm:$0xff]
      %v6059 = vld [vmem:[%s6051 + $0x38] sm:$0xff]
      %v6060 = vld [vmem:[%s6051 + $0x40] sm:$0xff]
      %v6061 = vld [vmem:[%s6051 + $0x48] sm:$0xff]
      %v6062 = vld [vmem:[%s6051 + $0x50] sm:$0xff]
      %v6063 = vld [vmem:[%s6051 + $0x58] sm:$0xff]
      %v6064 = vld [vmem:[%s6051 + $0x60] sm:$0xff]
      %v6065 = vld [vmem:[%s6051 + $0x68] sm:$0xff]
      %v6066 = vmax.f32 %v6036, %v6052
      %v6067 = vmax.f32 %v6037, %v6053
      %v6068 = vmax.f32 %v6038, %v6054
      %v6069 = vmax.f32 %v6039, %v6055
      %v6070 = vmax.f32 %v6040, %v6056
      %v6071 = vmax.f32 %v6041, %v6057
      %v6072 = vmax.f32 %v6042, %v6058
      %v6073 = vmax.f32 %v6043, %v6059
      %v6074 = vmax.f32 %v6044, %v6060
      %v6075 = vmax.f32 %v6045, %v6061
      %v6076 = vmax.f32 %v6046, %v6062
      %v6077 = vmax.f32 %v6047, %v6063
      %v6078 = vmax.f32 %v6048, %v6064
      %v6079 = vmax.f32 %v6049, %v6065
      %s6080 = scalar_lea.vmem [#allocation3], %s5974
      %6081 = vst.msk [vmem:[%s6080] sm:$0xff] %vm46, %v6066
      %6082 = vst.msk [vmem:[%s6080 + $0x8] sm:$0xff] %vm46, %v6067
      %6083 = vst.msk [vmem:[%s6080 + $0x10] sm:$0xff] %vm46, %v6068
      %6084 = vst.msk [vmem:[%s6080 + $0x18] sm:$0xff] %vm46, %v6069
      %6085 = vst.msk [vmem:[%s6080 + $0x20] sm:$0xff] %vm46, %v6070
      %6086 = vst.msk [vmem:[%s6080 + $0x28] sm:$0xff] %vm46, %v6071
      %6087 = vst.msk [vmem:[%s6080 + $0x30] sm:$0xff] %vm46, %v6072
      %6088 = vst.msk [vmem:[%s6080 + $0x38] sm:$0xff] %vm46, %v6073
      %6089 = vst.msk [vmem:[%s6080 + $0x40] sm:$0xff] %vm46, %v6074
      %6090 = vst.msk [vmem:[%s6080 + $0x48] sm:$0xff] %vm46, %v6075
      %6091 = vst.msk [vmem:[%s6080 + $0x50] sm:$0xff] %vm46, %v6076
      %6092 = vst.msk [vmem:[%s6080 + $0x58] sm:$0xff] %vm46, %v6077
      %6093 = vst.msk [vmem:[%s6080 + $0x60] sm:$0xff] %vm46, %v6078
      %6094 = vst.msk [vmem:[%s6080 + $0x68] sm:$0xff] %vm46, %v6079
    $region93: #{tpu_custom_call.1} parent=1 // loop_footer
      %s5973 = sadd.s32 1, %s5969
    $region94: #{tpu_custom_call.1} parent=1 // loop_footer_branch
      %5968 = sbr.rel target = $region90
    $region95: #{tpu_custom_call.1} parent=1 // loop_exit
      _
    %v6095 = vld [vmem:[%s9] sm:$0xff]
    %v6096 = vld [vmem:[%s9 + $0x8] sm:$0xff]
    %v6097 = vld [vmem:[%s9 + $0x10] sm:$0xff]
    %v6098 = vld [vmem:[%s9 + $0x18] sm:$0xff]
    %v6099 = vld [vmem:[%s9 + $0x20] sm:$0xff]
    %v6100 = vld [vmem:[%s9 + $0x28] sm:$0xff]
    %v6101 = vld [vmem:[%s9 + $0x30] sm:$0xff]
    %v6102 = vld [vmem:[%s9 + $0x38] sm:$0xff]
    %v6103 = vld [vmem:[%s9 + $0x40] sm:$0xff]
    %v6104 = vld [vmem:[%s9 + $0x48] sm:$0xff]
    %v6105 = vld [vmem:[%s9 + $0x50] sm:$0xff]
    %v6106 = vld [vmem:[%s9 + $0x58] sm:$0xff]
    %v6107 = vld [vmem:[%s9 + $0x60] sm:$0xff]
    %v6108 = vld [vmem:[%s9 + $0x68] sm:$0xff]
    %v6109 = vld [vmem:[%s9 + $0x70] sm:$0xff]
    %v6110 = vld [vmem:[%s9 + $0x78] sm:$0xff]
    %v6111 = vld [vmem:[%s9 + $0x80] sm:$0xff]
    %v6112 = vld [vmem:[%s9 + $0x88] sm:$0xff]
    %v6113 = vld [vmem:[%s9 + $0x90] sm:$0xff]
    %v6114 = vld [vmem:[%s9 + $0x98] sm:$0xff]
    %v6115 = vld [vmem:[%s9 + $0xa0] sm:$0xff]
    %v6116 = vld [vmem:[%s9 + $0xa8] sm:$0xff]
    %v6117 = vld [vmem:[%s9 + $0xb0] sm:$0xff]
    %v6118 = vld [vmem:[%s9 + $0xb8] sm:$0xff]
    %v6119 = vld [vmem:[%s9 + $0xc0] sm:$0xff]
    %v6120 = vld [vmem:[%s9 + $0xc8] sm:$0xff]
    %v6121 = vld [vmem:[%s9 + $0xd0] sm:$0xff]
    %v6122 = vld [vmem:[%s9 + $0xd8] sm:$0xff]
    %v6123 = vld [vmem:[%s9 + $0xe0] sm:$0xff]
    %v6124 = vld [vmem:[%s9 + $0xe8] sm:$0xff]
    %v6125 = vld [vmem:[%s9 + $0xf0] sm:$0xff]
    %v6126 = vld [vmem:[%s9 + $0xf8] sm:$0xff]
    %v6127 = vld [vmem:[%s9 + $0x100] sm:$0xff]
    %v6128 = vld [vmem:[%s9 + $0x108] sm:$0xff]
    %v6129 = vld [vmem:[%s9 + $0x110] sm:$0xff]
    %v6130 = vld [vmem:[%s9 + $0x118] sm:$0xff]
    %v6131 = vld [vmem:[%s9 + $0x120] sm:$0xff]
    %v6132 = vld [vmem:[%s9 + $0x128] sm:$0xff]
    %v6133 = vld [vmem:[%s9 + $0x130] sm:$0xff]
    %v6134 = vld [vmem:[%s9 + $0x138] sm:$0xff]
    %v6135 = vld [vmem:[%s9 + $0x140] sm:$0xff]
    %v6136 = vld [vmem:[%s9 + $0x148] sm:$0xff]
    %v6137 = vld [vmem:[%s9 + $0x150] sm:$0xff]
    %v6138 = vld [vmem:[%s9 + $0x158] sm:$0xff]
    %v6139 = vld [vmem:[%s9 + $0x160] sm:$0xff]
    %v6140 = vld [vmem:[%s9 + $0x168] sm:$0xff]
    %v6141 = vld [vmem:[%s9 + $0x170] sm:$0xff]
    %v6142 = vld [vmem:[%s9 + $0x178] sm:$0xff]
    %v6143 = vld [vmem:[%s9 + $0x180] sm:$0xff]
    %v6144 = vld [vmem:[%s9 + $0x188] sm:$0xff]
    %v6145 = vld [vmem:[%s9 + $0x190] sm:$0xff]
    %v6146 = vld [vmem:[%s9 + $0x198] sm:$0xff]
    %v6147 = vld [vmem:[%s9 + $0x1a0] sm:$0xff]
    %v6148 = vld [vmem:[%s9 + $0x1a8] sm:$0xff]
    %v6149 = vld [vmem:[%s9 + $0x1b0] sm:$0xff]
    %v6150 = vld [vmem:[%s9 + $0x1b8] sm:$0xff]
    %v6151 = vld [vmem:[%s9 + $0x1c0] sm:$0xff]
    %v6152 = vld [vmem:[%s9 + $0x1c8] sm:$0xff]
    %v6153 = vld [vmem:[%s9 + $0x1d0] sm:$0xff]
    %v6154 = vld [vmem:[%s9 + $0x1d8] sm:$0xff]
    %v6155 = vld [vmem:[%s9 + $0x1e0] sm:$0xff]
    %v6156 = vld [vmem:[%s9 + $0x1e8] sm:$0xff]
    %v6157 = vld [vmem:[%s9 + $0x1f0] sm:$0xff]
    %v6158 = vld [vmem:[%s9 + $0x1f8] sm:$0xff]
    %v6159 = vld [vmem:[%s9 + $0x200] sm:$0xff]
    %v6160 = vld [vmem:[%s9 + $0x208] sm:$0xff]
    %v6161 = vld [vmem:[%s9 + $0x210] sm:$0xff]
    %v6162 = vld [vmem:[%s9 + $0x218] sm:$0xff]
    %v6163 = vld [vmem:[%s9 + $0x220] sm:$0xff]
    %v6164 = vld [vmem:[%s9 + $0x228] sm:$0xff]
    %v6165 = vld [vmem:[%s9 + $0x230] sm:$0xff]
    %v6166 = vld [vmem:[%s9 + $0x238] sm:$0xff]
    %v6167 = vld [vmem:[%s9 + $0x240] sm:$0xff]
    %v6168 = vld [vmem:[%s9 + $0x248] sm:$0xff]
    %v6169 = vld [vmem:[%s9 + $0x250] sm:$0xff]
    %v6170 = vld [vmem:[%s9 + $0x258] sm:$0xff]
    %v6171 = vld [vmem:[%s9 + $0x260] sm:$0xff]
    %v6172 = vld [vmem:[%s9 + $0x268] sm:$0xff]
    %v6173 = vld [vmem:[%s9 + $0x270] sm:$0xff]
    %v6174 = vld [vmem:[%s9 + $0x278] sm:$0xff]
    %v6175 = vld [vmem:[%s9 + $0x280] sm:$0xff]
    %v6176 = vld [vmem:[%s9 + $0x288] sm:$0xff]
    %v6177 = vld [vmem:[%s9 + $0x290] sm:$0xff]
    %v6178 = vld [vmem:[%s9 + $0x298] sm:$0xff]
    %v6179 = vld [vmem:[%s9 + $0x2a0] sm:$0xff]
    %v6180 = vld [vmem:[%s9 + $0x2a8] sm:$0xff]
    %v6181 = vld [vmem:[%s9 + $0x2b0] sm:$0xff]
    %v6182 = vld [vmem:[%s9 + $0x2b8] sm:$0xff]
    %v6183 = vld [vmem:[%s9 + $0x2c0] sm:$0xff]
    %v6184 = vld [vmem:[%s9 + $0x2c8] sm:$0xff]
    %v6185 = vld [vmem:[%s9 + $0x2d0] sm:$0xff]
    %v6186 = vld [vmem:[%s9 + $0x2d8] sm:$0xff]
    %v6187 = vld [vmem:[%s9 + $0x2e0] sm:$0xff]
    %v6188 = vld [vmem:[%s9 + $0x2e8] sm:$0xff]
    %v6189 = vld [vmem:[%s9 + $0x2f0] sm:$0xff]
    %v6190 = vld [vmem:[%s9 + $0x2f8] sm:$0xff]
    %v6191 = vld [vmem:[%s9 + $0x300] sm:$0xff]
    %v6192 = vld [vmem:[%s9 + $0x308] sm:$0xff]
    %v6193 = vld [vmem:[%s9 + $0x310] sm:$0xff]
    %v6194 = vld [vmem:[%s9 + $0x318] sm:$0xff]
    %v6195 = vld [vmem:[%s9 + $0x320] sm:$0xff]
    %v6196 = vld [vmem:[%s9 + $0x328] sm:$0xff]
    %v6197 = vld [vmem:[%s9 + $0x330] sm:$0xff]
    %v6198 = vld [vmem:[%s9 + $0x338] sm:$0xff]
    %v6199 = vld [vmem:[%s9 + $0x340] sm:$0xff]
    %v6200 = vld [vmem:[%s9 + $0x348] sm:$0xff]
    %v6201 = vld [vmem:[%s9 + $0x350] sm:$0xff]
    %v6202 = vld [vmem:[%s9 + $0x358] sm:$0xff]
    %v6203 = vld [vmem:[%s9 + $0x360] sm:$0xff]
    %v6204 = vld [vmem:[%s9 + $0x368] sm:$0xff]
    %v6205 = vld [vmem:[%s9 + $0x370] sm:$0xff]
    %v6206 = vld [vmem:[%s9 + $0x378] sm:$0xff]
    %v6207 = vld [vmem:[%s9 + $0x380] sm:$0xff]
    %v6208 = vld [vmem:[%s9 + $0x388] sm:$0xff]
    %v6209 = vld [vmem:[%s9 + $0x390] sm:$0xff]
    %v6210 = vld [vmem:[%s9 + $0x398] sm:$0xff]
    %v6211 = vld [vmem:[%s9 + $0x3a0] sm:$0xff]
    %v6212 = vld [vmem:[%s9 + $0x3a8] sm:$0xff]
    %v6213 = vld [vmem:[%s9 + $0x3b0] sm:$0xff]
    %v6214 = vld [vmem:[%s9 + $0x3b8] sm:$0xff]
    %v6215 = vld [vmem:[%s9 + $0x3c0] sm:$0xff]
    %v6216 = vld [vmem:[%s9 + $0x3c8] sm:$0xff]
    %v6217 = vld [vmem:[%s9 + $0x3d0] sm:$0xff]
    %v6218 = vld [vmem:[%s9 + $0x3d8] sm:$0xff]
    %v6219 = vld [vmem:[%s9 + $0x3e0] sm:$0xff]
    %v6220 = vld [vmem:[%s9 + $0x3e8] sm:$0xff]
    %v6221 = vld [vmem:[%s9 + $0x3f0] sm:$0xff]
    %v6222 = vld [vmem:[%s9 + $0x3f8] sm:$0xff]
    %v6223 = vpack.c.bf16 %v6096, %v6095
    %v6224 = vpack.c.bf16 %v6098, %v6097
    %v6225 = vpack.c.bf16 %v6100, %v6099
    %v6226 = vpack.c.bf16 %v6102, %v6101
    %v6227 = vpack.c.bf16 %v6104, %v6103
    %v6228 = vpack.c.bf16 %v6106, %v6105
    %v6229 = vpack.c.bf16 %v6108, %v6107
    %v6230 = vpack.c.bf16 %v6110, %v6109
    %v6231 = vpack.c.bf16 %v6112, %v6111
    %v6232 = vpack.c.bf16 %v6114, %v6113
    %v6233 = vpack.c.bf16 %v6116, %v6115
    %v6234 = vpack.c.bf16 %v6118, %v6117
    %v6235 = vpack.c.bf16 %v6120, %v6119
    %v6236 = vpack.c.bf16 %v6122, %v6121
    %v6237 = vpack.c.bf16 %v6124, %v6123
    %v6238 = vpack.c.bf16 %v6126, %v6125
    %v6239 = vpack.c.bf16 %v6128, %v6127
    %v6240 = vpack.c.bf16 %v6130, %v6129
    %v6241 = vpack.c.bf16 %v6132, %v6131
    %v6242 = vpack.c.bf16 %v6134, %v6133
    %v6243 = vpack.c.bf16 %v6136, %v6135
    %v6244 = vpack.c.bf16 %v6138, %v6137
    %v6245 = vpack.c.bf16 %v6140, %v6139
    %v6246 = vpack.c.bf16 %v6142, %v6141
    %v6247 = vpack.c.bf16 %v6144, %v6143
    %v6248 = vpack.c.bf16 %v6146, %v6145
    %v6249 = vpack.c.bf16 %v6148, %v6147
    %v6250 = vpack.c.bf16 %v6150, %v6149
    %v6251 = vpack.c.bf16 %v6152, %v6151
    %v6252 = vpack.c.bf16 %v6154, %v6153
    %v6253 = vpack.c.bf16 %v6156, %v6155
    %v6254 = vpack.c.bf16 %v6158, %v6157
    %v6255 = vpack.c.bf16 %v6160, %v6159
    %v6256 = vpack.c.bf16 %v6162, %v6161
    %v6257 = vpack.c.bf16 %v6164, %v6163
    %v6258 = vpack.c.bf16 %v6166, %v6165
    %v6259 = vpack.c.bf16 %v6168, %v6167
    %v6260 = vpack.c.bf16 %v6170, %v6169
    %v6261 = vpack.c.bf16 %v6172, %v6171
    %v6262 = vpack.c.bf16 %v6174, %v6173
    %v6263 = vpack.c.bf16 %v6176, %v6175
    %v6264 = vpack.c.bf16 %v6178, %v6177
    %v6265 = vpack.c.bf16 %v6180, %v6179
    %v6266 = vpack.c.bf16 %v6182, %v6181
    %v6267 = vpack.c.bf16 %v6184, %v6183
    %v6268 = vpack.c.bf16 %v6186, %v6185
    %v6269 = vpack.c.bf16 %v6188, %v6187
    %v6270 = vpack.c.bf16 %v6190, %v6189
    %v6271 = vpack.c.bf16 %v6192, %v6191
    %v6272 = vpack.c.bf16 %v6194, %v6193
    %v6273 = vpack.c.bf16 %v6196, %v6195
    %v6274 = vpack.c.bf16 %v6198, %v6197
    %v6275 = vpack.c.bf16 %v6200, %v6199
    %v6276 = vpack.c.bf16 %v6202, %v6201
    %v6277 = vpack.c.bf16 %v6204, %v6203
    %v6278 = vpack.c.bf16 %v6206, %v6205
    %v6279 = vpack.c.bf16 %v6208, %v6207
    %v6280 = vpack.c.bf16 %v6210, %v6209
    %v6281 = vpack.c.bf16 %v6212, %v6211
    %v6282 = vpack.c.bf16 %v6214, %v6213
    %v6283 = vpack.c.bf16 %v6216, %v6215
    %v6284 = vpack.c.bf16 %v6218, %v6217
    %v6285 = vpack.c.bf16 %v6220, %v6219
    %v6286 = vpack.c.bf16 %v6222, %v6221
    %v6287 = vld [vmem:[%s10] sm:$0x1]
    %v6288 = vld [vmem:[%s11] sm:$0xff]
    %v6289 = vld [vmem:[%s11 + $0x8] sm:$0xff]
    %v6290 = vld [vmem:[%s11 + $0x10] sm:$0xff]
    %v6291 = vld [vmem:[%s11 + $0x18] sm:$0xff]
    %v6292 = vld [vmem:[%s11 + $0x20] sm:$0xff]
    %v6293 = vld [vmem:[%s11 + $0x28] sm:$0xff]
    %v6294 = vld [vmem:[%s11 + $0x30] sm:$0xff]
    %v6295 = vld [vmem:[%s11 + $0x38] sm:$0xff]
    %v6296 = vpack.c.bf16 %v6289, %v6288
    %v6297 = vpack.c.bf16 %v6291, %v6290
    %v6298 = vpack.c.bf16 %v6293, %v6292
    %v6299 = vpack.c.bf16 %v6295, %v6294
    %v6300 = vld [vmem:[%s12] sm:$0x1]
    %v6301 = vld [vmem:[#allocation3] sm:$0xff]
    %v6302 = vpack.c.bf16 %v6301, %v6301
    %v6303 = vld [vmem:[#allocation3 + $0x4] sm:$0xff]
    %v6304 = vpack.c.bf16 %v6303, %v6303
    %v6306 = vsel %vm46, %v6304, 0
    %6308 = vmatprep.subr.bf16.mxu0 0
    %6309 = vmatpush1.bf16.msra.mxu0 0
    %6310 = vmatprep.subr.bf16.mxu0 0
    %6311 = vmatpush1.bf16.msra.mxu0 0
    %6312 = vmatprep.subr.bf16.mxu0 0
    %6313 = vmatpush1.bf16.msra.mxu0 0
    %6314 = vmatprep.subr.bf16.mxu0 0
    %6315 = vmatpush1.bf16.msra.mxu0 0
    %6316 = vmatprep.subr.bf16.mxu0 0
    %6317 = vmatpush1.bf16.msra.mxu0 %v6230
    %6318 = vmatprep.subr.bf16.mxu0 0
    %6319 = vmatpush1.bf16.msra.mxu0 %v6229
    %6320 = vmatprep.subr.bf16.mxu0 0
    %6321 = vmatpush1.bf16.msra.mxu0 %v6228
    %6322 = vmatprep.subr.bf16.mxu0 0
    %6323 = vmatpush1.bf16.msra.mxu0 %v6227
    %6324 = vmatprep.subr.bf16.mxu0 0
    %6325 = vmatpush2.bf16.msra.mxu0 0
    %6326 = vmatprep.subr.bf16.mxu0 0
    %6327 = vmatpush2.bf16.msra.mxu0 0
    %6328 = vmatprep.subr.bf16.mxu0 0
    %6329 = vmatpush2.bf16.msra.mxu0 0
    %6330 = vmatprep.subr.bf16.mxu0 0
    %6331 = vmatpush2.bf16.msra.mxu0 0
    %6332 = vmatprep.subr.bf16.mxu0 0
    %6333 = vmatpush2.bf16.msra.mxu0 0
    %6334 = vmatprep.subr.bf16.mxu0 0
    %6335 = vmatpush2.bf16.msra.mxu0 0
    %6336 = vmatprep.subr.bf16.mxu0 0
    %6337 = vmatpush2.bf16.msra.mxu0 0
    %6338 = vmatprep.subr.bf16.mxu0 0
    %6339 = vmatpush2.bf16.msra.mxu0 0
    %6340 = vmatprep.mubr.bf16.mxu0 0
    %6341 = vmatmul.mubr.bf16.gmra.mxu0 %v6306
    %v6342 = vpop.f32.mrf.mxu0
    %v6343 = vadd.f32 0.0, %v6342
    %v6344 = vpop.f32.mrf.mxu0
    %v6345 = vpop.f32.mrf.mxu0
    %v6346 = vpop.f32.mrf.mxu0
    %6347 = vdwg.mxu0
    %v6349 = vsel %vm46, %v6302, 0
    %6351 = vmatprep.subr.bf16.mxu0 0
    %6352 = vmatpush1.bf16.msra.mxu0 0
    %6353 = vmatprep.subr.bf16.mxu0 0
    %6354 = vmatpush1.bf16.msra.mxu0 0
    %6355 = vmatprep.subr.bf16.mxu0 0
    %6356 = vmatpush1.bf16.msra.mxu0 0
    %6357 = vmatprep.subr.bf16.mxu0 0
    %6358 = vmatpush1.bf16.msra.mxu0 0
    %6359 = vmatprep.subr.bf16.mxu0 0
    %6360 = vmatpush1.bf16.msra.mxu0 %v6226
    %6361 = vmatprep.subr.bf16.mxu0 0
    %6362 = vmatpush1.bf16.msra.mxu0 %v6225
    %6363 = vmatprep.subr.bf16.mxu0 0
    %6364 = vmatpush1.bf16.msra.mxu0 %v6224
    %6365 = vmatprep.subr.bf16.mxu0 0
    %6366 = vmatpush1.bf16.msra.mxu0 %v6223
    %6367 = vmatprep.subr.bf16.mxu0 0
    %6368 = vmatpush2.bf16.msra.mxu0 0
    %6369 = vmatprep.subr.bf16.mxu0 0
    %6370 = vmatpush2.bf16.msra.mxu0 0
    %6371 = vmatprep.subr.bf16.mxu0 0
    %6372 = vmatpush2.bf16.msra.mxu0 0
    %6373 = vmatprep.subr.bf16.mxu0 0
    %6374 = vmatpush2.bf16.msra.mxu0 0
    %6375 = vmatprep.subr.bf16.mxu0 0
    %6376 = vmatpush2.bf16.msra.mxu0 0
    %6377 = vmatprep.subr.bf16.mxu0 0
    %6378 = vmatpush2.bf16.msra.mxu0 0
    %6379 = vmatprep.subr.bf16.mxu0 0
    %6380 = vmatpush2.bf16.msra.mxu0 0
    %6381 = vmatprep.subr.bf16.mxu0 0
    %6382 = vmatpush2.bf16.msra.mxu0 0
    %6383 = vmatprep.mubr.bf16.mxu0 0
    %6384 = vmatmul.mubr.bf16.gmra.mxu0 %v6349
    %v6385 = vpop.f32.mrf.mxu0
    %v6386 = vadd.f32 %v6343, %v6385
    %v6387 = vpop.f32.mrf.mxu0
    %v6388 = vpop.f32.mrf.mxu0
    %v6389 = vpop.f32.mrf.mxu0
    %6390 = vdwg.mxu0
    %v6391 = vld [vmem:[#allocation3 + $0x8] sm:$0xff]
    %v6392 = vpack.c.bf16 %v6391, %v6391
    %v6394 = vsel %vm46, %v6392, 0
    %6396 = vmatprep.subr.bf16.mxu0 0
    %6397 = vmatpush1.bf16.msra.mxu0 0
    %6398 = vmatprep.subr.bf16.mxu0 0
    %6399 = vmatpush1.bf16.msra.mxu0 0
    %6400 = vmatprep.subr.bf16.mxu0 0
    %6401 = vmatpush1.bf16.msra.mxu0 0
    %6402 = vmatprep.subr.bf16.mxu0 0
    %6403 = vmatpush1.bf16.msra.mxu0 0
    %6404 = vmatprep.subr.bf16.mxu0 0
    %6405 = vmatpush1.bf16.msra.mxu0 %v6234
    %6406 = vmatprep.subr.bf16.mxu0 0
    %6407 = vmatpush1.bf16.msra.mxu0 %v6233
    %6408 = vmatprep.subr.bf16.mxu0 0
    %6409 = vmatpush1.bf16.msra.mxu0 %v6232
    %6410 = vmatprep.subr.bf16.mxu0 0
    %6411 = vmatpush1.bf16.msra.mxu0 %v6231
    %6412 = vmatprep.subr.bf16.mxu0 0
    %6413 = vmatpush2.bf16.msra.mxu0 0
    %6414 = vmatprep.subr.bf16.mxu0 0
    %6415 = vmatpush2.bf16.msra.mxu0 0
    %6416 = vmatprep.subr.bf16.mxu0 0
    %6417 = vmatpush2.bf16.msra.mxu0 0
    %6418 = vmatprep.subr.bf16.mxu0 0
    %6419 = vmatpush2.bf16.msra.mxu0 0
    %6420 = vmatprep.subr.bf16.mxu0 0
    %6421 = vmatpush2.bf16.msra.mxu0 0
    %6422 = vmatprep.subr.bf16.mxu0 0
    %6423 = vmatpush2.bf16.msra.mxu0 0
    %6424 = vmatprep.subr.bf16.mxu0 0
    %6425 = vmatpush2.bf16.msra.mxu0 0
    %6426 = vmatprep.subr.bf16.mxu0 0
    %6427 = vmatpush2.bf16.msra.mxu0 0
    %6428 = vmatprep.mubr.bf16.mxu0 0
    %6429 = vmatmul.mubr.bf16.gmra.mxu0 %v6394
    %v6430 = vpop.f32.mrf.mxu0
    %v6431 = vadd.f32 0.0, %v6430
    %v6432 = vpop.f32.mrf.mxu0
    %v6433 = vpop.f32.mrf.mxu0
    %v6434 = vpop.f32.mrf.mxu0
    %6435 = vdwg.mxu0
    %v6436 = vadd.f32 %v6386, %v6431
    %v6437 = vld [vmem:[#allocation3 + $0xc] sm:$0xff]
    %v6438 = vpack.c.bf16 %v6437, %v6437
    %v6440 = vsel %vm46, %v6438, 0
    %6442 = vmatprep.subr.bf16.mxu0 0
    %6443 = vmatpush1.bf16.msra.mxu0 0
    %6444 = vmatprep.subr.bf16.mxu0 0
    %6445 = vmatpush1.bf16.msra.mxu0 0
    %6446 = vmatprep.subr.bf16.mxu0 0
    %6447 = vmatpush1.bf16.msra.mxu0 0
    %6448 = vmatprep.subr.bf16.mxu0 0
    %6449 = vmatpush1.bf16.msra.mxu0 0
    %6450 = vmatprep.subr.bf16.mxu0 0
    %6451 = vmatpush1.bf16.msra.mxu0 %v6238
    %6452 = vmatprep.subr.bf16.mxu0 0
    %6453 = vmatpush1.bf16.msra.mxu0 %v6237
    %6454 = vmatprep.subr.bf16.mxu0 0
    %6455 = vmatpush1.bf16.msra.mxu0 %v6236
    %6456 = vmatprep.subr.bf16.mxu0 0
    %6457 = vmatpush1.bf16.msra.mxu0 %v6235
    %6458 = vmatprep.subr.bf16.mxu0 0
    %6459 = vmatpush2.bf16.msra.mxu0 0
    %6460 = vmatprep.subr.bf16.mxu0 0
    %6461 = vmatpush2.bf16.msra.mxu0 0
    %6462 = vmatprep.subr.bf16.mxu0 0
    %6463 = vmatpush2.bf16.msra.mxu0 0
    %6464 = vmatprep.subr.bf16.mxu0 0
    %6465 = vmatpush2.bf16.msra.mxu0 0
    %6466 = vmatprep.subr.bf16.mxu0 0
    %6467 = vmatpush2.bf16.msra.mxu0 0
    %6468 = vmatprep.subr.bf16.mxu0 0
    %6469 = vmatpush2.bf16.msra.mxu0 0
    %6470 = vmatprep.subr.bf16.mxu0 0
    %6471 = vmatpush2.bf16.msra.mxu0 0
    %6472 = vmatprep.subr.bf16.mxu0 0
    %6473 = vmatpush2.bf16.msra.mxu0 0
    %6474 = vmatprep.mubr.bf16.mxu0 0
    %6475 = vmatmul.mubr.bf16.gmra.mxu0 %v6440
    %v6476 = vpop.f32.mrf.mxu0
    %v6477 = vadd.f32 0.0, %v6476
    %v6478 = vpop.f32.mrf.mxu0
    %v6479 = vpop.f32.mrf.mxu0
    %v6480 = vpop.f32.mrf.mxu0
    %6481 = vdwg.mxu0
    %v6482 = vadd.f32 %v6436, %v6477
    %v6483 = vld [vmem:[#allocation3 + $0x70] sm:$0xff]
    %v6484 = vpack.c.bf16 %v6483, %v6483
    %v6486 = vsel %vm46, %v6484, 0
    %6488 = vmatprep.subr.bf16.mxu0 0
    %6489 = vmatpush1.bf16.msra.mxu0 0
    %6490 = vmatprep.subr.bf16.mxu0 0
    %6491 = vmatpush1.bf16.msra.mxu0 0
    %6492 = vmatprep.subr.bf16.mxu0 0
    %6493 = vmatpush1.bf16.msra.mxu0 0
    %6494 = vmatprep.subr.bf16.mxu0 0
    %6495 = vmatpush1.bf16.msra.mxu0 0
    %6496 = vmatprep.subr.bf16.mxu0 0
    %6497 = vmatpush1.bf16.msra.mxu0 %v6242
    %6498 = vmatprep.subr.bf16.mxu0 0
    %6499 = vmatpush1.bf16.msra.mxu0 %v6241
    %6500 = vmatprep.subr.bf16.mxu0 0
    %6501 = vmatpush1.bf16.msra.mxu0 %v6240
    %6502 = vmatprep.subr.bf16.mxu0 0
    %6503 = vmatpush1.bf16.msra.mxu0 %v6239
    %6504 = vmatprep.subr.bf16.mxu0 0
    %6505 = vmatpush2.bf16.msra.mxu0 0
    %6506 = vmatprep.subr.bf16.mxu0 0
    %6507 = vmatpush2.bf16.msra.mxu0 0
    %6508 = vmatprep.subr.bf16.mxu0 0
    %6509 = vmatpush2.bf16.msra.mxu0 0
    %6510 = vmatprep.subr.bf16.mxu0 0
    %6511 = vmatpush2.bf16.msra.mxu0 0
    %6512 = vmatprep.subr.bf16.mxu0 0
    %6513 = vmatpush2.bf16.msra.mxu0 0
    %6514 = vmatprep.subr.bf16.mxu0 0
    %6515 = vmatpush2.bf16.msra.mxu0 0
    %6516 = vmatprep.subr.bf16.mxu0 0
    %6517 = vmatpush2.bf16.msra.mxu0 0
    %6518 = vmatprep.subr.bf16.mxu0 0
    %6519 = vmatpush2.bf16.msra.mxu0 0
    %6520 = vmatprep.mubr.bf16.mxu0 0
    %6521 = vmatmul.mubr.bf16.gmra.mxu0 %v6486
    %v6522 = vpop.f32.mrf.mxu0
    %v6523 = vadd.f32 0.0, %v6522
    %v6524 = vpop.f32.mrf.mxu0
    %v6525 = vpop.f32.mrf.mxu0
    %v6526 = vpop.f32.mrf.mxu0
    %6527 = vdwg.mxu0
    %v6528 = vadd.f32 %v6482, %v6523
    %v6529 = vld [vmem:[#allocation3 + $0x74] sm:$0xff]
    %v6530 = vpack.c.bf16 %v6529, %v6529
    %v6532 = vsel %vm46, %v6530, 0
    %6534 = vmatprep.subr.bf16.mxu0 0
    %6535 = vmatpush1.bf16.msra.mxu0 0
    %6536 = vmatprep.subr.bf16.mxu0 0
    %6537 = vmatpush1.bf16.msra.mxu0 0
    %6538 = vmatprep.subr.bf16.mxu0 0
    %6539 = vmatpush1.bf16.msra.mxu0 0
    %6540 = vmatprep.subr.bf16.mxu0 0
    %6541 = vmatpush1.bf16.msra.mxu0 0
    %6542 = vmatprep.subr.bf16.mxu0 0
    %6543 = vmatpush1.bf16.msra.mxu0 %v6246
    %6544 = vmatprep.subr.bf16.mxu0 0
    %6545 = vmatpush1.bf16.msra.mxu0 %v6245
    %6546 = vmatprep.subr.bf16.mxu0 0
    %6547 = vmatpush1.bf16.msra.mxu0 %v6244
    %6548 = vmatprep.subr.bf16.mxu0 0
    %6549 = vmatpush1.bf16.msra.mxu0 %v6243
    %6550 = vmatprep.subr.bf16.mxu0 0
    %6551 = vmatpush2.bf16.msra.mxu0 0
    %6552 = vmatprep.subr.bf16.mxu0 0
    %6553 = vmatpush2.bf16.msra.mxu0 0
    %6554 = vmatprep.subr.bf16.mxu0 0
    %6555 = vmatpush2.bf16.msra.mxu0 0
    %6556 = vmatprep.subr.bf16.mxu0 0
    %6557 = vmatpush2.bf16.msra.mxu0 0
    %6558 = vmatprep.subr.bf16.mxu0 0
    %6559 = vmatpush2.bf16.msra.mxu0 0
    %6560 = vmatprep.subr.bf16.mxu0 0
    %6561 = vmatpush2.bf16.msra.mxu0 0
    %6562 = vmatprep.subr.bf16.mxu0 0
    %6563 = vmatpush2.bf16.msra.mxu0 0
    %6564 = vmatprep.subr.bf16.mxu0 0
    %6565 = vmatpush2.bf16.msra.mxu0 0
    %6566 = vmatprep.mubr.bf16.mxu0 0
    %6567 = vmatmul.mubr.bf16.gmra.mxu0 %v6532
    %v6568 = vpop.f32.mrf.mxu0
    %v6569 = vadd.f32 0.0, %v6568
    %v6570 = vpop.f32.mrf.mxu0
    %v6571 = vpop.f32.mrf.mxu0
    %v6572 = vpop.f32.mrf.mxu0
    %6573 = vdwg.mxu0
    %v6574 = vadd.f32 %v6528, %v6569
    %v6575 = vld [vmem:[#allocation3 + $0x78] sm:$0xff]
    %v6576 = vpack.c.bf16 %v6575, %v6575
    %v6578 = vsel %vm46, %v6576, 0
    %6580 = vmatprep.subr.bf16.mxu0 0
    %6581 = vmatpush1.bf16.msra.mxu0 0
    %6582 = vmatprep.subr.bf16.mxu0 0
    %6583 = vmatpush1.bf16.msra.mxu0 0
    %6584 = vmatprep.subr.bf16.mxu0 0
    %6585 = vmatpush1.bf16.msra.mxu0 0
    %6586 = vmatprep.subr.bf16.mxu0 0
    %6587 = vmatpush1.bf16.msra.mxu0 0
    %6588 = vmatprep.subr.bf16.mxu0 0
    %6589 = vmatpush1.bf16.msra.mxu0 %v6250
    %6590 = vmatprep.subr.bf16.mxu0 0
    %6591 = vmatpush1.bf16.msra.mxu0 %v6249
    %6592 = vmatprep.subr.bf16.mxu0 0
    %6593 = vmatpush1.bf16.msra.mxu0 %v6248
    %6594 = vmatprep.subr.bf16.mxu0 0
    %6595 = vmatpush1.bf16.msra.mxu0 %v6247
    %6596 = vmatprep.subr.bf16.mxu0 0
    %6597 = vmatpush2.bf16.msra.mxu0 0
    %6598 = vmatprep.subr.bf16.mxu0 0
    %6599 = vmatpush2.bf16.msra.mxu0 0
    %6600 = vmatprep.subr.bf16.mxu0 0
    %6601 = vmatpush2.bf16.msra.mxu0 0
    %6602 = vmatprep.subr.bf16.mxu0 0
    %6603 = vmatpush2.bf16.msra.mxu0 0
    %6604 = vmatprep.subr.bf16.mxu0 0
    %6605 = vmatpush2.bf16.msra.mxu0 0
    %6606 = vmatprep.subr.bf16.mxu0 0
    %6607 = vmatpush2.bf16.msra.mxu0 0
    %6608 = vmatprep.subr.bf16.mxu0 0
    %6609 = vmatpush2.bf16.msra.mxu0 0
    %6610 = vmatprep.subr.bf16.mxu0 0
    %6611 = vmatpush2.bf16.msra.mxu0 0
    %6612 = vmatprep.mubr.bf16.mxu0 0
    %6613 = vmatmul.mubr.bf16.gmra.mxu0 %v6578
    %v6614 = vpop.f32.mrf.mxu0
    %v6615 = vadd.f32 0.0, %v6614
    %v6616 = vpop.f32.mrf.mxu0
    %v6617 = vpop.f32.mrf.mxu0
    %v6618 = vpop.f32.mrf.mxu0
    %6619 = vdwg.mxu0
    %v6620 = vadd.f32 %v6574, %v6615
    %v6621 = vld [vmem:[#allocation3 + $0x7c] sm:$0xff]
    %v6622 = vpack.c.bf16 %v6621, %v6621
    %v6624 = vsel %vm46, %v6622, 0
    %6626 = vmatprep.subr.bf16.mxu0 0
    %6627 = vmatpush1.bf16.msra.mxu0 0
    %6628 = vmatprep.subr.bf16.mxu0 0
    %6629 = vmatpush1.bf16.msra.mxu0 0
    %6630 = vmatprep.subr.bf16.mxu0 0
    %6631 = vmatpush1.bf16.msra.mxu0 0
    %6632 = vmatprep.subr.bf16.mxu0 0
    %6633 = vmatpush1.bf16.msra.mxu0 0
    %6634 = vmatprep.subr.bf16.mxu0 0
    %6635 = vmatpush1.bf16.msra.mxu0 %v6254
    %6636 = vmatprep.subr.bf16.mxu0 0
    %6637 = vmatpush1.bf16.msra.mxu0 %v6253
    %6638 = vmatprep.subr.bf16.mxu0 0
    %6639 = vmatpush1.bf16.msra.mxu0 %v6252
    %6640 = vmatprep.subr.bf16.mxu0 0
    %6641 = vmatpush1.bf16.msra.mxu0 %v6251
    %6642 = vmatprep.subr.bf16.mxu0 0
    %6643 = vmatpush2.bf16.msra.mxu0 0
    %6644 = vmatprep.subr.bf16.mxu0 0
    %6645 = vmatpush2.bf16.msra.mxu0 0
    %6646 = vmatprep.subr.bf16.mxu0 0
    %6647 = vmatpush2.bf16.msra.mxu0 0
    %6648 = vmatprep.subr.bf16.mxu0 0
    %6649 = vmatpush2.bf16.msra.mxu0 0
    %6650 = vmatprep.subr.bf16.mxu0 0
    %6651 = vmatpush2.bf16.msra.mxu0 0
    %6652 = vmatprep.subr.bf16.mxu0 0
    %6653 = vmatpush2.bf16.msra.mxu0 0
    %6654 = vmatprep.subr.bf16.mxu0 0
    %6655 = vmatpush2.bf16.msra.mxu0 0
    %6656 = vmatprep.subr.bf16.mxu0 0
    %6657 = vmatpush2.bf16.msra.mxu0 0
    %6658 = vmatprep.mubr.bf16.mxu0 0
    %6659 = vmatmul.mubr.bf16.gmra.mxu0 %v6624
    %v6660 = vpop.f32.mrf.mxu0
    %v6661 = vadd.f32 0.0, %v6660
    %v6662 = vpop.f32.mrf.mxu0
    %v6663 = vpop.f32.mrf.mxu0
    %v6664 = vpop.f32.mrf.mxu0
    %6665 = vdwg.mxu0
    %v6666 = vadd.f32 %v6620, %v6661
    %v6667 = vld [vmem:[#allocation3 + $0xe0] sm:$0xff]
    %v6668 = vpack.c.bf16 %v6667, %v6667
    %v6670 = vsel %vm46, %v6668, 0
    %6672 = vmatprep.subr.bf16.mxu0 0
    %6673 = vmatpush1.bf16.msra.mxu0 0
    %6674 = vmatprep.subr.bf16.mxu0 0
    %6675 = vmatpush1.bf16.msra.mxu0 0
    %6676 = vmatprep.subr.bf16.mxu0 0
    %6677 = vmatpush1.bf16.msra.mxu0 0
    %6678 = vmatprep.subr.bf16.mxu0 0
    %6679 = vmatpush1.bf16.msra.mxu0 0
    %6680 = vmatprep.subr.bf16.mxu0 0
    %6681 = vmatpush1.bf16.msra.mxu0 %v6258
    %6682 = vmatprep.subr.bf16.mxu0 0
    %6683 = vmatpush1.bf16.msra.mxu0 %v6257
    %6684 = vmatprep.subr.bf16.mxu0 0
    %6685 = vmatpush1.bf16.msra.mxu0 %v6256
    %6686 = vmatprep.subr.bf16.mxu0 0
    %6687 = vmatpush1.bf16.msra.mxu0 %v6255
    %6688 = vmatprep.subr.bf16.mxu0 0
    %6689 = vmatpush2.bf16.msra.mxu0 0
    %6690 = vmatprep.subr.bf16.mxu0 0
    %6691 = vmatpush2.bf16.msra.mxu0 0
    %6692 = vmatprep.subr.bf16.mxu0 0
    %6693 = vmatpush2.bf16.msra.mxu0 0
    %6694 = vmatprep.subr.bf16.mxu0 0
    %6695 = vmatpush2.bf16.msra.mxu0 0
    %6696 = vmatprep.subr.bf16.mxu0 0
    %6697 = vmatpush2.bf16.msra.mxu0 0
    %6698 = vmatprep.subr.bf16.mxu0 0
    %6699 = vmatpush2.bf16.msra.mxu0 0
    %6700 = vmatprep.subr.bf16.mxu0 0
    %6701 = vmatpush2.bf16.msra.mxu0 0
    %6702 = vmatprep.subr.bf16.mxu0 0
    %6703 = vmatpush2.bf16.msra.mxu0 0
    %6704 = vmatprep.mubr.bf16.mxu0 0
    %6705 = vmatmul.mubr.bf16.gmra.mxu0 %v6670
    %v6706 = vpop.f32.mrf.mxu0
    %v6707 = vadd.f32 0.0, %v6706
    %v6708 = vpop.f32.mrf.mxu0
    %v6709 = vpop.f32.mrf.mxu0
    %v6710 = vpop.f32.mrf.mxu0
    %6711 = vdwg.mxu0
    %v6712 = vadd.f32 %v6666, %v6707
    %v6713 = vld [vmem:[#allocation3 + $0xe4] sm:$0xff]
    %v6714 = vpack.c.bf16 %v6713, %v6713
    %v6716 = vsel %vm46, %v6714, 0
    %6718 = vmatprep.subr.bf16.mxu0 0
    %6719 = vmatpush1.bf16.msra.mxu0 0
    %6720 = vmatprep.subr.bf16.mxu0 0
    %6721 = vmatpush1.bf16.msra.mxu0 0
    %6722 = vmatprep.subr.bf16.mxu0 0
    %6723 = vmatpush1.bf16.msra.mxu0 0
    %6724 = vmatprep.subr.bf16.mxu0 0
    %6725 = vmatpush1.bf16.msra.mxu0 0
    %6726 = vmatprep.subr.bf16.mxu0 0
    %6727 = vmatpush1.bf16.msra.mxu0 %v6262
    %6728 = vmatprep.subr.bf16.mxu0 0
    %6729 = vmatpush1.bf16.msra.mxu0 %v6261
    %6730 = vmatprep.subr.bf16.mxu0 0
    %6731 = vmatpush1.bf16.msra.mxu0 %v6260
    %6732 = vmatprep.subr.bf16.mxu0 0
    %6733 = vmatpush1.bf16.msra.mxu0 %v6259
    %6734 = vmatprep.subr.bf16.mxu0 0
    %6735 = vmatpush2.bf16.msra.mxu0 0
    %6736 = vmatprep.subr.bf16.mxu0 0
    %6737 = vmatpush2.bf16.msra.mxu0 0
    %6738 = vmatprep.subr.bf16.mxu0 0
    %6739 = vmatpush2.bf16.msra.mxu0 0
    %6740 = vmatprep.subr.bf16.mxu0 0
    %6741 = vmatpush2.bf16.msra.mxu0 0
    %6742 = vmatprep.subr.bf16.mxu0 0
    %6743 = vmatpush2.bf16.msra.mxu0 0
    %6744 = vmatprep.subr.bf16.mxu0 0
    %6745 = vmatpush2.bf16.msra.mxu0 0
    %6746 = vmatprep.subr.bf16.mxu0 0
    %6747 = vmatpush2.bf16.msra.mxu0 0
    %6748 = vmatprep.subr.bf16.mxu0 0
    %6749 = vmatpush2.bf16.msra.mxu0 0
    %6750 = vmatprep.mubr.bf16.mxu0 0
    %6751 = vmatmul.mubr.bf16.gmra.mxu0 %v6716
    %v6752 = vpop.f32.mrf.mxu0
    %v6753 = vadd.f32 0.0, %v6752
    %v6754 = vpop.f32.mrf.mxu0
    %v6755 = vpop.f32.mrf.mxu0
    %v6756 = vpop.f32.mrf.mxu0
    %6757 = vdwg.mxu0
    %v6758 = vadd.f32 %v6712, %v6753
    %v6759 = vld [vmem:[#allocation3 + $0xe8] sm:$0xff]
    %v6760 = vpack.c.bf16 %v6759, %v6759
    %v6762 = vsel %vm46, %v6760, 0
    %6764 = vmatprep.subr.bf16.mxu0 0
    %6765 = vmatpush1.bf16.msra.mxu0 0
    %6766 = vmatprep.subr.bf16.mxu0 0
    %6767 = vmatpush1.bf16.msra.mxu0 0
    %6768 = vmatprep.subr.bf16.mxu0 0
    %6769 = vmatpush1.bf16.msra.mxu0 0
    %6770 = vmatprep.subr.bf16.mxu0 0
    %6771 = vmatpush1.bf16.msra.mxu0 0
    %6772 = vmatprep.subr.bf16.mxu0 0
    %6773 = vmatpush1.bf16.msra.mxu0 %v6266
    %6774 = vmatprep.subr.bf16.mxu0 0
    %6775 = vmatpush1.bf16.msra.mxu0 %v6265
    %6776 = vmatprep.subr.bf16.mxu0 0
    %6777 = vmatpush1.bf16.msra.mxu0 %v6264
    %6778 = vmatprep.subr.bf16.mxu0 0
    %6779 = vmatpush1.bf16.msra.mxu0 %v6263
    %6780 = vmatprep.subr.bf16.mxu0 0
    %6781 = vmatpush2.bf16.msra.mxu0 0
    %6782 = vmatprep.subr.bf16.mxu0 0
    %6783 = vmatpush2.bf16.msra.mxu0 0
    %6784 = vmatprep.subr.bf16.mxu0 0
    %6785 = vmatpush2.bf16.msra.mxu0 0
    %6786 = vmatprep.subr.bf16.mxu0 0
    %6787 = vmatpush2.bf16.msra.mxu0 0
    %6788 = vmatprep.subr.bf16.mxu0 0
    %6789 = vmatpush2.bf16.msra.mxu0 0
    %6790 = vmatprep.subr.bf16.mxu0 0
    %6791 = vmatpush2.bf16.msra.mxu0 0
    %6792 = vmatprep.subr.bf16.mxu0 0
    %6793 = vmatpush2.bf16.msra.mxu0 0
    %6794 = vmatprep.subr.bf16.mxu0 0
    %6795 = vmatpush2.bf16.msra.mxu0 0
    %6796 = vmatprep.mubr.bf16.mxu0 0
    %6797 = vmatmul.mubr.bf16.gmra.mxu0 %v6762
    %v6798 = vpop.f32.mrf.mxu0
    %v6799 = vadd.f32 0.0, %v6798
    %v6800 = vpop.f32.mrf.mxu0
    %v6801 = vpop.f32.mrf.mxu0
    %v6802 = vpop.f32.mrf.mxu0
    %6803 = vdwg.mxu0
    %v6804 = vadd.f32 %v6758, %v6799
    %v6805 = vld [vmem:[#allocation3 + $0xec] sm:$0xff]
    %v6806 = vpack.c.bf16 %v6805, %v6805
    %v6808 = vsel %vm46, %v6806, 0
    %6810 = vmatprep.subr.bf16.mxu0 0
    %6811 = vmatpush1.bf16.msra.mxu0 0
    %6812 = vmatprep.subr.bf16.mxu0 0
    %6813 = vmatpush1.bf16.msra.mxu0 0
    %6814 = vmatprep.subr.bf16.mxu0 0
    %6815 = vmatpush1.bf16.msra.mxu0 0
    %6816 = vmatprep.subr.bf16.mxu0 0
    %6817 = vmatpush1.bf16.msra.mxu0 0
    %6818 = vmatprep.subr.bf16.mxu0 0
    %6819 = vmatpush1.bf16.msra.mxu0 %v6270
    %6820 = vmatprep.subr.bf16.mxu0 0
    %6821 = vmatpush1.bf16.msra.mxu0 %v6269
    %6822 = vmatprep.subr.bf16.mxu0 0
    %6823 = vmatpush1.bf16.msra.mxu0 %v6268
    %6824 = vmatprep.subr.bf16.mxu0 0
    %6825 = vmatpush1.bf16.msra.mxu0 %v6267
    %6826 = vmatprep.subr.bf16.mxu0 0
    %6827 = vmatpush2.bf16.msra.mxu0 0
    %6828 = vmatprep.subr.bf16.mxu0 0
    %6829 = vmatpush2.bf16.msra.mxu0 0
    %6830 = vmatprep.subr.bf16.mxu0 0
    %6831 = vmatpush2.bf16.msra.mxu0 0
    %6832 = vmatprep.subr.bf16.mxu0 0
    %6833 = vmatpush2.bf16.msra.mxu0 0
    %6834 = vmatprep.subr.bf16.mxu0 0
    %6835 = vmatpush2.bf16.msra.mxu0 0
    %6836 = vmatprep.subr.bf16.mxu0 0
    %6837 = vmatpush2.bf16.msra.mxu0 0
    %6838 = vmatprep.subr.bf16.mxu0 0
    %6839 = vmatpush2.bf16.msra.mxu0 0
    %6840 = vmatprep.subr.bf16.mxu0 0
    %6841 = vmatpush2.bf16.msra.mxu0 0
    %6842 = vmatprep.mubr.bf16.mxu0 0
    %6843 = vmatmul.mubr.bf16.gmra.mxu0 %v6808
    %v6844 = vpop.f32.mrf.mxu0
    %v6845 = vadd.f32 0.0, %v6844
    %v6846 = vpop.f32.mrf.mxu0
    %v6847 = vpop.f32.mrf.mxu0
    %v6848 = vpop.f32.mrf.mxu0
    %6849 = vdwg.mxu0
    %v6850 = vadd.f32 %v6804, %v6845
    %v6851 = vld [vmem:[#allocation3 + $0x150] sm:$0xff]
    %v6852 = vpack.c.bf16 %v6851, %v6851
    %v6854 = vsel %vm46, %v6852, 0
    %6856 = vmatprep.subr.bf16.mxu0 0
    %6857 = vmatpush1.bf16.msra.mxu0 0
    %6858 = vmatprep.subr.bf16.mxu0 0
    %6859 = vmatpush1.bf16.msra.mxu0 0
    %6860 = vmatprep.subr.bf16.mxu0 0
    %6861 = vmatpush1.bf16.msra.mxu0 0
    %6862 = vmatprep.subr.bf16.mxu0 0
    %6863 = vmatpush1.bf16.msra.mxu0 0
    %6864 = vmatprep.subr.bf16.mxu0 0
    %6865 = vmatpush1.bf16.msra.mxu0 %v6274
    %6866 = vmatprep.subr.bf16.mxu0 0
    %6867 = vmatpush1.bf16.msra.mxu0 %v6273
    %6868 = vmatprep.subr.bf16.mxu0 0
    %6869 = vmatpush1.bf16.msra.mxu0 %v6272
    %6870 = vmatprep.subr.bf16.mxu0 0
    %6871 = vmatpush1.bf16.msra.mxu0 %v6271
    %6872 = vmatprep.subr.bf16.mxu0 0
    %6873 = vmatpush2.bf16.msra.mxu0 0
    %6874 = vmatprep.subr.bf16.mxu0 0
    %6875 = vmatpush2.bf16.msra.mxu0 0
    %6876 = vmatprep.subr.bf16.mxu0 0
    %6877 = vmatpush2.bf16.msra.mxu0 0
    %6878 = vmatprep.subr.bf16.mxu0 0
    %6879 = vmatpush2.bf16.msra.mxu0 0
    %6880 = vmatprep.subr.bf16.mxu0 0
    %6881 = vmatpush2.bf16.msra.mxu0 0
    %6882 = vmatprep.subr.bf16.mxu0 0
    %6883 = vmatpush2.bf16.msra.mxu0 0
    %6884 = vmatprep.subr.bf16.mxu0 0
    %6885 = vmatpush2.bf16.msra.mxu0 0
    %6886 = vmatprep.subr.bf16.mxu0 0
    %6887 = vmatpush2.bf16.msra.mxu0 0
    %6888 = vmatprep.mubr.bf16.mxu0 0
    %6889 = vmatmul.mubr.bf16.gmra.mxu0 %v6854
    %v6890 = vpop.f32.mrf.mxu0
    %v6891 = vadd.f32 0.0, %v6890
    %v6892 = vpop.f32.mrf.mxu0
    %v6893 = vpop.f32.mrf.mxu0
    %v6894 = vpop.f32.mrf.mxu0
    %6895 = vdwg.mxu0
    %v6896 = vadd.f32 %v6850, %v6891
    %v6897 = vld [vmem:[#allocation3 + $0x154] sm:$0xff]
    %v6898 = vpack.c.bf16 %v6897, %v6897
    %v6900 = vsel %vm46, %v6898, 0
    %6902 = vmatprep.subr.bf16.mxu0 0
    %6903 = vmatpush1.bf16.msra.mxu0 0
    %6904 = vmatprep.subr.bf16.mxu0 0
    %6905 = vmatpush1.bf16.msra.mxu0 0
    %6906 = vmatprep.subr.bf16.mxu0 0
    %6907 = vmatpush1.bf16.msra.mxu0 0
    %6908 = vmatprep.subr.bf16.mxu0 0
    %6909 = vmatpush1.bf16.msra.mxu0 0
    %6910 = vmatprep.subr.bf16.mxu0 0
    %6911 = vmatpush1.bf16.msra.mxu0 %v6278
    %6912 = vmatprep.subr.bf16.mxu0 0
    %6913 = vmatpush1.bf16.msra.mxu0 %v6277
    %6914 = vmatprep.subr.bf16.mxu0 0
    %6915 = vmatpush1.bf16.msra.mxu0 %v6276
    %6916 = vmatprep.subr.bf16.mxu0 0
    %6917 = vmatpush1.bf16.msra.mxu0 %v6275
    %6918 = vmatprep.subr.bf16.mxu0 0
    %6919 = vmatpush2.bf16.msra.mxu0 0
    %6920 = vmatprep.subr.bf16.mxu0 0
    %6921 = vmatpush2.bf16.msra.mxu0 0
    %6922 = vmatprep.subr.bf16.mxu0 0
    %6923 = vmatpush2.bf16.msra.mxu0 0
    %6924 = vmatprep.subr.bf16.mxu0 0
    %6925 = vmatpush2.bf16.msra.mxu0 0
    %6926 = vmatprep.subr.bf16.mxu0 0
    %6927 = vmatpush2.bf16.msra.mxu0 0
    %6928 = vmatprep.subr.bf16.mxu0 0
    %6929 = vmatpush2.bf16.msra.mxu0 0
    %6930 = vmatprep.subr.bf16.mxu0 0
    %6931 = vmatpush2.bf16.msra.mxu0 0
    %6932 = vmatprep.subr.bf16.mxu0 0
    %6933 = vmatpush2.bf16.msra.mxu0 0
    %6934 = vmatprep.mubr.bf16.mxu0 0
    %6935 = vmatmul.mubr.bf16.gmra.mxu0 %v6900
    %v6936 = vpop.f32.mrf.mxu0
    %v6937 = vadd.f32 0.0, %v6936
    %v6938 = vpop.f32.mrf.mxu0
    %v6939 = vpop.f32.mrf.mxu0
    %v6940 = vpop.f32.mrf.mxu0
    %6941 = vdwg.mxu0
    %v6942 = vadd.f32 %v6896, %v6937
    %v6943 = vld [vmem:[#allocation3 + $0x158] sm:$0xff]
    %v6944 = vpack.c.bf16 %v6943, %v6943
    %v6946 = vsel %vm46, %v6944, 0
    %6948 = vmatprep.subr.bf16.mxu0 0
    %6949 = vmatpush1.bf16.msra.mxu0 0
    %6950 = vmatprep.subr.bf16.mxu0 0
    %6951 = vmatpush1.bf16.msra.mxu0 0
    %6952 = vmatprep.subr.bf16.mxu0 0
    %6953 = vmatpush1.bf16.msra.mxu0 0
    %6954 = vmatprep.subr.bf16.mxu0 0
    %6955 = vmatpush1.bf16.msra.mxu0 0
    %6956 = vmatprep.subr.bf16.mxu0 0
    %6957 = vmatpush1.bf16.msra.mxu0 %v6282
    %6958 = vmatprep.subr.bf16.mxu0 0
    %6959 = vmatpush1.bf16.msra.mxu0 %v6281
    %6960 = vmatprep.subr.bf16.mxu0 0
    %6961 = vmatpush1.bf16.msra.mxu0 %v6280
    %6962 = vmatprep.subr.bf16.mxu0 0
    %6963 = vmatpush1.bf16.msra.mxu0 %v6279
    %6964 = vmatprep.subr.bf16.mxu0 0
    %6965 = vmatpush2.bf16.msra.mxu0 0
    %6966 = vmatprep.subr.bf16.mxu0 0
    %6967 = vmatpush2.bf16.msra.mxu0 0
    %6968 = vmatprep.subr.bf16.mxu0 0
    %6969 = vmatpush2.bf16.msra.mxu0 0
    %6970 = vmatprep.subr.bf16.mxu0 0
    %6971 = vmatpush2.bf16.msra.mxu0 0
    %6972 = vmatprep.subr.bf16.mxu0 0
    %6973 = vmatpush2.bf16.msra.mxu0 0
    %6974 = vmatprep.subr.bf16.mxu0 0
    %6975 = vmatpush2.bf16.msra.mxu0 0
    %6976 = vmatprep.subr.bf16.mxu0 0
    %6977 = vmatpush2.bf16.msra.mxu0 0
    %6978 = vmatprep.subr.bf16.mxu0 0
    %6979 = vmatpush2.bf16.msra.mxu0 0
    %6980 = vmatprep.mubr.bf16.mxu0 0
    %6981 = vmatmul.mubr.bf16.gmra.mxu0 %v6946
    %v6982 = vpop.f32.mrf.mxu0
    %v6983 = vadd.f32 0.0, %v6982
    %v6984 = vpop.f32.mrf.mxu0
    %v6985 = vpop.f32.mrf.mxu0
    %v6986 = vpop.f32.mrf.mxu0
    %6987 = vdwg.mxu0
    %v6988 = vadd.f32 %v6942, %v6983
    %v6989 = vld [vmem:[#allocation3 + $0x15c] sm:$0xff]
    %v6990 = vpack.c.bf16 %v6989, %v6989
    %v6992 = vsel %vm46, %v6990, 0
    %6994 = vmatprep.subr.bf16.mxu0 0
    %6995 = vmatpush1.bf16.msra.mxu0 0
    %6996 = vmatprep.subr.bf16.mxu0 0
    %6997 = vmatpush1.bf16.msra.mxu0 0
    %6998 = vmatprep.subr.bf16.mxu0 0
    %6999 = vmatpush1.bf16.msra.mxu0 0
    %7000 = vmatprep.subr.bf16.mxu0 0
    %7001 = vmatpush1.bf16.msra.mxu0 0
    %7002 = vmatprep.subr.bf16.mxu0 0
    %7003 = vmatpush1.bf16.msra.mxu0 %v6286
    %7004 = vmatprep.subr.bf16.mxu0 0
    %7005 = vmatpush1.bf16.msra.mxu0 %v6285
    %7006 = vmatprep.subr.bf16.mxu0 0
    %7007 = vmatpush1.bf16.msra.mxu0 %v6284
    %7008 = vmatprep.subr.bf16.mxu0 0
    %7009 = vmatpush1.bf16.msra.mxu0 %v6283
    %7010 = vmatprep.subr.bf16.mxu0 0
    %7011 = vmatpush2.bf16.msra.mxu0 0
    %7012 = vmatprep.subr.bf16.mxu0 0
    %7013 = vmatpush2.bf16.msra.mxu0 0
    %7014 = vmatprep.subr.bf16.mxu0 0
    %7015 = vmatpush2.bf16.msra.mxu0 0
    %7016 = vmatprep.subr.bf16.mxu0 0
    %7017 = vmatpush2.bf16.msra.mxu0 0
    %7018 = vmatprep.subr.bf16.mxu0 0
    %7019 = vmatpush2.bf16.msra.mxu0 0
    %7020 = vmatprep.subr.bf16.mxu0 0
    %7021 = vmatpush2.bf16.msra.mxu0 0
    %7022 = vmatprep.subr.bf16.mxu0 0
    %7023 = vmatpush2.bf16.msra.mxu0 0
    %7024 = vmatprep.subr.bf16.mxu0 0
    %7025 = vmatpush2.bf16.msra.mxu0 0
    %7026 = vmatprep.mubr.bf16.mxu0 0
    %7027 = vmatmul.mubr.bf16.gmra.mxu0 %v6992
    %v7028 = vpop.f32.mrf.mxu0
    %v7029 = vadd.f32 0.0, %v7028
    %v7030 = vpop.f32.mrf.mxu0
    %v7031 = vpop.f32.mrf.mxu0
    %v7032 = vpop.f32.mrf.mxu0
    %7033 = vdwg.mxu0
    %v7034 = vadd.f32 %v6988, %v7029
    %v7036 = vlaneseq
    %v7037 = vshrl.u32 %v7036, 7
    %v7038 = vsub.s32 0, %v7037
    %v7039 = vrot.slane %v6287, %v7038
    %v7041 = vadd.f32 %v7034, %v7039
    %v7042 = vmax.f32 %v7041, 0.0
    %v7043 = vpack.c.bf16 %v7042, %v7042
    %v7045 = vlaneseq
    %v7046 = vshrl.u32 %v7045, 7
    %v7047 = vsub.s32 0, %v7046
    %v7048 = vrot.slane %v6300, %v7047
    %v7051 = vsel %vm46, %v7043, 0
    %7053 = vmatprep.subr.bf16.mxu0 0
    %7054 = vmatpush1.bf16.msra.mxu0 0
    %7055 = vmatprep.subr.bf16.mxu0 0
    %7056 = vmatpush1.bf16.msra.mxu0 0
    %7057 = vmatprep.subr.bf16.mxu0 0
    %7058 = vmatpush1.bf16.msra.mxu0 0
    %7059 = vmatprep.subr.bf16.mxu0 0
    %7060 = vmatpush1.bf16.msra.mxu0 0
    %7061 = vmatprep.subr.bf16.mxu0 0
    %7062 = vmatpush1.bf16.msra.mxu0 %v6299
    %7063 = vmatprep.subr.bf16.mxu0 0
    %7064 = vmatpush1.bf16.msra.mxu0 %v6298
    %7065 = vmatprep.subr.bf16.mxu0 0
    %7066 = vmatpush1.bf16.msra.mxu0 %v6297
    %7067 = vmatprep.subr.bf16.mxu0 0
    %7068 = vmatpush1.bf16.msra.mxu0 %v6296
    %7069 = vmatprep.subr.bf16.mxu0 0
    %7070 = vmatpush2.bf16.msra.mxu0 0
    %7071 = vmatprep.subr.bf16.mxu0 0
    %7072 = vmatpush2.bf16.msra.mxu0 0
    %7073 = vmatprep.subr.bf16.mxu0 0
    %7074 = vmatpush2.bf16.msra.mxu0 0
    %7075 = vmatprep.subr.bf16.mxu0 0
    %7076 = vmatpush2.bf16.msra.mxu0 0
    %7077 = vmatprep.subr.bf16.mxu0 0
    %7078 = vmatpush2.bf16.msra.mxu0 0
    %7079 = vmatprep.subr.bf16.mxu0 0
    %7080 = vmatpush2.bf16.msra.mxu0 0
    %7081 = vmatprep.subr.bf16.mxu0 0
    %7082 = vmatpush2.bf16.msra.mxu0 0
    %7083 = vmatprep.subr.bf16.mxu0 0
    %7084 = vmatpush2.bf16.msra.mxu0 0
    %7085 = vmatprep.mubr.bf16.mxu0 0
    %7086 = vmatmul.mubr.bf16.gmra.mxu0 %v7051
    %v7087 = vpop.f32.mrf.mxu0
    %v7088 = vadd.f32 %v7048, %v7087
    %v7089 = vpop.f32.mrf.mxu0
    %v7090 = vpop.f32.mrf.mxu0
    %v7091 = vpop.f32.mrf.mxu0
    %7092 = vdwg.mxu0
    %v7093 = vmul.f32 %v7088, 4.6051702
    %v7094 = vadd.f32 %v7093, -4.6051702
    %v7095 = vmul.f32 %v7094, 1.442695
    %v7096 = vpow.pop %v7095
    %vm7097 = vcmask 122880
    %7098 = vst.msk [vmem:[#allocation4] sm:$0x1] %vm7097, %v7096
    %v7099 = vld [vmem:[#allocation3 + $0x310] sm:$0xff]
    %v7100 = vpack.c.bf16 %v7099, %v7099
    %v7101 = vld [vmem:[#allocation3 + $0x314] sm:$0xff]
    %v7102 = vpack.c.bf16 %v7101, %v7101
    %v7104 = vsel %vm46, %v7102, 0
    %7106 = vmatprep.subr.bf16.mxu0 0
    %7107 = vmatpush1.bf16.msra.mxu0 0
    %7108 = vmatprep.subr.bf16.mxu0 0
    %7109 = vmatpush1.bf16.msra.mxu0 0
    %7110 = vmatprep.subr.bf16.mxu0 0
    %7111 = vmatpush1.bf16.msra.mxu0 0
    %7112 = vmatprep.subr.bf16.mxu0 0
    %7113 = vmatpush1.bf16.msra.mxu0 0
    %7114 = vmatprep.subr.bf16.mxu0 0
    %7115 = vmatpush1.bf16.msra.mxu0 %v6230
    %7116 = vmatprep.subr.bf16.mxu0 0
    %7117 = vmatpush1.bf16.msra.mxu0 %v6229
    %7118 = vmatprep.subr.bf16.mxu0 0
    %7119 = vmatpush1.bf16.msra.mxu0 %v6228
    %7120 = vmatprep.subr.bf16.mxu0 0
    %7121 = vmatpush1.bf16.msra.mxu0 %v6227
    %7122 = vmatprep.subr.bf16.mxu0 0
    %7123 = vmatpush2.bf16.msra.mxu0 0
    %7124 = vmatprep.subr.bf16.mxu0 0
    %7125 = vmatpush2.bf16.msra.mxu0 0
    %7126 = vmatprep.subr.bf16.mxu0 0
    %7127 = vmatpush2.bf16.msra.mxu0 0
    %7128 = vmatprep.subr.bf16.mxu0 0
    %7129 = vmatpush2.bf16.msra.mxu0 0
    %7130 = vmatprep.subr.bf16.mxu0 0
    %7131 = vmatpush2.bf16.msra.mxu0 0
    %7132 = vmatprep.subr.bf16.mxu0 0
    %7133 = vmatpush2.bf16.msra.mxu0 0
    %7134 = vmatprep.subr.bf16.mxu0 0
    %7135 = vmatpush2.bf16.msra.mxu0 0
    %7136 = vmatprep.subr.bf16.mxu0 0
    %7137 = vmatpush2.bf16.msra.mxu0 0
    %7138 = vmatprep.mubr.bf16.mxu0 0
    %7139 = vmatmul.mubr.bf16.gmra.mxu0 %v7104
    %v7140 = vpop.f32.mrf.mxu0
    %v7141 = vadd.f32 0.0, %v7140
    %v7142 = vpop.f32.mrf.mxu0
    %v7143 = vpop.f32.mrf.mxu0
    %v7144 = vpop.f32.mrf.mxu0
    %7145 = vdwg.mxu0
    %v7147 = vsel %vm46, %v7100, 0
    %7149 = vmatprep.subr.bf16.mxu0 0
    %7150 = vmatpush1.bf16.msra.mxu0 0
    %7151 = vmatprep.subr.bf16.mxu0 0
    %7152 = vmatpush1.bf16.msra.mxu0 0
    %7153 = vmatprep.subr.bf16.mxu0 0
    %7154 = vmatpush1.bf16.msra.mxu0 0
    %7155 = vmatprep.subr.bf16.mxu0 0
    %7156 = vmatpush1.bf16.msra.mxu0 0
    %7157 = vmatprep.subr.bf16.mxu0 0
    %7158 = vmatpush1.bf16.msra.mxu0 %v6226
    %7159 = vmatprep.subr.bf16.mxu0 0
    %7160 = vmatpush1.bf16.msra.mxu0 %v6225
    %7161 = vmatprep.subr.bf16.mxu0 0
    %7162 = vmatpush1.bf16.msra.mxu0 %v6224
    %7163 = vmatprep.subr.bf16.mxu0 0
    %7164 = vmatpush1.bf16.msra.mxu0 %v6223
    %7165 = vmatprep.subr.bf16.mxu0 0
    %7166 = vmatpush2.bf16.msra.mxu0 0
    %7167 = vmatprep.subr.bf16.mxu0 0
    %7168 = vmatpush2.bf16.msra.mxu0 0
    %7169 = vmatprep.subr.bf16.mxu0 0
    %7170 = vmatpush2.bf16.msra.mxu0 0
    %7171 = vmatprep.subr.bf16.mxu0 0
    %7172 = vmatpush2.bf16.msra.mxu0 0
    %7173 = vmatprep.subr.bf16.mxu0 0
    %7174 = vmatpush2.bf16.msra.mxu0 0
    %7175 = vmatprep.subr.bf16.mxu0 0
    %7176 = vmatpush2.bf16.msra.mxu0 0
    %7177 = vmatprep.subr.bf16.mxu0 0
    %7178 = vmatpush2.bf16.msra.mxu0 0
    %7179 = vmatprep.subr.bf16.mxu0 0
    %7180 = vmatpush2.bf16.msra.mxu0 0
    %7181 = vmatprep.mubr.bf16.mxu0 0
    %7182 = vmatmul.mubr.bf16.gmra.mxu0 %v7147
    %v7183 = vpop.f32.mrf.mxu0
    %v7184 = vadd.f32 %v7141, %v7183
    %v7185 = vpop.f32.mrf.mxu0
    %v7186 = vpop.f32.mrf.mxu0
    %v7187 = vpop.f32.mrf.mxu0
    %7188 = vdwg.mxu0
    %v7189 = vld [vmem:[#allocation3 + $0x318] sm:$0xff]
    %v7190 = vpack.c.bf16 %v7189, %v7189
    %v7192 = vsel %vm46, %v7190, 0
    %7194 = vmatprep.subr.bf16.mxu0 0
    %7195 = vmatpush1.bf16.msra.mxu0 0
    %7196 = vmatprep.subr.bf16.mxu0 0
    %7197 = vmatpush1.bf16.msra.mxu0 0
    %7198 = vmatprep.subr.bf16.mxu0 0
    %7199 = vmatpush1.bf16.msra.mxu0 0
    %7200 = vmatprep.subr.bf16.mxu0 0
    %7201 = vmatpush1.bf16.msra.mxu0 0
    %7202 = vmatprep.subr.bf16.mxu0 0
    %7203 = vmatpush1.bf16.msra.mxu0 %v6234
    %7204 = vmatprep.subr.bf16.mxu0 0
    %7205 = vmatpush1.bf16.msra.mxu0 %v6233
    %7206 = vmatprep.subr.bf16.mxu0 0
    %7207 = vmatpush1.bf16.msra.mxu0 %v6232
    %7208 = vmatprep.subr.bf16.mxu0 0
    %7209 = vmatpush1.bf16.msra.mxu0 %v6231
    %7210 = vmatprep.subr.bf16.mxu0 0
    %7211 = vmatpush2.bf16.msra.mxu0 0
    %7212 = vmatprep.subr.bf16.mxu0 0
    %7213 = vmatpush2.bf16.msra.mxu0 0
    %7214 = vmatprep.subr.bf16.mxu0 0
    %7215 = vmatpush2.bf16.msra.mxu0 0
    %7216 = vmatprep.subr.bf16.mxu0 0
    %7217 = vmatpush2.bf16.msra.mxu0 0
    %7218 = vmatprep.subr.bf16.mxu0 0
    %7219 = vmatpush2.bf16.msra.mxu0 0
    %7220 = vmatprep.subr.bf16.mxu0 0
    %7221 = vmatpush2.bf16.msra.mxu0 0
    %7222 = vmatprep.subr.bf16.mxu0 0
    %7223 = vmatpush2.bf16.msra.mxu0 0
    %7224 = vmatprep.subr.bf16.mxu0 0
    %7225 = vmatpush2.bf16.msra.mxu0 0
    %7226 = vmatprep.mubr.bf16.mxu0 0
    %7227 = vmatmul.mubr.bf16.gmra.mxu0 %v7192
    %v7228 = vpop.f32.mrf.mxu0
    %v7229 = vadd.f32 0.0, %v7228
    %v7230 = vpop.f32.mrf.mxu0
    %v7231 = vpop.f32.mrf.mxu0
    %v7232 = vpop.f32.mrf.mxu0
    %7233 = vdwg.mxu0
    %v7234 = vadd.f32 %v7184, %v7229
    %v7235 = vld [vmem:[#allocation3 + $0x31c] sm:$0xff]
    %v7236 = vpack.c.bf16 %v7235, %v7235
    %v7238 = vsel %vm46, %v7236, 0
    %7240 = vmatprep.subr.bf16.mxu0 0
    %7241 = vmatpush1.bf16.msra.mxu0 0
    %7242 = vmatprep.subr.bf16.mxu0 0
    %7243 = vmatpush1.bf16.msra.mxu0 0
    %7244 = vmatprep.subr.bf16.mxu0 0
    %7245 = vmatpush1.bf16.msra.mxu0 0
    %7246 = vmatprep.subr.bf16.mxu0 0
    %7247 = vmatpush1.bf16.msra.mxu0 0
    %7248 = vmatprep.subr.bf16.mxu0 0
    %7249 = vmatpush1.bf16.msra.mxu0 %v6238
    %7250 = vmatprep.subr.bf16.mxu0 0
    %7251 = vmatpush1.bf16.msra.mxu0 %v6237
    %7252 = vmatprep.subr.bf16.mxu0 0
    %7253 = vmatpush1.bf16.msra.mxu0 %v6236
    %7254 = vmatprep.subr.bf16.mxu0 0
    %7255 = vmatpush1.bf16.msra.mxu0 %v6235
    %7256 = vmatprep.subr.bf16.mxu0 0
    %7257 = vmatpush2.bf16.msra.mxu0 0
    %7258 = vmatprep.subr.bf16.mxu0 0
    %7259 = vmatpush2.bf16.msra.mxu0 0
    %7260 = vmatprep.subr.bf16.mxu0 0
    %7261 = vmatpush2.bf16.msra.mxu0 0
    %7262 = vmatprep.subr.bf16.mxu0 0
    %7263 = vmatpush2.bf16.msra.mxu0 0
    %7264 = vmatprep.subr.bf16.mxu0 0
    %7265 = vmatpush2.bf16.msra.mxu0 0
    %7266 = vmatprep.subr.bf16.mxu0 0
    %7267 = vmatpush2.bf16.msra.mxu0 0
    %7268 = vmatprep.subr.bf16.mxu0 0
    %7269 = vmatpush2.bf16.msra.mxu0 0
    %7270 = vmatprep.subr.bf16.mxu0 0
    %7271 = vmatpush2.bf16.msra.mxu0 0
    %7272 = vmatprep.mubr.bf16.mxu0 0
    %7273 = vmatmul.mubr.bf16.gmra.mxu0 %v7238
    %v7274 = vpop.f32.mrf.mxu0
    %v7275 = vadd.f32 0.0, %v7274
    %v7276 = vpop.f32.mrf.mxu0
    %v7277 = vpop.f32.mrf.mxu0
    %v7278 = vpop.f32.mrf.mxu0
    %7279 = vdwg.mxu0
    %v7280 = vadd.f32 %v7234, %v7275
    %v7281 = vld [vmem:[#allocation3 + $0x380] sm:$0xff]
    %v7282 = vpack.c.bf16 %v7281, %v7281
    %v7284 = vsel %vm46, %v7282, 0
    %7286 = vmatprep.subr.bf16.mxu0 0
    %7287 = vmatpush1.bf16.msra.mxu0 0
    %7288 = vmatprep.subr.bf16.mxu0 0
    %7289 = vmatpush1.bf16.msra.mxu0 0
    %7290 = vmatprep.subr.bf16.mxu0 0
    %7291 = vmatpush1.bf16.msra.mxu0 0
    %7292 = vmatprep.subr.bf16.mxu0 0
    %7293 = vmatpush1.bf16.msra.mxu0 0
    %7294 = vmatprep.subr.bf16.mxu0 0
    %7295 = vmatpush1.bf16.msra.mxu0 %v6242
    %7296 = vmatprep.subr.bf16.mxu0 0
    %7297 = vmatpush1.bf16.msra.mxu0 %v6241
    %7298 = vmatprep.subr.bf16.mxu0 0
    %7299 = vmatpush1.bf16.msra.mxu0 %v6240
    %7300 = vmatprep.subr.bf16.mxu0 0
    %7301 = vmatpush1.bf16.msra.mxu0 %v6239
    %7302 = vmatprep.subr.bf16.mxu0 0
    %7303 = vmatpush2.bf16.msra.mxu0 0
    %7304 = vmatprep.subr.bf16.mxu0 0
    %7305 = vmatpush2.bf16.msra.mxu0 0
    %7306 = vmatprep.subr.bf16.mxu0 0
    %7307 = vmatpush2.bf16.msra.mxu0 0
    %7308 = vmatprep.subr.bf16.mxu0 0
    %7309 = vmatpush2.bf16.msra.mxu0 0
    %7310 = vmatprep.subr.bf16.mxu0 0
    %7311 = vmatpush2.bf16.msra.mxu0 0
    %7312 = vmatprep.subr.bf16.mxu0 0
    %7313 = vmatpush2.bf16.msra.mxu0 0
    %7314 = vmatprep.subr.bf16.mxu0 0
    %7315 = vmatpush2.bf16.msra.mxu0 0
    %7316 = vmatprep.subr.bf16.mxu0 0
    %7317 = vmatpush2.bf16.msra.mxu0 0
    %7318 = vmatprep.mubr.bf16.mxu0 0
    %7319 = vmatmul.mubr.bf16.gmra.mxu0 %v7284
    %v7320 = vpop.f32.mrf.mxu0
    %v7321 = vadd.f32 0.0, %v7320
    %v7322 = vpop.f32.mrf.mxu0
    %v7323 = vpop.f32.mrf.mxu0
    %v7324 = vpop.f32.mrf.mxu0
    %7325 = vdwg.mxu0
    %v7326 = vadd.f32 %v7280, %v7321
    %v7327 = vld [vmem:[#allocation3 + $0x384] sm:$0xff]
    %v7328 = vpack.c.bf16 %v7327, %v7327
    %v7330 = vsel %vm46, %v7328, 0
    %7332 = vmatprep.subr.bf16.mxu0 0
    %7333 = vmatpush1.bf16.msra.mxu0 0
    %7334 = vmatprep.subr.bf16.mxu0 0
    %7335 = vmatpush1.bf16.msra.mxu0 0
    %7336 = vmatprep.subr.bf16.mxu0 0
    %7337 = vmatpush1.bf16.msra.mxu0 0
    %7338 = vmatprep.subr.bf16.mxu0 0
    %7339 = vmatpush1.bf16.msra.mxu0 0
    %7340 = vmatprep.subr.bf16.mxu0 0
    %7341 = vmatpush1.bf16.msra.mxu0 %v6246
    %7342 = vmatprep.subr.bf16.mxu0 0
    %7343 = vmatpush1.bf16.msra.mxu0 %v6245
    %7344 = vmatprep.subr.bf16.mxu0 0
    %7345 = vmatpush1.bf16.msra.mxu0 %v6244
    %7346 = vmatprep.subr.bf16.mxu0 0
    %7347 = vmatpush1.bf16.msra.mxu0 %v6243
    %7348 = vmatprep.subr.bf16.mxu0 0
    %7349 = vmatpush2.bf16.msra.mxu0 0
    %7350 = vmatprep.subr.bf16.mxu0 0
    %7351 = vmatpush2.bf16.msra.mxu0 0
    %7352 = vmatprep.subr.bf16.mxu0 0
    %7353 = vmatpush2.bf16.msra.mxu0 0
    %7354 = vmatprep.subr.bf16.mxu0 0
    %7355 = vmatpush2.bf16.msra.mxu0 0
    %7356 = vmatprep.subr.bf16.mxu0 0
    %7357 = vmatpush2.bf16.msra.mxu0 0
    %7358 = vmatprep.subr.bf16.mxu0 0
    %7359 = vmatpush2.bf16.msra.mxu0 0
    %7360 = vmatprep.subr.bf16.mxu0 0
    %7361 = vmatpush2.bf16.msra.mxu0 0
    %7362 = vmatprep.subr.bf16.mxu0 0
    %7363 = vmatpush2.bf16.msra.mxu0 0
    %7364 = vmatprep.mubr.bf16.mxu0 0
    %7365 = vmatmul.mubr.bf16.gmra.mxu0 %v7330
    %v7366 = vpop.f32.mrf.mxu0
    %v7367 = vadd.f32 0.0, %v7366
    %v7368 = vpop.f32.mrf.mxu0
    %v7369 = vpop.f32.mrf.mxu0
    %v7370 = vpop.f32.mrf.mxu0
    %7371 = vdwg.mxu0
    %v7372 = vadd.f32 %v7326, %v7367
    %v7373 = vld [vmem:[#allocation3 + $0x388] sm:$0xff]
    %v7374 = vpack.c.bf16 %v7373, %v7373
    %v7376 = vsel %vm46, %v7374, 0
    %7378 = vmatprep.subr.bf16.mxu0 0
    %7379 = vmatpush1.bf16.msra.mxu0 0
    %7380 = vmatprep.subr.bf16.mxu0 0
    %7381 = vmatpush1.bf16.msra.mxu0 0
    %7382 = vmatprep.subr.bf16.mxu0 0
    %7383 = vmatpush1.bf16.msra.mxu0 0
    %7384 = vmatprep.subr.bf16.mxu0 0
    %7385 = vmatpush1.bf16.msra.mxu0 0
    %7386 = vmatprep.subr.bf16.mxu0 0
    %7387 = vmatpush1.bf16.msra.mxu0 %v6250
    %7388 = vmatprep.subr.bf16.mxu0 0
    %7389 = vmatpush1.bf16.msra.mxu0 %v6249
    %7390 = vmatprep.subr.bf16.mxu0 0
    %7391 = vmatpush1.bf16.msra.mxu0 %v6248
    %7392 = vmatprep.subr.bf16.mxu0 0
    %7393 = vmatpush1.bf16.msra.mxu0 %v6247
    %7394 = vmatprep.subr.bf16.mxu0 0
    %7395 = vmatpush2.bf16.msra.mxu0 0
    %7396 = vmatprep.subr.bf16.mxu0 0
    %7397 = vmatpush2.bf16.msra.mxu0 0
    %7398 = vmatprep.subr.bf16.mxu0 0
    %7399 = vmatpush2.bf16.msra.mxu0 0
    %7400 = vmatprep.subr.bf16.mxu0 0
    %7401 = vmatpush2.bf16.msra.mxu0 0
    %7402 = vmatprep.subr.bf16.mxu0 0
    %7403 = vmatpush2.bf16.msra.mxu0 0
    %7404 = vmatprep.subr.bf16.mxu0 0
    %7405 = vmatpush2.bf16.msra.mxu0 0
    %7406 = vmatprep.subr.bf16.mxu0 0
    %7407 = vmatpush2.bf16.msra.mxu0 0
    %7408 = vmatprep.subr.bf16.mxu0 0
    %7409 = vmatpush2.bf16.msra.mxu0 0
    %7410 = vmatprep.mubr.bf16.mxu0 0
    %7411 = vmatmul.mubr.bf16.gmra.mxu0 %v7376
    %v7412 = vpop.f32.mrf.mxu0
    %v7413 = vadd.f32 0.0, %v7412
    %v7414 = vpop.f32.mrf.mxu0
    %v7415 = vpop.f32.mrf.mxu0
    %v7416 = vpop.f32.mrf.mxu0
    %7417 = vdwg.mxu0
    %v7418 = vadd.f32 %v7372, %v7413
    %v7419 = vld [vmem:[#allocation3 + $0x38c] sm:$0xff]
    %v7420 = vpack.c.bf16 %v7419, %v7419
    %v7422 = vsel %vm46, %v7420, 0
    %7424 = vmatprep.subr.bf16.mxu0 0
    %7425 = vmatpush1.bf16.msra.mxu0 0
    %7426 = vmatprep.subr.bf16.mxu0 0
    %7427 = vmatpush1.bf16.msra.mxu0 0
    %7428 = vmatprep.subr.bf16.mxu0 0
    %7429 = vmatpush1.bf16.msra.mxu0 0
    %7430 = vmatprep.subr.bf16.mxu0 0
    %7431 = vmatpush1.bf16.msra.mxu0 0
    %7432 = vmatprep.subr.bf16.mxu0 0
    %7433 = vmatpush1.bf16.msra.mxu0 %v6254
    %7434 = vmatprep.subr.bf16.mxu0 0
    %7435 = vmatpush1.bf16.msra.mxu0 %v6253
    %7436 = vmatprep.subr.bf16.mxu0 0
    %7437 = vmatpush1.bf16.msra.mxu0 %v6252
    %7438 = vmatprep.subr.bf16.mxu0 0
    %7439 = vmatpush1.bf16.msra.mxu0 %v6251
    %7440 = vmatprep.subr.bf16.mxu0 0
    %7441 = vmatpush2.bf16.msra.mxu0 0
    %7442 = vmatprep.subr.bf16.mxu0 0
    %7443 = vmatpush2.bf16.msra.mxu0 0
    %7444 = vmatprep.subr.bf16.mxu0 0
    %7445 = vmatpush2.bf16.msra.mxu0 0
    %7446 = vmatprep.subr.bf16.mxu0 0
    %7447 = vmatpush2.bf16.msra.mxu0 0
    %7448 = vmatprep.subr.bf16.mxu0 0
    %7449 = vmatpush2.bf16.msra.mxu0 0
    %7450 = vmatprep.subr.bf16.mxu0 0
    %7451 = vmatpush2.bf16.msra.mxu0 0
    %7452 = vmatprep.subr.bf16.mxu0 0
    %7453 = vmatpush2.bf16.msra.mxu0 0
    %7454 = vmatprep.subr.bf16.mxu0 0
    %7455 = vmatpush2.bf16.msra.mxu0 0
    %7456 = vmatprep.mubr.bf16.mxu0 0
    %7457 = vmatmul.mubr.bf16.gmra.mxu0 %v7422
    %v7458 = vpop.f32.mrf.mxu0
    %v7459 = vadd.f32 0.0, %v7458
    %v7460 = vpop.f32.mrf.mxu0
    %v7461 = vpop.f32.mrf.mxu0
    %v7462 = vpop.f32.mrf.mxu0
    %7463 = vdwg.mxu0
    %v7464 = vadd.f32 %v7418, %v7459
    %v7465 = vld [vmem:[#allocation3 + $0x3f0] sm:$0xff]
    %v7466 = vpack.c.bf16 %v7465, %v7465
    %v7468 = vsel %vm46, %v7466, 0
    %7470 = vmatprep.subr.bf16.mxu0 0
    %7471 = vmatpush1.bf16.msra.mxu0 0
    %7472 = vmatprep.subr.bf16.mxu0 0
    %7473 = vmatpush1.bf16.msra.mxu0 0
    %7474 = vmatprep.subr.bf16.mxu0 0
    %7475 = vmatpush1.bf16.msra.mxu0 0
    %7476 = vmatprep.subr.bf16.mxu0 0
    %7477 = vmatpush1.bf16.msra.mxu0 0
    %7478 = vmatprep.subr.bf16.mxu0 0
    %7479 = vmatpush1.bf16.msra.mxu0 %v6258
    %7480 = vmatprep.subr.bf16.mxu0 0
    %7481 = vmatpush1.bf16.msra.mxu0 %v6257
    %7482 = vmatprep.subr.bf16.mxu0 0
    %7483 = vmatpush1.bf16.msra.mxu0 %v6256
    %7484 = vmatprep.subr.bf16.mxu0 0
    %7485 = vmatpush1.bf16.msra.mxu0 %v6255
    %7486 = vmatprep.subr.bf16.mxu0 0
    %7487 = vmatpush2.bf16.msra.mxu0 0
    %7488 = vmatprep.subr.bf16.mxu0 0
    %7489 = vmatpush2.bf16.msra.mxu0 0
    %7490 = vmatprep.subr.bf16.mxu0 0
    %7491 = vmatpush2.bf16.msra.mxu0 0
    %7492 = vmatprep.subr.bf16.mxu0 0
    %7493 = vmatpush2.bf16.msra.mxu0 0
    %7494 = vmatprep.subr.bf16.mxu0 0
    %7495 = vmatpush2.bf16.msra.mxu0 0
    %7496 = vmatprep.subr.bf16.mxu0 0
    %7497 = vmatpush2.bf16.msra.mxu0 0
    %7498 = vmatprep.subr.bf16.mxu0 0
    %7499 = vmatpush2.bf16.msra.mxu0 0
    %7500 = vmatprep.subr.bf16.mxu0 0
    %7501 = vmatpush2.bf16.msra.mxu0 0
    %7502 = vmatprep.mubr.bf16.mxu0 0
    %7503 = vmatmul.mubr.bf16.gmra.mxu0 %v7468
    %v7504 = vpop.f32.mrf.mxu0
    %v7505 = vadd.f32 0.0, %v7504
    %v7506 = vpop.f32.mrf.mxu0
    %v7507 = vpop.f32.mrf.mxu0
    %v7508 = vpop.f32.mrf.mxu0
    %7509 = vdwg.mxu0
    %v7510 = vadd.f32 %v7464, %v7505
    %v7511 = vld [vmem:[#allocation3 + $0x3f4] sm:$0xff]
    %v7512 = vpack.c.bf16 %v7511, %v7511
    %v7514 = vsel %vm46, %v7512, 0
    %7516 = vmatprep.subr.bf16.mxu0 0
    %7517 = vmatpush1.bf16.msra.mxu0 0
    %7518 = vmatprep.subr.bf16.mxu0 0
    %7519 = vmatpush1.bf16.msra.mxu0 0
    %7520 = vmatprep.subr.bf16.mxu0 0
    %7521 = vmatpush1.bf16.msra.mxu0 0
    %7522 = vmatprep.subr.bf16.mxu0 0
    %7523 = vmatpush1.bf16.msra.mxu0 0
    %7524 = vmatprep.subr.bf16.mxu0 0
    %7525 = vmatpush1.bf16.msra.mxu0 %v6262
    %7526 = vmatprep.subr.bf16.mxu0 0
    %7527 = vmatpush1.bf16.msra.mxu0 %v6261
    %7528 = vmatprep.subr.bf16.mxu0 0
    %7529 = vmatpush1.bf16.msra.mxu0 %v6260
    %7530 = vmatprep.subr.bf16.mxu0 0
    %7531 = vmatpush1.bf16.msra.mxu0 %v6259
    %7532 = vmatprep.subr.bf16.mxu0 0
    %7533 = vmatpush2.bf16.msra.mxu0 0
    %7534 = vmatprep.subr.bf16.mxu0 0
    %7535 = vmatpush2.bf16.msra.mxu0 0
    %7536 = vmatprep.subr.bf16.mxu0 0
    %7537 = vmatpush2.bf16.msra.mxu0 0
    %7538 = vmatprep.subr.bf16.mxu0 0
    %7539 = vmatpush2.bf16.msra.mxu0 0
    %7540 = vmatprep.subr.bf16.mxu0 0
    %7541 = vmatpush2.bf16.msra.mxu0 0
    %7542 = vmatprep.subr.bf16.mxu0 0
    %7543 = vmatpush2.bf16.msra.mxu0 0
    %7544 = vmatprep.subr.bf16.mxu0 0
    %7545 = vmatpush2.bf16.msra.mxu0 0
    %7546 = vmatprep.subr.bf16.mxu0 0
    %7547 = vmatpush2.bf16.msra.mxu0 0
    %7548 = vmatprep.mubr.bf16.mxu0 0
    %7549 = vmatmul.mubr.bf16.gmra.mxu0 %v7514
    %v7550 = vpop.f32.mrf.mxu0
    %v7551 = vadd.f32 0.0, %v7550
    %v7552 = vpop.f32.mrf.mxu0
    %v7553 = vpop.f32.mrf.mxu0
    %v7554 = vpop.f32.mrf.mxu0
    %7555 = vdwg.mxu0
    %v7556 = vadd.f32 %v7510, %v7551
    %v7557 = vld [vmem:[#allocation3 + $0x3f8] sm:$0xff]
    %v7558 = vpack.c.bf16 %v7557, %v7557
    %v7560 = vsel %vm46, %v7558, 0
    %7562 = vmatprep.subr.bf16.mxu0 0
    %7563 = vmatpush1.bf16.msra.mxu0 0
    %7564 = vmatprep.subr.bf16.mxu0 0
    %7565 = vmatpush1.bf16.msra.mxu0 0
    %7566 = vmatprep.subr.bf16.mxu0 0
    %7567 = vmatpush1.bf16.msra.mxu0 0
    %7568 = vmatprep.subr.bf16.mxu0 0
    %7569 = vmatpush1.bf16.msra.mxu0 0
    %7570 = vmatprep.subr.bf16.mxu0 0
    %7571 = vmatpush1.bf16.msra.mxu0 %v6266
    %7572 = vmatprep.subr.bf16.mxu0 0
    %7573 = vmatpush1.bf16.msra.mxu0 %v6265
    %7574 = vmatprep.subr.bf16.mxu0 0
    %7575 = vmatpush1.bf16.msra.mxu0 %v6264
    %7576 = vmatprep.subr.bf16.mxu0 0
    %7577 = vmatpush1.bf16.msra.mxu0 %v6263
    %7578 = vmatprep.subr.bf16.mxu0 0
    %7579 = vmatpush2.bf16.msra.mxu0 0
    %7580 = vmatprep.subr.bf16.mxu0 0
    %7581 = vmatpush2.bf16.msra.mxu0 0
    %7582 = vmatprep.subr.bf16.mxu0 0
    %7583 = vmatpush2.bf16.msra.mxu0 0
    %7584 = vmatprep.subr.bf16.mxu0 0
    %7585 = vmatpush2.bf16.msra.mxu0 0
    %7586 = vmatprep.subr.bf16.mxu0 0
    %7587 = vmatpush2.bf16.msra.mxu0 0
    %7588 = vmatprep.subr.bf16.mxu0 0
    %7589 = vmatpush2.bf16.msra.mxu0 0
    %7590 = vmatprep.subr.bf16.mxu0 0
    %7591 = vmatpush2.bf16.msra.mxu0 0
    %7592 = vmatprep.subr.bf16.mxu0 0
    %7593 = vmatpush2.bf16.msra.mxu0 0
    %7594 = vmatprep.mubr.bf16.mxu0 0
    %7595 = vmatmul.mubr.bf16.gmra.mxu0 %v7560
    %v7596 = vpop.f32.mrf.mxu0
    %v7597 = vadd.f32 0.0, %v7596
    %v7598 = vpop.f32.mrf.mxu0
    %v7599 = vpop.f32.mrf.mxu0
    %v7600 = vpop.f32.mrf.mxu0
    %7601 = vdwg.mxu0
    %v7602 = vadd.f32 %v7556, %v7597
    %v7603 = vld [vmem:[#allocation3 + $0x3fc] sm:$0xff]
    %v7604 = vpack.c.bf16 %v7603, %v7603
    %v7606 = vsel %vm46, %v7604, 0
    %7608 = vmatprep.subr.bf16.mxu0 0
    %7609 = vmatpush1.bf16.msra.mxu0 0
    %7610 = vmatprep.subr.bf16.mxu0 0
    %7611 = vmatpush1.bf16.msra.mxu0 0
    %7612 = vmatprep.subr.bf16.mxu0 0
    %7613 = vmatpush1.bf16.msra.mxu0 0
    %7614 = vmatprep.subr.bf16.mxu0 0
    %7615 = vmatpush1.bf16.msra.mxu0 0
    %7616 = vmatprep.subr.bf16.mxu0 0
    %7617 = vmatpush1.bf16.msra.mxu0 %v6270
    %7618 = vmatprep.subr.bf16.mxu0 0
    %7619 = vmatpush1.bf16.msra.mxu0 %v6269
    %7620 = vmatprep.subr.bf16.mxu0 0
    %7621 = vmatpush1.bf16.msra.mxu0 %v6268
    %7622 = vmatprep.subr.bf16.mxu0 0
    %7623 = vmatpush1.bf16.msra.mxu0 %v6267
    %7624 = vmatprep.subr.bf16.mxu0 0
    %7625 = vmatpush2.bf16.msra.mxu0 0
    %7626 = vmatprep.subr.bf16.mxu0 0
    %7627 = vmatpush2.bf16.msra.mxu0 0
    %7628 = vmatprep.subr.bf16.mxu0 0
    %7629 = vmatpush2.bf16.msra.mxu0 0
    %7630 = vmatprep.subr.bf16.mxu0 0
    %7631 = vmatpush2.bf16.msra.mxu0 0
    %7632 = vmatprep.subr.bf16.mxu0 0
    %7633 = vmatpush2.bf16.msra.mxu0 0
    %7634 = vmatprep.subr.bf16.mxu0 0
    %7635 = vmatpush2.bf16.msra.mxu0 0
    %7636 = vmatprep.subr.bf16.mxu0 0
    %7637 = vmatpush2.bf16.msra.mxu0 0
    %7638 = vmatprep.subr.bf16.mxu0 0
    %7639 = vmatpush2.bf16.msra.mxu0 0
    %7640 = vmatprep.mubr.bf16.mxu0 0
    %7641 = vmatmul.mubr.bf16.gmra.mxu0 %v7606
    %v7642 = vpop.f32.mrf.mxu0
    %v7643 = vadd.f32 0.0, %v7642
    %v7644 = vpop.f32.mrf.mxu0
    %v7645 = vpop.f32.mrf.mxu0
    %v7646 = vpop.f32.mrf.mxu0
    %7647 = vdwg.mxu0
    %v7648 = vadd.f32 %v7602, %v7643
    %v7649 = vld [vmem:[#allocation3 + $0x460] sm:$0xff]
    %v7650 = vpack.c.bf16 %v7649, %v7649
    %v7652 = vsel %vm46, %v7650, 0
    %7654 = vmatprep.subr.bf16.mxu0 0
    %7655 = vmatpush1.bf16.msra.mxu0 0
    %7656 = vmatprep.subr.bf16.mxu0 0
    %7657 = vmatpush1.bf16.msra.mxu0 0
    %7658 = vmatprep.subr.bf16.mxu0 0
    %7659 = vmatpush1.bf16.msra.mxu0 0
    %7660 = vmatprep.subr.bf16.mxu0 0
    %7661 = vmatpush1.bf16.msra.mxu0 0
    %7662 = vmatprep.subr.bf16.mxu0 0
    %7663 = vmatpush1.bf16.msra.mxu0 %v6274
    %7664 = vmatprep.subr.bf16.mxu0 0
    %7665 = vmatpush1.bf16.msra.mxu0 %v6273
    %7666 = vmatprep.subr.bf16.mxu0 0
    %7667 = vmatpush1.bf16.msra.mxu0 %v6272
    %7668 = vmatprep.subr.bf16.mxu0 0
    %7669 = vmatpush1.bf16.msra.mxu0 %v6271
    %7670 = vmatprep.subr.bf16.mxu0 0
    %7671 = vmatpush2.bf16.msra.mxu0 0
    %7672 = vmatprep.subr.bf16.mxu0 0
    %7673 = vmatpush2.bf16.msra.mxu0 0
    %7674 = vmatprep.subr.bf16.mxu0 0
    %7675 = vmatpush2.bf16.msra.mxu0 0
    %7676 = vmatprep.subr.bf16.mxu0 0
    %7677 = vmatpush2.bf16.msra.mxu0 0
    %7678 = vmatprep.subr.bf16.mxu0 0
    %7679 = vmatpush2.bf16.msra.mxu0 0
    %7680 = vmatprep.subr.bf16.mxu0 0
    %7681 = vmatpush2.bf16.msra.mxu0 0
    %7682 = vmatprep.subr.bf16.mxu0 0
    %7683 = vmatpush2.bf16.msra.mxu0 0
    %7684 = vmatprep.subr.bf16.mxu0 0
    %7685 = vmatpush2.bf16.msra.mxu0 0
    %7686 = vmatprep.mubr.bf16.mxu0 0
    %7687 = vmatmul.mubr.bf16.gmra.mxu0 %v7652
    %v7688 = vpop.f32.mrf.mxu0
    %v7689 = vadd.f32 0.0, %v7688
    %v7690 = vpop.f32.mrf.mxu0
    %v7691 = vpop.f32.mrf.mxu0
    %v7692 = vpop.f32.mrf.mxu0
    %7693 = vdwg.mxu0
    %v7694 = vadd.f32 %v7648, %v7689
    %v7695 = vld [vmem:[#allocation3 + $0x464] sm:$0xff]
    %v7696 = vpack.c.bf16 %v7695, %v7695
    %v7698 = vsel %vm46, %v7696, 0
    %7700 = vmatprep.subr.bf16.mxu0 0
    %7701 = vmatpush1.bf16.msra.mxu0 0
    %7702 = vmatprep.subr.bf16.mxu0 0
    %7703 = vmatpush1.bf16.msra.mxu0 0
    %7704 = vmatprep.subr.bf16.mxu0 0
    %7705 = vmatpush1.bf16.msra.mxu0 0
    %7706 = vmatprep.subr.bf16.mxu0 0
    %7707 = vmatpush1.bf16.msra.mxu0 0
    %7708 = vmatprep.subr.bf16.mxu0 0
    %7709 = vmatpush1.bf16.msra.mxu0 %v6278
    %7710 = vmatprep.subr.bf16.mxu0 0
    %7711 = vmatpush1.bf16.msra.mxu0 %v6277
    %7712 = vmatprep.subr.bf16.mxu0 0
    %7713 = vmatpush1.bf16.msra.mxu0 %v6276
    %7714 = vmatprep.subr.bf16.mxu0 0
    %7715 = vmatpush1.bf16.msra.mxu0 %v6275
    %7716 = vmatprep.subr.bf16.mxu0 0
    %7717 = vmatpush2.bf16.msra.mxu0 0
    %7718 = vmatprep.subr.bf16.mxu0 0
    %7719 = vmatpush2.bf16.msra.mxu0 0
    %7720 = vmatprep.subr.bf16.mxu0 0
    %7721 = vmatpush2.bf16.msra.mxu0 0
    %7722 = vmatprep.subr.bf16.mxu0 0
    %7723 = vmatpush2.bf16.msra.mxu0 0
    %7724 = vmatprep.subr.bf16.mxu0 0
    %7725 = vmatpush2.bf16.msra.mxu0 0
    %7726 = vmatprep.subr.bf16.mxu0 0
    %7727 = vmatpush2.bf16.msra.mxu0 0
    %7728 = vmatprep.subr.bf16.mxu0 0
    %7729 = vmatpush2.bf16.msra.mxu0 0
    %7730 = vmatprep.subr.bf16.mxu0 0
    %7731 = vmatpush2.bf16.msra.mxu0 0
    %7732 = vmatprep.mubr.bf16.mxu0 0
    %7733 = vmatmul.mubr.bf16.gmra.mxu0 %v7698
    %v7734 = vpop.f32.mrf.mxu0
    %v7735 = vadd.f32 0.0, %v7734
    %v7736 = vpop.f32.mrf.mxu0
    %v7737 = vpop.f32.mrf.mxu0
    %v7738 = vpop.f32.mrf.mxu0
    %7739 = vdwg.mxu0
    %v7740 = vadd.f32 %v7694, %v7735
    %v7741 = vld [vmem:[#allocation3 + $0x468] sm:$0xff]
    %v7742 = vpack.c.bf16 %v7741, %v7741
    %v7744 = vsel %vm46, %v7742, 0
    %7746 = vmatprep.subr.bf16.mxu0 0
    %7747 = vmatpush1.bf16.msra.mxu0 0
    %7748 = vmatprep.subr.bf16.mxu0 0
    %7749 = vmatpush1.bf16.msra.mxu0 0
    %7750 = vmatprep.subr.bf16.mxu0 0
    %7751 = vmatpush1.bf16.msra.mxu0 0
    %7752 = vmatprep.subr.bf16.mxu0 0
    %7753 = vmatpush1.bf16.msra.mxu0 0
    %7754 = vmatprep.subr.bf16.mxu0 0
    %7755 = vmatpush1.bf16.msra.mxu0 %v6282
    %7756 = vmatprep.subr.bf16.mxu0 0
    %7757 = vmatpush1.bf16.msra.mxu0 %v6281
    %7758 = vmatprep.subr.bf16.mxu0 0
    %7759 = vmatpush1.bf16.msra.mxu0 %v6280
    %7760 = vmatprep.subr.bf16.mxu0 0
    %7761 = vmatpush1.bf16.msra.mxu0 %v6279
    %7762 = vmatprep.subr.bf16.mxu0 0
    %7763 = vmatpush2.bf16.msra.mxu0 0
    %7764 = vmatprep.subr.bf16.mxu0 0
    %7765 = vmatpush2.bf16.msra.mxu0 0
    %7766 = vmatprep.subr.bf16.mxu0 0
    %7767 = vmatpush2.bf16.msra.mxu0 0
    %7768 = vmatprep.subr.bf16.mxu0 0
    %7769 = vmatpush2.bf16.msra.mxu0 0
    %7770 = vmatprep.subr.bf16.mxu0 0
    %7771 = vmatpush2.bf16.msra.mxu0 0
    %7772 = vmatprep.subr.bf16.mxu0 0
    %7773 = vmatpush2.bf16.msra.mxu0 0
    %7774 = vmatprep.subr.bf16.mxu0 0
    %7775 = vmatpush2.bf16.msra.mxu0 0
    %7776 = vmatprep.subr.bf16.mxu0 0
    %7777 = vmatpush2.bf16.msra.mxu0 0
    %7778 = vmatprep.mubr.bf16.mxu0 0
    %7779 = vmatmul.mubr.bf16.gmra.mxu0 %v7744
    %v7780 = vpop.f32.mrf.mxu0
    %v7781 = vadd.f32 0.0, %v7780
    %v7782 = vpop.f32.mrf.mxu0
    %v7783 = vpop.f32.mrf.mxu0
    %v7784 = vpop.f32.mrf.mxu0
    %7785 = vdwg.mxu0
    %v7786 = vadd.f32 %v7740, %v7781
    %v7787 = vld [vmem:[#allocation3 + $0x46c] sm:$0xff]
    %v7788 = vpack.c.bf16 %v7787, %v7787
    %v7790 = vsel %vm46, %v7788, 0
    %7792 = vmatprep.subr.bf16.mxu0 0
    %7793 = vmatpush1.bf16.msra.mxu0 0
    %7794 = vmatprep.subr.bf16.mxu0 0
    %7795 = vmatpush1.bf16.msra.mxu0 0
    %7796 = vmatprep.subr.bf16.mxu0 0
    %7797 = vmatpush1.bf16.msra.mxu0 0
    %7798 = vmatprep.subr.bf16.mxu0 0
    %7799 = vmatpush1.bf16.msra.mxu0 0
    %7800 = vmatprep.subr.bf16.mxu0 0
    %7801 = vmatpush1.bf16.msra.mxu0 %v6286
    %7802 = vmatprep.subr.bf16.mxu0 0
    %7803 = vmatpush1.bf16.msra.mxu0 %v6285
    %7804 = vmatprep.subr.bf16.mxu0 0
    %7805 = vmatpush1.bf16.msra.mxu0 %v6284
    %7806 = vmatprep.subr.bf16.mxu0 0
    %7807 = vmatpush1.bf16.msra.mxu0 %v6283
    %7808 = vmatprep.subr.bf16.mxu0 0
    %7809 = vmatpush2.bf16.msra.mxu0 0
    %7810 = vmatprep.subr.bf16.mxu0 0
    %7811 = vmatpush2.bf16.msra.mxu0 0
    %7812 = vmatprep.subr.bf16.mxu0 0
    %7813 = vmatpush2.bf16.msra.mxu0 0
    %7814 = vmatprep.subr.bf16.mxu0 0
    %7815 = vmatpush2.bf16.msra.mxu0 0
    %7816 = vmatprep.subr.bf16.mxu0 0
    %7817 = vmatpush2.bf16.msra.mxu0 0
    %7818 = vmatprep.subr.bf16.mxu0 0
    %7819 = vmatpush2.bf16.msra.mxu0 0
    %7820 = vmatprep.subr.bf16.mxu0 0
    %7821 = vmatpush2.bf16.msra.mxu0 0
    %7822 = vmatprep.subr.bf16.mxu0 0
    %7823 = vmatpush2.bf16.msra.mxu0 0
    %7824 = vmatprep.mubr.bf16.mxu0 0
    %7825 = vmatmul.mubr.bf16.gmra.mxu0 %v7790
    %v7826 = vpop.f32.mrf.mxu0
    %v7827 = vadd.f32 0.0, %v7826
    %v7828 = vpop.f32.mrf.mxu0
    %v7829 = vpop.f32.mrf.mxu0
    %v7830 = vpop.f32.mrf.mxu0
    %7831 = vdwg.mxu0
    %v7832 = vadd.f32 %v7786, %v7827
    %v7833 = vadd.f32 %v7832, %v7039
    %v7834 = vmax.f32 %v7833, 0.0
    %v7835 = vpack.c.bf16 %v7834, %v7834
    %v7837 = vsel %vm46, %v7835, 0
    %7839 = vmatprep.subr.bf16.mxu0 0
    %7840 = vmatpush1.bf16.msra.mxu0 0
    %7841 = vmatprep.subr.bf16.mxu0 0
    %7842 = vmatpush1.bf16.msra.mxu0 0
    %7843 = vmatprep.subr.bf16.mxu0 0
    %7844 = vmatpush1.bf16.msra.mxu0 0
    %7845 = vmatprep.subr.bf16.mxu0 0
    %7846 = vmatpush1.bf16.msra.mxu0 0
    %7847 = vmatprep.subr.bf16.mxu0 0
    %7848 = vmatpush1.bf16.msra.mxu0 %v6299
    %7849 = vmatprep.subr.bf16.mxu0 0
    %7850 = vmatpush1.bf16.msra.mxu0 %v6298
    %7851 = vmatprep.subr.bf16.mxu0 0
    %7852 = vmatpush1.bf16.msra.mxu0 %v6297
    %7853 = vmatprep.subr.bf16.mxu0 0
    %7854 = vmatpush1.bf16.msra.mxu0 %v6296
    %7855 = vmatprep.subr.bf16.mxu0 0
    %7856 = vmatpush2.bf16.msra.mxu0 0
    %7857 = vmatprep.subr.bf16.mxu0 0
    %7858 = vmatpush2.bf16.msra.mxu0 0
    %7859 = vmatprep.subr.bf16.mxu0 0
    %7860 = vmatpush2.bf16.msra.mxu0 0
    %7861 = vmatprep.subr.bf16.mxu0 0
    %7862 = vmatpush2.bf16.msra.mxu0 0
    %7863 = vmatprep.subr.bf16.mxu0 0
    %7864 = vmatpush2.bf16.msra.mxu0 0
    %7865 = vmatprep.subr.bf16.mxu0 0
    %7866 = vmatpush2.bf16.msra.mxu0 0
    %7867 = vmatprep.subr.bf16.mxu0 0
    %7868 = vmatpush2.bf16.msra.mxu0 0
    %7869 = vmatprep.subr.bf16.mxu0 0
    %7870 = vmatpush2.bf16.msra.mxu0 0
    %7871 = vmatprep.mubr.bf16.mxu0 0
    %7872 = vmatmul.mubr.bf16.gmra.mxu0 %v7837
    %v7873 = vpop.f32.mrf.mxu0
    %v7874 = vadd.f32 %v7048, %v7873
    %v7875 = vpop.f32.mrf.mxu0
    %v7876 = vpop.f32.mrf.mxu0
    %v7877 = vpop.f32.mrf.mxu0
    %7878 = vdwg.mxu0
    %v7879 = vmul.f32 %v7874, 4.6051702
    %v7880 = vadd.f32 %v7879, -4.6051702
    %v7881 = vmul.f32 %v7880, 1.442695
    %v7882 = vpow.pop %v7881
    %7883 = vst.msk [vmem:[#allocation4 + $0x1] sm:$0x1] %vm7097, %v7882
    // Predicated region
    $region96: #{tpu_custom_call.1} parent=1 // pred_check
      _
    $region97: #{tpu_custom_call.1} parent=1 // pred_check_branch
      %7885 = sbr.rel (0) target = $region99
    $region98: #{tpu_custom_call.1} parent=1 // pred_region
      %s7887 = ssub.s32 32, 32
      %7888 = vsyncadd [#allocation5], %s7887
      %s7890 = sshll.u32 [#allocation4], 4
      %s7891 = int_to_ptr.vmem [resolvable:$true] %s7890
      %7893 = dma.vmem_to_hbm [thread:$0]  %s7891, 32, %s13, [#allocation5]
    $region99: #{tpu_custom_call.1} parent=1 // pred_fallthru
      _
    // Predicated region
    $region100: #{tpu_custom_call.1} parent=1 // pred_check
      _
    $region101: #{tpu_custom_call.1} parent=1 // pred_check_branch
      %7895 = sbr.rel (0) target = $region103
    $region102: #{tpu_custom_call.1} parent=1 // pred_region
      %7896 = dma.done [#allocation5], 32
    $region103: #{tpu_custom_call.1} parent=1 // pred_fallthru
      _
    %7897 = vsyncpa [#allocation5], 1

</llo_original>
